<compile_context>
chip_gen: v7x
topology: tpu7x:2x2x1
jax: 0.10.0
libtpu: 0.0.40
codegen_flags: <defaults>
</compile_context>

<pallas_src>
import functools

import jax
import jax.numpy as jnp
from jax.experimental import pallas as pl
from jax.experimental.pallas import tpu as pltpu

_HI = jax.lax.Precision.HIGHEST     # only used by the pure-JAX reference
_BF16 = jnp.bfloat16
_F32 = jnp.float32
_VMEM_LIMIT = 32 * 1024 * 1024      # safe on v5e/v6e (128 MiB phys) and v7x (64 MiB phys)


# ----------------------------------------------------------------------------
# Pallas kernels
# ----------------------------------------------------------------------------
def _proj_kernel(z_ref, w_ref, y_ref, s_ref):
    """Layer 1: (B, nz) @ (nz, 16*C1) projection + per-column batch sums (pre-BN)."""
    y = jnp.dot(z_ref[...], w_ref[...], preferred_element_type=jnp.float32)
    s_ref[...] = jnp.concatenate(
        [jnp.sum(y, axis=0, keepdims=True),
         jnp.sum(y * y, axis=0, keepdims=True)], axis=0)
    y_ref[...] = y.astype(y_ref.dtype)


def _convt_kernel(Hin, Win, act, x_ref, w_ref, *out_refs):
    """One stride-2 ConvTranspose layer for ONE image.

    x_ref : (1, (Hin+3)*(Win+2), Cin) bf16  -- padded image, rows flattened (row-major).
    w_ref : (9*Cin, Nout) bf16              -- phase-packed weight, rows=(u,v,ci),
                                               cols=(dy,dx,co) (+ zero lane padding).
    Builds the im2col slab with 9 static row slices of the flat padded image (the
    "flat window" trick: window (u,v) is rows [u*Wp+v, u*Wp+v+Hin*Wp)), runs a single
    K=9*Cin GEMM with f32 accumulation and either
      - emits pre-BN output (bf16) + masked per-image BN partial sums (f32), or
      - applies tanh in-kernel (final layer, no BN).
    Rows with column index >= Win are junk (window wrap); they are excluded from the
    BN sums here and dropped in the XLA layout glue.
    """
    Wp = Win + 2
    R = Hin * Wp
    x = x_ref[0]                                                     # (Rin, Cin) bf16
    lhs = jnp.concatenate(
        [x[u * Wp + v: u * Wp + v + R, :] for u in range(3) for v in range(3)],
        axis=-1)                                                     # (R, 9*Cin) bf16
    y = jnp.dot(lhs, w_ref[...], preferred_element_type=jnp.float32)  # (R, Nout) f32

    if act == "tanh":
        (y_ref,) = out_refs
        y_ref[0] = jnp.tanh(y).astype(y_ref.dtype)
    else:
        y_ref, s_ref = out_refs
        col = jax.lax.broadcasted_iota(jnp.int32, (R, 1), 0) % Wp
        yv = jnp.where(col < Win, y, 0.0)                            # mask junk columns
        s_ref[0] = jnp.concatenate(
            [jnp.sum(yv, axis=0, keepdims=True),
             jnp.sum(yv * yv, axis=0, keepdims=True)], axis=0)       # (2, Nout) f32
        y_ref[0] = y.astype(y_ref.dtype)


# ----------------------------------------------------------------------------
# pallas_call wrappers
# ----------------------------------------------------------------------------
def _proj_call(z2, w_packed):
    B, nz = z2.shape
    N1 = w_packed.shape[1]
    ce = pl.CostEstimate(flops=int(2 * B * nz * N1), transcendentals=0,
                         bytes_accessed=int(B * nz * 2 + nz * N1 * 2 + B * N1 * 2 + 2 * N1 * 4))
    return pl.pallas_call(
        _proj_kernel,
        grid=(1,),
        in_specs=[pl.BlockSpec((B, nz), lambda i: (0, 0)),
                  pl.BlockSpec((nz, N1), lambda i: (0, 0))],
        out_specs=(pl.BlockSpec((B, N1), lambda i: (0, 0)),
                   pl.BlockSpec((2, N1), lambda i: (0, 0))),
        out_shape=(jax.ShapeDtypeStruct((B, N1), _BF16),
                   jax.ShapeDtypeStruct((2, N1), _F32)),
        compiler_params=pltpu.CompilerParams(
            dimension_semantics=("arbitrary",), vmem_limit_bytes=_VMEM_LIMIT),
        cost_estimate=ce,
    )(z2, w_packed)


def _convt_call(x, w_packed, *, Hin, Win, act, out_dtype, with_sums):
    """x: (B, (Hin+3)*(Win+2), Cin) bf16; w_packed: (9*Cin, Nout) bf16."""
    B, Rin, Cin = x.shape
    Nout = w_packed.shape[1]
    assert w_packed.shape[0] == 9 * Cin
    R = Hin * (Win + 2)
    kernel = functools.partial(_convt_kernel, Hin, Win, act)

    out_shape = [jax.ShapeDtypeStruct((B, R, Nout), out_dtype)]
    out_specs = [pl.BlockSpec((1, R, Nout), lambda b: (b, 0, 0))]
    if with_sums:
        out_shape.append(jax.ShapeDtypeStruct((B, 2, Nout), _F32))
        out_specs.append(pl.BlockSpec((1, 2, Nout), lambda b: (b, 0, 0)))

    out_bytes = jnp.dtype(out_dtype).itemsize
    ce = pl.CostEstimate(
        flops=int(2 * B * R * 9 * Cin * Nout),
        transcendentals=int(B * R * Nout) if act == "tanh" else 0,
        bytes_accessed=int(B * Rin * Cin * 2 + 9 * Cin * Nout * 2 + B * R * Nout * out_bytes))

    return pl.pallas_call(
        kernel,
        grid=(B,),
        in_specs=[pl.BlockSpec((1, Rin, Cin), lambda b: (b, 0, 0)),
                  pl.BlockSpec((9 * Cin, Nout), lambda b: (0, 0))],   # weight resident
        out_specs=tuple(out_specs) if with_sums else out_specs[0],
        out_shape=tuple(out_shape) if with_sums else out_shape[0],
        compiler_params=pltpu.CompilerParams(
            dimension_semantics=("parallel",),          # per-image: megacore-shardable
            vmem_limit_bytes=_VMEM_LIMIT),
        cost_estimate=ce,
    )(x, w_packed)


# ----------------------------------------------------------------------------
# Weight packing (one-time layout prep, plain JAX)
# ----------------------------------------------------------------------------
def _pack_proj_weight(w):
    """ConvTranspose2d(nz, C1, 4, 1, 0) on a 1x1 input is a projection:
    (nz, C1, 4, 4) -> (nz, 16*C1), column layout (oy*4 + ox)*C1 + co."""
    nz = w.shape[0]
    return jnp.transpose(w, (0, 2, 3, 1)).reshape(nz, -1)


def _pack_convT_weight(w):
    """ConvTranspose2d(Cin, Cout, 4, stride=2, padding=1) as a phase-packed GEMM:
    rows (u*3+v)*Cin + ci over the 3x3 im2col window, cols (dy*2+dx)*Cout + co."""
    cin, cout = w.shape[0], w.shape[1]
    wb = jnp.zeros((3, 3, cin, 2, 2, cout), _F32)
    for u in range(3):
        for v in range(3):
            for dy in range(2):
                for dx in range(2):
                    a, b = u - dy, v - dx
                    if 0 <= a <= 1 and 0 <= b <= 1:
                        wb = wb.at[u, v, :, dy, dx, :].set(
                            w[:, :, 3 + dy - 2 * u, 3 + dx - 2 * v])
    return wb.reshape(9 * cin, 4 * cout)


# ----------------------------------------------------------------------------
# XLA glue: BN finalize / affine+ReLU fused with the layout pass between kernels
# ----------------------------------------------------------------------------
def _bn_affine(s1, s2, n, gamma, beta, eps):
    g = gamma.reshape(-1).astype(_F32)
    b = beta.reshape(-1).astype(_F32)
    mean = s1 / n
    var = s2 / n - mean * mean                 # biased variance (PyTorch BN training)
    scale = g * jax.lax.rsqrt(var + eps)
    shift = b - mean * scale
    return scale, shift


def _flatten_pad_bf16(a):
    """NHWC image -> flattened, padded bf16 kernel input (B, (H+3)*(W+2), C).
    (1,1) halo pad for the im2col plus one extra bottom row so every flat-window
    slice in the kernel stays in bounds."""
    B, H, W, C = a.shape
    ap = jnp.pad(a, ((0, 0), (1, 2), (1, 1), (0, 0)))
    return ap.reshape(B, (H + 3) * (W + 2), C).astype(_BF16)


def _round_up(x, m):
    return (x + m - 1) // m * m


# ----------------------------------------------------------------------------
# Generator forward
# ----------------------------------------------------------------------------
def generator_forward(z, params, eps=1e-5):
    """z: (B, nz, 1, 1) f32 -> (B, nc, 64, 64), matching Generator.forward with
    BatchNorm in training mode (batch statistics, as a fresh nn.Module uses)."""
    B = z.shape[0]
    z2 = z.reshape(B, -1).astype(_BF16)

    # ---- Layer 1: projection kernel (pre-BN) + BN finalize/ReLU in glue ----
    C1 = params["g1"].shape[-1]
    w1p = _pack_proj_weight(params["w1"]).astype(_BF16)
    y1, s1 = _proj_call(z2, w1p)                                   # (B,16*C1), (2,16*C1)
    sm = s1[0].reshape(16, C1).sum(0)
    sq = s1[1].reshape(16, C1).sum(0)
    scale, shift = _bn_affine(sm, sq, B * 16, params["g1"], params["b1"], eps)
    a = jnp.maximum(y1.astype(_F32).reshape(B, 4, 4, C1) * scale + shift, 0.0)
    x = _flatten_pad_bf16(a)                                       # layer-2 input
    Hin, Win = 4, 4

    # ---- Layers 2-4: fused convT kernel (pre-BN + partial sums), glue finishes BN ----
    for i in (2, 3, 4):
        Cin = a.shape[-1]
        w = params[f"w{i}"]
        Cout = w.shape[1]
        wp = _pack_convT_weight(w).astype(_BF16)                   # (9*Cin, 4*Cout)
        y, s = _convt_call(x, wp, Hin=Hin, Win=Win, act="none",
                           out_dtype=_BF16, with_sums=True)
        stot = s.sum(0)                                            # (2, 4*Cout) f32
        s1c = stot[0].reshape(4, Cout).sum(0)
        s2c = stot[1].reshape(4, Cout).sum(0)
        n = B * Hin * Win * 4                                      # = B * Hout * Wout
        scale, shift = _bn_affine(s1c, s2c, n, params[f"g{i}"], params[f"b{i}"], eps)

        # fused XLA pass: drop junk cols, BN affine + ReLU, phase de-interleave, pad
        yv = y.astype(_F32).reshape(B, Hin, Win + 2, 2, 2, Cout)[:, :, :Win]
        av = jnp.maximum(yv * scale + shift, 0.0)
        a = av.transpose(0, 1, 3, 2, 4, 5).reshape(B, 2 * Hin, 2 * Win, Cout)
        x = _flatten_pad_bf16(a)
        Hin, Win = 2 * Hin, 2 * Win

    # ---- Layer 5: convT + in-kernel tanh, output lanes padded to 128 (lane-dense store) ----
    nc = params["w5"].shape[1]
    Cin = a.shape[-1]
    Npad = max(128, _round_up(4 * nc, 128))
    w5p = _pack_convT_weight(params["w5"]).astype(_BF16)
    w5p = jnp.pad(w5p, ((0, 0), (0, Npad - 4 * nc)))
    y5 = _convt_call(x, w5p, Hin=Hin, Win=Win, act="tanh",
                     out_dtype=_F32, with_sums=False)              # (B, Hin*(Win+2), Npad)

    # final glue (required anyway): drop junk cols + pad lanes, de-interleave, NCHW
    yv = y5.reshape(B, Hin, Win + 2, Npad)[:, :, :Win, :4 * nc]
    yv = yv.reshape(B, Hin, Win, 2, 2, nc)
    out = yv.transpose(0, 5, 1, 3, 2, 4).reshape(B, nc, 2 * Hin, 2 * Win)
    return out


# ----------------------------------------------------------------------------
# Parameters (torch layout: ConvTranspose2d weight is (Cin, Cout, kH, kW))
# ----------------------------------------------------------------------------
def init_params(key, nz, ngf, nc):
    chans = [nz, ngf * 8, ngf * 4, ngf * 2, ngf, nc]
    keys = jax.random.split(key, 16)
    p = {}
    for i in range(5):
        cin, cout = chans[i], chans[i + 1]
        p[f"w{i+1}"] = jax.random.normal(keys[i], (cin, cout, 4, 4), _F32) * 0.05
    for i in range(1, 5):
        ch = chans[i]
        p[f"g{i}"] = 1.0 + 0.1 * jax.random.normal(keys[5 + i], (1, ch), _F32)
        p[f"b{i}"] = 0.1 * jax.random.normal(keys[10 + i], (1, ch), _F32)
    return p


# ----------------------------------------------------------------------------
# Pure-JAX f32 reference (independent formulation: zero-dilation + flipped 4x4 conv)
# ----------------------------------------------------------------------------
def _ref_convT_s2(x, w):
    B, H, W, Cin = x.shape
    Cout = w.shape[1]
    xd = jnp.zeros((B, 2 * H - 1, 2 * W - 1, Cin), x.dtype).at[:, ::2, ::2, :].set(x)
    xdp = jnp.pad(xd, ((0, 0), (2, 2), (2, 2), (0, 0)))
    out = jnp.zeros((B, 2 * H, 2 * W, Cout), _F32)
    for ky in range(4):
        for kx in range(4):
            out = out + jnp.einsum("bhwc,cf->bhwf",
                                   xdp[:, ky:ky + 2 * H, kx:kx + 2 * W, :],
                                   w[:, :, 3 - ky, 3 - kx], precision=_HI)
    return out


def _ref_bn_train(x, gamma, beta, eps):
    mean = jnp.mean(x, axis=(0, 1, 2), keepdims=True)
    var = jnp.mean((x - mean) ** 2, axis=(0, 1, 2), keepdims=True)
    return (x - mean) * jax.lax.rsqrt(var + eps) * gamma[0] + beta[0]


def ref_forward(z, p, eps=1e-5):
    B = z.shape[0]
    x = jnp.einsum("bc,cfhw->bhwf", z.reshape(B, -1).astype(_F32), p["w1"], precision=_HI)
    x = jnp.maximum(_ref_bn_train(x, p["g1"], p["b1"], eps), 0.0)
    for i in (2, 3, 4):
        x = _ref_convT_s2(x, p[f"w{i}"])
        x = jnp.maximum(_ref_bn_train(x, p[f"g{i}"], p[f"b{i}"], eps), 0.0)
    x = jnp.tanh(_ref_convT_s2(x, p["w5"]))
    return jnp.transpose(x, (0, 3, 1, 2))


# ----------------------------------------------------------------------------
if __name__ == "__main__":
    B, nz, ngf, nc = 2, 16, 8, 3

    key = jax.random.PRNGKey(0)
    kz, kp = jax.random.split(key)
    z = jax.random.normal(kz, (B, nz, 1, 1), _F32)
    params = init_params(kp, nz, ngf, nc)

    out = jax.jit(generator_forward)(z, params)
    out = jax.block_until_ready(out)

    ref = ref_forward(z, params)
    assert out.shape == (B, nc, 64, 64), out.shape
    max_err = float(jnp.max(jnp.abs(out - ref)))
    # Kernel path stores activations/weights in bf16 and runs the MXU at default
    # (bf16) precision with f32 accumulation; the reference is full f32 HIGHEST.
    if max_err < 1e-1:
        print("KERNEL_OK")
    else:
        print(f"MISMATCH max_err={max_err:.3e}")
</pallas_src>

<mosaic_0001>
module attributes {stable_mosaic.version = 11 : i64} {
  func.func @_proj_kernel(%arg0: i32, %arg1: memref<2x16xbf16, #tpu.memory_space<vmem>>, %arg2: memref<16x1024xbf16, #tpu.memory_space<vmem>>, %arg3: memref<2x1024xbf16, #tpu.memory_space<vmem>>, %arg4: memref<2x1024xf32, #tpu.memory_space<vmem>>) attributes {dimension_semantics = [#tpu.dimension_semantics<arbitrary>], iteration_bounds = array<i64: 1>, scalar_prefetch = 0 : i64, scratch_operands = 0 : i64, tpu.core_type = #tpu.core_type<tc>, window_params = [{pipeline_mode = #tpu.pipeline_mode<synchronous>, transform_indices = @transform_0, window_bounds = array<i64: 2, 16>}, {pipeline_mode = #tpu.pipeline_mode<synchronous>, transform_indices = @transform_1, window_bounds = array<i64: 16, 1024>}, {pipeline_mode = #tpu.pipeline_mode<synchronous>, transform_indices = @transform_2, window_bounds = array<i64: 2, 1024>}, {pipeline_mode = #tpu.pipeline_mode<synchronous>, transform_indices = @transform_3, window_bounds = array<i64: 2, 1024>}]} {
    %c0 = arith.constant 0 : index
    %c0_0 = arith.constant 0 : index
    %0 = vector.load %arg1[%c0, %c0_0] : memref<2x16xbf16, #tpu.memory_space<vmem>>, vector<2x16xbf16>
    %c0_1 = arith.constant 0 : index
    %c0_2 = arith.constant 0 : index
    %1 = vector.load %arg2[%c0_1, %c0_2] : memref<16x1024xbf16, #tpu.memory_space<vmem>>, vector<16x1024xbf16>
    %cst = arith.constant dense<0.000000e+00> : vector<2x1024xf32>
    %2 = tpu.matmul %0, %1, %cst {dimension_numbers = #tpu.dot_dimension_numbers<[1], [0], [0], [1], [0, 0, 1, 1], [], []>} : vector<2x16xbf16>, vector<16x1024xbf16>, vector<2x1024xf32> -> vector<2x1024xf32>
    %cst_3 = arith.constant dense<0.000000e+00> : vector<1024xf32>
    %3 = vector.multi_reduction <add>, %2, %cst_3 [0] : vector<2x1024xf32> to vector<1024xf32>
    %4 = vector.shape_cast %3 : vector<1024xf32> to vector<1x1024xf32>
    %5 = arith.mulf %2, %2 : vector<2x1024xf32>
    %cst_4 = arith.constant dense<0.000000e+00> : vector<1024xf32>
    %6 = vector.multi_reduction <add>, %5, %cst_4 [0] : vector<2x1024xf32> to vector<1024xf32>
    %7 = vector.shape_cast %6 : vector<1024xf32> to vector<1x1024xf32>
    %8 = tpu.concatenate %4, %7 in 0 : vector<1x1024xf32>, vector<1x1024xf32> -> vector<2x1024xf32>
    %c0_5 = arith.constant 0 : index
    %c0_6 = arith.constant 0 : index
    %9 = vector.load %arg4[%c0_5, %c0_6] : memref<2x1024xf32, #tpu.memory_space<vmem>>, vector<2x1024xf32>
    tpu.vector_store %arg4[%c0_5, %c0_6], %8 {strides = array<i32>} : memref<2x1024xf32, #tpu.memory_space<vmem>>, vector<2x1024xf32>,
    %10 = arith.truncf %2 : vector<2x1024xf32> to vector<2x1024xbf16>
    %c0_7 = arith.constant 0 : index
    %c0_8 = arith.constant 0 : index
    %11 = vector.load %arg3[%c0_7, %c0_8] : memref<2x1024xbf16, #tpu.memory_space<vmem>>, vector<2x1024xbf16>
    tpu.vector_store %arg3[%c0_7, %c0_8], %10 {strides = array<i32>} : memref<2x1024xbf16, #tpu.memory_space<vmem>>, vector<2x1024xbf16>,
    return
  }
  func.func @transform_0(%arg0: i32) -> (i32, i32) {
    %c0_i32 = arith.constant 0 : i32
    %c0_i32_0 = arith.constant 0 : i32
    %c0_i32_1 = arith.constant 0 : i32
    return %c0_i32, %c0_i32_0 : i32, i32
  }
  func.func @transform_1(%arg0: i32) -> (i32, i32) {
    %c0_i32 = arith.constant 0 : i32
    %c0_i32_0 = arith.constant 0 : i32
    %c0_i32_1 = arith.constant 0 : i32
    return %c0_i32, %c0_i32_0 : i32, i32
  }
  func.func @transform_2(%arg0: i32) -> (i32, i32) {
    %c0_i32 = arith.constant 0 : i32
    %c0_i32_0 = arith.constant 0 : i32
    %c0_i32_1 = arith.constant 0 : i32
    return %c0_i32, %c0_i32_0 : i32, i32
  }
  func.func @transform_3(%arg0: i32) -> (i32, i32) {
    %c0_i32 = arith.constant 0 : i32
    %c0_i32_0 = arith.constant 0 : i32
    %c0_i32_1 = arith.constant 0 : i32
    return %c0_i32, %c0_i32_0 : i32, i32
  }
}

module attributes {stable_mosaic.version = 11 : i64} {
  func.func @_convt_kernel(%arg0: i32, %arg1: memref<1x42x64xbf16, #tpu.memory_space<vmem>>, %arg2: memref<576x128xbf16, #tpu.memory_space<vmem>>, %arg3: memref<1x24x128xbf16, #tpu.memory_space<vmem>>, %arg4: memref<1x2x128xf32, #tpu.memory_space<vmem>>) attributes {dimension_semantics = [#tpu.dimension_semantics<parallel>], iteration_bounds = array<i64: 2>, scalar_prefetch = 0 : i64, scratch_operands = 0 : i64, tpu.core_type = #tpu.core_type<tc>, window_params = [{transform_indices = @transform_0, window_bounds = array<i64: 1, 42, 64>}, {pipeline_mode = #tpu.pipeline_mode<synchronous>, transform_indices = @transform_1, window_bounds = array<i64: 576, 128>}, {transform_indices = @transform_2, window_bounds = array<i64: 1, 24, 128>}, {transform_indices = @transform_3, window_bounds = array<i64: 1, 2, 128>}]} {
    %c0 = arith.constant 0 : index
    %c0_0 = arith.constant 0 : index
    %c0_1 = arith.constant 0 : index
    %0 = vector.load %arg1[%c0, %c0_0, %c0_1] : memref<1x42x64xbf16, #tpu.memory_space<vmem>>, vector<1x42x64xbf16>
    %1 = vector.shape_cast %0 : vector<1x42x64xbf16> to vector<42x64xbf16>
    %2 = vector.extract_strided_slice %1 {offsets = [0, 0], sizes = [24, 64], strides = [1, 1]} : vector<42x64xbf16> to vector<24x64xbf16>
    %3 = vector.extract_strided_slice %1 {offsets = [1, 0], sizes = [24, 64], strides = [1, 1]} : vector<42x64xbf16> to vector<24x64xbf16>
    %4 = vector.extract_strided_slice %1 {offsets = [2, 0], sizes = [24, 64], strides = [1, 1]} : vector<42x64xbf16> to vector<24x64xbf16>
    %5 = vector.extract_strided_slice %1 {offsets = [6, 0], sizes = [24, 64], strides = [1, 1]} : vector<42x64xbf16> to vector<24x64xbf16>
    %6 = vector.extract_strided_slice %1 {offsets = [7, 0], sizes = [24, 64], strides = [1, 1]} : vector<42x64xbf16> to vector<24x64xbf16>
    %7 = vector.extract_strided_slice %1 {offsets = [8, 0], sizes = [24, 64], strides = [1, 1]} : vector<42x64xbf16> to vector<24x64xbf16>
    %8 = vector.extract_strided_slice %1 {offsets = [12, 0], sizes = [24, 64], strides = [1, 1]} : vector<42x64xbf16> to vector<24x64xbf16>
    %9 = vector.extract_strided_slice %1 {offsets = [13, 0], sizes = [24, 64], strides = [1, 1]} : vector<42x64xbf16> to vector<24x64xbf16>
    %10 = vector.extract_strided_slice %1 {offsets = [14, 0], sizes = [24, 64], strides = [1, 1]} : vector<42x64xbf16> to vector<24x64xbf16>
    %11 = tpu.concatenate %2, %3, %4, %5, %6, %7, %8, %9, %10 in 1 : vector<24x64xbf16>, vector<24x64xbf16>, vector<24x64xbf16>, vector<24x64xbf16>, vector<24x64xbf16>, vector<24x64xbf16>, vector<24x64xbf16>, vector<24x64xbf16>, vector<24x64xbf16> -> vector<24x576xbf16>
    %c0_2 = arith.constant 0 : index
    %c0_3 = arith.constant 0 : index
    %12 = vector.load %arg2[%c0_2, %c0_3] : memref<576x128xbf16, #tpu.memory_space<vmem>>, vector<576x128xbf16>
    %cst = arith.constant dense<0.000000e+00> : vector<24x128xf32>
    %13 = tpu.matmul %11, %12, %cst {dimension_numbers = #tpu.dot_dimension_numbers<[1], [0], [0], [1], [0, 0, 1, 1], [], []>} : vector<24x576xbf16>, vector<576x128xbf16>, vector<24x128xf32> -> vector<24x128xf32>
    %14 = tpu.iota {dimensions = array<i32: 0>} : vector<24x1xi32>
    %c6_i32 = arith.constant 6 : i32
    %c0_i32 = arith.constant 0 : i32
    %15 = arith.cmpi eq, %c6_i32, %c0_i32 : i32
    %c1_i32 = arith.constant 1 : i32
    %16 = arith.select %15, %c1_i32, %c6_i32 : i32
    %17 = vector.broadcast %16 : i32 to vector<24x1xi32>
    %18 = arith.remsi %14, %17 : vector<24x1xi32>
    %c0_i32_4 = arith.constant 0 : i32
    %19 = vector.broadcast %c0_i32_4 : i32 to vector<24x1xi32>
    %20 = arith.cmpi ne, %18, %19 : vector<24x1xi32>
    %c0_i32_5 = arith.constant 0 : i32
    %21 = vector.broadcast %c0_i32_5 : i32 to vector<24x1xi32>
    %22 = arith.cmpi slt, %18, %21 : vector<24x1xi32>
    %c0_i32_6 = arith.constant 0 : i32
    %23 = arith.cmpi slt, %16, %c0_i32_6 : i32
    %24 = vector.broadcast %23 : i1 to vector<24x1xi1>
    %25 = vector.broadcast %24 : vector<24x1xi1> to vector<24x1xi1>
    %26 = arith.xori %22, %25 : vector<24x1xi1>
    %27 = arith.andi %26, %20 : vector<24x1xi1>
    %28 = vector.broadcast %16 : i32 to vector<24x1xi32>
    %29 = arith.addi %18, %28 : vector<24x1xi32>
    %30 = arith.select %27, %29, %18 : vector<24x1xi1>, vector<24x1xi32>
    %c4_i32 = arith.constant 4 : i32
    %31 = vector.broadcast %c4_i32 : i32 to vector<24x1xi32>
    %32 = arith.cmpi slt, %30, %31 : vector<24x1xi32>
    %cst_7 = arith.constant 0.000000e+00 : f32
    %33 = vector.shape_cast %32 : vector<24x1xi1> to vector<24x1xi1>
    %34 = vector.broadcast %33 : vector<24x1xi1> to vector<24x128xi1>
    %35 = vector.broadcast %cst_7 : f32 to vector<24x128xf32>
    %36 = arith.select %34, %13, %35 : vector<24x128xi1>, vector<24x128xf32>
    %cst_8 = arith.constant dense<0.000000e+00> : vector<128xf32>
    %37 = vector.multi_reduction <add>, %36, %cst_8 [0] : vector<24x128xf32> to vector<128xf32>
    %38 = vector.shape_cast %37 : vector<128xf32> to vector<1x128xf32>
    %39 = arith.mulf %36, %36 : vector<24x128xf32>
    %cst_9 = arith.constant dense<0.000000e+00> : vector<128xf32>
    %40 = vector.multi_reduction <add>, %39, %cst_9 [0] : vector<24x128xf32> to vector<128xf32>
    %41 = vector.shape_cast %40 : vector<128xf32> to vector<1x128xf32>
    %42 = tpu.concatenate %38, %41 in 0 : vector<1x128xf32>, vector<1x128xf32> -> vector<2x128xf32>
    %c0_10 = arith.constant 0 : index
    %c0_11 = arith.constant 0 : index
    %c0_12 = arith.constant 0 : index
    %43 = vector.load %arg4[%c0_10, %c0_11, %c0_12] : memref<1x2x128xf32, #tpu.memory_space<vmem>>, vector<1x2x128xf32>
    %44 = vector.shape_cast %43 : vector<1x2x128xf32> to vector<2x128xf32>
    %45 = vector.shape_cast %42 : vector<2x128xf32> to vector<1x2x128xf32>
    tpu.vector_store %arg4[%c0_10, %c0_11, %c0_12], %45 {strides = array<i32>} : memref<1x2x128xf32, #tpu.memory_space<vmem>>, vector<1x2x128xf32>,
    %46 = arith.truncf %13 : vector<24x128xf32> to vector<24x128xbf16>
    %c0_13 = arith.constant 0 : index
    %c0_14 = arith.constant 0 : index
    %c0_15 = arith.constant 0 : index
    %47 = vector.load %arg3[%c0_13, %c0_14, %c0_15] : memref<1x24x128xbf16, #tpu.memory_space<vmem>>, vector<1x24x128xbf16>
    %48 = vector.shape_cast %47 : vector<1x24x128xbf16> to vector<24x128xbf16>
    %49 = vector.shape_cast %46 : vector<24x128xbf16> to vector<1x24x128xbf16>
    tpu.vector_store %arg3[%c0_13, %c0_14, %c0_15], %49 {strides = array<i32>} : memref<1x24x128xbf16, #tpu.memory_space<vmem>>, vector<1x24x128xbf16>,
    return
  }
  func.func @transform_0(%arg0: i32) -> (i32, i32, i32) {
    %c0_i32 = arith.constant 0 : i32
    %c0_i32_0 = arith.constant 0 : i32
    %c0_i32_1 = arith.constant 0 : i32
    return %arg0, %c0_i32, %c0_i32_0 : i32, i32, i32
  }
  func.func @transform_1(%arg0: i32) -> (i32, i32) {
    %c0_i32 = arith.constant 0 : i32
    %c0_i32_0 = arith.constant 0 : i32
    %c0_i32_1 = arith.constant 0 : i32
    return %c0_i32, %c0_i32_0 : i32, i32
  }
  func.func @transform_2(%arg0: i32) -> (i32, i32, i32) {
    %c0_i32 = arith.constant 0 : i32
    %c0_i32_0 = arith.constant 0 : i32
    %c0_i32_1 = arith.constant 0 : i32
    return %arg0, %c0_i32, %c0_i32_0 : i32, i32, i32
  }
  func.func @transform_3(%arg0: i32) -> (i32, i32, i32) {
    %c0_i32 = arith.constant 0 : i32
    %c0_i32_0 = arith.constant 0 : i32
    %c0_i32_1 = arith.constant 0 : i32
    return %arg0, %c0_i32, %c0_i32_0 : i32, i32, i32
  }
}

module attributes {stable_mosaic.version = 11 : i64} {
  func.func @_convt_kernel(%arg0: i32, %arg1: memref<1x110x32xbf16, #tpu.memory_space<vmem>>, %arg2: memref<288x64xbf16, #tpu.memory_space<vmem>>, %arg3: memref<1x80x64xbf16, #tpu.memory_space<vmem>>, %arg4: memref<1x2x64xf32, #tpu.memory_space<vmem>>) attributes {dimension_semantics = [#tpu.dimension_semantics<parallel>], iteration_bounds = array<i64: 2>, scalar_prefetch = 0 : i64, scratch_operands = 0 : i64, tpu.core_type = #tpu.core_type<tc>, window_params = [{transform_indices = @transform_0, window_bounds = array<i64: 1, 110, 32>}, {pipeline_mode = #tpu.pipeline_mode<synchronous>, transform_indices = @transform_1, window_bounds = array<i64: 288, 64>}, {transform_indices = @transform_2, window_bounds = array<i64: 1, 80, 64>}, {transform_indices = @transform_3, window_bounds = array<i64: 1, 2, 64>}]} {
    %c0 = arith.constant 0 : index
    %c0_0 = arith.constant 0 : index
    %c0_1 = arith.constant 0 : index
    %0 = vector.load %arg1[%c0, %c0_0, %c0_1] : memref<1x110x32xbf16, #tpu.memory_space<vmem>>, vector<1x110x32xbf16>
    %1 = vector.shape_cast %0 : vector<1x110x32xbf16> to vector<110x32xbf16>
    %2 = vector.extract_strided_slice %1 {offsets = [0, 0], sizes = [80, 32], strides = [1, 1]} : vector<110x32xbf16> to vector<80x32xbf16>
    %3 = vector.extract_strided_slice %1 {offsets = [1, 0], sizes = [80, 32], strides = [1, 1]} : vector<110x32xbf16> to vector<80x32xbf16>
    %4 = vector.extract_strided_slice %1 {offsets = [2, 0], sizes = [80, 32], strides = [1, 1]} : vector<110x32xbf16> to vector<80x32xbf16>
    %5 = vector.extract_strided_slice %1 {offsets = [10, 0], sizes = [80, 32], strides = [1, 1]} : vector<110x32xbf16> to vector<80x32xbf16>
    %6 = vector.extract_strided_slice %1 {offsets = [11, 0], sizes = [80, 32], strides = [1, 1]} : vector<110x32xbf16> to vector<80x32xbf16>
    %7 = vector.extract_strided_slice %1 {offsets = [12, 0], sizes = [80, 32], strides = [1, 1]} : vector<110x32xbf16> to vector<80x32xbf16>
    %8 = vector.extract_strided_slice %1 {offsets = [20, 0], sizes = [80, 32], strides = [1, 1]} : vector<110x32xbf16> to vector<80x32xbf16>
    %9 = vector.extract_strided_slice %1 {offsets = [21, 0], sizes = [80, 32], strides = [1, 1]} : vector<110x32xbf16> to vector<80x32xbf16>
    %10 = vector.extract_strided_slice %1 {offsets = [22, 0], sizes = [80, 32], strides = [1, 1]} : vector<110x32xbf16> to vector<80x32xbf16>
    %11 = tpu.concatenate %2, %3, %4, %5, %6, %7, %8, %9, %10 in 1 : vector<80x32xbf16>, vector<80x32xbf16>, vector<80x32xbf16>, vector<80x32xbf16>, vector<80x32xbf16>, vector<80x32xbf16>, vector<80x32xbf16>, vector<80x32xbf16>, vector<80x32xbf16> -> vector<80x288xbf16>
    %c0_2 = arith.constant 0 : index
    %c0_3 = arith.constant 0 : index
    %12 = vector.load %arg2[%c0_2, %c0_3] : memref<288x64xbf16, #tpu.memory_space<vmem>>, vector<288x64xbf16>
    %cst = arith.constant dense<0.000000e+00> : vector<80x64xf32>
    %13 = tpu.matmul %11, %12, %cst {dimension_numbers = #tpu.dot_dimension_numbers<[1], [0], [0], [1], [0, 0, 1, 1], [], []>} : vector<80x288xbf16>, vector<288x64xbf16>, vector<80x64xf32> -> vector<80x64xf32>
    %14 = tpu.iota {dimensions = array<i32: 0>} : vector<80x1xi32>
    %c10_i32 = arith.constant 10 : i32
    %c0_i32 = arith.constant 0 : i32
    %15 = arith.cmpi eq, %c10_i32, %c0_i32 : i32
    %c1_i32 = arith.constant 1 : i32
    %16 = arith.select %15, %c1_i32, %c10_i32 : i32
    %17 = vector.broadcast %16 : i32 to vector<80x1xi32>
    %18 = arith.remsi %14, %17 : vector<80x1xi32>
    %c0_i32_4 = arith.constant 0 : i32
    %19 = vector.broadcast %c0_i32_4 : i32 to vector<80x1xi32>
    %20 = arith.cmpi ne, %18, %19 : vector<80x1xi32>
    %c0_i32_5 = arith.constant 0 : i32
    %21 = vector.broadcast %c0_i32_5 : i32 to vector<80x1xi32>
    %22 = arith.cmpi slt, %18, %21 : vector<80x1xi32>
    %c0_i32_6 = arith.constant 0 : i32
    %23 = arith.cmpi slt, %16, %c0_i32_6 : i32
    %24 = vector.broadcast %23 : i1 to vector<80x1xi1>
    %25 = vector.broadcast %24 : vector<80x1xi1> to vector<80x1xi1>
    %26 = arith.xori %22, %25 : vector<80x1xi1>
    %27 = arith.andi %26, %20 : vector<80x1xi1>
    %28 = vector.broadcast %16 : i32 to vector<80x1xi32>
    %29 = arith.addi %18, %28 : vector<80x1xi32>
    %30 = arith.select %27, %29, %18 : vector<80x1xi1>, vector<80x1xi32>
    %c8_i32 = arith.constant 8 : i32
    %31 = vector.broadcast %c8_i32 : i32 to vector<80x1xi32>
    %32 = arith.cmpi slt, %30, %31 : vector<80x1xi32>
    %cst_7 = arith.constant 0.000000e+00 : f32
    %33 = vector.shape_cast %32 : vector<80x1xi1> to vector<80x1xi1>
    %34 = vector.broadcast %33 : vector<80x1xi1> to vector<80x64xi1>
    %35 = vector.broadcast %cst_7 : f32 to vector<80x64xf32>
    %36 = arith.select %34, %13, %35 : vector<80x64xi1>, vector<80x64xf32>
    %cst_8 = arith.constant dense<0.000000e+00> : vector<64xf32>
    %37 = vector.multi_reduction <add>, %36, %cst_8 [0] : vector<80x64xf32> to vector<64xf32>
    %38 = vector.shape_cast %37 : vector<64xf32> to vector<1x64xf32>
    %39 = arith.mulf %36, %36 : vector<80x64xf32>
    %cst_9 = arith.constant dense<0.000000e+00> : vector<64xf32>
    %40 = vector.multi_reduction <add>, %39, %cst_9 [0] : vector<80x64xf32> to vector<64xf32>
    %41 = vector.shape_cast %40 : vector<64xf32> to vector<1x64xf32>
    %42 = tpu.concatenate %38, %41 in 0 : vector<1x64xf32>, vector<1x64xf32> -> vector<2x64xf32>
    %c0_10 = arith.constant 0 : index
    %c0_11 = arith.constant 0 : index
    %c0_12 = arith.constant 0 : index
    %43 = vector.load %arg4[%c0_10, %c0_11, %c0_12] : memref<1x2x64xf32, #tpu.memory_space<vmem>>, vector<1x2x64xf32>
    %44 = vector.shape_cast %43 : vector<1x2x64xf32> to vector<2x64xf32>
    %45 = vector.shape_cast %42 : vector<2x64xf32> to vector<1x2x64xf32>
    tpu.vector_store %arg4[%c0_10, %c0_11, %c0_12], %45 {strides = array<i32>} : memref<1x2x64xf32, #tpu.memory_space<vmem>>, vector<1x2x64xf32>,
    %46 = arith.truncf %13 : vector<80x64xf32> to vector<80x64xbf16>
    %c0_13 = arith.constant 0 : index
    %c0_14 = arith.constant 0 : index
    %c0_15 = arith.constant 0 : index
    %47 = vector.load %arg3[%c0_13, %c0_14, %c0_15] : memref<1x80x64xbf16, #tpu.memory_space<vmem>>, vector<1x80x64xbf16>
    %48 = vector.shape_cast %47 : vector<1x80x64xbf16> to vector<80x64xbf16>
    %49 = vector.shape_cast %46 : vector<80x64xbf16> to vector<1x80x64xbf16>
    tpu.vector_store %arg3[%c0_13, %c0_14, %c0_15], %49 {strides = array<i32>} : memref<1x80x64xbf16, #tpu.memory_space<vmem>>, vector<1x80x64xbf16>,
    return
  }
  func.func @transform_0(%arg0: i32) -> (i32, i32, i32) {
    %c0_i32 = arith.constant 0 : i32
    %c0_i32_0 = arith.constant 0 : i32
    %c0_i32_1 = arith.constant 0 : i32
    return %arg0, %c0_i32, %c0_i32_0 : i32, i32, i32
  }
  func.func @transform_1(%arg0: i32) -> (i32, i32) {
    %c0_i32 = arith.constant 0 : i32
    %c0_i32_0 = arith.constant 0 : i32
    %c0_i32_1 = arith.constant 0 : i32
    return %c0_i32, %c0_i32_0 : i32, i32
  }
  func.func @transform_2(%arg0: i32) -> (i32, i32, i32) {
    %c0_i32 = arith.constant 0 : i32
    %c0_i32_0 = arith.constant 0 : i32
    %c0_i32_1 = arith.constant 0 : i32
    return %arg0, %c0_i32, %c0_i32_0 : i32, i32, i32
  }
  func.func @transform_3(%arg0: i32) -> (i32, i32, i32) {
    %c0_i32 = arith.constant 0 : i32
    %c0_i32_0 = arith.constant 0 : i32
    %c0_i32_1 = arith.constant 0 : i32
    return %arg0, %c0_i32, %c0_i32_0 : i32, i32, i32
  }
}

module attributes {stable_mosaic.version = 11 : i64} {
  func.func @_convt_kernel(%arg0: i32, %arg1: memref<1x342x16xbf16, #tpu.memory_space<vmem>>, %arg2: memref<144x32xbf16, #tpu.memory_space<vmem>>, %arg3: memref<1x288x32xbf16, #tpu.memory_space<vmem>>, %arg4: memref<1x2x32xf32, #tpu.memory_space<vmem>>) attributes {dimension_semantics = [#tpu.dimension_semantics<parallel>], iteration_bounds = array<i64: 2>, scalar_prefetch = 0 : i64, scratch_operands = 0 : i64, tpu.core_type = #tpu.core_type<tc>, window_params = [{transform_indices = @transform_0, window_bounds = array<i64: 1, 342, 16>}, {pipeline_mode = #tpu.pipeline_mode<synchronous>, transform_indices = @transform_1, window_bounds = array<i64: 144, 32>}, {transform_indices = @transform_2, window_bounds = array<i64: 1, 288, 32>}, {transform_indices = @transform_3, window_bounds = array<i64: 1, 2, 32>}]} {
    %c0 = arith.constant 0 : index
    %c0_0 = arith.constant 0 : index
    %c0_1 = arith.constant 0 : index
    %0 = vector.load %arg1[%c0, %c0_0, %c0_1] : memref<1x342x16xbf16, #tpu.memory_space<vmem>>, vector<1x342x16xbf16>
    %1 = vector.shape_cast %0 : vector<1x342x16xbf16> to vector<342x16xbf16>
    %2 = vector.extract_strided_slice %1 {offsets = [0, 0], sizes = [288, 16], strides = [1, 1]} : vector<342x16xbf16> to vector<288x16xbf16>
    %3 = vector.extract_strided_slice %1 {offsets = [1, 0], sizes = [288, 16], strides = [1, 1]} : vector<342x16xbf16> to vector<288x16xbf16>
    %4 = vector.extract_strided_slice %1 {offsets = [2, 0], sizes = [288, 16], strides = [1, 1]} : vector<342x16xbf16> to vector<288x16xbf16>
    %5 = vector.extract_strided_slice %1 {offsets = [18, 0], sizes = [288, 16], strides = [1, 1]} : vector<342x16xbf16> to vector<288x16xbf16>
    %6 = vector.extract_strided_slice %1 {offsets = [19, 0], sizes = [288, 16], strides = [1, 1]} : vector<342x16xbf16> to vector<288x16xbf16>
    %7 = vector.extract_strided_slice %1 {offsets = [20, 0], sizes = [288, 16], strides = [1, 1]} : vector<342x16xbf16> to vector<288x16xbf16>
    %8 = vector.extract_strided_slice %1 {offsets = [36, 0], sizes = [288, 16], strides = [1, 1]} : vector<342x16xbf16> to vector<288x16xbf16>
    %9 = vector.extract_strided_slice %1 {offsets = [37, 0], sizes = [288, 16], strides = [1, 1]} : vector<342x16xbf16> to vector<288x16xbf16>
    %10 = vector.extract_strided_slice %1 {offsets = [38, 0], sizes = [288, 16], strides = [1, 1]} : vector<342x16xbf16> to vector<288x16xbf16>
    %11 = tpu.concatenate %2, %3, %4, %5, %6, %7, %8, %9, %10 in 1 : vector<288x16xbf16>, vector<288x16xbf16>, vector<288x16xbf16>, vector<288x16xbf16>, vector<288x16xbf16>, vector<288x16xbf16>, vector<288x16xbf16>, vector<288x16xbf16>, vector<288x16xbf16> -> vector<288x144xbf16>
    %c0_2 = arith.constant 0 : index
    %c0_3 = arith.constant 0 : index
    %12 = vector.load %arg2[%c0_2, %c0_3] : memref<144x32xbf16, #tpu.memory_space<vmem>>, vector<144x32xbf16>
    %cst = arith.constant dense<0.000000e+00> : vector<288x32xf32>
    %13 = tpu.matmul %11, %12, %cst {dimension_numbers = #tpu.dot_dimension_numbers<[1], [0], [0], [1], [0, 0, 1, 1], [], []>} : vector<288x144xbf16>, vector<144x32xbf16>, vector<288x32xf32> -> vector<288x32xf32>
    %14 = tpu.iota {dimensions = array<i32: 0>} : vector<288x1xi32>
    %c18_i32 = arith.constant 18 : i32
    %c0_i32 = arith.constant 0 : i32
    %15 = arith.cmpi eq, %c18_i32, %c0_i32 : i32
    %c1_i32 = arith.constant 1 : i32
    %16 = arith.select %15, %c1_i32, %c18_i32 : i32
    %17 = vector.broadcast %16 : i32 to vector<288x1xi32>
    %18 = arith.remsi %14, %17 : vector<288x1xi32>
    %c0_i32_4 = arith.constant 0 : i32
    %19 = vector.broadcast %c0_i32_4 : i32 to vector<288x1xi32>
    %20 = arith.cmpi ne, %18, %19 : vector<288x1xi32>
    %c0_i32_5 = arith.constant 0 : i32
    %21 = vector.broadcast %c0_i32_5 : i32 to vector<288x1xi32>
    %22 = arith.cmpi slt, %18, %21 : vector<288x1xi32>
    %c0_i32_6 = arith.constant 0 : i32
    %23 = arith.cmpi slt, %16, %c0_i32_6 : i32
    %24 = vector.broadcast %23 : i1 to vector<288x1xi1>
    %25 = vector.broadcast %24 : vector<288x1xi1> to vector<288x1xi1>
    %26 = arith.xori %22, %25 : vector<288x1xi1>
    %27 = arith.andi %26, %20 : vector<288x1xi1>
    %28 = vector.broadcast %16 : i32 to vector<288x1xi32>
    %29 = arith.addi %18, %28 : vector<288x1xi32>
    %30 = arith.select %27, %29, %18 : vector<288x1xi1>, vector<288x1xi32>
    %c16_i32 = arith.constant 16 : i32
    %31 = vector.broadcast %c16_i32 : i32 to vector<288x1xi32>
    %32 = arith.cmpi slt, %30, %31 : vector<288x1xi32>
    %cst_7 = arith.constant 0.000000e+00 : f32
    %33 = vector.shape_cast %32 : vector<288x1xi1> to vector<288x1xi1>
    %34 = vector.broadcast %33 : vector<288x1xi1> to vector<288x32xi1>
    %35 = vector.broadcast %cst_7 : f32 to vector<288x32xf32>
    %36 = arith.select %34, %13, %35 : vector<288x32xi1>, vector<288x32xf32>
    %cst_8 = arith.constant dense<0.000000e+00> : vector<32xf32>
    %37 = vector.multi_reduction <add>, %36, %cst_8 [0] : vector<288x32xf32> to vector<32xf32>
    %38 = vector.shape_cast %37 : vector<32xf32> to vector<1x32xf32>
    %39 = arith.mulf %36, %36 : vector<288x32xf32>
    %cst_9 = arith.constant dense<0.000000e+00> : vector<32xf32>
    %40 = vector.multi_reduction <add>, %39, %cst_9 [0] : vector<288x32xf32> to vector<32xf32>
    %41 = vector.shape_cast %40 : vector<32xf32> to vector<1x32xf32>
    %42 = tpu.concatenate %38, %41 in 0 : vector<1x32xf32>, vector<1x32xf32> -> vector<2x32xf32>
    %c0_10 = arith.constant 0 : index
    %c0_11 = arith.constant 0 : index
    %c0_12 = arith.constant 0 : index
    %43 = vector.load %arg4[%c0_10, %c0_11, %c0_12] : memref<1x2x32xf32, #tpu.memory_space<vmem>>, vector<1x2x32xf32>
    %44 = vector.shape_cast %43 : vector<1x2x32xf32> to vector<2x32xf32>
    %45 = vector.shape_cast %42 : vector<2x32xf32> to vector<1x2x32xf32>
    tpu.vector_store %arg4[%c0_10, %c0_11, %c0_12], %45 {strides = array<i32>} : memref<1x2x32xf32, #tpu.memory_space<vmem>>, vector<1x2x32xf32>,
    %46 = arith.truncf %13 : vector<288x32xf32> to vector<288x32xbf16>
    %c0_13 = arith.constant 0 : index
    %c0_14 = arith.constant 0 : index
    %c0_15 = arith.constant 0 : index
    %47 = vector.load %arg3[%c0_13, %c0_14, %c0_15] : memref<1x288x32xbf16, #tpu.memory_space<vmem>>, vector<1x288x32xbf16>
    %48 = vector.shape_cast %47 : vector<1x288x32xbf16> to vector<288x32xbf16>
    %49 = vector.shape_cast %46 : vector<288x32xbf16> to vector<1x288x32xbf16>
    tpu.vector_store %arg3[%c0_13, %c0_14, %c0_15], %49 {strides = array<i32>} : memref<1x288x32xbf16, #tpu.memory_space<vmem>>, vector<1x288x32xbf16>,
    return
  }
  func.func @transform_0(%arg0: i32) -> (i32, i32, i32) {
    %c0_i32 = arith.constant 0 : i32
    %c0_i32_0 = arith.constant 0 : i32
    %c0_i32_1 = arith.constant 0 : i32
    return %arg0, %c0_i32, %c0_i32_0 : i32, i32, i32
  }
  func.func @transform_1(%arg0: i32) -> (i32, i32) {
    %c0_i32 = arith.constant 0 : i32
    %c0_i32_0 = arith.constant 0 : i32
    %c0_i32_1 = arith.constant 0 : i32
    return %c0_i32, %c0_i32_0 : i32, i32
  }
  func.func @transform_2(%arg0: i32) -> (i32, i32, i32) {
    %c0_i32 = arith.constant 0 : i32
    %c0_i32_0 = arith.constant 0 : i32
    %c0_i32_1 = arith.constant 0 : i32
    return %arg0, %c0_i32, %c0_i32_0 : i32, i32, i32
  }
  func.func @transform_3(%arg0: i32) -> (i32, i32, i32) {
    %c0_i32 = arith.constant 0 : i32
    %c0_i32_0 = arith.constant 0 : i32
    %c0_i32_1 = arith.constant 0 : i32
    return %arg0, %c0_i32, %c0_i32_0 : i32, i32, i32
  }
}

module attributes {stable_mosaic.version = 11 : i64} {
  func.func @_convt_kernel(%arg0: i32, %arg1: memref<1x1190x8xbf16, #tpu.memory_space<vmem>>, %arg2: memref<72x128xbf16, #tpu.memory_space<vmem>>, %arg3: memref<1x1088x128xf32, #tpu.memory_space<vmem>>) attributes {dimension_semantics = [#tpu.dimension_semantics<parallel>], iteration_bounds = array<i64: 2>, scalar_prefetch = 0 : i64, scratch_operands = 0 : i64, tpu.core_type = #tpu.core_type<tc>, window_params = [{transform_indices = @transform_0, window_bounds = array<i64: 1, 1190, 8>}, {pipeline_mode = #tpu.pipeline_mode<synchronous>, transform_indices = @transform_1, window_bounds = array<i64: 72, 128>}, {transform_indices = @transform_2, window_bounds = array<i64: 1, 1088, 128>}]} {
    %c0 = arith.constant 0 : index
    %c0_0 = arith.constant 0 : index
    %c0_1 = arith.constant 0 : index
    %0 = vector.load %arg1[%c0, %c0_0, %c0_1] : memref<1x1190x8xbf16, #tpu.memory_space<vmem>>, vector<1x1190x8xbf16>
    %1 = vector.shape_cast %0 : vector<1x1190x8xbf16> to vector<1190x8xbf16>
    %2 = vector.extract_strided_slice %1 {offsets = [0, 0], sizes = [1088, 8], strides = [1, 1]} : vector<1190x8xbf16> to vector<1088x8xbf16>
    %3 = vector.extract_strided_slice %1 {offsets = [1, 0], sizes = [1088, 8], strides = [1, 1]} : vector<1190x8xbf16> to vector<1088x8xbf16>
    %4 = vector.extract_strided_slice %1 {offsets = [2, 0], sizes = [1088, 8], strides = [1, 1]} : vector<1190x8xbf16> to vector<1088x8xbf16>
    %5 = vector.extract_strided_slice %1 {offsets = [34, 0], sizes = [1088, 8], strides = [1, 1]} : vector<1190x8xbf16> to vector<1088x8xbf16>
    %6 = vector.extract_strided_slice %1 {offsets = [35, 0], sizes = [1088, 8], strides = [1, 1]} : vector<1190x8xbf16> to vector<1088x8xbf16>
    %7 = vector.extract_strided_slice %1 {offsets = [36, 0], sizes = [1088, 8], strides = [1, 1]} : vector<1190x8xbf16> to vector<1088x8xbf16>
    %8 = vector.extract_strided_slice %1 {offsets = [68, 0], sizes = [1088, 8], strides = [1, 1]} : vector<1190x8xbf16> to vector<1088x8xbf16>
    %9 = vector.extract_strided_slice %1 {offsets = [69, 0], sizes = [1088, 8], strides = [1, 1]} : vector<1190x8xbf16> to vector<1088x8xbf16>
    %10 = vector.extract_strided_slice %1 {offsets = [70, 0], sizes = [1088, 8], strides = [1, 1]} : vector<1190x8xbf16> to vector<1088x8xbf16>
    %11 = tpu.concatenate %2, %3, %4, %5, %6, %7, %8, %9, %10 in 1 : vector<1088x8xbf16>, vector<1088x8xbf16>, vector<1088x8xbf16>, vector<1088x8xbf16>, vector<1088x8xbf16>, vector<1088x8xbf16>, vector<1088x8xbf16>, vector<1088x8xbf16>, vector<1088x8xbf16> -> vector<1088x72xbf16>
    %c0_2 = arith.constant 0 : index
    %c0_3 = arith.constant 0 : index
    %12 = vector.load %arg2[%c0_2, %c0_3] : memref<72x128xbf16, #tpu.memory_space<vmem>>, vector<72x128xbf16>
    %cst = arith.constant dense<0.000000e+00> : vector<1088x128xf32>
    %13 = tpu.matmul %11, %12, %cst {dimension_numbers = #tpu.dot_dimension_numbers<[1], [0], [0], [1], [0, 0, 1, 1], [], []>} : vector<1088x72xbf16>, vector<72x128xbf16>, vector<1088x128xf32> -> vector<1088x128xf32>
    %14 = math.tanh %13 : vector<1088x128xf32>
    %c0_4 = arith.constant 0 : index
    %c0_5 = arith.constant 0 : index
    %c0_6 = arith.constant 0 : index
    %15 = vector.load %arg3[%c0_4, %c0_5, %c0_6] : memref<1x1088x128xf32, #tpu.memory_space<vmem>>, vector<1x1088x128xf32>
    %16 = vector.shape_cast %15 : vector<1x1088x128xf32> to vector<1088x128xf32>
    %17 = vector.shape_cast %14 : vector<1088x128xf32> to vector<1x1088x128xf32>
    tpu.vector_store %arg3[%c0_4, %c0_5, %c0_6], %17 {strides = array<i32>} : memref<1x1088x128xf32, #tpu.memory_space<vmem>>, vector<1x1088x128xf32>,
    return
  }
  func.func @transform_0(%arg0: i32) -> (i32, i32, i32) {
    %c0_i32 = arith.constant 0 : i32
    %c0_i32_0 = arith.constant 0 : i32
    %c0_i32_1 = arith.constant 0 : i32
    return %arg0, %c0_i32, %c0_i32_0 : i32, i32, i32
  }
  func.func @transform_1(%arg0: i32) -> (i32, i32) {
    %c0_i32 = arith.constant 0 : i32
    %c0_i32_0 = arith.constant 0 : i32
    %c0_i32_1 = arith.constant 0 : i32
    return %c0_i32, %c0_i32_0 : i32, i32
  }
  func.func @transform_2(%arg0: i32) -> (i32, i32, i32) {
    %c0_i32 = arith.constant 0 : i32
    %c0_i32_0 = arith.constant 0 : i32
    %c0_i32_1 = arith.constant 0 : i32
    return %arg0, %c0_i32, %c0_i32_0 : i32, i32, i32
  }
}

</mosaic_0001>

<llo_original>
// kernel: squeeze.72
$region0: #{squeeze.72}
  %s0 = inlined_call_operand.vmem [shape: f32[1024], index: 0, kind: input, shape index: {}]
  %s1 = inlined_call_operand.vmem [shape: f32[16,64], index: 1, kind: output, shape index: {}]
  %v2 = vld [vmem:[%s0] sm:$0xff]
  %vm3 = vcmask 523264
  %4 = vst.msk [vmem:[%s1] ss:$2 sm:$0xff] %vm3, %v2
  %v5 = vld [vmem:[%s0] sm:$0xff]
  %6 = vrot.lane.b32.xlu0 %v5, 64
  %v7 = vpop.permute.xlu0 %6
  %vm8 = vcmask 523264
  %s9 = scalar_lea.vmem %s1, 1
  %10 = vst.msk [vmem:[%s9] ss:$2 sm:$0xff] %vm8, %v7

// kernel: generator_forward.5
$region0: #{generator_forward.5}
  #allocation0 [shape = 'u32[]', space=smem, size = 0x4, offset = 0x4, fixed_abs, tag = 'smem constant byte address 0x4 - core index']
  #allocation1 [shape = 'u32[144,128]{1,0:T(1,128)}', space=vmem, size = 0x12000, scoped, tag = 'internal scratch']
  %s0 = inlined_call_operand.vmem [shape: bf16[2,16], index: 0, kind: input, shape index: {}]
  %s1 = inlined_call_operand.vmem [shape: bf16[16,1024], index: 1, kind: input, shape index: {}]
  %s2 = inlined_call_operand.vmem [shape: bf16[2,1024], index: 2, kind: output, shape index: {0}]
  %s3 = inlined_call_operand.vmem [shape: f32[2,1024], index: 3, kind: output, shape index: {1}]
  %4 = xla_tuple %s2, %s3
  %s5 = sld [smem:[#allocation0]]
  $region26: #{generator_forward.5} parent=0
    _
  %s7 = ssub.s32 1, %s5
  %s8 = scalar_select 0, %s7, %s5
  // Predicated region
  $region2: #{generator_forward.5} parent=0 // pred_check
    _
  $region3: #{generator_forward.5} parent=0 // pred_check_branch
    %10 = sbr.rel (0) target = $region5
  $region4: #{generator_forward.5} parent=0 // pred_region
    _
  $region5: #{generator_forward.5} parent=0 // pred_fallthru
    _
  // Predicated region
  $region6: #{generator_forward.5} parent=0 // pred_check
    _
  $region7: #{generator_forward.5} parent=0 // pred_check_branch
    %12 = sbr.rel (0) target = $region9
  $region8: #{generator_forward.5} parent=0 // pred_region
    _
  $region9: #{generator_forward.5} parent=0 // pred_fallthru
    _
  %v14 = vld [vmem:[%s0] sm:$0x1]
  %v15 = vld [vmem:[%s1] sm:$0xff]
  %v16 = vld [vmem:[%s1 + $0x8] sm:$0xff]
  %v17 = vld [vmem:[%s1 + $0x10] sm:$0xff]
  %v18 = vld [vmem:[%s1 + $0x18] sm:$0xff]
  %v19 = vld [vmem:[%s1 + $0x20] sm:$0xff]
  %v20 = vld [vmem:[%s1 + $0x28] sm:$0xff]
  %v21 = vld [vmem:[%s1 + $0x30] sm:$0xff]
  %v22 = vld [vmem:[%s1 + $0x38] sm:$0xff]
  %v31 = vunpack.c.l.b16 %v15
  %v32 = vunpack.c.h.b16 %v15
  %v33 = vunpack.c.l.b16 %v16
  %v34 = vunpack.c.h.b16 %v16
  %v35 = vunpack.c.l.b16 %v17
  %v36 = vunpack.c.h.b16 %v17
  %v37 = vunpack.c.l.b16 %v18
  %v38 = vunpack.c.h.b16 %v18
  %v39 = vunpack.c.l.b16 %v19
  %v40 = vunpack.c.h.b16 %v19
  %v41 = vunpack.c.l.b16 %v20
  %v42 = vunpack.c.h.b16 %v20
  %v43 = vunpack.c.l.b16 %v21
  %v44 = vunpack.c.h.b16 %v21
  %v45 = vunpack.c.l.b16 %v22
  %v46 = vunpack.c.h.b16 %v22
  %v47 = vpack.c.b16 %v39, %v31
  %v48 = vpack.c.b16 %v40, %v32
  %v49 = vpack.c.b16 %v41, %v33
  %v50 = vpack.c.b16 %v42, %v34
  %v51 = vpack.c.b16 %v43, %v35
  %v52 = vpack.c.b16 %v44, %v36
  %v53 = vpack.c.b16 %v45, %v37
  %v54 = vpack.c.b16 %v46, %v38
  %vm63 = vcmask 130048
  %v65 = vsel %vm63, %v14, 0
  %67 = vmatprep.subr.bf16.mxu0 %v48
  %68 = vmatpush1.bf16.msra.mxu0 %v47
  %69 = vmatprep.subr.bf16.mxu0 0
  %70 = vmatpush1.bf16.msra.mxu0 0
  %71 = vmatprep.subr.bf16.mxu0 0
  %72 = vmatpush1.bf16.msra.mxu0 0
  %73 = vmatprep.subr.bf16.mxu0 0
  %74 = vmatpush1.bf16.msra.mxu0 0
  %75 = vmatprep.subr.bf16.mxu0 0
  %76 = vmatpush1.bf16.msra.mxu0 0
  %77 = vmatprep.subr.bf16.mxu0 0
  %78 = vmatpush1.bf16.msra.mxu0 0
  %79 = vmatprep.subr.bf16.mxu0 0
  %80 = vmatpush1.bf16.msra.mxu0 0
  %81 = vmatprep.subr.bf16.mxu0 0
  %82 = vmatpush1.bf16.msra.mxu0 0
  %83 = vmatprep.subr.bf16.mxu0 0
  %84 = vmatpush1.bf16.msra.mxu0 0
  %85 = vmatprep.subr.bf16.mxu0 0
  %86 = vmatpush1.bf16.msra.mxu0 0
  %87 = vmatprep.subr.bf16.mxu0 0
  %88 = vmatpush1.bf16.msra.mxu0 0
  %89 = vmatprep.subr.bf16.mxu0 0
  %90 = vmatpush1.bf16.msra.mxu0 0
  %91 = vmatprep.subr.bf16.mxu0 0
  %92 = vmatpush1.bf16.msra.mxu0 0
  %93 = vmatprep.subr.bf16.mxu0 0
  %94 = vmatpush1.bf16.msra.mxu0 0
  %95 = vmatprep.subr.bf16.mxu0 0
  %96 = vmatpush1.bf16.msra.mxu0 0
  %97 = vmatprep.subr.bf16.mxu0 0
  %98 = vmatpush1.bf16.msra.mxu0 0
  %99 = vmatprep.mubr.bf16.mxu0 0
  %100 = vmatmul.mubr.bf16.gmra.mrb[0].mxu0 %v65
  %v101 = vpop.f32.mrb[0].mxu0
  %v102 = vadd.f32 0.0, %v101
  %v103 = vpop.f32.mrb[0].mxu0
  %v104 = vadd.f32 0.0, %v103
  %v105 = vpop.f32.mrb[0].mxu0
  %v106 = vpop.f32.mrb[0].mxu0
  %107 = vdwg.mxu0
  %108 = vmatprep.subr.bf16.mxu0 %v50
  %109 = vmatpush1.bf16.msra.mxu0 %v49
  %110 = vmatprep.subr.bf16.mxu0 0
  %111 = vmatpush1.bf16.msra.mxu0 0
  %112 = vmatprep.subr.bf16.mxu0 0
  %113 = vmatpush1.bf16.msra.mxu0 0
  %114 = vmatprep.subr.bf16.mxu0 0
  %115 = vmatpush1.bf16.msra.mxu0 0
  %116 = vmatprep.subr.bf16.mxu0 0
  %117 = vmatpush1.bf16.msra.mxu0 0
  %118 = vmatprep.subr.bf16.mxu0 0
  %119 = vmatpush1.bf16.msra.mxu0 0
  %120 = vmatprep.subr.bf16.mxu0 0
  %121 = vmatpush1.bf16.msra.mxu0 0
  %122 = vmatprep.subr.bf16.mxu0 0
  %123 = vmatpush1.bf16.msra.mxu0 0
  %124 = vmatprep.subr.bf16.mxu0 0
  %125 = vmatpush1.bf16.msra.mxu0 0
  %126 = vmatprep.subr.bf16.mxu0 0
  %127 = vmatpush1.bf16.msra.mxu0 0
  %128 = vmatprep.subr.bf16.mxu0 0
  %129 = vmatpush1.bf16.msra.mxu0 0
  %130 = vmatprep.subr.bf16.mxu0 0
  %131 = vmatpush1.bf16.msra.mxu0 0
  %132 = vmatprep.subr.bf16.mxu0 0
  %133 = vmatpush1.bf16.msra.mxu0 0
  %134 = vmatprep.subr.bf16.mxu0 0
  %135 = vmatpush1.bf16.msra.mxu0 0
  %136 = vmatprep.subr.bf16.mxu0 0
  %137 = vmatpush1.bf16.msra.mxu0 0
  %138 = vmatprep.subr.bf16.mxu0 0
  %139 = vmatpush1.bf16.msra.mxu0 0
  %140 = vmatprep.mubr.bf16.mxu0 0
  %141 = vmatmul.mubr.bf16.gmra.mrb[0].mxu0 %v65
  %v142 = vpop.f32.mrb[0].mxu0
  %v143 = vadd.f32 0.0, %v142
  %v144 = vpop.f32.mrb[0].mxu0
  %v145 = vadd.f32 0.0, %v144
  %v146 = vpop.f32.mrb[0].mxu0
  %v147 = vpop.f32.mrb[0].mxu0
  %148 = vdwg.mxu0
  %149 = vmatprep.subr.bf16.mxu0 %v52
  %150 = vmatpush1.bf16.msra.mxu0 %v51
  %151 = vmatprep.subr.bf16.mxu0 0
  %152 = vmatpush1.bf16.msra.mxu0 0
  %153 = vmatprep.subr.bf16.mxu0 0
  %154 = vmatpush1.bf16.msra.mxu0 0
  %155 = vmatprep.subr.bf16.mxu0 0
  %156 = vmatpush1.bf16.msra.mxu0 0
  %157 = vmatprep.subr.bf16.mxu0 0
  %158 = vmatpush1.bf16.msra.mxu0 0
  %159 = vmatprep.subr.bf16.mxu0 0
  %160 = vmatpush1.bf16.msra.mxu0 0
  %161 = vmatprep.subr.bf16.mxu0 0
  %162 = vmatpush1.bf16.msra.mxu0 0
  %163 = vmatprep.subr.bf16.mxu0 0
  %164 = vmatpush1.bf16.msra.mxu0 0
  %165 = vmatprep.subr.bf16.mxu0 0
  %166 = vmatpush1.bf16.msra.mxu0 0
  %167 = vmatprep.subr.bf16.mxu0 0
  %168 = vmatpush1.bf16.msra.mxu0 0
  %169 = vmatprep.subr.bf16.mxu0 0
  %170 = vmatpush1.bf16.msra.mxu0 0
  %171 = vmatprep.subr.bf16.mxu0 0
  %172 = vmatpush1.bf16.msra.mxu0 0
  %173 = vmatprep.subr.bf16.mxu0 0
  %174 = vmatpush1.bf16.msra.mxu0 0
  %175 = vmatprep.subr.bf16.mxu0 0
  %176 = vmatpush1.bf16.msra.mxu0 0
  %177 = vmatprep.subr.bf16.mxu0 0
  %178 = vmatpush1.bf16.msra.mxu0 0
  %179 = vmatprep.subr.bf16.mxu0 0
  %180 = vmatpush1.bf16.msra.mxu0 0
  %181 = vmatprep.mubr.bf16.mxu0 0
  %182 = vmatmul.mubr.bf16.gmra.mrb[0].mxu0 %v65
  %v183 = vpop.f32.mrb[0].mxu0
  %v184 = vadd.f32 0.0, %v183
  %v185 = vpop.f32.mrb[0].mxu0
  %v186 = vadd.f32 0.0, %v185
  %v187 = vpop.f32.mrb[0].mxu0
  %v188 = vpop.f32.mrb[0].mxu0
  %189 = vdwg.mxu0
  %190 = vmatprep.subr.bf16.mxu0 %v54
  %191 = vmatpush1.bf16.msra.mxu0 %v53
  %192 = vmatprep.subr.bf16.mxu0 0
  %193 = vmatpush1.bf16.msra.mxu0 0
  %194 = vmatprep.subr.bf16.mxu0 0
  %195 = vmatpush1.bf16.msra.mxu0 0
  %196 = vmatprep.subr.bf16.mxu0 0
  %197 = vmatpush1.bf16.msra.mxu0 0
  %198 = vmatprep.subr.bf16.mxu0 0
  %199 = vmatpush1.bf16.msra.mxu0 0
  %200 = vmatprep.subr.bf16.mxu0 0
  %201 = vmatpush1.bf16.msra.mxu0 0
  %202 = vmatprep.subr.bf16.mxu0 0
  %203 = vmatpush1.bf16.msra.mxu0 0
  %204 = vmatprep.subr.bf16.mxu0 0
  %205 = vmatpush1.bf16.msra.mxu0 0
  %206 = vmatprep.subr.bf16.mxu0 0
  %207 = vmatpush1.bf16.msra.mxu0 0
  %208 = vmatprep.subr.bf16.mxu0 0
  %209 = vmatpush1.bf16.msra.mxu0 0
  %210 = vmatprep.subr.bf16.mxu0 0
  %211 = vmatpush1.bf16.msra.mxu0 0
  %212 = vmatprep.subr.bf16.mxu0 0
  %213 = vmatpush1.bf16.msra.mxu0 0
  %214 = vmatprep.subr.bf16.mxu0 0
  %215 = vmatpush1.bf16.msra.mxu0 0
  %216 = vmatprep.subr.bf16.mxu0 0
  %217 = vmatpush1.bf16.msra.mxu0 0
  %218 = vmatprep.subr.bf16.mxu0 0
  %219 = vmatpush1.bf16.msra.mxu0 0
  %220 = vmatprep.subr.bf16.mxu0 0
  %221 = vmatpush1.bf16.msra.mxu0 0
  %222 = vmatprep.mubr.bf16.mxu0 0
  %223 = vmatmul.mubr.bf16.gmra.mrb[0].mxu0 %v65
  %v224 = vpop.f32.mrb[0].mxu0
  %v225 = vadd.f32 0.0, %v224
  %v226 = vpop.f32.mrb[0].mxu0
  %v227 = vadd.f32 0.0, %v226
  %v228 = vpop.f32.mrb[0].mxu0
  %v229 = vpop.f32.mrb[0].mxu0
  %230 = vdwg.mxu0
  %vm231 = vcmask 1041408
  %v232 = vsel %vm231, %v102, 0.0
  %v233 = vrot.slane %v232, 4
  %v234 = vadd.f32 %v232, %v233
  %v235 = vrot.slane %v234, 2
  %v236 = vadd.f32 %v234, %v235
  %v237 = vrot.slane %v236, 1
  %v238 = vadd.f32 %v236, %v237
  %v239 = vsel %vm231, %v104, 0.0
  %v240 = vrot.slane %v239, 4
  %v241 = vadd.f32 %v239, %v240
  %v242 = vrot.slane %v241, 2
  %v243 = vadd.f32 %v241, %v242
  %v244 = vrot.slane %v243, 1
  %v245 = vadd.f32 %v243, %v244
  %v246 = vsel %vm231, %v143, 0.0
  %v247 = vrot.slane %v246, 4
  %v248 = vadd.f32 %v246, %v247
  %v249 = vrot.slane %v248, 2
  %v250 = vadd.f32 %v248, %v249
  %v251 = vrot.slane %v250, 1
  %v252 = vadd.f32 %v250, %v251
  %v253 = vsel %vm231, %v145, 0.0
  %v254 = vrot.slane %v253, 4
  %v255 = vadd.f32 %v253, %v254
  %v256 = vrot.slane %v255, 2
  %v257 = vadd.f32 %v255, %v256
  %v258 = vrot.slane %v257, 1
  %v259 = vadd.f32 %v257, %v258
  %v260 = vsel %vm231, %v184, 0.0
  %v261 = vrot.slane %v260, 4
  %v262 = vadd.f32 %v260, %v261
  %v263 = vrot.slane %v262, 2
  %v264 = vadd.f32 %v262, %v263
  %v265 = vrot.slane %v264, 1
  %v266 = vadd.f32 %v264, %v265
  %v267 = vsel %vm231, %v186, 0.0
  %v268 = vrot.slane %v267, 4
  %v269 = vadd.f32 %v267, %v268
  %v270 = vrot.slane %v269, 2
  %v271 = vadd.f32 %v269, %v270
  %v272 = vrot.slane %v271, 1
  %v273 = vadd.f32 %v271, %v272
  %v274 = vsel %vm231, %v225, 0.0
  %v275 = vrot.slane %v274, 4
  %v276 = vadd.f32 %v274, %v275
  %v277 = vrot.slane %v276, 2
  %v278 = vadd.f32 %v276, %v277
  %v279 = vrot.slane %v278, 1
  %v280 = vadd.f32 %v278, %v279
  %v281 = vsel %vm231, %v227, 0.0
  %v282 = vrot.slane %v281, 4
  %v283 = vadd.f32 %v281, %v282
  %v284 = vrot.slane %v283, 2
  %v285 = vadd.f32 %v283, %v284
  %v286 = vrot.slane %v285, 1
  %v287 = vadd.f32 %v285, %v286
  %v288 = vmul.f32 %v102, %v102
  %v289 = vmul.f32 %v104, %v104
  %v290 = vmul.f32 %v143, %v143
  %v291 = vmul.f32 %v145, %v145
  %v292 = vmul.f32 %v184, %v184
  %v293 = vmul.f32 %v186, %v186
  %v294 = vmul.f32 %v225, %v225
  %v295 = vmul.f32 %v227, %v227
  %v296 = vsel %vm231, %v288, 0.0
  %v297 = vrot.slane %v296, 4
  %v298 = vadd.f32 %v296, %v297
  %v299 = vrot.slane %v298, 2
  %v300 = vadd.f32 %v298, %v299
  %v301 = vrot.slane %v300, 1
  %v302 = vadd.f32 %v300, %v301
  %v303 = vsel %vm231, %v289, 0.0
  %v304 = vrot.slane %v303, 4
  %v305 = vadd.f32 %v303, %v304
  %v306 = vrot.slane %v305, 2
  %v307 = vadd.f32 %v305, %v306
  %v308 = vrot.slane %v307, 1
  %v309 = vadd.f32 %v307, %v308
  %v310 = vsel %vm231, %v290, 0.0
  %v311 = vrot.slane %v310, 4
  %v312 = vadd.f32 %v310, %v311
  %v313 = vrot.slane %v312, 2
  %v314 = vadd.f32 %v312, %v313
  %v315 = vrot.slane %v314, 1
  %v316 = vadd.f32 %v314, %v315
  %v317 = vsel %vm231, %v291, 0.0
  %v318 = vrot.slane %v317, 4
  %v319 = vadd.f32 %v317, %v318
  %v320 = vrot.slane %v319, 2
  %v321 = vadd.f32 %v319, %v320
  %v322 = vrot.slane %v321, 1
  %v323 = vadd.f32 %v321, %v322
  %v324 = vsel %vm231, %v292, 0.0
  %v325 = vrot.slane %v324, 4
  %v326 = vadd.f32 %v324, %v325
  %v327 = vrot.slane %v326, 2
  %v328 = vadd.f32 %v326, %v327
  %v329 = vrot.slane %v328, 1
  %v330 = vadd.f32 %v328, %v329
  %v331 = vsel %vm231, %v293, 0.0
  %v332 = vrot.slane %v331, 4
  %v333 = vadd.f32 %v331, %v332
  %v334 = vrot.slane %v333, 2
  %v335 = vadd.f32 %v333, %v334
  %v336 = vrot.slane %v335, 1
  %v337 = vadd.f32 %v335, %v336
  %v338 = vsel %vm231, %v294, 0.0
  %v339 = vrot.slane %v338, 4
  %v340 = vadd.f32 %v338, %v339
  %v341 = vrot.slane %v340, 2
  %v342 = vadd.f32 %v340, %v341
  %v343 = vrot.slane %v342, 1
  %v344 = vadd.f32 %v342, %v343
  %v345 = vsel %vm231, %v295, 0.0
  %v346 = vrot.slane %v345, 4
  %v347 = vadd.f32 %v345, %v346
  %v348 = vrot.slane %v347, 2
  %v349 = vadd.f32 %v347, %v348
  %v350 = vrot.slane %v349, 1
  %v351 = vadd.f32 %v349, %v350
  %vm352 = vcmask 1040384
  %v353 = vsel %vm352, %v238, %v302
  %v354 = vsel %vm352, %v245, %v309
  %v355 = vsel %vm352, %v252, %v316
  %v356 = vsel %vm352, %v259, %v323
  %v357 = vsel %vm352, %v266, %v330
  %v358 = vsel %vm352, %v273, %v337
  %v359 = vsel %vm352, %v280, %v344
  %v360 = vsel %vm352, %v287, %v351
  %v369 = vcombine.low %v353, %v354
  %v370 = vcombine.low %v355, %v356
  %v372 = vunpack.c.l.s4 1983009808
  %v373 = vunpack.c.0.s8 %v372
  %v374 = vlaneseq
  %v375 = vshrl.u32 %v374, 7
  %v376 = vsub.s32 %v373, %v375
  %v377 = vrot.slane %v369, %v376
  %v379 = vunpack.c.l.s4 1983009808
  %v380 = vunpack.c.0.s8 %v379
  %v381 = vlaneseq
  %v382 = vshrl.u32 %v381, 7
  %v383 = vsub.s32 %v380, %v382
  %v384 = vrot.slane %v370, %v383
  %v385 = vcombine.low %v377, %v384
  %v386 = vcombine.low %v357, %v358
  %v387 = vcombine.low %v359, %v360
  %v389 = vunpack.c.l.s4 1983009808
  %v390 = vunpack.c.0.s8 %v389
  %v391 = vlaneseq
  %v392 = vshrl.u32 %v391, 7
  %v393 = vsub.s32 %v390, %v392
  %v394 = vrot.slane %v386, %v393
  %v396 = vunpack.c.l.s4 1983009808
  %v397 = vunpack.c.0.s8 %v396
  %v398 = vlaneseq
  %v399 = vshrl.u32 %v398, 7
  %v400 = vsub.s32 %v397, %v399
  %v401 = vrot.slane %v387, %v400
  %v402 = vcombine.low %v394, %v401
  %405 = vst [vmem:[%s3] sm:$0xff] %v385
  %406 = vst [vmem:[%s3 + $0x8] sm:$0xff] %v402
  %v407 = vpack.c.bf16 %v102, %v102
  %v408 = vpack.c.bf16 %v104, %v104
  %v409 = vpack.c.bf16 %v143, %v143
  %v410 = vpack.c.bf16 %v145, %v145
  %v411 = vpack.c.bf16 %v184, %v184
  %v412 = vpack.c.bf16 %v186, %v186
  %v413 = vpack.c.bf16 %v225, %v225
  %v414 = vpack.c.bf16 %v227, %v227
  %v423 = vcombine.low %v407, %v408
  %v424 = vcombine.low %v409, %v410
  %v425 = vcombine.low %v411, %v412
  %v426 = vcombine.low %v413, %v414
  %v428 = vunpack.c.l.s4 1966171168
  %v429 = vunpack.c.0.s8 %v428
  %v430 = vlaneseq
  %v431 = vshrl.u32 %v430, 7
  %v432 = vsub.s32 %v429, %v431
  %v433 = vrot.slane %v423, %v432
  %v435 = vunpack.c.l.s4 1966171168
  %v436 = vunpack.c.0.s8 %v435
  %v437 = vlaneseq
  %v438 = vshrl.u32 %v437, 7
  %v439 = vsub.s32 %v436, %v438
  %v440 = vrot.slane %v424, %v439
  %v442 = vunpack.c.l.s4 1966171168
  %v443 = vunpack.c.0.s8 %v442
  %v444 = vlaneseq
  %v445 = vshrl.u32 %v444, 7
  %v446 = vsub.s32 %v443, %v445
  %v447 = vrot.slane %v425, %v446
  %v449 = vunpack.c.l.s4 1966171168
  %v450 = vunpack.c.0.s8 %v449
  %v451 = vlaneseq
  %v452 = vshrl.u32 %v451, 7
  %v453 = vsub.s32 %v450, %v452
  %v454 = vrot.slane %v426, %v453
  %v455 = vcombine.low %v433, %v440
  %v456 = vcombine.low %v447, %v454
  %v458 = vunpack.c.l.s4 1966171168
  %v459 = vunpack.c.0.s8 %v458
  %v460 = vlaneseq
  %v461 = vshrl.u32 %v460, 7
  %v462 = vsub.s32 %v459, %v461
  %v463 = vrot.slane %v455, %v462
  %v465 = vunpack.c.l.s4 1966171168
  %v466 = vunpack.c.0.s8 %v465
  %v467 = vlaneseq
  %v468 = vshrl.u32 %v467, 7
  %v469 = vsub.s32 %v466, %v468
  %v470 = vrot.slane %v456, %v469
  %v471 = vcombine.low %v463, %v470
  %473 = vst [vmem:[%s2] sm:$0xff] %v471
  // Predicated region
  $region10: #{generator_forward.5} parent=0 // pred_check
    _
  $region11: #{generator_forward.5} parent=0 // pred_check_branch
    %475 = sbr.rel (0) target = $region13
  $region12: #{generator_forward.5} parent=0 // pred_region
    _
  $region13: #{generator_forward.5} parent=0 // pred_fallthru
    _
  // Predicated region
  $region14: #{generator_forward.5} parent=0 // pred_check
    _
  $region15: #{generator_forward.5} parent=0 // pred_check_branch
    %477 = sbr.rel (0) target = $region17
  $region16: #{generator_forward.5} parent=0 // pred_region
    _
  $region17: #{generator_forward.5} parent=0 // pred_fallthru
    _
  // Predicated region
  $region18: #{generator_forward.5} parent=0 // pred_check
    _
  $region19: #{generator_forward.5} parent=0 // pred_check_branch
    %479 = sbr.rel (0) target = $region21
  $region20: #{generator_forward.5} parent=0 // pred_region
    _
  $region21: #{generator_forward.5} parent=0 // pred_fallthru
    _
  // Predicated region
  $region22: #{generator_forward.5} parent=0 // pred_check
    _
  $region23: #{generator_forward.5} parent=0 // pred_check_branch
    %481 = sbr.rel (0) target = $region25
  $region24: #{generator_forward.5} parent=0 // pred_region
    _
  $region25: #{generator_forward.5} parent=0 // pred_fallthru
    _

// kernel: squeeze.90
$region0: #{squeeze.90}
  %s0 = inlined_call_operand.vmem [shape: f32[128], index: 0, kind: input, shape index: {}]
  %s1 = inlined_call_operand.vmem [shape: f32[4,32], index: 1, kind: output, shape index: {}]
  $region1: #{squeeze.90} parent=0
    #allocation0 [shape = 'u8[4096]{0}', space=vmem, size = 0x1000, scoped, tag = 'scoped mem for output reshape']
    #allocation1 [shape = 'u8[4096]{0}', space=vmem, size = 0x1000, scoped, tag = 'scoped mem for input reshape']
    %s3 = sshllo.u32 0, 1
    %v4 = vld [vmem:[%s0] sm:%s3]
    %5 = vst [vmem:[#allocation1] sm:%s3] %v4
    %v6 = vld [vmem:[#allocation1] sm:$0x1]
    %vm7 = vcmask 261120
    %8 = vst.msk [vmem:[#allocation0] sm:$0x1] %vm7, %v6
    %v9 = vld [vmem:[#allocation1] sm:$0x1]
    %10 = vrot.lane.b32.xlu0 %v9, 96
    %v11 = vpop.permute.xlu0 %10
    %vm12 = vcmask 261120
    %s13 = scalar_lea.vmem [#allocation0], 1
    %14 = vst.msk [vmem:[%s13] sm:$0x1] %vm12, %v11
    %v15 = vld [vmem:[#allocation1] sm:$0x1]
    %16 = vrot.lane.b32.xlu0 %v15, 64
    %v17 = vpop.permute.xlu0 %16
    %vm18 = vcmask 261120
    %s19 = scalar_lea.vmem [#allocation0], 2
    %20 = vst.msk [vmem:[%s19] sm:$0x1] %vm18, %v17
    %v21 = vld [vmem:[#allocation1] sm:$0x1]
    %22 = vrot.lane.b32.xlu0 %v21, 32
    %v23 = vpop.permute.xlu0 %22
    %vm24 = vcmask 261120
    %s25 = scalar_lea.vmem [#allocation0], 3
    %26 = vst.msk [vmem:[%s25] sm:$0x1] %vm24, %v23
    %s28 = sshllo.u32 0, 4
    %v30 = vld [vmem:[#allocation0] sm:%s28]
    %s31 = sshllo.u32 0, 4
    %32 = vst [vmem:[%s1] sm:%s31] %v30

// kernel: generator_forward.6
$region0: #{generator_forward.6}
  #allocation0 [shape = 'u32[]', space=smem, size = 0x4, offset = 0x4, fixed_abs, tag = 'smem constant byte address 0x4 - core index']
  #allocation1 [shape = 'u32[144,128]{1,0:T(1,128)}', space=vmem, size = 0x12000, scoped, tag = 'internal scratch']
  %s0 = inlined_call_operand.vmem [shape: bf16[2,42,64], index: 0, kind: input, shape index: {}]
  %s1 = inlined_call_operand.vmem [shape: bf16[576,128], index: 1, kind: input, shape index: {}]
  %s2 = inlined_call_operand.vmem [shape: bf16[2,24,128], index: 2, kind: output, shape index: {0}]
  %s3 = inlined_call_operand.vmem [shape: f32[2,2,128], index: 3, kind: output, shape index: {1}]
  %4 = xla_tuple %s2, %s3
  %s5 = sld [smem:[#allocation0]]
  $region49: #{generator_forward.6} parent=0
    _
  %s7 = ssub.s32 1, %s5
  %s8 = scalar_select 0, %s7, %s5
  loop: start=0, step=1, limit=4
  $region2: #{generator_forward.6} parent=0 // loop_pre_header
    _
  $region3: #{generator_forward.6} parent=0 // loop_header
    %s10 = sphi 0, %s14
    %p11 = scmp.ge.s32.totalorder %s10, 4
    %s20 = sphi 0, %s22
    %s23 = sphi 0, %s20
    %s24 = sphi 0, %s23
    %s40 = sphi 0, %s24
    %s44 = sphi 0, %s44
    %s46 = sphi 0, %s44
    %s47 = sphi 0, %s46
    %s61 = sphi 0, %s47
    %s67 = sphi 0, %s69
    %s70 = sphi 0, %s67
    %s71 = sphi 0, %s70
    %s87 = sphi 0, %s71
    %s93 = sphi 0, %s95
    %s96 = sphi 0, %s93
    %s97 = sphi 0, %s96
    %s113 = sphi 0, %s97
  $region4: #{generator_forward.6} parent=0 // loop_header_branch
    %13 = sbr.rel (%p11) target = $region8
  $region5: #{generator_forward.6} parent=0 // loop_body
    %s15 = ssub.s32 %s10, 1
    %s16 = ssub.s32 %s10, 2
    %s17 = sadd.s32 %s10, 1
    %s18 = ssub.s32 %s10, %s17
    %p19 = scmp.eq.s32.totalorder %s18, 0
    %s21 = sadd.s32 %s20, 1
    %s22 = scalar_select %p19, %s20, %s21
    %p25 = pneg %p19
    %p26 = scmp.eq.s32.totalorder %s10, 1
    %p27 = por %p25, %p26
    %p28 = scmp.ne.s32.totalorder %s20, %s23
    %p29 = scmp.eq.s32.totalorder %s10, 0
    %p30 = por %p28, %p29
    %p31 = scmp.ne.s32.totalorder %s20, %s23
    %p32 = scmp.eq.s32.totalorder %s15, 1
    %p33 = por %p31, %p32
    %p34 = scmp.ne.s32.totalorder %s23, %s24
    %p35 = scmp.eq.s32.totalorder %s15, 0
    %p36 = por %p34, %p35
    %p37 = scmp.ne.s32.totalorder %s23, %s24
    %p38 = scmp.eq.s32.totalorder %s16, 1
    %p39 = por %p37, %p38
    %p41 = scmp.ne.s32.totalorder %s24, %s40
    %p42 = scmp.eq.s32.totalorder %s16, 0
    %p43 = por %p41, %p42
    %s45 = sadd.s32 %s44, 1
    %p48 = scmp.eq.s32.totalorder %s10, 1
    %p49 = scmp.ne.s32.totalorder %s44, %s46
    %p50 = scmp.eq.s32.totalorder %s10, 0
    %p51 = por %p49, %p50
    %p52 = scmp.ne.s32.totalorder %s44, %s46
    %p53 = scmp.eq.s32.totalorder %s15, 1
    %p54 = por %p52, %p53
    %p55 = scmp.ne.s32.totalorder %s46, %s47
    %p56 = scmp.eq.s32.totalorder %s15, 0
    %p57 = por %p55, %p56
    %p58 = scmp.ne.s32.totalorder %s46, %s47
    %p59 = scmp.eq.s32.totalorder %s16, 1
    %p60 = por %p58, %p59
    %p62 = scmp.ne.s32.totalorder %s47, %s61
    %p63 = scmp.eq.s32.totalorder %s16, 0
    %p64 = por %p62, %p63
    %s65 = ssub.s32 %s10, %s17
    %p66 = scmp.eq.s32.totalorder %s65, 0
    %s68 = sadd.s32 %s67, 1
    %s69 = scalar_select %p66, %s67, %s68
    %p72 = pneg %p66
    %p73 = scmp.eq.s32.totalorder %s10, 1
    %p74 = por %p72, %p73
    %p75 = scmp.ne.s32.totalorder %s67, %s70
    %p76 = scmp.eq.s32.totalorder %s10, 0
    %p77 = por %p75, %p76
    %p78 = scmp.ne.s32.totalorder %s67, %s70
    %p79 = scmp.eq.s32.totalorder %s15, 1
    %p80 = por %p78, %p79
    %p81 = scmp.ne.s32.totalorder %s70, %s71
    %p82 = scmp.eq.s32.totalorder %s15, 0
    %p83 = por %p81, %p82
    %p84 = scmp.ne.s32.totalorder %s70, %s71
    %p85 = scmp.eq.s32.totalorder %s16, 1
    %p86 = por %p84, %p85
    %p88 = scmp.ne.s32.totalorder %s71, %s87
    %p89 = scmp.eq.s32.totalorder %s16, 0
    %p90 = por %p88, %p89
    %s91 = ssub.s32 %s10, %s17
    %p92 = scmp.eq.s32.totalorder %s91, 0
    %s94 = sadd.s32 %s93, 1
    %s95 = scalar_select %p92, %s93, %s94
    %p98 = pneg %p92
    %p99 = scmp.eq.s32.totalorder %s10, 1
    %p100 = por %p98, %p99
    %p101 = scmp.ne.s32.totalorder %s93, %s96
    %p102 = scmp.eq.s32.totalorder %s10, 0
    %p103 = por %p101, %p102
    %p104 = scmp.ne.s32.totalorder %s93, %s96
    %p105 = scmp.eq.s32.totalorder %s15, 1
    %p106 = por %p104, %p105
    %p107 = scmp.ne.s32.totalorder %s96, %s97
    %p108 = scmp.eq.s32.totalorder %s15, 0
    %p109 = por %p107, %p108
    %p110 = scmp.ne.s32.totalorder %s96, %s97
    %p111 = scmp.eq.s32.totalorder %s16, 1
    %p112 = por %p110, %p111
    %p114 = scmp.ne.s32.totalorder %s97, %s113
    %p115 = scmp.eq.s32.totalorder %s16, 0
    %p116 = por %p114, %p115
    %p117 = scmp.le.s32.totalorder 1, %s10
    %p118 = scmp.lt.s32.totalorder %s10, 3
    %p119 = pnand %p117, %p118
    %p120 = pneg %p119
    // Predicated region
    $region9: #{generator_forward.6} parent=5 // pred_check
      _
    $region10: #{generator_forward.6} parent=5 // pred_check_branch
      %122 = sbr.rel (%p119) target = $region12
    $region11: #{generator_forward.6} parent=5 // pred_region
      %s123 = ssub.s32 %s10, 1
      // Predicated region
      $region13: #{generator_forward.6} parent=11 // pred_check
        %p124 = pneg %p57
      $region14: #{generator_forward.6} parent=11 // pred_check_branch
        %126 = sbr.rel (%p124) target = $region16
      $region15: #{generator_forward.6} parent=11 // pred_region
        _
      $region16: #{generator_forward.6} parent=11 // pred_fallthru
        _
    $region12: #{generator_forward.6} parent=5 // pred_fallthru
      _
    %p127 = scmp.lt.s32.totalorder %s10, 2
    // Predicated region
    $region17: #{generator_forward.6} parent=5 // pred_check
      %p128 = pneg %p127
    $region18: #{generator_forward.6} parent=5 // pred_check_branch
      %130 = sbr.rel (%p128) target = $region20
    $region19: #{generator_forward.6} parent=5 // pred_region
      // Predicated region
      $region21: #{generator_forward.6} parent=19 // pred_check
        %p131 = pneg %p30
      $region22: #{generator_forward.6} parent=19 // pred_check_branch
        %133 = sbr.rel (%p131) target = $region24
      $region23: #{generator_forward.6} parent=19 // pred_region
        %p134 = scmp.lt.s32.totalorder %s10, 1
        %s135 = scalar_select %p134, %s10, 1
        %s136 = smul.addr %s135, 6
        %s137 = smul.addr %s136, 4
        %s138 = scalar_lea.vmem %s0, %s137
      $region24: #{generator_forward.6} parent=19 // pred_fallthru
        _
    $region20: #{generator_forward.6} parent=5 // pred_fallthru
      _
    %p139 = scmp.le.s32.totalorder 1, %s10
    %p140 = scmp.lt.s32.totalorder %s10, 3
    %p141 = pnand %p139, %p140
    %p142 = pneg %p141
    // Predicated region
    $region25: #{generator_forward.6} parent=5 // pred_check
      _
    $region26: #{generator_forward.6} parent=5 // pred_check_branch
      %144 = sbr.rel (%p141) target = $region28
    $region27: #{generator_forward.6} parent=5 // pred_region
      %s145 = ssub.s32 %s10, 1
      %p146 = scmp.lt.s32.totalorder %s15, 1
      %s147 = scalar_select %p146, %s15, 1
      %s148 = smul.addr %s147, 6
      %s149 = smul.addr %s148, 4
      %s150 = scalar_lea.vmem %s0, %s149
      %p151 = pneg %p36
      %p152 = pneg %p33
      %p153 = pneg %p57
      %p154 = pneg %p54
      %p155 = pneg %p83
      %p156 = pneg %p80
      %p157 = scmp.lt.s32.totalorder %s15, 1
      %s158 = scalar_select %p157, %s15, 1
      %s159 = smul.addr %s158, 3
      %s160 = smul.addr %s159, 4
      %s161 = scalar_lea.vmem %s2, %s160
      %p162 = pneg %p109
      %p163 = pneg %p106
      %p164 = scmp.lt.s32.totalorder %s15, 1
      %s165 = scalar_select %p164, %s15, 1
      %s166 = smul.addr %s165, 2
      %s167 = scalar_lea.vmem %s3, %s166
      %p168 = scmp.lt.s32.totalorder %s15, 1
      %s169 = scalar_select %p168, %s15, 1
      %s170 = smul.addr %s169, 6
      %s171 = smul.addr %s170, 4
      %s172 = scalar_lea.vmem %s0, %s171
      %p173 = scmp.lt.s32.totalorder %s15, 1
      %s174 = scalar_select %p173, %s15, 1
      %s175 = smul.addr %s174, 3
      %s176 = smul.addr %s175, 4
      %s177 = scalar_lea.vmem %s2, %s176
      %p178 = scmp.lt.s32.totalorder %s15, 1
      %s179 = scalar_select %p178, %s15, 1
      %s180 = smul.addr %s179, 2
      %s181 = scalar_lea.vmem %s3, %s180
      %v183 = vld [vmem:[%s172] sm:$0xf]
      %v184 = vld [vmem:[%s172 + $0x4] sm:$0xf]
      %v185 = vld [vmem:[%s172 + $0x8] sm:$0xf]
      %v186 = vld [vmem:[%s172 + $0xc] sm:$0xf]
      %v187 = vld [vmem:[%s172 + $0x10] sm:$0xf]
      %v191 = vunpack.c.l.b16 %v183
      %v192 = vunpack.c.l.b16 %v184
      %v193 = vunpack.c.l.b16 %v185
      %v194 = vpack.c.b16 %v192, %v191
      %v195 = vpack.c.b16 %v193, %v193
      %v197 = vunpack.c.l.b16 %v186
      %v198 = vpack.c.b16 %v197, %v193
      %vm199 = vsmask.f32 7424
      %v201 = vshrl.u32 %v194, 16
      %v203 = vshll.u32 %v194, 16
      %v205 = vrot.slane %v203, 1
      %v206 = vor.u32 %v201, %v205
      %v208 = vshll.u32 %v198, 16
      %v210 = vrot.slane %v208, 1
      %v211 = vsel %vm199, %v206, %v210
      %v212 = vshrl.u32 %v198, 16
      %v214 = vor.u32 %v212, %v210
      %215 = vrot.lane.b32.xlu0 %v211, 64
      %v216 = vpop.permute.xlu0 %215
      %217 = vrot.lane.b32.xlu0 %v214, 64
      %v218 = vpop.permute.xlu0 %217
      %vm219 = vcmask 1046528
      %v220 = vrot.slane %v194, 1
      %v221 = vrot.slane %v198, 1
      %v222 = vsel %vm219, %v220, %v221
      %vm223 = vcmask 1044480
      %v224 = vrot.slane %v194, 3
      %v225 = vrot.slane %v198, 3
      %v226 = vsel %vm223, %v224, %v225
      %227 = vrot.lane.b32.xlu0 %v226, 64
      %v228 = vpop.permute.xlu0 %227
      %229 = vrot.lane.b32.xlu0 %v225, 64
      %v230 = vpop.permute.xlu0 %229
      %vm231 = vsmask.f32 4352
      %v232 = vrot.slane %v201, 3
      %v233 = vrot.slane %v203, 4
      %v234 = vor.u32 %v232, %v233
      %v235 = vrot.slane %v212, 3
      %v236 = vrot.slane %v208, 4
      %v237 = vor.u32 %v235, %v236
      %v238 = vsel %vm231, %v234, %v237
      %v239 = vpack.c.b16 %v193, %v192
      %v240 = vpack.c.b16 %v197, %v197
      %241 = vrot.lane.b32.xlu0 %v239, 64
      %v242 = vpop.permute.xlu0 %241
      %243 = vrot.lane.b32.xlu0 %v240, 64
      %v244 = vpop.permute.xlu0 %243
      %v246 = vunpack.c.l.b16 %v187
      %v247 = vpack.c.b16 %v246, %v197
      %vm248 = vcmask 1045504
      %v249 = vrot.slane %v239, 2
      %v250 = vrot.slane %v247, 2
      %v251 = vsel %vm248, %v249, %v250
      %vm252 = vsmask.f32 5376
      %v254 = vshrl.u32 %v239, 16
      %v256 = vrot.slane %v254, 2
      %v257 = vshll.u32 %v239, 16
      %v259 = vrot.slane %v257, 3
      %v260 = vor.u32 %v256, %v259
      %v262 = vshrl.u32 %v247, 16
      %v264 = vrot.slane %v262, 2
      %v265 = vshll.u32 %v247, 16
      %v267 = vrot.slane %v265, 3
      %v268 = vor.u32 %v264, %v267
      %v269 = vsel %vm252, %v260, %v268
      %270 = vrot.lane.b32.xlu0 %v269, 64
      %v271 = vpop.permute.xlu0 %270
      %272 = vrot.lane.b32.xlu0 %v268, 64
      %v273 = vpop.permute.xlu0 %272
      %v274 = vrot.slane %v239, 3
      %v275 = vrot.slane %v247, 3
      %v276 = vsel %vm223, %v274, %v275
      %vm277 = vcmask 523264
      %v279 = vsel %vm277, %v194, %v216
      %v283 = vsel %vm277, %v195, %v218
      %v287 = vsel %vm277, %v222, %v228
      %v291 = vsel %vm277, %v221, %v230
      %v295 = vsel %vm277, %v238, %v242
      %v299 = vsel %vm277, %v237, %v244
      %v303 = vsel %vm277, %v251, %v271
      %v307 = vsel %vm277, %v250, %v273
      %v309 = vld [vmem:[%s1] sm:$0xf]
      %v310 = vld [vmem:[%s1 + $0x4] sm:$0xf]
      %v311 = vld [vmem:[%s1 + $0x8] sm:$0xf]
      %v312 = vld [vmem:[%s1 + $0xc] sm:$0xf]
      %v313 = vld [vmem:[%s1 + $0x10] sm:$0xf]
      %v314 = vld [vmem:[%s1 + $0x14] sm:$0xf]
      %v315 = vld [vmem:[%s1 + $0x18] sm:$0xf]
      %v316 = vld [vmem:[%s1 + $0x1c] sm:$0xf]
      %v317 = vld [vmem:[%s1 + $0x20] sm:$0xf]
      %v318 = vld [vmem:[%s1 + $0x24] sm:$0xf]
      %v319 = vld [vmem:[%s1 + $0x28] sm:$0xf]
      %v320 = vld [vmem:[%s1 + $0x2c] sm:$0xf]
      %v321 = vld [vmem:[%s1 + $0x30] sm:$0xf]
      %v322 = vld [vmem:[%s1 + $0x34] sm:$0xf]
      %v323 = vld [vmem:[%s1 + $0x38] sm:$0xf]
      %v324 = vld [vmem:[%s1 + $0x3c] sm:$0xf]
      %v325 = vld [vmem:[%s1 + $0x40] sm:$0xf]
      %v326 = vld [vmem:[%s1 + $0x44] sm:$0xf]
      %v327 = vld [vmem:[%s1 + $0x48] sm:$0xf]
      %v328 = vld [vmem:[%s1 + $0x4c] sm:$0xf]
      %v329 = vld [vmem:[%s1 + $0x50] sm:$0xf]
      %v330 = vld [vmem:[%s1 + $0x54] sm:$0xf]
      %v331 = vld [vmem:[%s1 + $0x58] sm:$0xf]
      %v332 = vld [vmem:[%s1 + $0x5c] sm:$0xf]
      %v333 = vld [vmem:[%s1 + $0x60] sm:$0xf]
      %v334 = vld [vmem:[%s1 + $0x64] sm:$0xf]
      %v335 = vld [vmem:[%s1 + $0x68] sm:$0xf]
      %v336 = vld [vmem:[%s1 + $0x6c] sm:$0xf]
      %v337 = vld [vmem:[%s1 + $0x70] sm:$0xf]
      %v338 = vld [vmem:[%s1 + $0x74] sm:$0xf]
      %v339 = vld [vmem:[%s1 + $0x78] sm:$0xf]
      %v340 = vld [vmem:[%s1 + $0x7c] sm:$0xf]
      %v341 = vld [vmem:[%s1 + $0x80] sm:$0xf]
      %v342 = vld [vmem:[%s1 + $0x84] sm:$0xf]
      %v343 = vld [vmem:[%s1 + $0x88] sm:$0xf]
      %v344 = vld [vmem:[%s1 + $0x8c] sm:$0xf]
      %v345 = vld [vmem:[%s1 + $0x90] sm:$0xf]
      %v346 = vld [vmem:[%s1 + $0x94] sm:$0xf]
      %v347 = vld [vmem:[%s1 + $0x98] sm:$0xf]
      %v348 = vld [vmem:[%s1 + $0x9c] sm:$0xf]
      %v349 = vld [vmem:[%s1 + $0xa0] sm:$0xf]
      %v350 = vld [vmem:[%s1 + $0xa4] sm:$0xf]
      %v351 = vld [vmem:[%s1 + $0xa8] sm:$0xf]
      %v352 = vld [vmem:[%s1 + $0xac] sm:$0xf]
      %v353 = vld [vmem:[%s1 + $0xb0] sm:$0xf]
      %v354 = vld [vmem:[%s1 + $0xb4] sm:$0xf]
      %v355 = vld [vmem:[%s1 + $0xb8] sm:$0xf]
      %v356 = vld [vmem:[%s1 + $0xbc] sm:$0xf]
      %v357 = vld [vmem:[%s1 + $0xc0] sm:$0xf]
      %v358 = vld [vmem:[%s1 + $0xc4] sm:$0xf]
      %v359 = vld [vmem:[%s1 + $0xc8] sm:$0xf]
      %v360 = vld [vmem:[%s1 + $0xcc] sm:$0xf]
      %v361 = vld [vmem:[%s1 + $0xd0] sm:$0xf]
      %v362 = vld [vmem:[%s1 + $0xd4] sm:$0xf]
      %v363 = vld [vmem:[%s1 + $0xd8] sm:$0xf]
      %v364 = vld [vmem:[%s1 + $0xdc] sm:$0xf]
      %v365 = vld [vmem:[%s1 + $0xe0] sm:$0xf]
      %v366 = vld [vmem:[%s1 + $0xe4] sm:$0xf]
      %v367 = vld [vmem:[%s1 + $0xe8] sm:$0xf]
      %v368 = vld [vmem:[%s1 + $0xec] sm:$0xf]
      %v369 = vld [vmem:[%s1 + $0xf0] sm:$0xf]
      %v370 = vld [vmem:[%s1 + $0xf4] sm:$0xf]
      %v371 = vld [vmem:[%s1 + $0xf8] sm:$0xf]
      %v372 = vld [vmem:[%s1 + $0xfc] sm:$0xf]
      %v373 = vld [vmem:[%s1 + $0x100] sm:$0xf]
      %v374 = vld [vmem:[%s1 + $0x104] sm:$0xf]
      %v375 = vld [vmem:[%s1 + $0x108] sm:$0xf]
      %v376 = vld [vmem:[%s1 + $0x10c] sm:$0xf]
      %v377 = vld [vmem:[%s1 + $0x110] sm:$0xf]
      %v378 = vld [vmem:[%s1 + $0x114] sm:$0xf]
      %v379 = vld [vmem:[%s1 + $0x118] sm:$0xf]
      %v380 = vld [vmem:[%s1 + $0x11c] sm:$0xf]
      %v453 = vunpack.c.l.b16 %v309
      %v454 = vunpack.c.l.b16 %v310
      %v455 = vunpack.c.l.b16 %v311
      %v456 = vunpack.c.l.b16 %v312
      %v457 = vunpack.c.l.b16 %v313
      %v458 = vunpack.c.l.b16 %v314
      %v459 = vunpack.c.l.b16 %v315
      %v460 = vunpack.c.l.b16 %v316
      %v461 = vunpack.c.l.b16 %v317
      %v462 = vunpack.c.l.b16 %v318
      %v463 = vunpack.c.l.b16 %v319
      %v464 = vunpack.c.l.b16 %v320
      %v465 = vunpack.c.l.b16 %v321
      %v466 = vunpack.c.l.b16 %v322
      %v467 = vunpack.c.l.b16 %v323
      %v468 = vunpack.c.l.b16 %v324
      %v469 = vunpack.c.l.b16 %v325
      %v470 = vunpack.c.l.b16 %v326
      %v471 = vunpack.c.l.b16 %v327
      %v472 = vunpack.c.l.b16 %v328
      %v473 = vunpack.c.l.b16 %v329
      %v474 = vunpack.c.l.b16 %v330
      %v475 = vunpack.c.l.b16 %v331
      %v476 = vunpack.c.l.b16 %v332
      %v477 = vunpack.c.l.b16 %v333
      %v478 = vunpack.c.l.b16 %v334
      %v479 = vunpack.c.l.b16 %v335
      %v480 = vunpack.c.l.b16 %v336
      %v481 = vunpack.c.l.b16 %v337
      %v482 = vunpack.c.l.b16 %v338
      %v483 = vunpack.c.l.b16 %v339
      %v484 = vunpack.c.l.b16 %v340
      %v485 = vunpack.c.l.b16 %v341
      %v486 = vunpack.c.l.b16 %v342
      %v487 = vunpack.c.l.b16 %v343
      %v488 = vunpack.c.l.b16 %v344
      %v489 = vunpack.c.l.b16 %v345
      %v490 = vunpack.c.l.b16 %v346
      %v491 = vunpack.c.l.b16 %v347
      %v492 = vunpack.c.l.b16 %v348
      %v493 = vunpack.c.l.b16 %v349
      %v494 = vunpack.c.l.b16 %v350
      %v495 = vunpack.c.l.b16 %v351
      %v496 = vunpack.c.l.b16 %v352
      %v497 = vunpack.c.l.b16 %v353
      %v498 = vunpack.c.l.b16 %v354
      %v499 = vunpack.c.l.b16 %v355
      %v500 = vunpack.c.l.b16 %v356
      %v501 = vunpack.c.l.b16 %v357
      %v502 = vunpack.c.l.b16 %v358
      %v503 = vunpack.c.l.b16 %v359
      %v504 = vunpack.c.l.b16 %v360
      %v505 = vunpack.c.l.b16 %v361
      %v506 = vunpack.c.l.b16 %v362
      %v507 = vunpack.c.l.b16 %v363
      %v508 = vunpack.c.l.b16 %v364
      %v509 = vunpack.c.l.b16 %v365
      %v510 = vunpack.c.l.b16 %v366
      %v511 = vunpack.c.l.b16 %v367
      %v512 = vunpack.c.l.b16 %v368
      %v513 = vunpack.c.l.b16 %v369
      %v514 = vunpack.c.l.b16 %v370
      %v515 = vunpack.c.l.b16 %v371
      %v516 = vunpack.c.l.b16 %v372
      %v517 = vunpack.c.l.b16 %v373
      %v518 = vunpack.c.l.b16 %v374
      %v519 = vunpack.c.l.b16 %v375
      %v520 = vunpack.c.l.b16 %v376
      %v521 = vunpack.c.l.b16 %v377
      %v522 = vunpack.c.l.b16 %v378
      %v523 = vunpack.c.l.b16 %v379
      %v524 = vunpack.c.l.b16 %v380
      %v525 = vpack.c.b16 %v454, %v453
      %v526 = vpack.c.b16 %v456, %v455
      %v527 = vpack.c.b16 %v458, %v457
      %v528 = vpack.c.b16 %v460, %v459
      %v529 = vpack.c.b16 %v462, %v461
      %v530 = vpack.c.b16 %v464, %v463
      %v531 = vpack.c.b16 %v466, %v465
      %v532 = vpack.c.b16 %v468, %v467
      %v533 = vpack.c.b16 %v470, %v469
      %v534 = vpack.c.b16 %v472, %v471
      %v535 = vpack.c.b16 %v474, %v473
      %v536 = vpack.c.b16 %v476, %v475
      %v537 = vpack.c.b16 %v478, %v477
      %v538 = vpack.c.b16 %v480, %v479
      %v539 = vpack.c.b16 %v482, %v481
      %v540 = vpack.c.b16 %v484, %v483
      %v541 = vpack.c.b16 %v486, %v485
      %v542 = vpack.c.b16 %v488, %v487
      %v543 = vpack.c.b16 %v490, %v489
      %v544 = vpack.c.b16 %v492, %v491
      %v545 = vpack.c.b16 %v494, %v493
      %v546 = vpack.c.b16 %v496, %v495
      %v547 = vpack.c.b16 %v498, %v497
      %v548 = vpack.c.b16 %v500, %v499
      %v549 = vpack.c.b16 %v502, %v501
      %v550 = vpack.c.b16 %v504, %v503
      %v551 = vpack.c.b16 %v506, %v505
      %v552 = vpack.c.b16 %v508, %v507
      %v553 = vpack.c.b16 %v510, %v509
      %v554 = vpack.c.b16 %v512, %v511
      %v555 = vpack.c.b16 %v514, %v513
      %v556 = vpack.c.b16 %v516, %v515
      %v557 = vpack.c.b16 %v518, %v517
      %v558 = vpack.c.b16 %v520, %v519
      %v559 = vpack.c.b16 %v522, %v521
      %v560 = vpack.c.b16 %v524, %v523
      %v598 = vsel %vm277, %v276, 0
      %v601 = vsel %vm277, %v275, 0
      %603 = vmatprep.subr.bf16.mxu0 0
      %604 = vmatpush1.bf16.msra.mxu0 %v525
      %605 = vmatprep.subr.bf16.mxu0 0
      %606 = vmatpush1.bf16.msra.mxu0 %v526
      %607 = vmatprep.subr.bf16.mxu0 0
      %608 = vmatpush1.bf16.msra.mxu0 %v527
      %609 = vmatprep.subr.bf16.mxu0 0
      %610 = vmatpush1.bf16.msra.mxu0 %v528
      %611 = vmatprep.subr.bf16.mxu0 0
      %612 = vmatpush1.bf16.msra.mxu0 %v529
      %613 = vmatprep.subr.bf16.mxu0 0
      %614 = vmatpush1.bf16.msra.mxu0 %v530
      %615 = vmatprep.subr.bf16.mxu0 0
      %616 = vmatpush1.bf16.msra.mxu0 %v531
      %617 = vmatprep.subr.bf16.mxu0 0
      %618 = vmatpush1.bf16.msra.mxu0 %v532
      %619 = vmatprep.subr.bf16.mxu0 0
      %620 = vmatpush1.bf16.msra.mxu0 %v533
      %621 = vmatprep.subr.bf16.mxu0 0
      %622 = vmatpush1.bf16.msra.mxu0 %v534
      %623 = vmatprep.subr.bf16.mxu0 0
      %624 = vmatpush1.bf16.msra.mxu0 %v535
      %625 = vmatprep.subr.bf16.mxu0 0
      %626 = vmatpush1.bf16.msra.mxu0 %v536
      %627 = vmatprep.subr.bf16.mxu0 0
      %628 = vmatpush1.bf16.msra.mxu0 %v537
      %629 = vmatprep.subr.bf16.mxu0 0
      %630 = vmatpush1.bf16.msra.mxu0 %v538
      %631 = vmatprep.subr.bf16.mxu0 0
      %632 = vmatpush1.bf16.msra.mxu0 %v539
      %633 = vmatprep.subr.bf16.mxu0 0
      %634 = vmatpush1.bf16.msra.mxu0 %v540
      %635 = vmatprep.mubr.bf16.mxu0 %v287
      %636 = vmatmul.mubr.bf16.gmra.mrb[0].mxu0 %v279
      %v637 = vpop.f32.mrb[0].mxu0
      %v638 = vadd.f32 0.0, %v637
      %v639 = vpop.f32.mrb[0].mxu0
      %v640 = vpop.f32.mrb[0].mxu0
      %v641 = vadd.f32 0.0, %v640
      %v642 = vpop.f32.mrb[0].mxu0
      %643 = vmatprep.mubr.bf16.mxu0 %v291
      %644 = vmatmul.mubr.bf16.gmra.mrb[0].mxu0 %v283
      %v645 = vpop.f32.mrb[0].mxu0
      %v646 = vadd.f32 0.0, %v645
      %v647 = vpop.f32.mrb[0].mxu0
      %v648 = vpop.f32.mrb[0].mxu0
      %v649 = vpop.f32.mrb[0].mxu0
      %650 = vdwg.mxu0
      %651 = vmatprep.subr.bf16.mxu0 0
      %652 = vmatpush1.bf16.msra.mxu0 %v541
      %653 = vmatprep.subr.bf16.mxu0 0
      %654 = vmatpush1.bf16.msra.mxu0 %v542
      %655 = vmatprep.subr.bf16.mxu0 0
      %656 = vmatpush1.bf16.msra.mxu0 %v543
      %657 = vmatprep.subr.bf16.mxu0 0
      %658 = vmatpush1.bf16.msra.mxu0 %v544
      %659 = vmatprep.subr.bf16.mxu0 0
      %660 = vmatpush1.bf16.msra.mxu0 %v545
      %661 = vmatprep.subr.bf16.mxu0 0
      %662 = vmatpush1.bf16.msra.mxu0 %v546
      %663 = vmatprep.subr.bf16.mxu0 0
      %664 = vmatpush1.bf16.msra.mxu0 %v547
      %665 = vmatprep.subr.bf16.mxu0 0
      %666 = vmatpush1.bf16.msra.mxu0 %v548
      %667 = vmatprep.subr.bf16.mxu0 0
      %668 = vmatpush1.bf16.msra.mxu0 %v549
      %669 = vmatprep.subr.bf16.mxu0 0
      %670 = vmatpush1.bf16.msra.mxu0 %v550
      %671 = vmatprep.subr.bf16.mxu0 0
      %672 = vmatpush1.bf16.msra.mxu0 %v551
      %673 = vmatprep.subr.bf16.mxu0 0
      %674 = vmatpush1.bf16.msra.mxu0 %v552
      %675 = vmatprep.subr.bf16.mxu0 0
      %676 = vmatpush1.bf16.msra.mxu0 %v553
      %677 = vmatprep.subr.bf16.mxu0 0
      %678 = vmatpush1.bf16.msra.mxu0 %v554
      %679 = vmatprep.subr.bf16.mxu0 0
      %680 = vmatpush1.bf16.msra.mxu0 %v555
      %681 = vmatprep.subr.bf16.mxu0 0
      %682 = vmatpush1.bf16.msra.mxu0 %v556
      %683 = vmatprep.mubr.bf16.mxu0 %v303
      %684 = vmatmul.mubr.bf16.gmra.mrb[0].mxu0 %v295
      %v685 = vpop.f32.mrb[0].mxu0
      %v686 = vadd.f32 %v638, %v685
      %v687 = vpop.f32.mrb[0].mxu0
      %v688 = vpop.f32.mrb[0].mxu0
      %v689 = vadd.f32 %v641, %v688
      %v690 = vpop.f32.mrb[0].mxu0
      %691 = vmatprep.mubr.bf16.mxu0 %v307
      %692 = vmatmul.mubr.bf16.gmra.mrb[0].mxu0 %v299
      %v693 = vpop.f32.mrb[0].mxu0
      %v694 = vadd.f32 %v646, %v693
      %v695 = vpop.f32.mrb[0].mxu0
      %v696 = vpop.f32.mrb[0].mxu0
      %v697 = vpop.f32.mrb[0].mxu0
      %698 = vdwg.mxu0
      %699 = vmatprep.subr.bf16.mxu0 0
      %700 = vmatpush1.bf16.msra.mxu0 %v557
      %701 = vmatprep.subr.bf16.mxu0 0
      %702 = vmatpush1.bf16.msra.mxu0 %v558
      %703 = vmatprep.subr.bf16.mxu0 0
      %704 = vmatpush1.bf16.msra.mxu0 %v559
      %705 = vmatprep.subr.bf16.mxu0 0
      %706 = vmatpush1.bf16.msra.mxu0 %v560
      %707 = vmatprep.subr.bf16.mxu0 0
      %708 = vmatpush1.bf16.msra.mxu0 0
      %709 = vmatprep.subr.bf16.mxu0 0
      %710 = vmatpush1.bf16.msra.mxu0 0
      %711 = vmatprep.subr.bf16.mxu0 0
      %712 = vmatpush1.bf16.msra.mxu0 0
      %713 = vmatprep.subr.bf16.mxu0 0
      %714 = vmatpush1.bf16.msra.mxu0 0
      %715 = vmatprep.subr.bf16.mxu0 0
      %716 = vmatpush1.bf16.msra.mxu0 0
      %717 = vmatprep.subr.bf16.mxu0 0
      %718 = vmatpush1.bf16.msra.mxu0 0
      %719 = vmatprep.subr.bf16.mxu0 0
      %720 = vmatpush1.bf16.msra.mxu0 0
      %721 = vmatprep.subr.bf16.mxu0 0
      %722 = vmatpush1.bf16.msra.mxu0 0
      %723 = vmatprep.subr.bf16.mxu0 0
      %724 = vmatpush1.bf16.msra.mxu0 0
      %725 = vmatprep.subr.bf16.mxu0 0
      %726 = vmatpush1.bf16.msra.mxu0 0
      %727 = vmatprep.subr.bf16.mxu0 0
      %728 = vmatpush1.bf16.msra.mxu0 0
      %729 = vmatprep.subr.bf16.mxu0 0
      %730 = vmatpush1.bf16.msra.mxu0 0
      %731 = vmatprep.mubr.bf16.mxu0 0
      %732 = vmatmul.mubr.bf16.gmra.mrb[0].mxu0 %v598
      %v733 = vpop.f32.mrb[0].mxu0
      %v734 = vadd.f32 %v686, %v733
      %v735 = vpop.f32.mrb[0].mxu0
      %v736 = vpop.f32.mrb[0].mxu0
      %v737 = vadd.f32 %v689, %v736
      %v738 = vpop.f32.mrb[0].mxu0
      %739 = vmatprep.mubr.bf16.mxu0 0
      %740 = vmatmul.mubr.bf16.gmra.mrb[0].mxu0 %v601
      %v741 = vpop.f32.mrb[0].mxu0
      %v742 = vadd.f32 %v694, %v741
      %v743 = vpop.f32.mrb[0].mxu0
      %v744 = vpop.f32.mrb[0].mxu0
      %v745 = vpop.f32.mrb[0].mxu0
      %746 = vdwg.mxu0
      %v747 = vlaneseq
      %v748 = vshrl.u32 %v747, 7
      %v749 = vadd.s32 %v748, 8
      %v750 = vadd.s32 %v748, 16
      %vm751 = vcmp.lt.s32.totalorder %v748, 0
      %v752 = vsub.s32 0, %v748
      %v753 = vsel %vm751, %v752, %v748
      %v754 = vmul.u32.u64.compose %v753, 2863311531
      %v755 = vextract.low.u32 %v754
      %v756 = vextract.high.u32 %v754
      %v757 = vshrl.u32 %v756, 2
      %v758 = vmul.u32 %v757, 6
      %v759 = vsub.s32 %v753, %v758
      %v760 = vsub.s32 0, %v759
      %v761 = vsel %vm751, %v760, %v759
      %vm762 = vcmp.lt.s32.totalorder %v749, 0
      %v763 = vsub.s32 0, %v749
      %v764 = vsel %vm762, %v763, %v749
      %v765 = vmul.u32.u64.compose %v764, 2863311531
      %v766 = vextract.low.u32 %v765
      %v767 = vextract.high.u32 %v765
      %v768 = vshrl.u32 %v767, 2
      %v769 = vmul.u32 %v768, 6
      %v770 = vsub.s32 %v764, %v769
      %v771 = vsub.s32 0, %v770
      %v772 = vsel %vm762, %v771, %v770
      %vm773 = vcmp.lt.s32.totalorder %v750, 0
      %v774 = vsub.s32 0, %v750
      %v775 = vsel %vm773, %v774, %v750
      %v776 = vmul.u32.u64.compose %v775, 2863311531
      %v777 = vextract.low.u32 %v776
      %v778 = vextract.high.u32 %v776
      %v779 = vshrl.u32 %v778, 2
      %v780 = vmul.u32 %v779, 6
      %v781 = vsub.s32 %v775, %v780
      %v782 = vsub.s32 0, %v781
      %v783 = vsel %vm773, %v782, %v781
      %vm784 = vcmp.ne.s32.totalorder %v761, 0
      %vm785 = vcmp.ne.s32.totalorder %v772, 0
      %vm786 = vcmp.ne.s32.totalorder %v783, 0
      %vm787 = vcmp.lt.s32.totalorder %v761, 0
      %vm788 = vcmp.lt.s32.totalorder %v772, 0
      %vm789 = vcmp.lt.s32.totalorder %v783, 0
      %vm790 = vmand %vm787, %vm784
      %vm791 = vmand %vm788, %vm785
      %vm792 = vmand %vm789, %vm786
      %v793 = vadd.s32 %v761, 6
      %v794 = vadd.s32 %v772, 6
      %v795 = vadd.s32 %v783, 6
      %v796 = vsel %vm790, %v793, %v761
      %v797 = vsel %vm791, %v794, %v772
      %v798 = vsel %vm792, %v795, %v783
      %vm799 = vcmp.lt.s32.totalorder %v796, 4
      %vm800 = vcmp.lt.s32.totalorder %v797, 4
      %vm801 = vcmp.lt.s32.totalorder %v798, 4
      %v802 = vsel %vm799, 1, 0
      %v803 = vsel %vm800, 1, 0
      %v804 = vsel %vm801, 1, 0
      %vm805 = vcmp.eq.s32.totalorder %v802, 1
      %vm806 = vcmp.eq.s32.totalorder %v803, 1
      %vm807 = vcmp.eq.s32.totalorder %v804, 1
      %v808 = vsel %vm805, %v734, 0.0
      %v809 = vsel %vm806, %v737, 0.0
      %v810 = vsel %vm807, %v742, 0.0
      %v811 = vadd.f32 %v808, %v809
      %v812 = vadd.f32 %v811, %v810
      %v813 = vrot.slane %v812, 4
      %v814 = vadd.f32 %v812, %v813
      %v815 = vrot.slane %v814, 2
      %v816 = vadd.f32 %v814, %v815
      %v817 = vrot.slane %v816, 1
      %v818 = vadd.f32 %v816, %v817
      %v819 = vmul.f32 %v808, %v808
      %v820 = vmul.f32 %v809, %v809
      %v821 = vmul.f32 %v810, %v810
      %v822 = vadd.f32 %v819, %v820
      %v823 = vadd.f32 %v822, %v821
      %v824 = vrot.slane %v823, 4
      %v825 = vadd.f32 %v823, %v824
      %v826 = vrot.slane %v825, 2
      %v827 = vadd.f32 %v825, %v826
      %v828 = vrot.slane %v827, 1
      %v829 = vadd.f32 %v827, %v828
      %vm830 = vcmask 1040384
      %v831 = vsel %vm830, %v818, %v829
      %832 = vst [vmem:[%s181] sm:$0x3] %v831
      %v833 = vpack.c.bf16 %v737, %v734
      %v834 = vpack.c.bf16 %v742, %v742
      %v837 = vunpack.c.l.b16 %v833
      %v838 = vunpack.c.h.b16 %v833
      %v839 = vunpack.c.l.b16 %v834
      %v840 = vpack.c.b16 %v837, %v837
      %v841 = vpack.c.b16 %v838, %v838
      %v842 = vpack.c.b16 %v839, %v839
      %846 = vst [vmem:[%s177] sm:$0xf] %v840
      %847 = vst [vmem:[%s177 + $0x4] sm:$0xf] %v841
      %848 = vst [vmem:[%s177 + $0x8] sm:$0xf] %v842
      %p849 = scmp.lt.s32.totalorder %s15, 1
      %s850 = scalar_select %p849, %s15, 1
      %s851 = smul.addr %s850, 3
      %s852 = smul.addr %s851, 4
      %s853 = scalar_lea.vmem %s2, %s852
      %p854 = scmp.lt.s32.totalorder %s15, 1
      %s855 = scalar_select %p854, %s15, 1
      %s856 = smul.addr %s855, 2
      %s857 = scalar_lea.vmem %s3, %s856
      // Predicated region
      $region29: #{generator_forward.6} parent=27 // pred_check
        %p858 = pneg %p80
      $region30: #{generator_forward.6} parent=27 // pred_check_branch
        %860 = sbr.rel (%p858) target = $region32
      $region31: #{generator_forward.6} parent=27 // pred_region
        _
      $region32: #{generator_forward.6} parent=27 // pred_fallthru
        _
      // Predicated region
      $region33: #{generator_forward.6} parent=27 // pred_check
        %p861 = pneg %p106
      $region34: #{generator_forward.6} parent=27 // pred_check_branch
        %863 = sbr.rel (%p861) target = $region36
      $region35: #{generator_forward.6} parent=27 // pred_region
        _
      $region36: #{generator_forward.6} parent=27 // pred_fallthru
        _
    $region28: #{generator_forward.6} parent=5 // pred_fallthru
      _
    %p864 = scmp.le.s32.totalorder 2, %s10
    // Predicated region
    $region37: #{generator_forward.6} parent=5 // pred_check
      %p865 = pneg %p864
    $region38: #{generator_forward.6} parent=5 // pred_check_branch
      %867 = sbr.rel (%p865) target = $region40
    $region39: #{generator_forward.6} parent=5 // pred_region
      %s868 = ssub.s32 %s10, 2
      // Predicated region
      $region41: #{generator_forward.6} parent=39 // pred_check
        %p869 = pneg %p86
      $region42: #{generator_forward.6} parent=39 // pred_check_branch
        %871 = sbr.rel (%p869) target = $region44
      $region43: #{generator_forward.6} parent=39 // pred_region
        %p872 = scmp.lt.s32.totalorder %s16, 1
        %s873 = scalar_select %p872, %s16, 1
        %s874 = smul.addr %s873, 3
        %s875 = smul.addr %s874, 4
        %s876 = scalar_lea.vmem %s2, %s875
      $region44: #{generator_forward.6} parent=39 // pred_fallthru
        _
      // Predicated region
      $region45: #{generator_forward.6} parent=39 // pred_check
        %p877 = pneg %p112
      $region46: #{generator_forward.6} parent=39 // pred_check_branch
        %879 = sbr.rel (%p877) target = $region48
      $region47: #{generator_forward.6} parent=39 // pred_region
        %p880 = scmp.lt.s32.totalorder %s16, 1
        %s881 = scalar_select %p880, %s16, 1
        %s882 = smul.addr %s881, 2
        %s883 = scalar_lea.vmem %s3, %s882
      $region48: #{generator_forward.6} parent=39 // pred_fallthru
        _
    $region40: #{generator_forward.6} parent=5 // pred_fallthru
      _
  $region6: #{generator_forward.6} parent=0 // loop_footer
    %s14 = sadd.s32 1, %s10
  $region7: #{generator_forward.6} parent=0 // loop_footer_branch
    %9 = sbr.rel target = $region3
  $region8: #{generator_forward.6} parent=0 // loop_exit
    _

// kernel: squeeze.108
$region0: #{squeeze.108}
  %s0 = inlined_call_operand.vmem [shape: f32[64], index: 0, kind: input, shape index: {}]
  %s1 = inlined_call_operand.vmem [shape: f32[4,16], index: 1, kind: output, shape index: {}]
  $region1: #{squeeze.108} parent=0
    #allocation0 [shape = 'u8[4096]{0}', space=vmem, size = 0x1000, scoped, tag = 'scoped mem for output reshape']
    #allocation1 [shape = 'u8[4096]{0}', space=vmem, size = 0x1000, scoped, tag = 'scoped mem for input reshape']
    %s3 = sshllo.u32 0, 1
    %v4 = vld [vmem:[%s0] sm:%s3]
    %5 = vst [vmem:[#allocation1] sm:%s3] %v4
    %v6 = vld [vmem:[#allocation1] sm:$0x1]
    %vm7 = vcmask 130048
    %8 = vst.msk [vmem:[#allocation0] sm:$0x1] %vm7, %v6
    %v9 = vld [vmem:[#allocation1] sm:$0x1]
    %10 = vrot.lane.b32.xlu0 %v9, 112
    %v11 = vpop.permute.xlu0 %10
    %vm12 = vcmask 130048
    %s13 = scalar_lea.vmem [#allocation0], 1
    %14 = vst.msk [vmem:[%s13] sm:$0x1] %vm12, %v11
    %v15 = vld [vmem:[#allocation1] sm:$0x1]
    %16 = vrot.lane.b32.xlu0 %v15, 96
    %v17 = vpop.permute.xlu0 %16
    %vm18 = vcmask 130048
    %s19 = scalar_lea.vmem [#allocation0], 2
    %20 = vst.msk [vmem:[%s19] sm:$0x1] %vm18, %v17
    %v21 = vld [vmem:[#allocation1] sm:$0x1]
    %22 = vrot.lane.b32.xlu0 %v21, 80
    %v23 = vpop.permute.xlu0 %22
    %vm24 = vcmask 130048
    %s25 = scalar_lea.vmem [#allocation0], 3
    %26 = vst.msk [vmem:[%s25] sm:$0x1] %vm24, %v23
    %s28 = sshllo.u32 0, 4
    %v30 = vld [vmem:[#allocation0] sm:%s28]
    %s31 = sshllo.u32 0, 4
    %32 = vst [vmem:[%s1] sm:%s31] %v30

// kernel: generator_forward.7
$region0: #{generator_forward.7}
  #allocation0 [shape = 'u32[]', space=smem, size = 0x4, offset = 0x4, fixed_abs, tag = 'smem constant byte address 0x4 - core index']
  #allocation1 [shape = 'u32[144,128]{1,0:T(1,128)}', space=vmem, size = 0x12000, scoped, tag = 'internal scratch']
  %s0 = inlined_call_operand.vmem [shape: bf16[2,110,32], index: 0, kind: input, shape index: {}]
  %s1 = inlined_call_operand.vmem [shape: bf16[288,64], index: 1, kind: input, shape index: {}]
  %s2 = inlined_call_operand.vmem [shape: bf16[2,80,64], index: 2, kind: output, shape index: {0}]
  %s3 = inlined_call_operand.vmem [shape: f32[2,2,64], index: 3, kind: output, shape index: {1}]
  %4 = xla_tuple %s2, %s3
  %s5 = sld [smem:[#allocation0]]
  $region49: #{generator_forward.7} parent=0
    _
  %s7 = ssub.s32 1, %s5
  %s8 = scalar_select 0, %s7, %s5
  loop: start=0, step=1, limit=4
  $region2: #{generator_forward.7} parent=0 // loop_pre_header
    _
  $region3: #{generator_forward.7} parent=0 // loop_header
    %s10 = sphi 0, %s14
    %p11 = scmp.ge.s32.totalorder %s10, 4
    %s20 = sphi 0, %s22
    %s23 = sphi 0, %s20
    %s24 = sphi 0, %s23
    %s40 = sphi 0, %s24
    %s44 = sphi 0, %s44
    %s46 = sphi 0, %s44
    %s47 = sphi 0, %s46
    %s61 = sphi 0, %s47
    %s67 = sphi 0, %s69
    %s70 = sphi 0, %s67
    %s71 = sphi 0, %s70
    %s87 = sphi 0, %s71
    %s93 = sphi 0, %s95
    %s96 = sphi 0, %s93
    %s97 = sphi 0, %s96
    %s113 = sphi 0, %s97
  $region4: #{generator_forward.7} parent=0 // loop_header_branch
    %13 = sbr.rel (%p11) target = $region8
  $region5: #{generator_forward.7} parent=0 // loop_body
    %s15 = ssub.s32 %s10, 1
    %s16 = ssub.s32 %s10, 2
    %s17 = sadd.s32 %s10, 1
    %s18 = ssub.s32 %s10, %s17
    %p19 = scmp.eq.s32.totalorder %s18, 0
    %s21 = sadd.s32 %s20, 1
    %s22 = scalar_select %p19, %s20, %s21
    %p25 = pneg %p19
    %p26 = scmp.eq.s32.totalorder %s10, 1
    %p27 = por %p25, %p26
    %p28 = scmp.ne.s32.totalorder %s20, %s23
    %p29 = scmp.eq.s32.totalorder %s10, 0
    %p30 = por %p28, %p29
    %p31 = scmp.ne.s32.totalorder %s20, %s23
    %p32 = scmp.eq.s32.totalorder %s15, 1
    %p33 = por %p31, %p32
    %p34 = scmp.ne.s32.totalorder %s23, %s24
    %p35 = scmp.eq.s32.totalorder %s15, 0
    %p36 = por %p34, %p35
    %p37 = scmp.ne.s32.totalorder %s23, %s24
    %p38 = scmp.eq.s32.totalorder %s16, 1
    %p39 = por %p37, %p38
    %p41 = scmp.ne.s32.totalorder %s24, %s40
    %p42 = scmp.eq.s32.totalorder %s16, 0
    %p43 = por %p41, %p42
    %s45 = sadd.s32 %s44, 1
    %p48 = scmp.eq.s32.totalorder %s10, 1
    %p49 = scmp.ne.s32.totalorder %s44, %s46
    %p50 = scmp.eq.s32.totalorder %s10, 0
    %p51 = por %p49, %p50
    %p52 = scmp.ne.s32.totalorder %s44, %s46
    %p53 = scmp.eq.s32.totalorder %s15, 1
    %p54 = por %p52, %p53
    %p55 = scmp.ne.s32.totalorder %s46, %s47
    %p56 = scmp.eq.s32.totalorder %s15, 0
    %p57 = por %p55, %p56
    %p58 = scmp.ne.s32.totalorder %s46, %s47
    %p59 = scmp.eq.s32.totalorder %s16, 1
    %p60 = por %p58, %p59
    %p62 = scmp.ne.s32.totalorder %s47, %s61
    %p63 = scmp.eq.s32.totalorder %s16, 0
    %p64 = por %p62, %p63
    %s65 = ssub.s32 %s10, %s17
    %p66 = scmp.eq.s32.totalorder %s65, 0
    %s68 = sadd.s32 %s67, 1
    %s69 = scalar_select %p66, %s67, %s68
    %p72 = pneg %p66
    %p73 = scmp.eq.s32.totalorder %s10, 1
    %p74 = por %p72, %p73
    %p75 = scmp.ne.s32.totalorder %s67, %s70
    %p76 = scmp.eq.s32.totalorder %s10, 0
    %p77 = por %p75, %p76
    %p78 = scmp.ne.s32.totalorder %s67, %s70
    %p79 = scmp.eq.s32.totalorder %s15, 1
    %p80 = por %p78, %p79
    %p81 = scmp.ne.s32.totalorder %s70, %s71
    %p82 = scmp.eq.s32.totalorder %s15, 0
    %p83 = por %p81, %p82
    %p84 = scmp.ne.s32.totalorder %s70, %s71
    %p85 = scmp.eq.s32.totalorder %s16, 1
    %p86 = por %p84, %p85
    %p88 = scmp.ne.s32.totalorder %s71, %s87
    %p89 = scmp.eq.s32.totalorder %s16, 0
    %p90 = por %p88, %p89
    %s91 = ssub.s32 %s10, %s17
    %p92 = scmp.eq.s32.totalorder %s91, 0
    %s94 = sadd.s32 %s93, 1
    %s95 = scalar_select %p92, %s93, %s94
    %p98 = pneg %p92
    %p99 = scmp.eq.s32.totalorder %s10, 1
    %p100 = por %p98, %p99
    %p101 = scmp.ne.s32.totalorder %s93, %s96
    %p102 = scmp.eq.s32.totalorder %s10, 0
    %p103 = por %p101, %p102
    %p104 = scmp.ne.s32.totalorder %s93, %s96
    %p105 = scmp.eq.s32.totalorder %s15, 1
    %p106 = por %p104, %p105
    %p107 = scmp.ne.s32.totalorder %s96, %s97
    %p108 = scmp.eq.s32.totalorder %s15, 0
    %p109 = por %p107, %p108
    %p110 = scmp.ne.s32.totalorder %s96, %s97
    %p111 = scmp.eq.s32.totalorder %s16, 1
    %p112 = por %p110, %p111
    %p114 = scmp.ne.s32.totalorder %s97, %s113
    %p115 = scmp.eq.s32.totalorder %s16, 0
    %p116 = por %p114, %p115
    %p117 = scmp.le.s32.totalorder 1, %s10
    %p118 = scmp.lt.s32.totalorder %s10, 3
    %p119 = pnand %p117, %p118
    %p120 = pneg %p119
    // Predicated region
    $region9: #{generator_forward.7} parent=5 // pred_check
      _
    $region10: #{generator_forward.7} parent=5 // pred_check_branch
      %122 = sbr.rel (%p119) target = $region12
    $region11: #{generator_forward.7} parent=5 // pred_region
      %s123 = ssub.s32 %s10, 1
      // Predicated region
      $region13: #{generator_forward.7} parent=11 // pred_check
        %p124 = pneg %p57
      $region14: #{generator_forward.7} parent=11 // pred_check_branch
        %126 = sbr.rel (%p124) target = $region16
      $region15: #{generator_forward.7} parent=11 // pred_region
        _
      $region16: #{generator_forward.7} parent=11 // pred_fallthru
        _
    $region12: #{generator_forward.7} parent=5 // pred_fallthru
      _
    %p127 = scmp.lt.s32.totalorder %s10, 2
    // Predicated region
    $region17: #{generator_forward.7} parent=5 // pred_check
      %p128 = pneg %p127
    $region18: #{generator_forward.7} parent=5 // pred_check_branch
      %130 = sbr.rel (%p128) target = $region20
    $region19: #{generator_forward.7} parent=5 // pred_region
      // Predicated region
      $region21: #{generator_forward.7} parent=19 // pred_check
        %p131 = pneg %p30
      $region22: #{generator_forward.7} parent=19 // pred_check_branch
        %133 = sbr.rel (%p131) target = $region24
      $region23: #{generator_forward.7} parent=19 // pred_region
        %p134 = scmp.lt.s32.totalorder %s10, 1
        %s135 = scalar_select %p134, %s10, 1
        %s136 = smul.addr %s135, 14
        %s137 = smul.addr %s136, 4
        %s138 = scalar_lea.vmem %s0, %s137
      $region24: #{generator_forward.7} parent=19 // pred_fallthru
        _
    $region20: #{generator_forward.7} parent=5 // pred_fallthru
      _
    %p139 = scmp.le.s32.totalorder 1, %s10
    %p140 = scmp.lt.s32.totalorder %s10, 3
    %p141 = pnand %p139, %p140
    %p142 = pneg %p141
    // Predicated region
    $region25: #{generator_forward.7} parent=5 // pred_check
      _
    $region26: #{generator_forward.7} parent=5 // pred_check_branch
      %144 = sbr.rel (%p141) target = $region28
    $region27: #{generator_forward.7} parent=5 // pred_region
      %s145 = ssub.s32 %s10, 1
      %p146 = scmp.lt.s32.totalorder %s15, 1
      %s147 = scalar_select %p146, %s15, 1
      %s148 = smul.addr %s147, 14
      %s149 = smul.addr %s148, 4
      %s150 = scalar_lea.vmem %s0, %s149
      %p151 = pneg %p36
      %p152 = pneg %p33
      %p153 = pneg %p57
      %p154 = pneg %p54
      %p155 = pneg %p83
      %p156 = pneg %p80
      %p157 = scmp.lt.s32.totalorder %s15, 1
      %s158 = scalar_select %p157, %s15, 1
      %s159 = smul.addr %s158, 10
      %s160 = smul.addr %s159, 4
      %s161 = scalar_lea.vmem %s2, %s160
      %p162 = pneg %p109
      %p163 = pneg %p106
      %p164 = scmp.lt.s32.totalorder %s15, 1
      %s165 = scalar_select %p164, %s15, 1
      %s166 = smul.addr %s165, 2
      %s167 = scalar_lea.vmem %s3, %s166
      %p168 = scmp.lt.s32.totalorder %s15, 1
      %s169 = scalar_select %p168, %s15, 1
      %s170 = smul.addr %s169, 14
      %s171 = smul.addr %s170, 4
      %s172 = scalar_lea.vmem %s0, %s171
      %p173 = scmp.lt.s32.totalorder %s15, 1
      %s174 = scalar_select %p173, %s15, 1
      %s175 = smul.addr %s174, 10
      %s176 = smul.addr %s175, 4
      %s177 = scalar_lea.vmem %s2, %s176
      %p178 = scmp.lt.s32.totalorder %s15, 1
      %s179 = scalar_select %p178, %s15, 1
      %s180 = smul.addr %s179, 2
      %s181 = scalar_lea.vmem %s3, %s180
      %v183 = vld [vmem:[%s172] sm:$0xf]
      %v184 = vld [vmem:[%s172 + $0x4] sm:$0xf]
      %v185 = vld [vmem:[%s172 + $0x8] sm:$0xf]
      %v186 = vld [vmem:[%s172 + $0xc] sm:$0xf]
      %v187 = vld [vmem:[%s172 + $0x10] sm:$0xf]
      %v188 = vld [vmem:[%s172 + $0x14] sm:$0xf]
      %v189 = vld [vmem:[%s172 + $0x18] sm:$0xf]
      %v190 = vld [vmem:[%s172 + $0x1c] sm:$0xf]
      %v191 = vld [vmem:[%s172 + $0x20] sm:$0xf]
      %v192 = vld [vmem:[%s172 + $0x24] sm:$0xf]
      %v193 = vld [vmem:[%s172 + $0x28] sm:$0xf]
      %v194 = vld [vmem:[%s172 + $0x2c] sm:$0xf]
      %v195 = vld [vmem:[%s172 + $0x30] sm:$0xf]
      %v206 = vunpack.c.l.b16 %v183
      %v207 = vunpack.c.l.b16 %v184
      %v208 = vunpack.c.l.b16 %v185
      %v209 = vunpack.c.l.b16 %v186
      %v210 = vunpack.c.l.b16 %v187
      %v211 = vunpack.c.l.b16 %v188
      %v212 = vunpack.c.l.b16 %v189
      %v213 = vunpack.c.l.b16 %v190
      %v214 = vunpack.c.l.b16 %v191
      %v215 = vunpack.c.l.b16 %v192
      %v216 = vpack.c.b16 %v207, %v206
      %v217 = vpack.c.b16 %v209, %v208
      %v218 = vpack.c.b16 %v211, %v210
      %v219 = vpack.c.b16 %v213, %v212
      %v220 = vpack.c.b16 %v215, %v214
      %v222 = vunpack.c.l.b16 %v193
      %v223 = vpack.c.b16 %v222, %v222
      %vm224 = vsmask.f32 7424
      %v226 = vshrl.u32 %v216, 16
      %v228 = vshll.u32 %v216, 16
      %v230 = vrot.slane %v228, 1
      %v231 = vor.u32 %v226, %v230
      %v233 = vshll.u32 %v217, 16
      %v235 = vrot.slane %v233, 1
      %v236 = vsel %vm224, %v231, %v235
      %v237 = vshrl.u32 %v217, 16
      %v239 = vor.u32 %v237, %v235
      %v241 = vshll.u32 %v218, 16
      %v243 = vrot.slane %v241, 1
      %v244 = vsel %vm224, %v239, %v243
      %v245 = vshrl.u32 %v218, 16
      %v247 = vor.u32 %v245, %v243
      %v249 = vshll.u32 %v219, 16
      %v251 = vrot.slane %v249, 1
      %v252 = vsel %vm224, %v247, %v251
      %v253 = vshrl.u32 %v219, 16
      %v255 = vor.u32 %v253, %v251
      %v257 = vshll.u32 %v220, 16
      %v259 = vrot.slane %v257, 1
      %v260 = vsel %vm224, %v255, %v259
      %v261 = vshrl.u32 %v220, 16
      %v263 = vor.u32 %v261, %v259
      %v265 = vshll.u32 %v223, 16
      %v267 = vrot.slane %v265, 1
      %v268 = vsel %vm224, %v263, %v267
      %269 = vrot.lane.b32.xlu0 %v236, 32
      %v270 = vpop.permute.xlu0 %269
      %271 = vrot.lane.b32.xlu0 %v244, 32
      %v272 = vpop.permute.xlu0 %271
      %273 = vrot.lane.b32.xlu0 %v252, 32
      %v274 = vpop.permute.xlu0 %273
      %275 = vrot.lane.b32.xlu0 %v260, 32
      %v276 = vpop.permute.xlu0 %275
      %277 = vrot.lane.b32.xlu0 %v268, 32
      %v278 = vpop.permute.xlu0 %277
      %vm279 = vcmask 1046528
      %v280 = vrot.slane %v216, 1
      %v281 = vrot.slane %v217, 1
      %v282 = vsel %vm279, %v280, %v281
      %v283 = vrot.slane %v218, 1
      %v284 = vsel %vm279, %v281, %v283
      %v285 = vrot.slane %v219, 1
      %v286 = vsel %vm279, %v283, %v285
      %v287 = vrot.slane %v220, 1
      %v288 = vsel %vm279, %v285, %v287
      %v289 = vrot.slane %v223, 1
      %v290 = vsel %vm279, %v287, %v289
      %291 = vrot.lane.b32.xlu0 %v282, 64
      %v292 = vpop.permute.xlu0 %291
      %293 = vrot.lane.b32.xlu0 %v284, 64
      %v294 = vpop.permute.xlu0 %293
      %295 = vrot.lane.b32.xlu0 %v286, 64
      %v296 = vpop.permute.xlu0 %295
      %297 = vrot.lane.b32.xlu0 %v288, 64
      %v298 = vpop.permute.xlu0 %297
      %299 = vrot.lane.b32.xlu0 %v290, 64
      %v300 = vpop.permute.xlu0 %299
      %v302 = vunpack.c.l.b16 %v194
      %v303 = vpack.c.b16 %v208, %v207
      %v304 = vpack.c.b16 %v210, %v209
      %v305 = vpack.c.b16 %v212, %v211
      %v306 = vpack.c.b16 %v214, %v213
      %v307 = vpack.c.b16 %v222, %v215
      %v308 = vpack.c.b16 %v302, %v302
      %v309 = vrot.slane %v303, 1
      %v310 = vrot.slane %v304, 1
      %v311 = vsel %vm279, %v309, %v310
      %v312 = vrot.slane %v305, 1
      %v313 = vsel %vm279, %v310, %v312
      %v314 = vrot.slane %v306, 1
      %v315 = vsel %vm279, %v312, %v314
      %v316 = vrot.slane %v307, 1
      %v317 = vsel %vm279, %v314, %v316
      %v318 = vrot.slane %v308, 1
      %v319 = vsel %vm279, %v316, %v318
      %320 = vrot.lane.b32.xlu0 %v311, 96
      %v321 = vpop.permute.xlu0 %320
      %322 = vrot.lane.b32.xlu0 %v313, 96
      %v323 = vpop.permute.xlu0 %322
      %324 = vrot.lane.b32.xlu0 %v315, 96
      %v325 = vpop.permute.xlu0 %324
      %326 = vrot.lane.b32.xlu0 %v317, 96
      %v327 = vpop.permute.xlu0 %326
      %328 = vrot.lane.b32.xlu0 %v319, 96
      %v329 = vpop.permute.xlu0 %328
      %vm330 = vsmask.f32 6400
      %v332 = vshrl.u32 %v303, 16
      %v334 = vrot.slane %v332, 1
      %v335 = vshll.u32 %v303, 16
      %v337 = vrot.slane %v335, 2
      %v338 = vor.u32 %v334, %v337
      %v340 = vshrl.u32 %v304, 16
      %v342 = vrot.slane %v340, 1
      %v343 = vshll.u32 %v304, 16
      %v345 = vrot.slane %v343, 2
      %v346 = vor.u32 %v342, %v345
      %v347 = vsel %vm330, %v338, %v346
      %v349 = vshrl.u32 %v305, 16
      %v351 = vrot.slane %v349, 1
      %v352 = vshll.u32 %v305, 16
      %v354 = vrot.slane %v352, 2
      %v355 = vor.u32 %v351, %v354
      %v356 = vsel %vm330, %v346, %v355
      %v358 = vshrl.u32 %v306, 16
      %v360 = vrot.slane %v358, 1
      %v361 = vshll.u32 %v306, 16
      %v363 = vrot.slane %v361, 2
      %v364 = vor.u32 %v360, %v363
      %v365 = vsel %vm330, %v355, %v364
      %v367 = vshrl.u32 %v307, 16
      %v369 = vrot.slane %v367, 1
      %v370 = vshll.u32 %v307, 16
      %v372 = vrot.slane %v370, 2
      %v373 = vor.u32 %v369, %v372
      %v374 = vsel %vm330, %v364, %v373
      %v376 = vshrl.u32 %v308, 16
      %v378 = vrot.slane %v376, 1
      %v379 = vshll.u32 %v308, 16
      %v381 = vrot.slane %v379, 2
      %v382 = vor.u32 %v378, %v381
      %v383 = vsel %vm330, %v373, %v382
      %vm384 = vcmask 1045504
      %v385 = vrot.slane %v303, 2
      %v386 = vrot.slane %v304, 2
      %v387 = vsel %vm384, %v385, %v386
      %v388 = vrot.slane %v305, 2
      %v389 = vsel %vm384, %v386, %v388
      %v390 = vrot.slane %v306, 2
      %v391 = vsel %vm384, %v388, %v390
      %v392 = vrot.slane %v307, 2
      %v393 = vsel %vm384, %v390, %v392
      %v394 = vrot.slane %v308, 2
      %v395 = vsel %vm384, %v392, %v394
      %396 = vrot.lane.b32.xlu0 %v387, 32
      %v397 = vpop.permute.xlu0 %396
      %398 = vrot.lane.b32.xlu0 %v389, 32
      %v399 = vpop.permute.xlu0 %398
      %400 = vrot.lane.b32.xlu0 %v391, 32
      %v401 = vpop.permute.xlu0 %400
      %402 = vrot.lane.b32.xlu0 %v393, 32
      %v403 = vpop.permute.xlu0 %402
      %404 = vrot.lane.b32.xlu0 %v395, 32
      %v405 = vpop.permute.xlu0 %404
      %v407 = vunpack.c.l.b16 %v195
      %v408 = vpack.c.b16 %v302, %v222
      %v409 = vpack.c.b16 %v407, %v407
      %v410 = vrot.slane %v217, 2
      %v411 = vrot.slane %v218, 2
      %v412 = vsel %vm384, %v410, %v411
      %v413 = vrot.slane %v219, 2
      %v414 = vsel %vm384, %v411, %v413
      %v415 = vrot.slane %v220, 2
      %v416 = vsel %vm384, %v413, %v415
      %v417 = vrot.slane %v408, 2
      %v418 = vsel %vm384, %v415, %v417
      %v419 = vrot.slane %v409, 2
      %v420 = vsel %vm384, %v417, %v419
      %421 = vrot.lane.b32.xlu0 %v412, 64
      %v422 = vpop.permute.xlu0 %421
      %423 = vrot.lane.b32.xlu0 %v414, 64
      %v424 = vpop.permute.xlu0 %423
      %425 = vrot.lane.b32.xlu0 %v416, 64
      %v426 = vpop.permute.xlu0 %425
      %427 = vrot.lane.b32.xlu0 %v418, 64
      %v428 = vpop.permute.xlu0 %427
      %429 = vrot.lane.b32.xlu0 %v420, 64
      %v430 = vpop.permute.xlu0 %429
      %vm431 = vsmask.f32 5376
      %v432 = vrot.slane %v237, 2
      %v433 = vrot.slane %v233, 3
      %v434 = vor.u32 %v432, %v433
      %v435 = vrot.slane %v245, 2
      %v436 = vrot.slane %v241, 3
      %v437 = vor.u32 %v435, %v436
      %v438 = vsel %vm431, %v434, %v437
      %v439 = vrot.slane %v253, 2
      %v440 = vrot.slane %v249, 3
      %v441 = vor.u32 %v439, %v440
      %v442 = vsel %vm431, %v437, %v441
      %v443 = vrot.slane %v261, 2
      %v444 = vrot.slane %v257, 3
      %v445 = vor.u32 %v443, %v444
      %v446 = vsel %vm431, %v441, %v445
      %v448 = vshrl.u32 %v408, 16
      %v450 = vrot.slane %v448, 2
      %v451 = vshll.u32 %v408, 16
      %v453 = vrot.slane %v451, 3
      %v454 = vor.u32 %v450, %v453
      %v455 = vsel %vm431, %v445, %v454
      %v457 = vshrl.u32 %v409, 16
      %v459 = vrot.slane %v457, 2
      %v460 = vshll.u32 %v409, 16
      %v462 = vrot.slane %v460, 3
      %v463 = vor.u32 %v459, %v462
      %v464 = vsel %vm431, %v454, %v463
      %465 = vrot.lane.b32.xlu0 %v438, 96
      %v466 = vpop.permute.xlu0 %465
      %467 = vrot.lane.b32.xlu0 %v442, 96
      %v468 = vpop.permute.xlu0 %467
      %469 = vrot.lane.b32.xlu0 %v446, 96
      %v470 = vpop.permute.xlu0 %469
      %471 = vrot.lane.b32.xlu0 %v455, 96
      %v472 = vpop.permute.xlu0 %471
      %473 = vrot.lane.b32.xlu0 %v464, 96
      %v474 = vpop.permute.xlu0 %473
      %vm475 = vcmask 1044480
      %v476 = vrot.slane %v217, 3
      %v477 = vrot.slane %v218, 3
      %v478 = vsel %vm475, %v476, %v477
      %v479 = vrot.slane %v219, 3
      %v480 = vsel %vm475, %v477, %v479
      %v481 = vrot.slane %v220, 3
      %v482 = vsel %vm475, %v479, %v481
      %v483 = vrot.slane %v408, 3
      %v484 = vsel %vm475, %v481, %v483
      %v485 = vrot.slane %v409, 3
      %v486 = vsel %vm475, %v483, %v485
      %vm487 = vcmask 261120
      %v489 = vsel %vm487, %v216, %v270
      %v491 = vsel %vm487, %v217, %v272
      %v493 = vsel %vm487, %v218, %v274
      %v495 = vsel %vm487, %v219, %v276
      %v497 = vsel %vm487, %v220, %v278
      %vm498 = vcmask 523264
      %v500 = vsel %vm498, %v489, %v292
      %v502 = vsel %vm498, %v491, %v294
      %v504 = vsel %vm498, %v493, %v296
      %v506 = vsel %vm498, %v495, %v298
      %v508 = vsel %vm498, %v497, %v300
      %vm509 = vcmask 785408
      %v511 = vsel %vm509, %v500, %v321
      %v514 = vsel %vm509, %v502, %v323
      %v517 = vsel %vm509, %v504, %v325
      %v520 = vsel %vm509, %v506, %v327
      %v523 = vsel %vm509, %v508, %v329
      %v527 = vsel %vm487, %v347, %v397
      %v530 = vsel %vm487, %v356, %v399
      %v533 = vsel %vm487, %v365, %v401
      %v536 = vsel %vm487, %v374, %v403
      %v539 = vsel %vm487, %v383, %v405
      %v541 = vsel %vm498, %v527, %v422
      %v543 = vsel %vm498, %v530, %v424
      %v545 = vsel %vm498, %v533, %v426
      %v547 = vsel %vm498, %v536, %v428
      %v549 = vsel %vm498, %v539, %v430
      %v551 = vsel %vm509, %v541, %v466
      %v554 = vsel %vm509, %v543, %v468
      %v557 = vsel %vm509, %v545, %v470
      %v560 = vsel %vm509, %v547, %v472
      %v563 = vsel %vm509, %v549, %v474
      %v565 = vld [vmem:[%s1] sm:$0xf]
      %v566 = vld [vmem:[%s1 + $0x4] sm:$0xf]
      %v567 = vld [vmem:[%s1 + $0x8] sm:$0xf]
      %v568 = vld [vmem:[%s1 + $0xc] sm:$0xf]
      %v569 = vld [vmem:[%s1 + $0x10] sm:$0xf]
      %v570 = vld [vmem:[%s1 + $0x14] sm:$0xf]
      %v571 = vld [vmem:[%s1 + $0x18] sm:$0xf]
      %v572 = vld [vmem:[%s1 + $0x1c] sm:$0xf]
      %v573 = vld [vmem:[%s1 + $0x20] sm:$0xf]
      %v574 = vld [vmem:[%s1 + $0x24] sm:$0xf]
      %v575 = vld [vmem:[%s1 + $0x28] sm:$0xf]
      %v576 = vld [vmem:[%s1 + $0x2c] sm:$0xf]
      %v577 = vld [vmem:[%s1 + $0x30] sm:$0xf]
      %v578 = vld [vmem:[%s1 + $0x34] sm:$0xf]
      %v579 = vld [vmem:[%s1 + $0x38] sm:$0xf]
      %v580 = vld [vmem:[%s1 + $0x3c] sm:$0xf]
      %v581 = vld [vmem:[%s1 + $0x40] sm:$0xf]
      %v582 = vld [vmem:[%s1 + $0x44] sm:$0xf]
      %v583 = vld [vmem:[%s1 + $0x48] sm:$0xf]
      %v584 = vld [vmem:[%s1 + $0x4c] sm:$0xf]
      %v585 = vld [vmem:[%s1 + $0x50] sm:$0xf]
      %v586 = vld [vmem:[%s1 + $0x54] sm:$0xf]
      %v587 = vld [vmem:[%s1 + $0x58] sm:$0xf]
      %v588 = vld [vmem:[%s1 + $0x5c] sm:$0xf]
      %v589 = vld [vmem:[%s1 + $0x60] sm:$0xf]
      %v590 = vld [vmem:[%s1 + $0x64] sm:$0xf]
      %v591 = vld [vmem:[%s1 + $0x68] sm:$0xf]
      %v592 = vld [vmem:[%s1 + $0x6c] sm:$0xf]
      %v593 = vld [vmem:[%s1 + $0x70] sm:$0xf]
      %v594 = vld [vmem:[%s1 + $0x74] sm:$0xf]
      %v595 = vld [vmem:[%s1 + $0x78] sm:$0xf]
      %v596 = vld [vmem:[%s1 + $0x7c] sm:$0xf]
      %v597 = vld [vmem:[%s1 + $0x80] sm:$0xf]
      %v598 = vld [vmem:[%s1 + $0x84] sm:$0xf]
      %v599 = vld [vmem:[%s1 + $0x88] sm:$0xf]
      %v600 = vld [vmem:[%s1 + $0x8c] sm:$0xf]
      %v637 = vunpack.c.l.b16 %v565
      %v638 = vunpack.c.l.b16 %v566
      %v639 = vunpack.c.l.b16 %v567
      %v640 = vunpack.c.l.b16 %v568
      %v641 = vunpack.c.l.b16 %v569
      %v642 = vunpack.c.l.b16 %v570
      %v643 = vunpack.c.l.b16 %v571
      %v644 = vunpack.c.l.b16 %v572
      %v645 = vunpack.c.l.b16 %v573
      %v646 = vunpack.c.l.b16 %v574
      %v647 = vunpack.c.l.b16 %v575
      %v648 = vunpack.c.l.b16 %v576
      %v649 = vunpack.c.l.b16 %v577
      %v650 = vunpack.c.l.b16 %v578
      %v651 = vunpack.c.l.b16 %v579
      %v652 = vunpack.c.l.b16 %v580
      %v653 = vunpack.c.l.b16 %v581
      %v654 = vunpack.c.l.b16 %v582
      %v655 = vunpack.c.l.b16 %v583
      %v656 = vunpack.c.l.b16 %v584
      %v657 = vunpack.c.l.b16 %v585
      %v658 = vunpack.c.l.b16 %v586
      %v659 = vunpack.c.l.b16 %v587
      %v660 = vunpack.c.l.b16 %v588
      %v661 = vunpack.c.l.b16 %v589
      %v662 = vunpack.c.l.b16 %v590
      %v663 = vunpack.c.l.b16 %v591
      %v664 = vunpack.c.l.b16 %v592
      %v665 = vunpack.c.l.b16 %v593
      %v666 = vunpack.c.l.b16 %v594
      %v667 = vunpack.c.l.b16 %v595
      %v668 = vunpack.c.l.b16 %v596
      %v669 = vunpack.c.l.b16 %v597
      %v670 = vunpack.c.l.b16 %v598
      %v671 = vunpack.c.l.b16 %v599
      %v672 = vunpack.c.l.b16 %v600
      %v673 = vpack.c.b16 %v638, %v637
      %v674 = vpack.c.b16 %v640, %v639
      %v675 = vpack.c.b16 %v642, %v641
      %v676 = vpack.c.b16 %v644, %v643
      %v677 = vpack.c.b16 %v646, %v645
      %v678 = vpack.c.b16 %v648, %v647
      %v679 = vpack.c.b16 %v650, %v649
      %v680 = vpack.c.b16 %v652, %v651
      %v681 = vpack.c.b16 %v654, %v653
      %v682 = vpack.c.b16 %v656, %v655
      %v683 = vpack.c.b16 %v658, %v657
      %v684 = vpack.c.b16 %v660, %v659
      %v685 = vpack.c.b16 %v662, %v661
      %v686 = vpack.c.b16 %v664, %v663
      %v687 = vpack.c.b16 %v666, %v665
      %v688 = vpack.c.b16 %v668, %v667
      %v689 = vpack.c.b16 %v670, %v669
      %v690 = vpack.c.b16 %v672, %v671
      %v710 = vsel %vm487, %v478, 0
      %v713 = vsel %vm487, %v480, 0
      %v716 = vsel %vm487, %v482, 0
      %v719 = vsel %vm487, %v484, 0
      %v722 = vsel %vm487, %v486, 0
      %724 = vmatprep.subr.bf16.mxu0 0
      %725 = vmatpush1.bf16.msra.mxu0 %v673
      %726 = vmatprep.subr.bf16.mxu0 0
      %727 = vmatpush1.bf16.msra.mxu0 %v674
      %728 = vmatprep.subr.bf16.mxu0 0
      %729 = vmatpush1.bf16.msra.mxu0 %v675
      %730 = vmatprep.subr.bf16.mxu0 0
      %731 = vmatpush1.bf16.msra.mxu0 %v676
      %732 = vmatprep.subr.bf16.mxu0 0
      %733 = vmatpush1.bf16.msra.mxu0 %v677
      %734 = vmatprep.subr.bf16.mxu0 0
      %735 = vmatpush1.bf16.msra.mxu0 %v678
      %736 = vmatprep.subr.bf16.mxu0 0
      %737 = vmatpush1.bf16.msra.mxu0 %v679
      %738 = vmatprep.subr.bf16.mxu0 0
      %739 = vmatpush1.bf16.msra.mxu0 %v680
      %740 = vmatprep.subr.bf16.mxu0 0
      %741 = vmatpush1.bf16.msra.mxu0 %v681
      %742 = vmatprep.subr.bf16.mxu0 0
      %743 = vmatpush1.bf16.msra.mxu0 %v682
      %744 = vmatprep.subr.bf16.mxu0 0
      %745 = vmatpush1.bf16.msra.mxu0 %v683
      %746 = vmatprep.subr.bf16.mxu0 0
      %747 = vmatpush1.bf16.msra.mxu0 %v684
      %748 = vmatprep.subr.bf16.mxu0 0
      %749 = vmatpush1.bf16.msra.mxu0 %v685
      %750 = vmatprep.subr.bf16.mxu0 0
      %751 = vmatpush1.bf16.msra.mxu0 %v686
      %752 = vmatprep.subr.bf16.mxu0 0
      %753 = vmatpush1.bf16.msra.mxu0 %v687
      %754 = vmatprep.subr.bf16.mxu0 0
      %755 = vmatpush1.bf16.msra.mxu0 %v688
      %756 = vmatprep.mubr.bf16.mxu0 %v551
      %757 = vmatmul.mubr.bf16.gmra.mrb[0].mxu0 %v511
      %v758 = vpop.f32.mrb[0].mxu0
      %v759 = vadd.f32 0.0, %v758
      %v760 = vpop.f32.mrb[0].mxu0
      %v761 = vpop.f32.mrb[0].mxu0
      %v762 = vadd.f32 0.0, %v761
      %v763 = vpop.f32.mrb[0].mxu0
      %764 = vmatprep.mubr.bf16.mxu0 %v554
      %765 = vmatmul.mubr.bf16.gmra.mrb[0].mxu0 %v514
      %v766 = vpop.f32.mrb[0].mxu0
      %v767 = vadd.f32 0.0, %v766
      %v768 = vpop.f32.mrb[0].mxu0
      %v769 = vpop.f32.mrb[0].mxu0
      %v770 = vadd.f32 0.0, %v769
      %v771 = vpop.f32.mrb[0].mxu0
      %772 = vmatprep.mubr.bf16.mxu0 %v557
      %773 = vmatmul.mubr.bf16.gmra.mrb[0].mxu0 %v517
      %v774 = vpop.f32.mrb[0].mxu0
      %v775 = vadd.f32 0.0, %v774
      %v776 = vpop.f32.mrb[0].mxu0
      %v777 = vpop.f32.mrb[0].mxu0
      %v778 = vadd.f32 0.0, %v777
      %v779 = vpop.f32.mrb[0].mxu0
      %780 = vmatprep.mubr.bf16.mxu0 %v560
      %781 = vmatmul.mubr.bf16.gmra.mrb[0].mxu0 %v520
      %v782 = vpop.f32.mrb[0].mxu0
      %v783 = vadd.f32 0.0, %v782
      %v784 = vpop.f32.mrb[0].mxu0
      %v785 = vpop.f32.mrb[0].mxu0
      %v786 = vadd.f32 0.0, %v785
      %v787 = vpop.f32.mrb[0].mxu0
      %788 = vmatprep.mubr.bf16.mxu0 %v563
      %789 = vmatmul.mubr.bf16.gmra.mrb[0].mxu0 %v523
      %v790 = vpop.f32.mrb[0].mxu0
      %v791 = vadd.f32 0.0, %v790
      %v792 = vpop.f32.mrb[0].mxu0
      %v793 = vpop.f32.mrb[0].mxu0
      %v794 = vadd.f32 0.0, %v793
      %v795 = vpop.f32.mrb[0].mxu0
      %796 = vdwg.mxu0
      %797 = vmatprep.subr.bf16.mxu0 0
      %798 = vmatpush1.bf16.msra.mxu0 %v689
      %799 = vmatprep.subr.bf16.mxu0 0
      %800 = vmatpush1.bf16.msra.mxu0 %v690
      %801 = vmatprep.subr.bf16.mxu0 0
      %802 = vmatpush1.bf16.msra.mxu0 0
      %803 = vmatprep.subr.bf16.mxu0 0
      %804 = vmatpush1.bf16.msra.mxu0 0
      %805 = vmatprep.subr.bf16.mxu0 0
      %806 = vmatpush1.bf16.msra.mxu0 0
      %807 = vmatprep.subr.bf16.mxu0 0
      %808 = vmatpush1.bf16.msra.mxu0 0
      %809 = vmatprep.subr.bf16.mxu0 0
      %810 = vmatpush1.bf16.msra.mxu0 0
      %811 = vmatprep.subr.bf16.mxu0 0
      %812 = vmatpush1.bf16.msra.mxu0 0
      %813 = vmatprep.subr.bf16.mxu0 0
      %814 = vmatpush1.bf16.msra.mxu0 0
      %815 = vmatprep.subr.bf16.mxu0 0
      %816 = vmatpush1.bf16.msra.mxu0 0
      %817 = vmatprep.subr.bf16.mxu0 0
      %818 = vmatpush1.bf16.msra.mxu0 0
      %819 = vmatprep.subr.bf16.mxu0 0
      %820 = vmatpush1.bf16.msra.mxu0 0
      %821 = vmatprep.subr.bf16.mxu0 0
      %822 = vmatpush1.bf16.msra.mxu0 0
      %823 = vmatprep.subr.bf16.mxu0 0
      %824 = vmatpush1.bf16.msra.mxu0 0
      %825 = vmatprep.subr.bf16.mxu0 0
      %826 = vmatpush1.bf16.msra.mxu0 0
      %827 = vmatprep.subr.bf16.mxu0 0
      %828 = vmatpush1.bf16.msra.mxu0 0
      %829 = vmatprep.mubr.bf16.mxu0 0
      %830 = vmatmul.mubr.bf16.gmra.mrb[0].mxu0 %v710
      %v831 = vpop.f32.mrb[0].mxu0
      %v832 = vadd.f32 %v759, %v831
      %v833 = vpop.f32.mrb[0].mxu0
      %v834 = vpop.f32.mrb[0].mxu0
      %v835 = vadd.f32 %v762, %v834
      %v836 = vpop.f32.mrb[0].mxu0
      %837 = vmatprep.mubr.bf16.mxu0 0
      %838 = vmatmul.mubr.bf16.gmra.mrb[0].mxu0 %v713
      %v839 = vpop.f32.mrb[0].mxu0
      %v840 = vadd.f32 %v767, %v839
      %v841 = vpop.f32.mrb[0].mxu0
      %v842 = vpop.f32.mrb[0].mxu0
      %v843 = vadd.f32 %v770, %v842
      %v844 = vpop.f32.mrb[0].mxu0
      %845 = vmatprep.mubr.bf16.mxu0 0
      %846 = vmatmul.mubr.bf16.gmra.mrb[0].mxu0 %v716
      %v847 = vpop.f32.mrb[0].mxu0
      %v848 = vadd.f32 %v775, %v847
      %v849 = vpop.f32.mrb[0].mxu0
      %v850 = vpop.f32.mrb[0].mxu0
      %v851 = vadd.f32 %v778, %v850
      %v852 = vpop.f32.mrb[0].mxu0
      %853 = vmatprep.mubr.bf16.mxu0 0
      %854 = vmatmul.mubr.bf16.gmra.mrb[0].mxu0 %v719
      %v855 = vpop.f32.mrb[0].mxu0
      %v856 = vadd.f32 %v783, %v855
      %v857 = vpop.f32.mrb[0].mxu0
      %v858 = vpop.f32.mrb[0].mxu0
      %v859 = vadd.f32 %v786, %v858
      %v860 = vpop.f32.mrb[0].mxu0
      %861 = vmatprep.mubr.bf16.mxu0 0
      %862 = vmatmul.mubr.bf16.gmra.mrb[0].mxu0 %v722
      %v863 = vpop.f32.mrb[0].mxu0
      %v864 = vadd.f32 %v791, %v863
      %v865 = vpop.f32.mrb[0].mxu0
      %v866 = vpop.f32.mrb[0].mxu0
      %v867 = vadd.f32 %v794, %v866
      %v868 = vpop.f32.mrb[0].mxu0
      %869 = vdwg.mxu0
      %v870 = vlaneseq
      %v871 = vshrl.u32 %v870, 7
      %v872 = vadd.s32 %v871, 8
      %v873 = vadd.s32 %v871, 16
      %v874 = vadd.s32 %v871, 24
      %v875 = vadd.s32 %v871, 32
      %v876 = vadd.s32 %v871, 40
      %v877 = vadd.s32 %v871, 48
      %v878 = vadd.s32 %v871, 56
      %v879 = vadd.s32 %v871, 64
      %v880 = vadd.s32 %v871, 72
      %vm881 = vcmp.lt.s32.totalorder %v871, 0
      %v882 = vsub.s32 0, %v871
      %v883 = vsel %vm881, %v882, %v871
      %v884 = vmul.u32.u64.compose %v883, 3435973837
      %v885 = vextract.low.u32 %v884
      %v886 = vextract.high.u32 %v884
      %v887 = vshrl.u32 %v886, 3
      %v888 = vmul.u32 %v887, 10
      %v889 = vsub.s32 %v883, %v888
      %v890 = vsub.s32 0, %v889
      %v891 = vsel %vm881, %v890, %v889
      %vm892 = vcmp.lt.s32.totalorder %v872, 0
      %v893 = vsub.s32 0, %v872
      %v894 = vsel %vm892, %v893, %v872
      %v895 = vmul.u32.u64.compose %v894, 3435973837
      %v896 = vextract.low.u32 %v895
      %v897 = vextract.high.u32 %v895
      %v898 = vshrl.u32 %v897, 3
      %v899 = vmul.u32 %v898, 10
      %v900 = vsub.s32 %v894, %v899
      %v901 = vsub.s32 0, %v900
      %v902 = vsel %vm892, %v901, %v900
      %vm903 = vcmp.lt.s32.totalorder %v873, 0
      %v904 = vsub.s32 0, %v873
      %v905 = vsel %vm903, %v904, %v873
      %v906 = vmul.u32.u64.compose %v905, 3435973837
      %v907 = vextract.low.u32 %v906
      %v908 = vextract.high.u32 %v906
      %v909 = vshrl.u32 %v908, 3
      %v910 = vmul.u32 %v909, 10
      %v911 = vsub.s32 %v905, %v910
      %v912 = vsub.s32 0, %v911
      %v913 = vsel %vm903, %v912, %v911
      %vm914 = vcmp.lt.s32.totalorder %v874, 0
      %v915 = vsub.s32 0, %v874
      %v916 = vsel %vm914, %v915, %v874
      %v917 = vmul.u32.u64.compose %v916, 3435973837
      %v918 = vextract.low.u32 %v917
      %v919 = vextract.high.u32 %v917
      %v920 = vshrl.u32 %v919, 3
      %v921 = vmul.u32 %v920, 10
      %v922 = vsub.s32 %v916, %v921
      %v923 = vsub.s32 0, %v922
      %v924 = vsel %vm914, %v923, %v922
      %vm925 = vcmp.lt.s32.totalorder %v875, 0
      %v926 = vsub.s32 0, %v875
      %v927 = vsel %vm925, %v926, %v875
      %v928 = vmul.u32.u64.compose %v927, 3435973837
      %v929 = vextract.low.u32 %v928
      %v930 = vextract.high.u32 %v928
      %v931 = vshrl.u32 %v930, 3
      %v932 = vmul.u32 %v931, 10
      %v933 = vsub.s32 %v927, %v932
      %v934 = vsub.s32 0, %v933
      %v935 = vsel %vm925, %v934, %v933
      %vm936 = vcmp.lt.s32.totalorder %v876, 0
      %v937 = vsub.s32 0, %v876
      %v938 = vsel %vm936, %v937, %v876
      %v939 = vmul.u32.u64.compose %v938, 3435973837
      %v940 = vextract.low.u32 %v939
      %v941 = vextract.high.u32 %v939
      %v942 = vshrl.u32 %v941, 3
      %v943 = vmul.u32 %v942, 10
      %v944 = vsub.s32 %v938, %v943
      %v945 = vsub.s32 0, %v944
      %v946 = vsel %vm936, %v945, %v944
      %vm947 = vcmp.lt.s32.totalorder %v877, 0
      %v948 = vsub.s32 0, %v877
      %v949 = vsel %vm947, %v948, %v877
      %v950 = vmul.u32.u64.compose %v949, 3435973837
      %v951 = vextract.low.u32 %v950
      %v952 = vextract.high.u32 %v950
      %v953 = vshrl.u32 %v952, 3
      %v954 = vmul.u32 %v953, 10
      %v955 = vsub.s32 %v949, %v954
      %v956 = vsub.s32 0, %v955
      %v957 = vsel %vm947, %v956, %v955
      %vm958 = vcmp.lt.s32.totalorder %v878, 0
      %v959 = vsub.s32 0, %v878
      %v960 = vsel %vm958, %v959, %v878
      %v961 = vmul.u32.u64.compose %v960, 3435973837
      %v962 = vextract.low.u32 %v961
      %v963 = vextract.high.u32 %v961
      %v964 = vshrl.u32 %v963, 3
      %v965 = vmul.u32 %v964, 10
      %v966 = vsub.s32 %v960, %v965
      %v967 = vsub.s32 0, %v966
      %v968 = vsel %vm958, %v967, %v966
      %vm969 = vcmp.lt.s32.totalorder %v879, 0
      %v970 = vsub.s32 0, %v879
      %v971 = vsel %vm969, %v970, %v879
      %v972 = vmul.u32.u64.compose %v971, 3435973837
      %v973 = vextract.low.u32 %v972
      %v974 = vextract.high.u32 %v972
      %v975 = vshrl.u32 %v974, 3
      %v976 = vmul.u32 %v975, 10
      %v977 = vsub.s32 %v971, %v976
      %v978 = vsub.s32 0, %v977
      %v979 = vsel %vm969, %v978, %v977
      %vm980 = vcmp.lt.s32.totalorder %v880, 0
      %v981 = vsub.s32 0, %v880
      %v982 = vsel %vm980, %v981, %v880
      %v983 = vmul.u32.u64.compose %v982, 3435973837
      %v984 = vextract.low.u32 %v983
      %v985 = vextract.high.u32 %v983
      %v986 = vshrl.u32 %v985, 3
      %v987 = vmul.u32 %v986, 10
      %v988 = vsub.s32 %v982, %v987
      %v989 = vsub.s32 0, %v988
      %v990 = vsel %vm980, %v989, %v988
      %vm991 = vcmp.ne.s32.totalorder %v891, 0
      %vm992 = vcmp.ne.s32.totalorder %v902, 0
      %vm993 = vcmp.ne.s32.totalorder %v913, 0
      %vm994 = vcmp.ne.s32.totalorder %v924, 0
      %vm995 = vcmp.ne.s32.totalorder %v935, 0
      %vm996 = vcmp.ne.s32.totalorder %v946, 0
      %vm997 = vcmp.ne.s32.totalorder %v957, 0
      %vm998 = vcmp.ne.s32.totalorder %v968, 0
      %vm999 = vcmp.ne.s32.totalorder %v979, 0
      %vm1000 = vcmp.ne.s32.totalorder %v990, 0
      %vm1001 = vcmp.lt.s32.totalorder %v891, 0
      %vm1002 = vcmp.lt.s32.totalorder %v902, 0
      %vm1003 = vcmp.lt.s32.totalorder %v913, 0
      %vm1004 = vcmp.lt.s32.totalorder %v924, 0
      %vm1005 = vcmp.lt.s32.totalorder %v935, 0
      %vm1006 = vcmp.lt.s32.totalorder %v946, 0
      %vm1007 = vcmp.lt.s32.totalorder %v957, 0
      %vm1008 = vcmp.lt.s32.totalorder %v968, 0
      %vm1009 = vcmp.lt.s32.totalorder %v979, 0
      %vm1010 = vcmp.lt.s32.totalorder %v990, 0
      %vm1011 = vmand %vm1001, %vm991
      %vm1012 = vmand %vm1002, %vm992
      %vm1013 = vmand %vm1003, %vm993
      %vm1014 = vmand %vm1004, %vm994
      %vm1015 = vmand %vm1005, %vm995
      %vm1016 = vmand %vm1006, %vm996
      %vm1017 = vmand %vm1007, %vm997
      %vm1018 = vmand %vm1008, %vm998
      %vm1019 = vmand %vm1009, %vm999
      %vm1020 = vmand %vm1010, %vm1000
      %v1021 = vadd.s32 %v891, 10
      %v1022 = vadd.s32 %v902, 10
      %v1023 = vadd.s32 %v913, 10
      %v1024 = vadd.s32 %v924, 10
      %v1025 = vadd.s32 %v935, 10
      %v1026 = vadd.s32 %v946, 10
      %v1027 = vadd.s32 %v957, 10
      %v1028 = vadd.s32 %v968, 10
      %v1029 = vadd.s32 %v979, 10
      %v1030 = vadd.s32 %v990, 10
      %v1031 = vsel %vm1011, %v1021, %v891
      %v1032 = vsel %vm1012, %v1022, %v902
      %v1033 = vsel %vm1013, %v1023, %v913
      %v1034 = vsel %vm1014, %v1024, %v924
      %v1035 = vsel %vm1015, %v1025, %v935
      %v1036 = vsel %vm1016, %v1026, %v946
      %v1037 = vsel %vm1017, %v1027, %v957
      %v1038 = vsel %vm1018, %v1028, %v968
      %v1039 = vsel %vm1019, %v1029, %v979
      %v1040 = vsel %vm1020, %v1030, %v990
      %vm1041 = vcmp.lt.s32.totalorder %v1031, 8
      %vm1042 = vcmp.lt.s32.totalorder %v1032, 8
      %vm1043 = vcmp.lt.s32.totalorder %v1033, 8
      %vm1044 = vcmp.lt.s32.totalorder %v1034, 8
      %vm1045 = vcmp.lt.s32.totalorder %v1035, 8
      %vm1046 = vcmp.lt.s32.totalorder %v1036, 8
      %vm1047 = vcmp.lt.s32.totalorder %v1037, 8
      %vm1048 = vcmp.lt.s32.totalorder %v1038, 8
      %vm1049 = vcmp.lt.s32.totalorder %v1039, 8
      %vm1050 = vcmp.lt.s32.totalorder %v1040, 8
      %v1051 = vsel %vm1041, 1, 0
      %v1052 = vsel %vm1042, 1, 0
      %v1053 = vsel %vm1043, 1, 0
      %v1054 = vsel %vm1044, 1, 0
      %v1055 = vsel %vm1045, 1, 0
      %v1056 = vsel %vm1046, 1, 0
      %v1057 = vsel %vm1047, 1, 0
      %v1058 = vsel %vm1048, 1, 0
      %v1059 = vsel %vm1049, 1, 0
      %v1060 = vsel %vm1050, 1, 0
      %vm1061 = vcmp.eq.s32.totalorder %v1051, 1
      %vm1062 = vcmp.eq.s32.totalorder %v1052, 1
      %vm1063 = vcmp.eq.s32.totalorder %v1053, 1
      %vm1064 = vcmp.eq.s32.totalorder %v1054, 1
      %vm1065 = vcmp.eq.s32.totalorder %v1055, 1
      %vm1066 = vcmp.eq.s32.totalorder %v1056, 1
      %vm1067 = vcmp.eq.s32.totalorder %v1057, 1
      %vm1068 = vcmp.eq.s32.totalorder %v1058, 1
      %vm1069 = vcmp.eq.s32.totalorder %v1059, 1
      %vm1070 = vcmp.eq.s32.totalorder %v1060, 1
      %v1071 = vsel %vm1061, %v832, 0.0
      %v1072 = vsel %vm1062, %v835, 0.0
      %v1073 = vsel %vm1063, %v840, 0.0
      %v1074 = vsel %vm1064, %v843, 0.0
      %v1075 = vsel %vm1065, %v848, 0.0
      %v1076 = vsel %vm1066, %v851, 0.0
      %v1077 = vsel %vm1067, %v856, 0.0
      %v1078 = vsel %vm1068, %v859, 0.0
      %v1079 = vsel %vm1069, %v864, 0.0
      %v1080 = vsel %vm1070, %v867, 0.0
      %v1081 = vsel %vm498, %v1071, 0.0
      %v1082 = vsel %vm498, %v1072, 0.0
      %v1083 = vadd.f32 %v1081, %v1082
      %v1084 = vsel %vm498, %v1073, 0.0
      %v1085 = vadd.f32 %v1083, %v1084
      %v1086 = vsel %vm498, %v1074, 0.0
      %v1087 = vadd.f32 %v1085, %v1086
      %v1088 = vsel %vm498, %v1075, 0.0
      %v1089 = vadd.f32 %v1087, %v1088
      %v1090 = vsel %vm498, %v1076, 0.0
      %v1091 = vadd.f32 %v1089, %v1090
      %v1092 = vsel %vm498, %v1077, 0.0
      %v1093 = vadd.f32 %v1091, %v1092
      %v1094 = vsel %vm498, %v1078, 0.0
      %v1095 = vadd.f32 %v1093, %v1094
      %v1096 = vsel %vm498, %v1079, 0.0
      %v1097 = vadd.f32 %v1095, %v1096
      %v1098 = vsel %vm498, %v1080, 0.0
      %v1099 = vadd.f32 %v1097, %v1098
      %v1100 = vrot.slane %v1099, 4
      %v1101 = vadd.f32 %v1099, %v1100
      %v1102 = vrot.slane %v1101, 2
      %v1103 = vadd.f32 %v1101, %v1102
      %v1104 = vrot.slane %v1103, 1
      %v1105 = vadd.f32 %v1103, %v1104
      %v1106 = vmul.f32 %v1071, %v1071
      %v1107 = vmul.f32 %v1072, %v1072
      %v1108 = vmul.f32 %v1073, %v1073
      %v1109 = vmul.f32 %v1074, %v1074
      %v1110 = vmul.f32 %v1075, %v1075
      %v1111 = vmul.f32 %v1076, %v1076
      %v1112 = vmul.f32 %v1077, %v1077
      %v1113 = vmul.f32 %v1078, %v1078
      %v1114 = vmul.f32 %v1079, %v1079
      %v1115 = vmul.f32 %v1080, %v1080
      %v1116 = vsel %vm498, %v1106, 0.0
      %v1117 = vsel %vm498, %v1107, 0.0
      %v1118 = vadd.f32 %v1116, %v1117
      %v1119 = vsel %vm498, %v1108, 0.0
      %v1120 = vadd.f32 %v1118, %v1119
      %v1121 = vsel %vm498, %v1109, 0.0
      %v1122 = vadd.f32 %v1120, %v1121
      %v1123 = vsel %vm498, %v1110, 0.0
      %v1124 = vadd.f32 %v1122, %v1123
      %v1125 = vsel %vm498, %v1111, 0.0
      %v1126 = vadd.f32 %v1124, %v1125
      %v1127 = vsel %vm498, %v1112, 0.0
      %v1128 = vadd.f32 %v1126, %v1127
      %v1129 = vsel %vm498, %v1113, 0.0
      %v1130 = vadd.f32 %v1128, %v1129
      %v1131 = vsel %vm498, %v1114, 0.0
      %v1132 = vadd.f32 %v1130, %v1131
      %v1133 = vsel %vm498, %v1115, 0.0
      %v1134 = vadd.f32 %v1132, %v1133
      %v1135 = vrot.slane %v1134, 4
      %v1136 = vadd.f32 %v1134, %v1135
      %v1137 = vrot.slane %v1136, 2
      %v1138 = vadd.f32 %v1136, %v1137
      %v1139 = vrot.slane %v1138, 1
      %v1140 = vadd.f32 %v1138, %v1139
      %vm1141 = vcmask 1040384
      %v1142 = vsel %vm1141, %v1105, %v1140
      %vm1143 = vcmask 517120
      %1144 = vst.msk [vmem:[%s181] sm:$0x3] %vm1143, %v1142
      %v1145 = vpack.c.bf16 %v835, %v832
      %v1146 = vpack.c.bf16 %v843, %v840
      %v1147 = vpack.c.bf16 %v851, %v848
      %v1148 = vpack.c.bf16 %v859, %v856
      %v1149 = vpack.c.bf16 %v867, %v864
      %v1155 = vunpack.c.l.b16 %v1145
      %v1156 = vunpack.c.h.b16 %v1145
      %v1157 = vunpack.c.l.b16 %v1146
      %v1158 = vunpack.c.h.b16 %v1146
      %v1159 = vunpack.c.l.b16 %v1147
      %v1160 = vunpack.c.h.b16 %v1147
      %v1161 = vunpack.c.l.b16 %v1148
      %v1162 = vunpack.c.h.b16 %v1148
      %v1163 = vunpack.c.l.b16 %v1149
      %v1164 = vunpack.c.h.b16 %v1149
      %v1165 = vpack.c.b16 %v1155, %v1155
      %v1166 = vpack.c.b16 %v1156, %v1156
      %v1167 = vpack.c.b16 %v1157, %v1157
      %v1168 = vpack.c.b16 %v1158, %v1158
      %v1169 = vpack.c.b16 %v1159, %v1159
      %v1170 = vpack.c.b16 %v1160, %v1160
      %v1171 = vpack.c.b16 %v1161, %v1161
      %v1172 = vpack.c.b16 %v1162, %v1162
      %v1173 = vpack.c.b16 %v1163, %v1163
      %v1174 = vpack.c.b16 %v1164, %v1164
      %vm1185 = vcmask 519168
      %1186 = vst.msk [vmem:[%s177] sm:$0xf] %vm1185, %v1165
      %1187 = vst.msk [vmem:[%s177 + $0x4] sm:$0xf] %vm1185, %v1166
      %1188 = vst.msk [vmem:[%s177 + $0x8] sm:$0xf] %vm1185, %v1167
      %1189 = vst.msk [vmem:[%s177 + $0xc] sm:$0xf] %vm1185, %v1168
      %1190 = vst.msk [vmem:[%s177 + $0x10] sm:$0xf] %vm1185, %v1169
      %1191 = vst.msk [vmem:[%s177 + $0x14] sm:$0xf] %vm1185, %v1170
      %1192 = vst.msk [vmem:[%s177 + $0x18] sm:$0xf] %vm1185, %v1171
      %1193 = vst.msk [vmem:[%s177 + $0x1c] sm:$0xf] %vm1185, %v1172
      %1194 = vst.msk [vmem:[%s177 + $0x20] sm:$0xf] %vm1185, %v1173
      %1195 = vst.msk [vmem:[%s177 + $0x24] sm:$0xf] %vm1185, %v1174
      %p1196 = scmp.lt.s32.totalorder %s15, 1
      %s1197 = scalar_select %p1196, %s15, 1
      %s1198 = smul.addr %s1197, 10
      %s1199 = smul.addr %s1198, 4
      %s1200 = scalar_lea.vmem %s2, %s1199
      %p1201 = scmp.lt.s32.totalorder %s15, 1
      %s1202 = scalar_select %p1201, %s15, 1
      %s1203 = smul.addr %s1202, 2
      %s1204 = scalar_lea.vmem %s3, %s1203
      // Predicated region
      $region29: #{generator_forward.7} parent=27 // pred_check
        %p1205 = pneg %p80
      $region30: #{generator_forward.7} parent=27 // pred_check_branch
        %1207 = sbr.rel (%p1205) target = $region32
      $region31: #{generator_forward.7} parent=27 // pred_region
        _
      $region32: #{generator_forward.7} parent=27 // pred_fallthru
        _
      // Predicated region
      $region33: #{generator_forward.7} parent=27 // pred_check
        %p1208 = pneg %p106
      $region34: #{generator_forward.7} parent=27 // pred_check_branch
        %1210 = sbr.rel (%p1208) target = $region36
      $region35: #{generator_forward.7} parent=27 // pred_region
        _
      $region36: #{generator_forward.7} parent=27 // pred_fallthru
        _
    $region28: #{generator_forward.7} parent=5 // pred_fallthru
      _
    %p1211 = scmp.le.s32.totalorder 2, %s10
    // Predicated region
    $region37: #{generator_forward.7} parent=5 // pred_check
      %p1212 = pneg %p1211
    $region38: #{generator_forward.7} parent=5 // pred_check_branch
      %1214 = sbr.rel (%p1212) target = $region40
    $region39: #{generator_forward.7} parent=5 // pred_region
      %s1215 = ssub.s32 %s10, 2
      // Predicated region
      $region41: #{generator_forward.7} parent=39 // pred_check
        %p1216 = pneg %p86
      $region42: #{generator_forward.7} parent=39 // pred_check_branch
        %1218 = sbr.rel (%p1216) target = $region44
      $region43: #{generator_forward.7} parent=39 // pred_region
        %p1219 = scmp.lt.s32.totalorder %s16, 1
        %s1220 = scalar_select %p1219, %s16, 1
        %s1221 = smul.addr %s1220, 10
        %s1222 = smul.addr %s1221, 4
        %s1223 = scalar_lea.vmem %s2, %s1222
      $region44: #{generator_forward.7} parent=39 // pred_fallthru
        _
      // Predicated region
      $region45: #{generator_forward.7} parent=39 // pred_check
        %p1224 = pneg %p112
      $region46: #{generator_forward.7} parent=39 // pred_check_branch
        %1226 = sbr.rel (%p1224) target = $region48
      $region47: #{generator_forward.7} parent=39 // pred_region
        %p1227 = scmp.lt.s32.totalorder %s16, 1
        %s1228 = scalar_select %p1227, %s16, 1
        %s1229 = smul.addr %s1228, 2
        %s1230 = scalar_lea.vmem %s3, %s1229
      $region48: #{generator_forward.7} parent=39 // pred_fallthru
        _
    $region40: #{generator_forward.7} parent=5 // pred_fallthru
      _
  $region6: #{generator_forward.7} parent=0 // loop_footer
    %s14 = sadd.s32 1, %s10
  $region7: #{generator_forward.7} parent=0 // loop_footer_branch
    %9 = sbr.rel target = $region3
  $region8: #{generator_forward.7} parent=0 // loop_exit
    _

// kernel: squeeze.126
$region0: #{squeeze.126}
  %s0 = inlined_call_operand.vmem [shape: f32[32], index: 0, kind: input, shape index: {}]
  %s1 = inlined_call_operand.vmem [shape: f32[4,8], index: 1, kind: output, shape index: {}]
  $region1: #{squeeze.126} parent=0
    #allocation0 [shape = 'u8[4096]{0}', space=vmem, size = 0x1000, scoped, tag = 'scoped mem for output reshape']
    #allocation1 [shape = 'u8[4096]{0}', space=vmem, size = 0x1000, scoped, tag = 'scoped mem for input reshape']
    %s3 = sshllo.u32 0, 1
    %v4 = vld [vmem:[%s0] sm:%s3]
    %5 = vst [vmem:[#allocation1] sm:%s3] %v4
    %v6 = vld [vmem:[#allocation1] sm:$0x1]
    %vm7 = vcmask 64512
    %8 = vst.msk [vmem:[#allocation0] sm:$0x1] %vm7, %v6
    %v9 = vld [vmem:[#allocation1] sm:$0x1]
    %10 = vrot.lane.b32.xlu0 %v9, 120
    %v11 = vpop.permute.xlu0 %10
    %vm12 = vcmask 64512
    %s13 = scalar_lea.vmem [#allocation0], 1
    %14 = vst.msk [vmem:[%s13] sm:$0x1] %vm12, %v11
    %v15 = vld [vmem:[#allocation1] sm:$0x1]
    %16 = vrot.lane.b32.xlu0 %v15, 112
    %v17 = vpop.permute.xlu0 %16
    %vm18 = vcmask 64512
    %s19 = scalar_lea.vmem [#allocation0], 2
    %20 = vst.msk [vmem:[%s19] sm:$0x1] %vm18, %v17
    %v21 = vld [vmem:[#allocation1] sm:$0x1]
    %22 = vrot.lane.b32.xlu0 %v21, 104
    %v23 = vpop.permute.xlu0 %22
    %vm24 = vcmask 64512
    %s25 = scalar_lea.vmem [#allocation0], 3
    %26 = vst.msk [vmem:[%s25] sm:$0x1] %vm24, %v23
    %s28 = sshllo.u32 0, 4
    %v30 = vld [vmem:[#allocation0] sm:%s28]
    %s31 = sshllo.u32 0, 4
    %32 = vst [vmem:[%s1] sm:%s31] %v30

// kernel: generator_forward.8
$region0: #{generator_forward.8}
  #allocation0 [shape = 'u32[]', space=smem, size = 0x4, offset = 0x4, fixed_abs, tag = 'smem constant byte address 0x4 - core index']
  #allocation1 [shape = 'u32[144,128]{1,0:T(1,128)}', space=vmem, size = 0x12000, scoped, tag = 'internal scratch']
  %s0 = inlined_call_operand.vmem [shape: bf16[2,342,16], index: 0, kind: input, shape index: {}]
  %s1 = inlined_call_operand.vmem [shape: bf16[144,32], index: 1, kind: input, shape index: {}]
  %s2 = inlined_call_operand.vmem [shape: bf16[2,288,32], index: 2, kind: output, shape index: {0}]
  %s3 = inlined_call_operand.vmem [shape: f32[2,2,32], index: 3, kind: output, shape index: {1}]
  %4 = xla_tuple %s2, %s3
  %s5 = sld [smem:[#allocation0]]
  $region49: #{generator_forward.8} parent=0
    _
  %s7 = ssub.s32 1, %s5
  %s8 = scalar_select 0, %s7, %s5
  loop: start=0, step=1, limit=4
  $region2: #{generator_forward.8} parent=0 // loop_pre_header
    _
  $region3: #{generator_forward.8} parent=0 // loop_header
    %s10 = sphi 0, %s14
    %p11 = scmp.ge.s32.totalorder %s10, 4
    %s20 = sphi 0, %s22
    %s23 = sphi 0, %s20
    %s24 = sphi 0, %s23
    %s40 = sphi 0, %s24
    %s44 = sphi 0, %s44
    %s46 = sphi 0, %s44
    %s47 = sphi 0, %s46
    %s61 = sphi 0, %s47
    %s67 = sphi 0, %s69
    %s70 = sphi 0, %s67
    %s71 = sphi 0, %s70
    %s87 = sphi 0, %s71
    %s93 = sphi 0, %s95
    %s96 = sphi 0, %s93
    %s97 = sphi 0, %s96
    %s113 = sphi 0, %s97
  $region4: #{generator_forward.8} parent=0 // loop_header_branch
    %13 = sbr.rel (%p11) target = $region8
  $region5: #{generator_forward.8} parent=0 // loop_body
    %s15 = ssub.s32 %s10, 1
    %s16 = ssub.s32 %s10, 2
    %s17 = sadd.s32 %s10, 1
    %s18 = ssub.s32 %s10, %s17
    %p19 = scmp.eq.s32.totalorder %s18, 0
    %s21 = sadd.s32 %s20, 1
    %s22 = scalar_select %p19, %s20, %s21
    %p25 = pneg %p19
    %p26 = scmp.eq.s32.totalorder %s10, 1
    %p27 = por %p25, %p26
    %p28 = scmp.ne.s32.totalorder %s20, %s23
    %p29 = scmp.eq.s32.totalorder %s10, 0
    %p30 = por %p28, %p29
    %p31 = scmp.ne.s32.totalorder %s20, %s23
    %p32 = scmp.eq.s32.totalorder %s15, 1
    %p33 = por %p31, %p32
    %p34 = scmp.ne.s32.totalorder %s23, %s24
    %p35 = scmp.eq.s32.totalorder %s15, 0
    %p36 = por %p34, %p35
    %p37 = scmp.ne.s32.totalorder %s23, %s24
    %p38 = scmp.eq.s32.totalorder %s16, 1
    %p39 = por %p37, %p38
    %p41 = scmp.ne.s32.totalorder %s24, %s40
    %p42 = scmp.eq.s32.totalorder %s16, 0
    %p43 = por %p41, %p42
    %s45 = sadd.s32 %s44, 1
    %p48 = scmp.eq.s32.totalorder %s10, 1
    %p49 = scmp.ne.s32.totalorder %s44, %s46
    %p50 = scmp.eq.s32.totalorder %s10, 0
    %p51 = por %p49, %p50
    %p52 = scmp.ne.s32.totalorder %s44, %s46
    %p53 = scmp.eq.s32.totalorder %s15, 1
    %p54 = por %p52, %p53
    %p55 = scmp.ne.s32.totalorder %s46, %s47
    %p56 = scmp.eq.s32.totalorder %s15, 0
    %p57 = por %p55, %p56
    %p58 = scmp.ne.s32.totalorder %s46, %s47
    %p59 = scmp.eq.s32.totalorder %s16, 1
    %p60 = por %p58, %p59
    %p62 = scmp.ne.s32.totalorder %s47, %s61
    %p63 = scmp.eq.s32.totalorder %s16, 0
    %p64 = por %p62, %p63
    %s65 = ssub.s32 %s10, %s17
    %p66 = scmp.eq.s32.totalorder %s65, 0
    %s68 = sadd.s32 %s67, 1
    %s69 = scalar_select %p66, %s67, %s68
    %p72 = pneg %p66
    %p73 = scmp.eq.s32.totalorder %s10, 1
    %p74 = por %p72, %p73
    %p75 = scmp.ne.s32.totalorder %s67, %s70
    %p76 = scmp.eq.s32.totalorder %s10, 0
    %p77 = por %p75, %p76
    %p78 = scmp.ne.s32.totalorder %s67, %s70
    %p79 = scmp.eq.s32.totalorder %s15, 1
    %p80 = por %p78, %p79
    %p81 = scmp.ne.s32.totalorder %s70, %s71
    %p82 = scmp.eq.s32.totalorder %s15, 0
    %p83 = por %p81, %p82
    %p84 = scmp.ne.s32.totalorder %s70, %s71
    %p85 = scmp.eq.s32.totalorder %s16, 1
    %p86 = por %p84, %p85
    %p88 = scmp.ne.s32.totalorder %s71, %s87
    %p89 = scmp.eq.s32.totalorder %s16, 0
    %p90 = por %p88, %p89
    %s91 = ssub.s32 %s10, %s17
    %p92 = scmp.eq.s32.totalorder %s91, 0
    %s94 = sadd.s32 %s93, 1
    %s95 = scalar_select %p92, %s93, %s94
    %p98 = pneg %p92
    %p99 = scmp.eq.s32.totalorder %s10, 1
    %p100 = por %p98, %p99
    %p101 = scmp.ne.s32.totalorder %s93, %s96
    %p102 = scmp.eq.s32.totalorder %s10, 0
    %p103 = por %p101, %p102
    %p104 = scmp.ne.s32.totalorder %s93, %s96
    %p105 = scmp.eq.s32.totalorder %s15, 1
    %p106 = por %p104, %p105
    %p107 = scmp.ne.s32.totalorder %s96, %s97
    %p108 = scmp.eq.s32.totalorder %s15, 0
    %p109 = por %p107, %p108
    %p110 = scmp.ne.s32.totalorder %s96, %s97
    %p111 = scmp.eq.s32.totalorder %s16, 1
    %p112 = por %p110, %p111
    %p114 = scmp.ne.s32.totalorder %s97, %s113
    %p115 = scmp.eq.s32.totalorder %s16, 0
    %p116 = por %p114, %p115
    %p117 = scmp.le.s32.totalorder 1, %s10
    %p118 = scmp.lt.s32.totalorder %s10, 3
    %p119 = pnand %p117, %p118
    %p120 = pneg %p119
    // Predicated region
    $region9: #{generator_forward.8} parent=5 // pred_check
      _
    $region10: #{generator_forward.8} parent=5 // pred_check_branch
      %122 = sbr.rel (%p119) target = $region12
    $region11: #{generator_forward.8} parent=5 // pred_region
      %s123 = ssub.s32 %s10, 1
      // Predicated region
      $region13: #{generator_forward.8} parent=11 // pred_check
        %p124 = pneg %p57
      $region14: #{generator_forward.8} parent=11 // pred_check_branch
        %126 = sbr.rel (%p124) target = $region16
      $region15: #{generator_forward.8} parent=11 // pred_region
        _
      $region16: #{generator_forward.8} parent=11 // pred_fallthru
        _
    $region12: #{generator_forward.8} parent=5 // pred_fallthru
      _
    %p127 = scmp.lt.s32.totalorder %s10, 2
    // Predicated region
    $region17: #{generator_forward.8} parent=5 // pred_check
      %p128 = pneg %p127
    $region18: #{generator_forward.8} parent=5 // pred_check_branch
      %130 = sbr.rel (%p128) target = $region20
    $region19: #{generator_forward.8} parent=5 // pred_region
      // Predicated region
      $region21: #{generator_forward.8} parent=19 // pred_check
        %p131 = pneg %p30
      $region22: #{generator_forward.8} parent=19 // pred_check_branch
        %133 = sbr.rel (%p131) target = $region24
      $region23: #{generator_forward.8} parent=19 // pred_region
        %p134 = scmp.lt.s32.totalorder %s10, 1
        %s135 = scalar_select %p134, %s10, 1
        %s136 = smul.addr %s135, 43
        %s137 = smul.addr %s136, 4
        %s138 = scalar_lea.vmem %s0, %s137
      $region24: #{generator_forward.8} parent=19 // pred_fallthru
        _
    $region20: #{generator_forward.8} parent=5 // pred_fallthru
      _
    %p139 = scmp.le.s32.totalorder 1, %s10
    %p140 = scmp.lt.s32.totalorder %s10, 3
    %p141 = pnand %p139, %p140
    %p142 = pneg %p141
    // Predicated region
    $region25: #{generator_forward.8} parent=5 // pred_check
      _
    $region26: #{generator_forward.8} parent=5 // pred_check_branch
      %144 = sbr.rel (%p141) target = $region28
    $region27: #{generator_forward.8} parent=5 // pred_region
      %s145 = ssub.s32 %s10, 1
      %p146 = scmp.lt.s32.totalorder %s15, 1
      %s147 = scalar_select %p146, %s15, 1
      %s148 = smul.addr %s147, 43
      %s149 = smul.addr %s148, 4
      %s150 = scalar_lea.vmem %s0, %s149
      %p151 = pneg %p36
      %p152 = pneg %p33
      %p153 = pneg %p57
      %p154 = pneg %p54
      %p155 = pneg %p83
      %p156 = pneg %p80
      %p157 = scmp.lt.s32.totalorder %s15, 1
      %s158 = scalar_select %p157, %s15, 1
      %s159 = smul.addr %s158, 36
      %s160 = smul.addr %s159, 4
      %s161 = scalar_lea.vmem %s2, %s160
      %p162 = pneg %p109
      %p163 = pneg %p106
      %p164 = scmp.lt.s32.totalorder %s15, 1
      %s165 = scalar_select %p164, %s15, 1
      %s166 = smul.addr %s165, 2
      %s167 = scalar_lea.vmem %s3, %s166
      %p168 = scmp.lt.s32.totalorder %s15, 1
      %s169 = scalar_select %p168, %s15, 1
      %s170 = smul.addr %s169, 43
      %s171 = smul.addr %s170, 4
      %s172 = scalar_lea.vmem %s0, %s171
      %p173 = scmp.lt.s32.totalorder %s15, 1
      %s174 = scalar_select %p173, %s15, 1
      %s175 = smul.addr %s174, 36
      %s176 = smul.addr %s175, 4
      %s177 = scalar_lea.vmem %s2, %s176
      %p178 = scmp.lt.s32.totalorder %s15, 1
      %s179 = scalar_select %p178, %s15, 1
      %s180 = smul.addr %s179, 2
      %s181 = scalar_lea.vmem %s3, %s180
      %v183 = vld [vmem:[%s172] sm:$0xf]
      %v184 = vld [vmem:[%s172 + $0x4] sm:$0xf]
      %v185 = vld [vmem:[%s172 + $0x8] sm:$0xf]
      %v186 = vld [vmem:[%s172 + $0xc] sm:$0xf]
      %v187 = vld [vmem:[%s172 + $0x10] sm:$0xf]
      %v188 = vld [vmem:[%s172 + $0x14] sm:$0xf]
      %v189 = vld [vmem:[%s172 + $0x18] sm:$0xf]
      %v190 = vld [vmem:[%s172 + $0x1c] sm:$0xf]
      %v191 = vld [vmem:[%s172 + $0x20] sm:$0xf]
      %v192 = vld [vmem:[%s172 + $0x24] sm:$0xf]
      %v193 = vld [vmem:[%s172 + $0x28] sm:$0xf]
      %v194 = vld [vmem:[%s172 + $0x2c] sm:$0xf]
      %v195 = vld [vmem:[%s172 + $0x30] sm:$0xf]
      %v196 = vld [vmem:[%s172 + $0x34] sm:$0xf]
      %v197 = vld [vmem:[%s172 + $0x38] sm:$0xf]
      %v198 = vld [vmem:[%s172 + $0x3c] sm:$0xf]
      %v199 = vld [vmem:[%s172 + $0x40] sm:$0xf]
      %v200 = vld [vmem:[%s172 + $0x44] sm:$0xf]
      %v201 = vld [vmem:[%s172 + $0x48] sm:$0xf]
      %v202 = vld [vmem:[%s172 + $0x4c] sm:$0xf]
      %v203 = vld [vmem:[%s172 + $0x50] sm:$0xf]
      %v204 = vld [vmem:[%s172 + $0x54] sm:$0xf]
      %v205 = vld [vmem:[%s172 + $0x58] sm:$0xf]
      %v206 = vld [vmem:[%s172 + $0x5c] sm:$0xf]
      %v207 = vld [vmem:[%s172 + $0x60] sm:$0xf]
      %v208 = vld [vmem:[%s172 + $0x64] sm:$0xf]
      %v209 = vld [vmem:[%s172 + $0x68] sm:$0xf]
      %v210 = vld [vmem:[%s172 + $0x6c] sm:$0xf]
      %v211 = vld [vmem:[%s172 + $0x70] sm:$0xf]
      %v212 = vld [vmem:[%s172 + $0x74] sm:$0xf]
      %v213 = vld [vmem:[%s172 + $0x78] sm:$0xf]
      %v214 = vld [vmem:[%s172 + $0x7c] sm:$0xf]
      %v215 = vld [vmem:[%s172 + $0x80] sm:$0xf]
      %v216 = vld [vmem:[%s172 + $0x84] sm:$0xf]
      %v217 = vld [vmem:[%s172 + $0x88] sm:$0xf]
      %v218 = vld [vmem:[%s172 + $0x8c] sm:$0xf]
      %v219 = vld [vmem:[%s172 + $0x90] sm:$0xf]
      %v220 = vld [vmem:[%s172 + $0x94] sm:$0xf]
      %v221 = vld [vmem:[%s172 + $0x98] sm:$0xf]
      %v222 = vld [vmem:[%s172 + $0x9c] sm:$0xf]
      %v223 = vld [vmem:[%s172 + $0xa0] sm:$0xf]
      %v260 = vunpack.c.l.b16 %v183
      %v261 = vunpack.c.l.b16 %v184
      %v262 = vunpack.c.l.b16 %v185
      %v263 = vunpack.c.l.b16 %v186
      %v264 = vunpack.c.l.b16 %v187
      %v265 = vunpack.c.l.b16 %v188
      %v266 = vunpack.c.l.b16 %v189
      %v267 = vunpack.c.l.b16 %v190
      %v268 = vunpack.c.l.b16 %v191
      %v269 = vunpack.c.l.b16 %v192
      %v270 = vunpack.c.l.b16 %v193
      %v271 = vunpack.c.l.b16 %v194
      %v272 = vunpack.c.l.b16 %v195
      %v273 = vunpack.c.l.b16 %v196
      %v274 = vunpack.c.l.b16 %v197
      %v275 = vunpack.c.l.b16 %v198
      %v276 = vunpack.c.l.b16 %v199
      %v277 = vunpack.c.l.b16 %v200
      %v278 = vunpack.c.l.b16 %v201
      %v279 = vunpack.c.l.b16 %v202
      %v280 = vunpack.c.l.b16 %v203
      %v281 = vunpack.c.l.b16 %v204
      %v282 = vunpack.c.l.b16 %v205
      %v283 = vunpack.c.l.b16 %v206
      %v284 = vunpack.c.l.b16 %v207
      %v285 = vunpack.c.l.b16 %v208
      %v286 = vunpack.c.l.b16 %v209
      %v287 = vunpack.c.l.b16 %v210
      %v288 = vunpack.c.l.b16 %v211
      %v289 = vunpack.c.l.b16 %v212
      %v290 = vunpack.c.l.b16 %v213
      %v291 = vunpack.c.l.b16 %v214
      %v292 = vunpack.c.l.b16 %v215
      %v293 = vunpack.c.l.b16 %v216
      %v294 = vunpack.c.l.b16 %v217
      %v295 = vunpack.c.l.b16 %v218
      %v296 = vpack.c.b16 %v261, %v260
      %v297 = vpack.c.b16 %v263, %v262
      %v298 = vpack.c.b16 %v265, %v264
      %v299 = vpack.c.b16 %v267, %v266
      %v300 = vpack.c.b16 %v269, %v268
      %v301 = vpack.c.b16 %v271, %v270
      %v302 = vpack.c.b16 %v273, %v272
      %v303 = vpack.c.b16 %v275, %v274
      %v304 = vpack.c.b16 %v277, %v276
      %v305 = vpack.c.b16 %v279, %v278
      %v306 = vpack.c.b16 %v281, %v280
      %v307 = vpack.c.b16 %v283, %v282
      %v308 = vpack.c.b16 %v285, %v284
      %v309 = vpack.c.b16 %v287, %v286
      %v310 = vpack.c.b16 %v289, %v288
      %v311 = vpack.c.b16 %v291, %v290
      %v312 = vpack.c.b16 %v293, %v292
      %v313 = vpack.c.b16 %v295, %v294
      %v315 = vunpack.c.l.b16 %v219
      %v316 = vpack.c.b16 %v315, %v315
      %vm317 = vsmask.f32 7424
      %v319 = vshrl.u32 %v296, 16
      %v321 = vshll.u32 %v296, 16
      %v323 = vrot.slane %v321, 1
      %v324 = vor.u32 %v319, %v323
      %v326 = vshll.u32 %v297, 16
      %v328 = vrot.slane %v326, 1
      %v329 = vsel %vm317, %v324, %v328
      %v330 = vshrl.u32 %v297, 16
      %v332 = vor.u32 %v330, %v328
      %v334 = vshll.u32 %v298, 16
      %v336 = vrot.slane %v334, 1
      %v337 = vsel %vm317, %v332, %v336
      %v338 = vshrl.u32 %v298, 16
      %v340 = vor.u32 %v338, %v336
      %v342 = vshll.u32 %v299, 16
      %v344 = vrot.slane %v342, 1
      %v345 = vsel %vm317, %v340, %v344
      %v346 = vshrl.u32 %v299, 16
      %v348 = vor.u32 %v346, %v344
      %v350 = vshll.u32 %v300, 16
      %v352 = vrot.slane %v350, 1
      %v353 = vsel %vm317, %v348, %v352
      %v354 = vshrl.u32 %v300, 16
      %v356 = vor.u32 %v354, %v352
      %v358 = vshll.u32 %v301, 16
      %v360 = vrot.slane %v358, 1
      %v361 = vsel %vm317, %v356, %v360
      %v362 = vshrl.u32 %v301, 16
      %v364 = vor.u32 %v362, %v360
      %v366 = vshll.u32 %v302, 16
      %v368 = vrot.slane %v366, 1
      %v369 = vsel %vm317, %v364, %v368
      %v370 = vshrl.u32 %v302, 16
      %v372 = vor.u32 %v370, %v368
      %v374 = vshll.u32 %v303, 16
      %v376 = vrot.slane %v374, 1
      %v377 = vsel %vm317, %v372, %v376
      %v378 = vshrl.u32 %v303, 16
      %v380 = vor.u32 %v378, %v376
      %v382 = vshll.u32 %v304, 16
      %v384 = vrot.slane %v382, 1
      %v385 = vsel %vm317, %v380, %v384
      %v386 = vshrl.u32 %v304, 16
      %v388 = vor.u32 %v386, %v384
      %v390 = vshll.u32 %v305, 16
      %v392 = vrot.slane %v390, 1
      %v393 = vsel %vm317, %v388, %v392
      %v394 = vshrl.u32 %v305, 16
      %v396 = vor.u32 %v394, %v392
      %v398 = vshll.u32 %v306, 16
      %v400 = vrot.slane %v398, 1
      %v401 = vsel %vm317, %v396, %v400
      %v402 = vshrl.u32 %v306, 16
      %v404 = vor.u32 %v402, %v400
      %v406 = vshll.u32 %v307, 16
      %v408 = vrot.slane %v406, 1
      %v409 = vsel %vm317, %v404, %v408
      %v410 = vshrl.u32 %v307, 16
      %v412 = vor.u32 %v410, %v408
      %v414 = vshll.u32 %v308, 16
      %v416 = vrot.slane %v414, 1
      %v417 = vsel %vm317, %v412, %v416
      %v418 = vshrl.u32 %v308, 16
      %v420 = vor.u32 %v418, %v416
      %v422 = vshll.u32 %v309, 16
      %v424 = vrot.slane %v422, 1
      %v425 = vsel %vm317, %v420, %v424
      %v426 = vshrl.u32 %v309, 16
      %v428 = vor.u32 %v426, %v424
      %v430 = vshll.u32 %v310, 16
      %v432 = vrot.slane %v430, 1
      %v433 = vsel %vm317, %v428, %v432
      %v434 = vshrl.u32 %v310, 16
      %v436 = vor.u32 %v434, %v432
      %v438 = vshll.u32 %v311, 16
      %v440 = vrot.slane %v438, 1
      %v441 = vsel %vm317, %v436, %v440
      %v442 = vshrl.u32 %v311, 16
      %v444 = vor.u32 %v442, %v440
      %v446 = vshll.u32 %v312, 16
      %v448 = vrot.slane %v446, 1
      %v449 = vsel %vm317, %v444, %v448
      %v450 = vshrl.u32 %v312, 16
      %v452 = vor.u32 %v450, %v448
      %v454 = vshll.u32 %v313, 16
      %v456 = vrot.slane %v454, 1
      %v457 = vsel %vm317, %v452, %v456
      %v458 = vshrl.u32 %v313, 16
      %v460 = vor.u32 %v458, %v456
      %v462 = vshll.u32 %v316, 16
      %v464 = vrot.slane %v462, 1
      %v465 = vsel %vm317, %v460, %v464
      %466 = vrot.lane.b32.xlu0 %v329, 16
      %v467 = vpop.permute.xlu0 %466
      %468 = vrot.lane.b32.xlu0 %v337, 16
      %v469 = vpop.permute.xlu0 %468
      %470 = vrot.lane.b32.xlu0 %v345, 16
      %v471 = vpop.permute.xlu0 %470
      %472 = vrot.lane.b32.xlu0 %v353, 16
      %v473 = vpop.permute.xlu0 %472
      %474 = vrot.lane.b32.xlu0 %v361, 16
      %v475 = vpop.permute.xlu0 %474
      %476 = vrot.lane.b32.xlu0 %v369, 16
      %v477 = vpop.permute.xlu0 %476
      %478 = vrot.lane.b32.xlu0 %v377, 16
      %v479 = vpop.permute.xlu0 %478
      %480 = vrot.lane.b32.xlu0 %v385, 16
      %v481 = vpop.permute.xlu0 %480
      %482 = vrot.lane.b32.xlu0 %v393, 16
      %v483 = vpop.permute.xlu0 %482
      %484 = vrot.lane.b32.xlu0 %v401, 16
      %v485 = vpop.permute.xlu0 %484
      %486 = vrot.lane.b32.xlu0 %v409, 16
      %v487 = vpop.permute.xlu0 %486
      %488 = vrot.lane.b32.xlu0 %v417, 16
      %v489 = vpop.permute.xlu0 %488
      %490 = vrot.lane.b32.xlu0 %v425, 16
      %v491 = vpop.permute.xlu0 %490
      %492 = vrot.lane.b32.xlu0 %v433, 16
      %v493 = vpop.permute.xlu0 %492
      %494 = vrot.lane.b32.xlu0 %v441, 16
      %v495 = vpop.permute.xlu0 %494
      %496 = vrot.lane.b32.xlu0 %v449, 16
      %v497 = vpop.permute.xlu0 %496
      %498 = vrot.lane.b32.xlu0 %v457, 16
      %v499 = vpop.permute.xlu0 %498
      %500 = vrot.lane.b32.xlu0 %v465, 16
      %v501 = vpop.permute.xlu0 %500
      %vm502 = vcmask 1046528
      %v503 = vrot.slane %v296, 1
      %v504 = vrot.slane %v297, 1
      %v505 = vsel %vm502, %v503, %v504
      %v506 = vrot.slane %v298, 1
      %v507 = vsel %vm502, %v504, %v506
      %v508 = vrot.slane %v299, 1
      %v509 = vsel %vm502, %v506, %v508
      %v510 = vrot.slane %v300, 1
      %v511 = vsel %vm502, %v508, %v510
      %v512 = vrot.slane %v301, 1
      %v513 = vsel %vm502, %v510, %v512
      %v514 = vrot.slane %v302, 1
      %v515 = vsel %vm502, %v512, %v514
      %v516 = vrot.slane %v303, 1
      %v517 = vsel %vm502, %v514, %v516
      %v518 = vrot.slane %v304, 1
      %v519 = vsel %vm502, %v516, %v518
      %v520 = vrot.slane %v305, 1
      %v521 = vsel %vm502, %v518, %v520
      %v522 = vrot.slane %v306, 1
      %v523 = vsel %vm502, %v520, %v522
      %v524 = vrot.slane %v307, 1
      %v525 = vsel %vm502, %v522, %v524
      %v526 = vrot.slane %v308, 1
      %v527 = vsel %vm502, %v524, %v526
      %v528 = vrot.slane %v309, 1
      %v529 = vsel %vm502, %v526, %v528
      %v530 = vrot.slane %v310, 1
      %v531 = vsel %vm502, %v528, %v530
      %v532 = vrot.slane %v311, 1
      %v533 = vsel %vm502, %v530, %v532
      %v534 = vrot.slane %v312, 1
      %v535 = vsel %vm502, %v532, %v534
      %v536 = vrot.slane %v313, 1
      %v537 = vsel %vm502, %v534, %v536
      %v538 = vrot.slane %v316, 1
      %v539 = vsel %vm502, %v536, %v538
      %540 = vrot.lane.b32.xlu0 %v505, 32
      %v541 = vpop.permute.xlu0 %540
      %542 = vrot.lane.b32.xlu0 %v507, 32
      %v543 = vpop.permute.xlu0 %542
      %544 = vrot.lane.b32.xlu0 %v509, 32
      %v545 = vpop.permute.xlu0 %544
      %546 = vrot.lane.b32.xlu0 %v511, 32
      %v547 = vpop.permute.xlu0 %546
      %548 = vrot.lane.b32.xlu0 %v513, 32
      %v549 = vpop.permute.xlu0 %548
      %550 = vrot.lane.b32.xlu0 %v515, 32
      %v551 = vpop.permute.xlu0 %550
      %552 = vrot.lane.b32.xlu0 %v517, 32
      %v553 = vpop.permute.xlu0 %552
      %554 = vrot.lane.b32.xlu0 %v519, 32
      %v555 = vpop.permute.xlu0 %554
      %556 = vrot.lane.b32.xlu0 %v521, 32
      %v557 = vpop.permute.xlu0 %556
      %558 = vrot.lane.b32.xlu0 %v523, 32
      %v559 = vpop.permute.xlu0 %558
      %560 = vrot.lane.b32.xlu0 %v525, 32
      %v561 = vpop.permute.xlu0 %560
      %562 = vrot.lane.b32.xlu0 %v527, 32
      %v563 = vpop.permute.xlu0 %562
      %564 = vrot.lane.b32.xlu0 %v529, 32
      %v565 = vpop.permute.xlu0 %564
      %566 = vrot.lane.b32.xlu0 %v531, 32
      %v567 = vpop.permute.xlu0 %566
      %568 = vrot.lane.b32.xlu0 %v533, 32
      %v569 = vpop.permute.xlu0 %568
      %570 = vrot.lane.b32.xlu0 %v535, 32
      %v571 = vpop.permute.xlu0 %570
      %572 = vrot.lane.b32.xlu0 %v537, 32
      %v573 = vpop.permute.xlu0 %572
      %574 = vrot.lane.b32.xlu0 %v539, 32
      %v575 = vpop.permute.xlu0 %574
      %v578 = vunpack.c.l.b16 %v220
      %v579 = vunpack.c.l.b16 %v221
      %v580 = vpack.c.b16 %v578, %v315
      %v581 = vpack.c.b16 %v579, %v579
      %v582 = vrot.slane %v580, 1
      %v583 = vsel %vm502, %v536, %v582
      %v584 = vrot.slane %v581, 1
      %v585 = vsel %vm502, %v582, %v584
      %586 = vrot.lane.b32.xlu0 %v507, 48
      %v587 = vpop.permute.xlu0 %586
      %588 = vrot.lane.b32.xlu0 %v509, 48
      %v589 = vpop.permute.xlu0 %588
      %590 = vrot.lane.b32.xlu0 %v511, 48
      %v591 = vpop.permute.xlu0 %590
      %592 = vrot.lane.b32.xlu0 %v513, 48
      %v593 = vpop.permute.xlu0 %592
      %594 = vrot.lane.b32.xlu0 %v515, 48
      %v595 = vpop.permute.xlu0 %594
      %596 = vrot.lane.b32.xlu0 %v517, 48
      %v597 = vpop.permute.xlu0 %596
      %598 = vrot.lane.b32.xlu0 %v519, 48
      %v599 = vpop.permute.xlu0 %598
      %600 = vrot.lane.b32.xlu0 %v521, 48
      %v601 = vpop.permute.xlu0 %600
      %602 = vrot.lane.b32.xlu0 %v523, 48
      %v603 = vpop.permute.xlu0 %602
      %604 = vrot.lane.b32.xlu0 %v525, 48
      %v605 = vpop.permute.xlu0 %604
      %606 = vrot.lane.b32.xlu0 %v527, 48
      %v607 = vpop.permute.xlu0 %606
      %608 = vrot.lane.b32.xlu0 %v529, 48
      %v609 = vpop.permute.xlu0 %608
      %610 = vrot.lane.b32.xlu0 %v531, 48
      %v611 = vpop.permute.xlu0 %610
      %612 = vrot.lane.b32.xlu0 %v533, 48
      %v613 = vpop.permute.xlu0 %612
      %614 = vrot.lane.b32.xlu0 %v535, 48
      %v615 = vpop.permute.xlu0 %614
      %616 = vrot.lane.b32.xlu0 %v537, 48
      %v617 = vpop.permute.xlu0 %616
      %618 = vrot.lane.b32.xlu0 %v583, 48
      %v619 = vpop.permute.xlu0 %618
      %620 = vrot.lane.b32.xlu0 %v585, 48
      %v621 = vpop.permute.xlu0 %620
      %vm622 = vsmask.f32 6400
      %v623 = vrot.slane %v330, 1
      %v624 = vrot.slane %v326, 2
      %v625 = vor.u32 %v623, %v624
      %v626 = vrot.slane %v338, 1
      %v627 = vrot.slane %v334, 2
      %v628 = vor.u32 %v626, %v627
      %v629 = vsel %vm622, %v625, %v628
      %v630 = vrot.slane %v346, 1
      %v631 = vrot.slane %v342, 2
      %v632 = vor.u32 %v630, %v631
      %v633 = vsel %vm622, %v628, %v632
      %v634 = vrot.slane %v354, 1
      %v635 = vrot.slane %v350, 2
      %v636 = vor.u32 %v634, %v635
      %v637 = vsel %vm622, %v632, %v636
      %v638 = vrot.slane %v362, 1
      %v639 = vrot.slane %v358, 2
      %v640 = vor.u32 %v638, %v639
      %v641 = vsel %vm622, %v636, %v640
      %v642 = vrot.slane %v370, 1
      %v643 = vrot.slane %v366, 2
      %v644 = vor.u32 %v642, %v643
      %v645 = vsel %vm622, %v640, %v644
      %v646 = vrot.slane %v378, 1
      %v647 = vrot.slane %v374, 2
      %v648 = vor.u32 %v646, %v647
      %v649 = vsel %vm622, %v644, %v648
      %v650 = vrot.slane %v386, 1
      %v651 = vrot.slane %v382, 2
      %v652 = vor.u32 %v650, %v651
      %v653 = vsel %vm622, %v648, %v652
      %v654 = vrot.slane %v394, 1
      %v655 = vrot.slane %v390, 2
      %v656 = vor.u32 %v654, %v655
      %v657 = vsel %vm622, %v652, %v656
      %v658 = vrot.slane %v402, 1
      %v659 = vrot.slane %v398, 2
      %v660 = vor.u32 %v658, %v659
      %v661 = vsel %vm622, %v656, %v660
      %v662 = vrot.slane %v410, 1
      %v663 = vrot.slane %v406, 2
      %v664 = vor.u32 %v662, %v663
      %v665 = vsel %vm622, %v660, %v664
      %v666 = vrot.slane %v418, 1
      %v667 = vrot.slane %v414, 2
      %v668 = vor.u32 %v666, %v667
      %v669 = vsel %vm622, %v664, %v668
      %v670 = vrot.slane %v426, 1
      %v671 = vrot.slane %v422, 2
      %v672 = vor.u32 %v670, %v671
      %v673 = vsel %vm622, %v668, %v672
      %v674 = vrot.slane %v434, 1
      %v675 = vrot.slane %v430, 2
      %v676 = vor.u32 %v674, %v675
      %v677 = vsel %vm622, %v672, %v676
      %v678 = vrot.slane %v442, 1
      %v679 = vrot.slane %v438, 2
      %v680 = vor.u32 %v678, %v679
      %v681 = vsel %vm622, %v676, %v680
      %v682 = vrot.slane %v450, 1
      %v683 = vrot.slane %v446, 2
      %v684 = vor.u32 %v682, %v683
      %v685 = vsel %vm622, %v680, %v684
      %v686 = vrot.slane %v458, 1
      %v687 = vrot.slane %v454, 2
      %v688 = vor.u32 %v686, %v687
      %v689 = vsel %vm622, %v684, %v688
      %v691 = vshrl.u32 %v580, 16
      %v693 = vrot.slane %v691, 1
      %v694 = vshll.u32 %v580, 16
      %v696 = vrot.slane %v694, 2
      %v697 = vor.u32 %v693, %v696
      %v698 = vsel %vm622, %v688, %v697
      %v700 = vshrl.u32 %v581, 16
      %v702 = vrot.slane %v700, 1
      %v703 = vshll.u32 %v581, 16
      %v705 = vrot.slane %v703, 2
      %v706 = vor.u32 %v702, %v705
      %v707 = vsel %vm622, %v697, %v706
      %708 = vrot.lane.b32.xlu0 %v629, 64
      %v709 = vpop.permute.xlu0 %708
      %710 = vrot.lane.b32.xlu0 %v633, 64
      %v711 = vpop.permute.xlu0 %710
      %712 = vrot.lane.b32.xlu0 %v637, 64
      %v713 = vpop.permute.xlu0 %712
      %714 = vrot.lane.b32.xlu0 %v641, 64
      %v715 = vpop.permute.xlu0 %714
      %716 = vrot.lane.b32.xlu0 %v645, 64
      %v717 = vpop.permute.xlu0 %716
      %718 = vrot.lane.b32.xlu0 %v649, 64
      %v719 = vpop.permute.xlu0 %718
      %720 = vrot.lane.b32.xlu0 %v653, 64
      %v721 = vpop.permute.xlu0 %720
      %722 = vrot.lane.b32.xlu0 %v657, 64
      %v723 = vpop.permute.xlu0 %722
      %724 = vrot.lane.b32.xlu0 %v661, 64
      %v725 = vpop.permute.xlu0 %724
      %726 = vrot.lane.b32.xlu0 %v665, 64
      %v727 = vpop.permute.xlu0 %726
      %728 = vrot.lane.b32.xlu0 %v669, 64
      %v729 = vpop.permute.xlu0 %728
      %730 = vrot.lane.b32.xlu0 %v673, 64
      %v731 = vpop.permute.xlu0 %730
      %732 = vrot.lane.b32.xlu0 %v677, 64
      %v733 = vpop.permute.xlu0 %732
      %734 = vrot.lane.b32.xlu0 %v681, 64
      %v735 = vpop.permute.xlu0 %734
      %736 = vrot.lane.b32.xlu0 %v685, 64
      %v737 = vpop.permute.xlu0 %736
      %738 = vrot.lane.b32.xlu0 %v689, 64
      %v739 = vpop.permute.xlu0 %738
      %740 = vrot.lane.b32.xlu0 %v698, 64
      %v741 = vpop.permute.xlu0 %740
      %742 = vrot.lane.b32.xlu0 %v707, 64
      %v743 = vpop.permute.xlu0 %742
      %vm744 = vcmask 1045504
      %v745 = vrot.slane %v297, 2
      %v746 = vrot.slane %v298, 2
      %v747 = vsel %vm744, %v745, %v746
      %v748 = vrot.slane %v299, 2
      %v749 = vsel %vm744, %v746, %v748
      %v750 = vrot.slane %v300, 2
      %v751 = vsel %vm744, %v748, %v750
      %v752 = vrot.slane %v301, 2
      %v753 = vsel %vm744, %v750, %v752
      %v754 = vrot.slane %v302, 2
      %v755 = vsel %vm744, %v752, %v754
      %v756 = vrot.slane %v303, 2
      %v757 = vsel %vm744, %v754, %v756
      %v758 = vrot.slane %v304, 2
      %v759 = vsel %vm744, %v756, %v758
      %v760 = vrot.slane %v305, 2
      %v761 = vsel %vm744, %v758, %v760
      %v762 = vrot.slane %v306, 2
      %v763 = vsel %vm744, %v760, %v762
      %v764 = vrot.slane %v307, 2
      %v765 = vsel %vm744, %v762, %v764
      %v766 = vrot.slane %v308, 2
      %v767 = vsel %vm744, %v764, %v766
      %v768 = vrot.slane %v309, 2
      %v769 = vsel %vm744, %v766, %v768
      %v770 = vrot.slane %v310, 2
      %v771 = vsel %vm744, %v768, %v770
      %v772 = vrot.slane %v311, 2
      %v773 = vsel %vm744, %v770, %v772
      %v774 = vrot.slane %v312, 2
      %v775 = vsel %vm744, %v772, %v774
      %v776 = vrot.slane %v313, 2
      %v777 = vsel %vm744, %v774, %v776
      %v778 = vrot.slane %v580, 2
      %v779 = vsel %vm744, %v776, %v778
      %v780 = vrot.slane %v581, 2
      %v781 = vsel %vm744, %v778, %v780
      %782 = vrot.lane.b32.xlu0 %v747, 80
      %v783 = vpop.permute.xlu0 %782
      %784 = vrot.lane.b32.xlu0 %v749, 80
      %v785 = vpop.permute.xlu0 %784
      %786 = vrot.lane.b32.xlu0 %v751, 80
      %v787 = vpop.permute.xlu0 %786
      %788 = vrot.lane.b32.xlu0 %v753, 80
      %v789 = vpop.permute.xlu0 %788
      %790 = vrot.lane.b32.xlu0 %v755, 80
      %v791 = vpop.permute.xlu0 %790
      %792 = vrot.lane.b32.xlu0 %v757, 80
      %v793 = vpop.permute.xlu0 %792
      %794 = vrot.lane.b32.xlu0 %v759, 80
      %v795 = vpop.permute.xlu0 %794
      %796 = vrot.lane.b32.xlu0 %v761, 80
      %v797 = vpop.permute.xlu0 %796
      %798 = vrot.lane.b32.xlu0 %v763, 80
      %v799 = vpop.permute.xlu0 %798
      %800 = vrot.lane.b32.xlu0 %v765, 80
      %v801 = vpop.permute.xlu0 %800
      %802 = vrot.lane.b32.xlu0 %v767, 80
      %v803 = vpop.permute.xlu0 %802
      %804 = vrot.lane.b32.xlu0 %v769, 80
      %v805 = vpop.permute.xlu0 %804
      %806 = vrot.lane.b32.xlu0 %v771, 80
      %v807 = vpop.permute.xlu0 %806
      %808 = vrot.lane.b32.xlu0 %v773, 80
      %v809 = vpop.permute.xlu0 %808
      %810 = vrot.lane.b32.xlu0 %v775, 80
      %v811 = vpop.permute.xlu0 %810
      %812 = vrot.lane.b32.xlu0 %v777, 80
      %v813 = vpop.permute.xlu0 %812
      %814 = vrot.lane.b32.xlu0 %v779, 80
      %v815 = vpop.permute.xlu0 %814
      %816 = vrot.lane.b32.xlu0 %v781, 80
      %v817 = vpop.permute.xlu0 %816
      %v820 = vunpack.c.l.b16 %v222
      %v821 = vunpack.c.l.b16 %v223
      %v822 = vpack.c.b16 %v820, %v579
      %v823 = vpack.c.b16 %v821, %v821
      %v824 = vrot.slane %v822, 2
      %v825 = vsel %vm744, %v778, %v824
      %v826 = vrot.slane %v823, 2
      %v827 = vsel %vm744, %v824, %v826
      %828 = vrot.lane.b32.xlu0 %v749, 96
      %v829 = vpop.permute.xlu0 %828
      %830 = vrot.lane.b32.xlu0 %v751, 96
      %v831 = vpop.permute.xlu0 %830
      %832 = vrot.lane.b32.xlu0 %v753, 96
      %v833 = vpop.permute.xlu0 %832
      %834 = vrot.lane.b32.xlu0 %v755, 96
      %v835 = vpop.permute.xlu0 %834
      %836 = vrot.lane.b32.xlu0 %v757, 96
      %v837 = vpop.permute.xlu0 %836
      %838 = vrot.lane.b32.xlu0 %v759, 96
      %v839 = vpop.permute.xlu0 %838
      %840 = vrot.lane.b32.xlu0 %v761, 96
      %v841 = vpop.permute.xlu0 %840
      %842 = vrot.lane.b32.xlu0 %v763, 96
      %v843 = vpop.permute.xlu0 %842
      %844 = vrot.lane.b32.xlu0 %v765, 96
      %v845 = vpop.permute.xlu0 %844
      %846 = vrot.lane.b32.xlu0 %v767, 96
      %v847 = vpop.permute.xlu0 %846
      %848 = vrot.lane.b32.xlu0 %v769, 96
      %v849 = vpop.permute.xlu0 %848
      %850 = vrot.lane.b32.xlu0 %v771, 96
      %v851 = vpop.permute.xlu0 %850
      %852 = vrot.lane.b32.xlu0 %v773, 96
      %v853 = vpop.permute.xlu0 %852
      %854 = vrot.lane.b32.xlu0 %v775, 96
      %v855 = vpop.permute.xlu0 %854
      %856 = vrot.lane.b32.xlu0 %v777, 96
      %v857 = vpop.permute.xlu0 %856
      %858 = vrot.lane.b32.xlu0 %v779, 96
      %v859 = vpop.permute.xlu0 %858
      %860 = vrot.lane.b32.xlu0 %v825, 96
      %v861 = vpop.permute.xlu0 %860
      %862 = vrot.lane.b32.xlu0 %v827, 96
      %v863 = vpop.permute.xlu0 %862
      %vm864 = vsmask.f32 5376
      %v865 = vrot.slane %v338, 2
      %v866 = vrot.slane %v334, 3
      %v867 = vor.u32 %v865, %v866
      %v868 = vrot.slane %v346, 2
      %v869 = vrot.slane %v342, 3
      %v870 = vor.u32 %v868, %v869
      %v871 = vsel %vm864, %v867, %v870
      %v872 = vrot.slane %v354, 2
      %v873 = vrot.slane %v350, 3
      %v874 = vor.u32 %v872, %v873
      %v875 = vsel %vm864, %v870, %v874
      %v876 = vrot.slane %v362, 2
      %v877 = vrot.slane %v358, 3
      %v878 = vor.u32 %v876, %v877
      %v879 = vsel %vm864, %v874, %v878
      %v880 = vrot.slane %v370, 2
      %v881 = vrot.slane %v366, 3
      %v882 = vor.u32 %v880, %v881
      %v883 = vsel %vm864, %v878, %v882
      %v884 = vrot.slane %v378, 2
      %v885 = vrot.slane %v374, 3
      %v886 = vor.u32 %v884, %v885
      %v887 = vsel %vm864, %v882, %v886
      %v888 = vrot.slane %v386, 2
      %v889 = vrot.slane %v382, 3
      %v890 = vor.u32 %v888, %v889
      %v891 = vsel %vm864, %v886, %v890
      %v892 = vrot.slane %v394, 2
      %v893 = vrot.slane %v390, 3
      %v894 = vor.u32 %v892, %v893
      %v895 = vsel %vm864, %v890, %v894
      %v896 = vrot.slane %v402, 2
      %v897 = vrot.slane %v398, 3
      %v898 = vor.u32 %v896, %v897
      %v899 = vsel %vm864, %v894, %v898
      %v900 = vrot.slane %v410, 2
      %v901 = vrot.slane %v406, 3
      %v902 = vor.u32 %v900, %v901
      %v903 = vsel %vm864, %v898, %v902
      %v904 = vrot.slane %v418, 2
      %v905 = vrot.slane %v414, 3
      %v906 = vor.u32 %v904, %v905
      %v907 = vsel %vm864, %v902, %v906
      %v908 = vrot.slane %v426, 2
      %v909 = vrot.slane %v422, 3
      %v910 = vor.u32 %v908, %v909
      %v911 = vsel %vm864, %v906, %v910
      %v912 = vrot.slane %v434, 2
      %v913 = vrot.slane %v430, 3
      %v914 = vor.u32 %v912, %v913
      %v915 = vsel %vm864, %v910, %v914
      %v916 = vrot.slane %v442, 2
      %v917 = vrot.slane %v438, 3
      %v918 = vor.u32 %v916, %v917
      %v919 = vsel %vm864, %v914, %v918
      %v920 = vrot.slane %v450, 2
      %v921 = vrot.slane %v446, 3
      %v922 = vor.u32 %v920, %v921
      %v923 = vsel %vm864, %v918, %v922
      %v924 = vrot.slane %v458, 2
      %v925 = vrot.slane %v454, 3
      %v926 = vor.u32 %v924, %v925
      %v927 = vsel %vm864, %v922, %v926
      %v928 = vrot.slane %v691, 2
      %v929 = vrot.slane %v694, 3
      %v930 = vor.u32 %v928, %v929
      %v931 = vsel %vm864, %v926, %v930
      %v933 = vshrl.u32 %v822, 16
      %v935 = vrot.slane %v933, 2
      %v936 = vshll.u32 %v822, 16
      %v938 = vrot.slane %v936, 3
      %v939 = vor.u32 %v935, %v938
      %v940 = vsel %vm864, %v930, %v939
      %v942 = vshrl.u32 %v823, 16
      %v944 = vrot.slane %v942, 2
      %v945 = vshll.u32 %v823, 16
      %v947 = vrot.slane %v945, 3
      %v948 = vor.u32 %v944, %v947
      %v949 = vsel %vm864, %v939, %v948
      %950 = vrot.lane.b32.xlu0 %v871, 112
      %v951 = vpop.permute.xlu0 %950
      %952 = vrot.lane.b32.xlu0 %v875, 112
      %v953 = vpop.permute.xlu0 %952
      %954 = vrot.lane.b32.xlu0 %v879, 112
      %v955 = vpop.permute.xlu0 %954
      %956 = vrot.lane.b32.xlu0 %v883, 112
      %v957 = vpop.permute.xlu0 %956
      %958 = vrot.lane.b32.xlu0 %v887, 112
      %v959 = vpop.permute.xlu0 %958
      %960 = vrot.lane.b32.xlu0 %v891, 112
      %v961 = vpop.permute.xlu0 %960
      %962 = vrot.lane.b32.xlu0 %v895, 112
      %v963 = vpop.permute.xlu0 %962
      %964 = vrot.lane.b32.xlu0 %v899, 112
      %v965 = vpop.permute.xlu0 %964
      %966 = vrot.lane.b32.xlu0 %v903, 112
      %v967 = vpop.permute.xlu0 %966
      %968 = vrot.lane.b32.xlu0 %v907, 112
      %v969 = vpop.permute.xlu0 %968
      %970 = vrot.lane.b32.xlu0 %v911, 112
      %v971 = vpop.permute.xlu0 %970
      %972 = vrot.lane.b32.xlu0 %v915, 112
      %v973 = vpop.permute.xlu0 %972
      %974 = vrot.lane.b32.xlu0 %v919, 112
      %v975 = vpop.permute.xlu0 %974
      %976 = vrot.lane.b32.xlu0 %v923, 112
      %v977 = vpop.permute.xlu0 %976
      %978 = vrot.lane.b32.xlu0 %v927, 112
      %v979 = vpop.permute.xlu0 %978
      %980 = vrot.lane.b32.xlu0 %v931, 112
      %v981 = vpop.permute.xlu0 %980
      %982 = vrot.lane.b32.xlu0 %v940, 112
      %v983 = vpop.permute.xlu0 %982
      %984 = vrot.lane.b32.xlu0 %v949, 112
      %v985 = vpop.permute.xlu0 %984
      %vm986 = vcmask 1044480
      %v987 = vrot.slane %v298, 3
      %v988 = vrot.slane %v299, 3
      %v989 = vsel %vm986, %v987, %v988
      %v990 = vrot.slane %v300, 3
      %v991 = vsel %vm986, %v988, %v990
      %v992 = vrot.slane %v301, 3
      %v993 = vsel %vm986, %v990, %v992
      %v994 = vrot.slane %v302, 3
      %v995 = vsel %vm986, %v992, %v994
      %v996 = vrot.slane %v303, 3
      %v997 = vsel %vm986, %v994, %v996
      %v998 = vrot.slane %v304, 3
      %v999 = vsel %vm986, %v996, %v998
      %v1000 = vrot.slane %v305, 3
      %v1001 = vsel %vm986, %v998, %v1000
      %v1002 = vrot.slane %v306, 3
      %v1003 = vsel %vm986, %v1000, %v1002
      %v1004 = vrot.slane %v307, 3
      %v1005 = vsel %vm986, %v1002, %v1004
      %v1006 = vrot.slane %v308, 3
      %v1007 = vsel %vm986, %v1004, %v1006
      %v1008 = vrot.slane %v309, 3
      %v1009 = vsel %vm986, %v1006, %v1008
      %v1010 = vrot.slane %v310, 3
      %v1011 = vsel %vm986, %v1008, %v1010
      %v1012 = vrot.slane %v311, 3
      %v1013 = vsel %vm986, %v1010, %v1012
      %v1014 = vrot.slane %v312, 3
      %v1015 = vsel %vm986, %v1012, %v1014
      %v1016 = vrot.slane %v313, 3
      %v1017 = vsel %vm986, %v1014, %v1016
      %v1018 = vrot.slane %v580, 3
      %v1019 = vsel %vm986, %v1016, %v1018
      %v1020 = vrot.slane %v822, 3
      %v1021 = vsel %vm986, %v1018, %v1020
      %v1022 = vrot.slane %v823, 3
      %v1023 = vsel %vm986, %v1020, %v1022
      %vm1024 = vcmask 130048
      %v1026 = vsel %vm1024, %v296, %v467
      %v1028 = vsel %vm1024, %v297, %v469
      %v1030 = vsel %vm1024, %v298, %v471
      %v1032 = vsel %vm1024, %v299, %v473
      %v1034 = vsel %vm1024, %v300, %v475
      %v1036 = vsel %vm1024, %v301, %v477
      %v1038 = vsel %vm1024, %v302, %v479
      %v1040 = vsel %vm1024, %v303, %v481
      %v1042 = vsel %vm1024, %v304, %v483
      %v1044 = vsel %vm1024, %v305, %v485
      %v1046 = vsel %vm1024, %v306, %v487
      %v1048 = vsel %vm1024, %v307, %v489
      %v1050 = vsel %vm1024, %v308, %v491
      %v1052 = vsel %vm1024, %v309, %v493
      %v1054 = vsel %vm1024, %v310, %v495
      %v1056 = vsel %vm1024, %v311, %v497
      %v1058 = vsel %vm1024, %v312, %v499
      %v1060 = vsel %vm1024, %v313, %v501
      %vm1061 = vcmask 261120
      %v1063 = vsel %vm1061, %v1026, %v541
      %v1065 = vsel %vm1061, %v1028, %v543
      %v1067 = vsel %vm1061, %v1030, %v545
      %v1069 = vsel %vm1061, %v1032, %v547
      %v1071 = vsel %vm1061, %v1034, %v549
      %v1073 = vsel %vm1061, %v1036, %v551
      %v1075 = vsel %vm1061, %v1038, %v553
      %v1077 = vsel %vm1061, %v1040, %v555
      %v1079 = vsel %vm1061, %v1042, %v557
      %v1081 = vsel %vm1061, %v1044, %v559
      %v1083 = vsel %vm1061, %v1046, %v561
      %v1085 = vsel %vm1061, %v1048, %v563
      %v1087 = vsel %vm1061, %v1050, %v565
      %v1089 = vsel %vm1061, %v1052, %v567
      %v1091 = vsel %vm1061, %v1054, %v569
      %v1093 = vsel %vm1061, %v1056, %v571
      %v1095 = vsel %vm1061, %v1058, %v573
      %v1097 = vsel %vm1061, %v1060, %v575
      %vm1098 = vcmask 392192
      %v1100 = vsel %vm1098, %v1063, %v587
      %v1102 = vsel %vm1098, %v1065, %v589
      %v1104 = vsel %vm1098, %v1067, %v591
      %v1106 = vsel %vm1098, %v1069, %v593
      %v1108 = vsel %vm1098, %v1071, %v595
      %v1110 = vsel %vm1098, %v1073, %v597
      %v1112 = vsel %vm1098, %v1075, %v599
      %v1114 = vsel %vm1098, %v1077, %v601
      %v1116 = vsel %vm1098, %v1079, %v603
      %v1118 = vsel %vm1098, %v1081, %v605
      %v1120 = vsel %vm1098, %v1083, %v607
      %v1122 = vsel %vm1098, %v1085, %v609
      %v1124 = vsel %vm1098, %v1087, %v611
      %v1126 = vsel %vm1098, %v1089, %v613
      %v1128 = vsel %vm1098, %v1091, %v615
      %v1130 = vsel %vm1098, %v1093, %v617
      %v1132 = vsel %vm1098, %v1095, %v619
      %v1134 = vsel %vm1098, %v1097, %v621
      %vm1135 = vcmask 523264
      %v1137 = vsel %vm1135, %v1100, %v709
      %v1139 = vsel %vm1135, %v1102, %v711
      %v1141 = vsel %vm1135, %v1104, %v713
      %v1143 = vsel %vm1135, %v1106, %v715
      %v1145 = vsel %vm1135, %v1108, %v717
      %v1147 = vsel %vm1135, %v1110, %v719
      %v1149 = vsel %vm1135, %v1112, %v721
      %v1151 = vsel %vm1135, %v1114, %v723
      %v1153 = vsel %vm1135, %v1116, %v725
      %v1155 = vsel %vm1135, %v1118, %v727
      %v1157 = vsel %vm1135, %v1120, %v729
      %v1159 = vsel %vm1135, %v1122, %v731
      %v1161 = vsel %vm1135, %v1124, %v733
      %v1163 = vsel %vm1135, %v1126, %v735
      %v1165 = vsel %vm1135, %v1128, %v737
      %v1167 = vsel %vm1135, %v1130, %v739
      %v1169 = vsel %vm1135, %v1132, %v741
      %v1171 = vsel %vm1135, %v1134, %v743
      %vm1172 = vcmask 654336
      %v1174 = vsel %vm1172, %v1137, %v783
      %v1176 = vsel %vm1172, %v1139, %v785
      %v1178 = vsel %vm1172, %v1141, %v787
      %v1180 = vsel %vm1172, %v1143, %v789
      %v1182 = vsel %vm1172, %v1145, %v791
      %v1184 = vsel %vm1172, %v1147, %v793
      %v1186 = vsel %vm1172, %v1149, %v795
      %v1188 = vsel %vm1172, %v1151, %v797
      %v1190 = vsel %vm1172, %v1153, %v799
      %v1192 = vsel %vm1172, %v1155, %v801
      %v1194 = vsel %vm1172, %v1157, %v803
      %v1196 = vsel %vm1172, %v1159, %v805
      %v1198 = vsel %vm1172, %v1161, %v807
      %v1200 = vsel %vm1172, %v1163, %v809
      %v1202 = vsel %vm1172, %v1165, %v811
      %v1204 = vsel %vm1172, %v1167, %v813
      %v1206 = vsel %vm1172, %v1169, %v815
      %v1208 = vsel %vm1172, %v1171, %v817
      %vm1209 = vcmask 785408
      %v1211 = vsel %vm1209, %v1174, %v829
      %v1213 = vsel %vm1209, %v1176, %v831
      %v1215 = vsel %vm1209, %v1178, %v833
      %v1217 = vsel %vm1209, %v1180, %v835
      %v1219 = vsel %vm1209, %v1182, %v837
      %v1221 = vsel %vm1209, %v1184, %v839
      %v1223 = vsel %vm1209, %v1186, %v841
      %v1225 = vsel %vm1209, %v1188, %v843
      %v1227 = vsel %vm1209, %v1190, %v845
      %v1229 = vsel %vm1209, %v1192, %v847
      %v1231 = vsel %vm1209, %v1194, %v849
      %v1233 = vsel %vm1209, %v1196, %v851
      %v1235 = vsel %vm1209, %v1198, %v853
      %v1237 = vsel %vm1209, %v1200, %v855
      %v1239 = vsel %vm1209, %v1202, %v857
      %v1241 = vsel %vm1209, %v1204, %v859
      %v1243 = vsel %vm1209, %v1206, %v861
      %v1245 = vsel %vm1209, %v1208, %v863
      %vm1246 = vcmask 916480
      %v1248 = vsel %vm1246, %v1211, %v951
      %v1251 = vsel %vm1246, %v1213, %v953
      %v1254 = vsel %vm1246, %v1215, %v955
      %v1257 = vsel %vm1246, %v1217, %v957
      %v1260 = vsel %vm1246, %v1219, %v959
      %v1263 = vsel %vm1246, %v1221, %v961
      %v1266 = vsel %vm1246, %v1223, %v963
      %v1269 = vsel %vm1246, %v1225, %v965
      %v1272 = vsel %vm1246, %v1227, %v967
      %v1275 = vsel %vm1246, %v1229, %v969
      %v1278 = vsel %vm1246, %v1231, %v971
      %v1281 = vsel %vm1246, %v1233, %v973
      %v1284 = vsel %vm1246, %v1235, %v975
      %v1287 = vsel %vm1246, %v1237, %v977
      %v1290 = vsel %vm1246, %v1239, %v979
      %v1293 = vsel %vm1246, %v1241, %v981
      %v1296 = vsel %vm1246, %v1243, %v983
      %v1299 = vsel %vm1246, %v1245, %v985
      %v1301 = vld [vmem:[%s1] sm:$0xf]
      %v1302 = vld [vmem:[%s1 + $0x4] sm:$0xf]
      %v1303 = vld [vmem:[%s1 + $0x8] sm:$0xf]
      %v1304 = vld [vmem:[%s1 + $0xc] sm:$0xf]
      %v1305 = vld [vmem:[%s1 + $0x10] sm:$0xf]
      %v1306 = vld [vmem:[%s1 + $0x14] sm:$0xf]
      %v1307 = vld [vmem:[%s1 + $0x18] sm:$0xf]
      %v1308 = vld [vmem:[%s1 + $0x1c] sm:$0xf]
      %v1309 = vld [vmem:[%s1 + $0x20] sm:$0xf]
      %v1310 = vld [vmem:[%s1 + $0x24] sm:$0xf]
      %v1311 = vld [vmem:[%s1 + $0x28] sm:$0xf]
      %v1312 = vld [vmem:[%s1 + $0x2c] sm:$0xf]
      %v1313 = vld [vmem:[%s1 + $0x30] sm:$0xf]
      %v1314 = vld [vmem:[%s1 + $0x34] sm:$0xf]
      %v1315 = vld [vmem:[%s1 + $0x38] sm:$0xf]
      %v1316 = vld [vmem:[%s1 + $0x3c] sm:$0xf]
      %v1317 = vld [vmem:[%s1 + $0x40] sm:$0xf]
      %v1318 = vld [vmem:[%s1 + $0x44] sm:$0xf]
      %v1337 = vunpack.c.l.b16 %v1301
      %v1338 = vunpack.c.l.b16 %v1302
      %v1339 = vunpack.c.l.b16 %v1303
      %v1340 = vunpack.c.l.b16 %v1304
      %v1341 = vunpack.c.l.b16 %v1305
      %v1342 = vunpack.c.l.b16 %v1306
      %v1343 = vunpack.c.l.b16 %v1307
      %v1344 = vunpack.c.l.b16 %v1308
      %v1345 = vunpack.c.l.b16 %v1309
      %v1346 = vunpack.c.l.b16 %v1310
      %v1347 = vunpack.c.l.b16 %v1311
      %v1348 = vunpack.c.l.b16 %v1312
      %v1349 = vunpack.c.l.b16 %v1313
      %v1350 = vunpack.c.l.b16 %v1314
      %v1351 = vunpack.c.l.b16 %v1315
      %v1352 = vunpack.c.l.b16 %v1316
      %v1353 = vunpack.c.l.b16 %v1317
      %v1354 = vunpack.c.l.b16 %v1318
      %v1355 = vpack.c.b16 %v1338, %v1337
      %v1356 = vpack.c.b16 %v1340, %v1339
      %v1357 = vpack.c.b16 %v1342, %v1341
      %v1358 = vpack.c.b16 %v1344, %v1343
      %v1359 = vpack.c.b16 %v1346, %v1345
      %v1360 = vpack.c.b16 %v1348, %v1347
      %v1361 = vpack.c.b16 %v1350, %v1349
      %v1362 = vpack.c.b16 %v1352, %v1351
      %v1363 = vpack.c.b16 %v1354, %v1353
      %v1374 = vsel %vm1024, %v989, 0
      %v1377 = vsel %vm1024, %v991, 0
      %v1380 = vsel %vm1024, %v993, 0
      %v1383 = vsel %vm1024, %v995, 0
      %v1386 = vsel %vm1024, %v997, 0
      %v1389 = vsel %vm1024, %v999, 0
      %v1392 = vsel %vm1024, %v1001, 0
      %v1395 = vsel %vm1024, %v1003, 0
      %v1398 = vsel %vm1024, %v1005, 0
      %v1401 = vsel %vm1024, %v1007, 0
      %v1404 = vsel %vm1024, %v1009, 0
      %v1407 = vsel %vm1024, %v1011, 0
      %v1410 = vsel %vm1024, %v1013, 0
      %v1413 = vsel %vm1024, %v1015, 0
      %v1416 = vsel %vm1024, %v1017, 0
      %v1419 = vsel %vm1024, %v1019, 0
      %v1422 = vsel %vm1024, %v1021, 0
      %v1425 = vsel %vm1024, %v1023, 0
      %1427 = vmatprep.subr.bf16.mxu0 0
      %1428 = vmatpush1.bf16.msra.mxu0 %v1355
      %1429 = vmatprep.subr.bf16.mxu0 0
      %1430 = vmatpush1.bf16.msra.mxu0 %v1356
      %1431 = vmatprep.subr.bf16.mxu0 0
      %1432 = vmatpush1.bf16.msra.mxu0 %v1357
      %1433 = vmatprep.subr.bf16.mxu0 0
      %1434 = vmatpush1.bf16.msra.mxu0 %v1358
      %1435 = vmatprep.subr.bf16.mxu0 0
      %1436 = vmatpush1.bf16.msra.mxu0 %v1359
      %1437 = vmatprep.subr.bf16.mxu0 0
      %1438 = vmatpush1.bf16.msra.mxu0 %v1360
      %1439 = vmatprep.subr.bf16.mxu0 0
      %1440 = vmatpush1.bf16.msra.mxu0 %v1361
      %1441 = vmatprep.subr.bf16.mxu0 0
      %1442 = vmatpush1.bf16.msra.mxu0 %v1362
      %1443 = vmatprep.subr.bf16.mxu0 0
      %1444 = vmatpush1.bf16.msra.mxu0 %v1363
      %1445 = vmatprep.subr.bf16.mxu0 0
      %1446 = vmatpush1.bf16.msra.mxu0 0
      %1447 = vmatprep.subr.bf16.mxu0 0
      %1448 = vmatpush1.bf16.msra.mxu0 0
      %1449 = vmatprep.subr.bf16.mxu0 0
      %1450 = vmatpush1.bf16.msra.mxu0 0
      %1451 = vmatprep.subr.bf16.mxu0 0
      %1452 = vmatpush1.bf16.msra.mxu0 0
      %1453 = vmatprep.subr.bf16.mxu0 0
      %1454 = vmatpush1.bf16.msra.mxu0 0
      %1455 = vmatprep.subr.bf16.mxu0 0
      %1456 = vmatpush1.bf16.msra.mxu0 0
      %1457 = vmatprep.subr.bf16.mxu0 0
      %1458 = vmatpush1.bf16.msra.mxu0 0
      %1459 = vmatprep.mubr.bf16.mxu0 %v1374
      %1460 = vmatmul.mubr.bf16.gmra.mrb[0].mxu0 %v1248
      %v1461 = vpop.f32.mrb[0].mxu0
      %v1462 = vadd.f32 0.0, %v1461
      %v1463 = vpop.f32.mrb[0].mxu0
      %v1464 = vpop.f32.mrb[0].mxu0
      %v1465 = vadd.f32 0.0, %v1464
      %v1466 = vpop.f32.mrb[0].mxu0
      %1467 = vmatprep.mubr.bf16.mxu0 %v1377
      %1468 = vmatmul.mubr.bf16.gmra.mrb[0].mxu0 %v1251
      %v1469 = vpop.f32.mrb[0].mxu0
      %v1470 = vadd.f32 0.0, %v1469
      %v1471 = vpop.f32.mrb[0].mxu0
      %v1472 = vpop.f32.mrb[0].mxu0
      %v1473 = vadd.f32 0.0, %v1472
      %v1474 = vpop.f32.mrb[0].mxu0
      %1475 = vmatprep.mubr.bf16.mxu0 %v1380
      %1476 = vmatmul.mubr.bf16.gmra.mrb[0].mxu0 %v1254
      %v1477 = vpop.f32.mrb[0].mxu0
      %v1478 = vadd.f32 0.0, %v1477
      %v1479 = vpop.f32.mrb[0].mxu0
      %v1480 = vpop.f32.mrb[0].mxu0
      %v1481 = vadd.f32 0.0, %v1480
      %v1482 = vpop.f32.mrb[0].mxu0
      %1483 = vmatprep.mubr.bf16.mxu0 %v1383
      %1484 = vmatmul.mubr.bf16.gmra.mrb[0].mxu0 %v1257
      %v1485 = vpop.f32.mrb[0].mxu0
      %v1486 = vadd.f32 0.0, %v1485
      %v1487 = vpop.f32.mrb[0].mxu0
      %v1488 = vpop.f32.mrb[0].mxu0
      %v1489 = vadd.f32 0.0, %v1488
      %v1490 = vpop.f32.mrb[0].mxu0
      %1491 = vmatprep.mubr.bf16.mxu0 %v1386
      %1492 = vmatmul.mubr.bf16.gmra.mrb[0].mxu0 %v1260
      %v1493 = vpop.f32.mrb[0].mxu0
      %v1494 = vadd.f32 0.0, %v1493
      %v1495 = vpop.f32.mrb[0].mxu0
      %v1496 = vpop.f32.mrb[0].mxu0
      %v1497 = vadd.f32 0.0, %v1496
      %v1498 = vpop.f32.mrb[0].mxu0
      %1499 = vmatprep.mubr.bf16.mxu0 %v1389
      %1500 = vmatmul.mubr.bf16.gmra.mrb[0].mxu0 %v1263
      %v1501 = vpop.f32.mrb[0].mxu0
      %v1502 = vadd.f32 0.0, %v1501
      %v1503 = vpop.f32.mrb[0].mxu0
      %v1504 = vpop.f32.mrb[0].mxu0
      %v1505 = vadd.f32 0.0, %v1504
      %v1506 = vpop.f32.mrb[0].mxu0
      %1507 = vmatprep.mubr.bf16.mxu0 %v1392
      %1508 = vmatmul.mubr.bf16.gmra.mrb[0].mxu0 %v1266
      %v1509 = vpop.f32.mrb[0].mxu0
      %v1510 = vadd.f32 0.0, %v1509
      %v1511 = vpop.f32.mrb[0].mxu0
      %v1512 = vpop.f32.mrb[0].mxu0
      %v1513 = vadd.f32 0.0, %v1512
      %v1514 = vpop.f32.mrb[0].mxu0
      %1515 = vmatprep.mubr.bf16.mxu0 %v1395
      %1516 = vmatmul.mubr.bf16.gmra.mrb[0].mxu0 %v1269
      %v1517 = vpop.f32.mrb[0].mxu0
      %v1518 = vadd.f32 0.0, %v1517
      %v1519 = vpop.f32.mrb[0].mxu0
      %v1520 = vpop.f32.mrb[0].mxu0
      %v1521 = vadd.f32 0.0, %v1520
      %v1522 = vpop.f32.mrb[0].mxu0
      %1523 = vmatprep.mubr.bf16.mxu0 %v1398
      %1524 = vmatmul.mubr.bf16.gmra.mrb[0].mxu0 %v1272
      %v1525 = vpop.f32.mrb[0].mxu0
      %v1526 = vadd.f32 0.0, %v1525
      %v1527 = vpop.f32.mrb[0].mxu0
      %v1528 = vpop.f32.mrb[0].mxu0
      %v1529 = vadd.f32 0.0, %v1528
      %v1530 = vpop.f32.mrb[0].mxu0
      %1531 = vmatprep.mubr.bf16.mxu0 %v1401
      %1532 = vmatmul.mubr.bf16.gmra.mrb[0].mxu0 %v1275
      %v1533 = vpop.f32.mrb[0].mxu0
      %v1534 = vadd.f32 0.0, %v1533
      %v1535 = vpop.f32.mrb[0].mxu0
      %v1536 = vpop.f32.mrb[0].mxu0
      %v1537 = vadd.f32 0.0, %v1536
      %v1538 = vpop.f32.mrb[0].mxu0
      %1539 = vmatprep.mubr.bf16.mxu0 %v1404
      %1540 = vmatmul.mubr.bf16.gmra.mrb[0].mxu0 %v1278
      %v1541 = vpop.f32.mrb[0].mxu0
      %v1542 = vadd.f32 0.0, %v1541
      %v1543 = vpop.f32.mrb[0].mxu0
      %v1544 = vpop.f32.mrb[0].mxu0
      %v1545 = vadd.f32 0.0, %v1544
      %v1546 = vpop.f32.mrb[0].mxu0
      %1547 = vmatprep.mubr.bf16.mxu0 %v1407
      %1548 = vmatmul.mubr.bf16.gmra.mrb[0].mxu0 %v1281
      %v1549 = vpop.f32.mrb[0].mxu0
      %v1550 = vadd.f32 0.0, %v1549
      %v1551 = vpop.f32.mrb[0].mxu0
      %v1552 = vpop.f32.mrb[0].mxu0
      %v1553 = vadd.f32 0.0, %v1552
      %v1554 = vpop.f32.mrb[0].mxu0
      %1555 = vmatprep.mubr.bf16.mxu0 %v1410
      %1556 = vmatmul.mubr.bf16.gmra.mrb[0].mxu0 %v1284
      %v1557 = vpop.f32.mrb[0].mxu0
      %v1558 = vadd.f32 0.0, %v1557
      %v1559 = vpop.f32.mrb[0].mxu0
      %v1560 = vpop.f32.mrb[0].mxu0
      %v1561 = vadd.f32 0.0, %v1560
      %v1562 = vpop.f32.mrb[0].mxu0
      %1563 = vmatprep.mubr.bf16.mxu0 %v1413
      %1564 = vmatmul.mubr.bf16.gmra.mrb[0].mxu0 %v1287
      %v1565 = vpop.f32.mrb[0].mxu0
      %v1566 = vadd.f32 0.0, %v1565
      %v1567 = vpop.f32.mrb[0].mxu0
      %v1568 = vpop.f32.mrb[0].mxu0
      %v1569 = vadd.f32 0.0, %v1568
      %v1570 = vpop.f32.mrb[0].mxu0
      %1571 = vmatprep.mubr.bf16.mxu0 %v1416
      %1572 = vmatmul.mubr.bf16.gmra.mrb[0].mxu0 %v1290
      %v1573 = vpop.f32.mrb[0].mxu0
      %v1574 = vadd.f32 0.0, %v1573
      %v1575 = vpop.f32.mrb[0].mxu0
      %v1576 = vpop.f32.mrb[0].mxu0
      %v1577 = vadd.f32 0.0, %v1576
      %v1578 = vpop.f32.mrb[0].mxu0
      %1579 = vmatprep.mubr.bf16.mxu0 %v1419
      %1580 = vmatmul.mubr.bf16.gmra.mrb[0].mxu0 %v1293
      %v1581 = vpop.f32.mrb[0].mxu0
      %v1582 = vadd.f32 0.0, %v1581
      %v1583 = vpop.f32.mrb[0].mxu0
      %v1584 = vpop.f32.mrb[0].mxu0
      %v1585 = vadd.f32 0.0, %v1584
      %v1586 = vpop.f32.mrb[0].mxu0
      %1587 = vmatprep.mubr.bf16.mxu0 %v1422
      %1588 = vmatmul.mubr.bf16.gmra.mrb[0].mxu0 %v1296
      %v1589 = vpop.f32.mrb[0].mxu0
      %v1590 = vadd.f32 0.0, %v1589
      %v1591 = vpop.f32.mrb[0].mxu0
      %v1592 = vpop.f32.mrb[0].mxu0
      %v1593 = vadd.f32 0.0, %v1592
      %v1594 = vpop.f32.mrb[0].mxu0
      %1595 = vmatprep.mubr.bf16.mxu0 %v1425
      %1596 = vmatmul.mubr.bf16.gmra.mrb[0].mxu0 %v1299
      %v1597 = vpop.f32.mrb[0].mxu0
      %v1598 = vadd.f32 0.0, %v1597
      %v1599 = vpop.f32.mrb[0].mxu0
      %v1600 = vpop.f32.mrb[0].mxu0
      %v1601 = vadd.f32 0.0, %v1600
      %v1602 = vpop.f32.mrb[0].mxu0
      %1603 = vdwg.mxu0
      %v1604 = vlaneseq
      %v1605 = vshrl.u32 %v1604, 7
      %v1606 = vadd.s32 %v1605, 8
      %v1607 = vadd.s32 %v1605, 16
      %v1608 = vadd.s32 %v1605, 24
      %v1609 = vadd.s32 %v1605, 32
      %v1610 = vadd.s32 %v1605, 40
      %v1611 = vadd.s32 %v1605, 48
      %v1612 = vadd.s32 %v1605, 56
      %v1613 = vadd.s32 %v1605, 64
      %v1614 = vadd.s32 %v1605, 72
      %v1615 = vadd.s32 %v1605, 80
      %v1616 = vadd.s32 %v1605, 88
      %v1617 = vadd.s32 %v1605, 96
      %v1618 = vadd.s32 %v1605, 104
      %v1619 = vadd.s32 %v1605, 112
      %v1620 = vadd.s32 %v1605, 120
      %v1621 = vadd.s32 %v1605, 128
      %v1622 = vadd.s32 %v1605, 136
      %v1623 = vadd.s32 %v1605, 144
      %v1624 = vadd.s32 %v1605, 152
      %v1625 = vadd.s32 %v1605, 160
      %v1626 = vadd.s32 %v1605, 168
      %v1627 = vadd.s32 %v1605, 176
      %v1628 = vadd.s32 %v1605, 184
      %v1629 = vadd.s32 %v1605, 192
      %v1630 = vadd.s32 %v1605, 200
      %v1631 = vadd.s32 %v1605, 208
      %v1632 = vadd.s32 %v1605, 216
      %v1633 = vadd.s32 %v1605, 224
      %v1634 = vadd.s32 %v1605, 232
      %v1635 = vadd.s32 %v1605, 240
      %v1636 = vadd.s32 %v1605, 248
      %v1637 = vadd.s32 %v1605, 256
      %v1638 = vadd.s32 %v1605, 264
      %v1639 = vadd.s32 %v1605, 272
      %v1640 = vadd.s32 %v1605, 280
      %vm1641 = vcmp.lt.s32.totalorder %v1605, 0
      %v1642 = vsub.s32 0, %v1605
      %v1643 = vsel %vm1641, %v1642, %v1605
      %v1644 = vmul.u32.u64.compose %v1643, 3817748708
      %v1645 = vextract.low.u32 %v1644
      %v1646 = vextract.high.u32 %v1644
      %v1647 = vshrl.u32 %v1646, 4
      %v1648 = vmul.u32 %v1647, 18
      %v1649 = vsub.s32 %v1643, %v1648
      %v1650 = vsub.s32 0, %v1649
      %v1651 = vsel %vm1641, %v1650, %v1649
      %vm1652 = vcmp.lt.s32.totalorder %v1606, 0
      %v1653 = vsub.s32 0, %v1606
      %v1654 = vsel %vm1652, %v1653, %v1606
      %v1655 = vmul.u32.u64.compose %v1654, 3817748708
      %v1656 = vextract.low.u32 %v1655
      %v1657 = vextract.high.u32 %v1655
      %v1658 = vshrl.u32 %v1657, 4
      %v1659 = vmul.u32 %v1658, 18
      %v1660 = vsub.s32 %v1654, %v1659
      %v1661 = vsub.s32 0, %v1660
      %v1662 = vsel %vm1652, %v1661, %v1660
      %vm1663 = vcmp.lt.s32.totalorder %v1607, 0
      %v1664 = vsub.s32 0, %v1607
      %v1665 = vsel %vm1663, %v1664, %v1607
      %v1666 = vmul.u32.u64.compose %v1665, 3817748708
      %v1667 = vextract.low.u32 %v1666
      %v1668 = vextract.high.u32 %v1666
      %v1669 = vshrl.u32 %v1668, 4
      %v1670 = vmul.u32 %v1669, 18
      %v1671 = vsub.s32 %v1665, %v1670
      %v1672 = vsub.s32 0, %v1671
      %v1673 = vsel %vm1663, %v1672, %v1671
      %vm1674 = vcmp.lt.s32.totalorder %v1608, 0
      %v1675 = vsub.s32 0, %v1608
      %v1676 = vsel %vm1674, %v1675, %v1608
      %v1677 = vmul.u32.u64.compose %v1676, 3817748708
      %v1678 = vextract.low.u32 %v1677
      %v1679 = vextract.high.u32 %v1677
      %v1680 = vshrl.u32 %v1679, 4
      %v1681 = vmul.u32 %v1680, 18
      %v1682 = vsub.s32 %v1676, %v1681
      %v1683 = vsub.s32 0, %v1682
      %v1684 = vsel %vm1674, %v1683, %v1682
      %vm1685 = vcmp.lt.s32.totalorder %v1609, 0
      %v1686 = vsub.s32 0, %v1609
      %v1687 = vsel %vm1685, %v1686, %v1609
      %v1688 = vmul.u32.u64.compose %v1687, 3817748708
      %v1689 = vextract.low.u32 %v1688
      %v1690 = vextract.high.u32 %v1688
      %v1691 = vshrl.u32 %v1690, 4
      %v1692 = vmul.u32 %v1691, 18
      %v1693 = vsub.s32 %v1687, %v1692
      %v1694 = vsub.s32 0, %v1693
      %v1695 = vsel %vm1685, %v1694, %v1693
      %vm1696 = vcmp.lt.s32.totalorder %v1610, 0
      %v1697 = vsub.s32 0, %v1610
      %v1698 = vsel %vm1696, %v1697, %v1610
      %v1699 = vmul.u32.u64.compose %v1698, 3817748708
      %v1700 = vextract.low.u32 %v1699
      %v1701 = vextract.high.u32 %v1699
      %v1702 = vshrl.u32 %v1701, 4
      %v1703 = vmul.u32 %v1702, 18
      %v1704 = vsub.s32 %v1698, %v1703
      %v1705 = vsub.s32 0, %v1704
      %v1706 = vsel %vm1696, %v1705, %v1704
      %vm1707 = vcmp.lt.s32.totalorder %v1611, 0
      %v1708 = vsub.s32 0, %v1611
      %v1709 = vsel %vm1707, %v1708, %v1611
      %v1710 = vmul.u32.u64.compose %v1709, 3817748708
      %v1711 = vextract.low.u32 %v1710
      %v1712 = vextract.high.u32 %v1710
      %v1713 = vshrl.u32 %v1712, 4
      %v1714 = vmul.u32 %v1713, 18
      %v1715 = vsub.s32 %v1709, %v1714
      %v1716 = vsub.s32 0, %v1715
      %v1717 = vsel %vm1707, %v1716, %v1715
      %vm1718 = vcmp.lt.s32.totalorder %v1612, 0
      %v1719 = vsub.s32 0, %v1612
      %v1720 = vsel %vm1718, %v1719, %v1612
      %v1721 = vmul.u32.u64.compose %v1720, 3817748708
      %v1722 = vextract.low.u32 %v1721
      %v1723 = vextract.high.u32 %v1721
      %v1724 = vshrl.u32 %v1723, 4
      %v1725 = vmul.u32 %v1724, 18
      %v1726 = vsub.s32 %v1720, %v1725
      %v1727 = vsub.s32 0, %v1726
      %v1728 = vsel %vm1718, %v1727, %v1726
      %vm1729 = vcmp.lt.s32.totalorder %v1613, 0
      %v1730 = vsub.s32 0, %v1613
      %v1731 = vsel %vm1729, %v1730, %v1613
      %v1732 = vmul.u32.u64.compose %v1731, 3817748708
      %v1733 = vextract.low.u32 %v1732
      %v1734 = vextract.high.u32 %v1732
      %v1735 = vshrl.u32 %v1734, 4
      %v1736 = vmul.u32 %v1735, 18
      %v1737 = vsub.s32 %v1731, %v1736
      %v1738 = vsub.s32 0, %v1737
      %v1739 = vsel %vm1729, %v1738, %v1737
      %vm1740 = vcmp.lt.s32.totalorder %v1614, 0
      %v1741 = vsub.s32 0, %v1614
      %v1742 = vsel %vm1740, %v1741, %v1614
      %v1743 = vmul.u32.u64.compose %v1742, 3817748708
      %v1744 = vextract.low.u32 %v1743
      %v1745 = vextract.high.u32 %v1743
      %v1746 = vshrl.u32 %v1745, 4
      %v1747 = vmul.u32 %v1746, 18
      %v1748 = vsub.s32 %v1742, %v1747
      %v1749 = vsub.s32 0, %v1748
      %v1750 = vsel %vm1740, %v1749, %v1748
      %vm1751 = vcmp.lt.s32.totalorder %v1615, 0
      %v1752 = vsub.s32 0, %v1615
      %v1753 = vsel %vm1751, %v1752, %v1615
      %v1754 = vmul.u32.u64.compose %v1753, 3817748708
      %v1755 = vextract.low.u32 %v1754
      %v1756 = vextract.high.u32 %v1754
      %v1757 = vshrl.u32 %v1756, 4
      %v1758 = vmul.u32 %v1757, 18
      %v1759 = vsub.s32 %v1753, %v1758
      %v1760 = vsub.s32 0, %v1759
      %v1761 = vsel %vm1751, %v1760, %v1759
      %vm1762 = vcmp.lt.s32.totalorder %v1616, 0
      %v1763 = vsub.s32 0, %v1616
      %v1764 = vsel %vm1762, %v1763, %v1616
      %v1765 = vmul.u32.u64.compose %v1764, 3817748708
      %v1766 = vextract.low.u32 %v1765
      %v1767 = vextract.high.u32 %v1765
      %v1768 = vshrl.u32 %v1767, 4
      %v1769 = vmul.u32 %v1768, 18
      %v1770 = vsub.s32 %v1764, %v1769
      %v1771 = vsub.s32 0, %v1770
      %v1772 = vsel %vm1762, %v1771, %v1770
      %vm1773 = vcmp.lt.s32.totalorder %v1617, 0
      %v1774 = vsub.s32 0, %v1617
      %v1775 = vsel %vm1773, %v1774, %v1617
      %v1776 = vmul.u32.u64.compose %v1775, 3817748708
      %v1777 = vextract.low.u32 %v1776
      %v1778 = vextract.high.u32 %v1776
      %v1779 = vshrl.u32 %v1778, 4
      %v1780 = vmul.u32 %v1779, 18
      %v1781 = vsub.s32 %v1775, %v1780
      %v1782 = vsub.s32 0, %v1781
      %v1783 = vsel %vm1773, %v1782, %v1781
      %vm1784 = vcmp.lt.s32.totalorder %v1618, 0
      %v1785 = vsub.s32 0, %v1618
      %v1786 = vsel %vm1784, %v1785, %v1618
      %v1787 = vmul.u32.u64.compose %v1786, 3817748708
      %v1788 = vextract.low.u32 %v1787
      %v1789 = vextract.high.u32 %v1787
      %v1790 = vshrl.u32 %v1789, 4
      %v1791 = vmul.u32 %v1790, 18
      %v1792 = vsub.s32 %v1786, %v1791
      %v1793 = vsub.s32 0, %v1792
      %v1794 = vsel %vm1784, %v1793, %v1792
      %vm1795 = vcmp.lt.s32.totalorder %v1619, 0
      %v1796 = vsub.s32 0, %v1619
      %v1797 = vsel %vm1795, %v1796, %v1619
      %v1798 = vmul.u32.u64.compose %v1797, 3817748708
      %v1799 = vextract.low.u32 %v1798
      %v1800 = vextract.high.u32 %v1798
      %v1801 = vshrl.u32 %v1800, 4
      %v1802 = vmul.u32 %v1801, 18
      %v1803 = vsub.s32 %v1797, %v1802
      %v1804 = vsub.s32 0, %v1803
      %v1805 = vsel %vm1795, %v1804, %v1803
      %vm1806 = vcmp.lt.s32.totalorder %v1620, 0
      %v1807 = vsub.s32 0, %v1620
      %v1808 = vsel %vm1806, %v1807, %v1620
      %v1809 = vmul.u32.u64.compose %v1808, 3817748708
      %v1810 = vextract.low.u32 %v1809
      %v1811 = vextract.high.u32 %v1809
      %v1812 = vshrl.u32 %v1811, 4
      %v1813 = vmul.u32 %v1812, 18
      %v1814 = vsub.s32 %v1808, %v1813
      %v1815 = vsub.s32 0, %v1814
      %v1816 = vsel %vm1806, %v1815, %v1814
      %vm1817 = vcmp.lt.s32.totalorder %v1621, 0
      %v1818 = vsub.s32 0, %v1621
      %v1819 = vsel %vm1817, %v1818, %v1621
      %v1820 = vmul.u32.u64.compose %v1819, 3817748708
      %v1821 = vextract.low.u32 %v1820
      %v1822 = vextract.high.u32 %v1820
      %v1823 = vshrl.u32 %v1822, 4
      %v1824 = vmul.u32 %v1823, 18
      %v1825 = vsub.s32 %v1819, %v1824
      %v1826 = vsub.s32 0, %v1825
      %v1827 = vsel %vm1817, %v1826, %v1825
      %vm1828 = vcmp.lt.s32.totalorder %v1622, 0
      %v1829 = vsub.s32 0, %v1622
      %v1830 = vsel %vm1828, %v1829, %v1622
      %v1831 = vmul.u32.u64.compose %v1830, 3817748708
      %v1832 = vextract.low.u32 %v1831
      %v1833 = vextract.high.u32 %v1831
      %v1834 = vshrl.u32 %v1833, 4
      %v1835 = vmul.u32 %v1834, 18
      %v1836 = vsub.s32 %v1830, %v1835
      %v1837 = vsub.s32 0, %v1836
      %v1838 = vsel %vm1828, %v1837, %v1836
      %vm1839 = vcmp.lt.s32.totalorder %v1623, 0
      %v1840 = vsub.s32 0, %v1623
      %v1841 = vsel %vm1839, %v1840, %v1623
      %v1842 = vmul.u32.u64.compose %v1841, 3817748708
      %v1843 = vextract.low.u32 %v1842
      %v1844 = vextract.high.u32 %v1842
      %v1845 = vshrl.u32 %v1844, 4
      %v1846 = vmul.u32 %v1845, 18
      %v1847 = vsub.s32 %v1841, %v1846
      %v1848 = vsub.s32 0, %v1847
      %v1849 = vsel %vm1839, %v1848, %v1847
      %vm1850 = vcmp.lt.s32.totalorder %v1624, 0
      %v1851 = vsub.s32 0, %v1624
      %v1852 = vsel %vm1850, %v1851, %v1624
      %v1853 = vmul.u32.u64.compose %v1852, 3817748708
      %v1854 = vextract.low.u32 %v1853
      %v1855 = vextract.high.u32 %v1853
      %v1856 = vshrl.u32 %v1855, 4
      %v1857 = vmul.u32 %v1856, 18
      %v1858 = vsub.s32 %v1852, %v1857
      %v1859 = vsub.s32 0, %v1858
      %v1860 = vsel %vm1850, %v1859, %v1858
      %vm1861 = vcmp.lt.s32.totalorder %v1625, 0
      %v1862 = vsub.s32 0, %v1625
      %v1863 = vsel %vm1861, %v1862, %v1625
      %v1864 = vmul.u32.u64.compose %v1863, 3817748708
      %v1865 = vextract.low.u32 %v1864
      %v1866 = vextract.high.u32 %v1864
      %v1867 = vshrl.u32 %v1866, 4
      %v1868 = vmul.u32 %v1867, 18
      %v1869 = vsub.s32 %v1863, %v1868
      %v1870 = vsub.s32 0, %v1869
      %v1871 = vsel %vm1861, %v1870, %v1869
      %vm1872 = vcmp.lt.s32.totalorder %v1626, 0
      %v1873 = vsub.s32 0, %v1626
      %v1874 = vsel %vm1872, %v1873, %v1626
      %v1875 = vmul.u32.u64.compose %v1874, 3817748708
      %v1876 = vextract.low.u32 %v1875
      %v1877 = vextract.high.u32 %v1875
      %v1878 = vshrl.u32 %v1877, 4
      %v1879 = vmul.u32 %v1878, 18
      %v1880 = vsub.s32 %v1874, %v1879
      %v1881 = vsub.s32 0, %v1880
      %v1882 = vsel %vm1872, %v1881, %v1880
      %vm1883 = vcmp.lt.s32.totalorder %v1627, 0
      %v1884 = vsub.s32 0, %v1627
      %v1885 = vsel %vm1883, %v1884, %v1627
      %v1886 = vmul.u32.u64.compose %v1885, 3817748708
      %v1887 = vextract.low.u32 %v1886
      %v1888 = vextract.high.u32 %v1886
      %v1889 = vshrl.u32 %v1888, 4
      %v1890 = vmul.u32 %v1889, 18
      %v1891 = vsub.s32 %v1885, %v1890
      %v1892 = vsub.s32 0, %v1891
      %v1893 = vsel %vm1883, %v1892, %v1891
      %vm1894 = vcmp.lt.s32.totalorder %v1628, 0
      %v1895 = vsub.s32 0, %v1628
      %v1896 = vsel %vm1894, %v1895, %v1628
      %v1897 = vmul.u32.u64.compose %v1896, 3817748708
      %v1898 = vextract.low.u32 %v1897
      %v1899 = vextract.high.u32 %v1897
      %v1900 = vshrl.u32 %v1899, 4
      %v1901 = vmul.u32 %v1900, 18
      %v1902 = vsub.s32 %v1896, %v1901
      %v1903 = vsub.s32 0, %v1902
      %v1904 = vsel %vm1894, %v1903, %v1902
      %vm1905 = vcmp.lt.s32.totalorder %v1629, 0
      %v1906 = vsub.s32 0, %v1629
      %v1907 = vsel %vm1905, %v1906, %v1629
      %v1908 = vmul.u32.u64.compose %v1907, 3817748708
      %v1909 = vextract.low.u32 %v1908
      %v1910 = vextract.high.u32 %v1908
      %v1911 = vshrl.u32 %v1910, 4
      %v1912 = vmul.u32 %v1911, 18
      %v1913 = vsub.s32 %v1907, %v1912
      %v1914 = vsub.s32 0, %v1913
      %v1915 = vsel %vm1905, %v1914, %v1913
      %vm1916 = vcmp.lt.s32.totalorder %v1630, 0
      %v1917 = vsub.s32 0, %v1630
      %v1918 = vsel %vm1916, %v1917, %v1630
      %v1919 = vmul.u32.u64.compose %v1918, 3817748708
      %v1920 = vextract.low.u32 %v1919
      %v1921 = vextract.high.u32 %v1919
      %v1922 = vshrl.u32 %v1921, 4
      %v1923 = vmul.u32 %v1922, 18
      %v1924 = vsub.s32 %v1918, %v1923
      %v1925 = vsub.s32 0, %v1924
      %v1926 = vsel %vm1916, %v1925, %v1924
      %vm1927 = vcmp.lt.s32.totalorder %v1631, 0
      %v1928 = vsub.s32 0, %v1631
      %v1929 = vsel %vm1927, %v1928, %v1631
      %v1930 = vmul.u32.u64.compose %v1929, 3817748708
      %v1931 = vextract.low.u32 %v1930
      %v1932 = vextract.high.u32 %v1930
      %v1933 = vshrl.u32 %v1932, 4
      %v1934 = vmul.u32 %v1933, 18
      %v1935 = vsub.s32 %v1929, %v1934
      %v1936 = vsub.s32 0, %v1935
      %v1937 = vsel %vm1927, %v1936, %v1935
      %vm1938 = vcmp.lt.s32.totalorder %v1632, 0
      %v1939 = vsub.s32 0, %v1632
      %v1940 = vsel %vm1938, %v1939, %v1632
      %v1941 = vmul.u32.u64.compose %v1940, 3817748708
      %v1942 = vextract.low.u32 %v1941
      %v1943 = vextract.high.u32 %v1941
      %v1944 = vshrl.u32 %v1943, 4
      %v1945 = vmul.u32 %v1944, 18
      %v1946 = vsub.s32 %v1940, %v1945
      %v1947 = vsub.s32 0, %v1946
      %v1948 = vsel %vm1938, %v1947, %v1946
      %vm1949 = vcmp.lt.s32.totalorder %v1633, 0
      %v1950 = vsub.s32 0, %v1633
      %v1951 = vsel %vm1949, %v1950, %v1633
      %v1952 = vmul.u32.u64.compose %v1951, 3817748708
      %v1953 = vextract.low.u32 %v1952
      %v1954 = vextract.high.u32 %v1952
      %v1955 = vshrl.u32 %v1954, 4
      %v1956 = vmul.u32 %v1955, 18
      %v1957 = vsub.s32 %v1951, %v1956
      %v1958 = vsub.s32 0, %v1957
      %v1959 = vsel %vm1949, %v1958, %v1957
      %vm1960 = vcmp.lt.s32.totalorder %v1634, 0
      %v1961 = vsub.s32 0, %v1634
      %v1962 = vsel %vm1960, %v1961, %v1634
      %v1963 = vmul.u32.u64.compose %v1962, 3817748708
      %v1964 = vextract.low.u32 %v1963
      %v1965 = vextract.high.u32 %v1963
      %v1966 = vshrl.u32 %v1965, 4
      %v1967 = vmul.u32 %v1966, 18
      %v1968 = vsub.s32 %v1962, %v1967
      %v1969 = vsub.s32 0, %v1968
      %v1970 = vsel %vm1960, %v1969, %v1968
      %vm1971 = vcmp.lt.s32.totalorder %v1635, 0
      %v1972 = vsub.s32 0, %v1635
      %v1973 = vsel %vm1971, %v1972, %v1635
      %v1974 = vmul.u32.u64.compose %v1973, 3817748708
      %v1975 = vextract.low.u32 %v1974
      %v1976 = vextract.high.u32 %v1974
      %v1977 = vshrl.u32 %v1976, 4
      %v1978 = vmul.u32 %v1977, 18
      %v1979 = vsub.s32 %v1973, %v1978
      %v1980 = vsub.s32 0, %v1979
      %v1981 = vsel %vm1971, %v1980, %v1979
      %vm1982 = vcmp.lt.s32.totalorder %v1636, 0
      %v1983 = vsub.s32 0, %v1636
      %v1984 = vsel %vm1982, %v1983, %v1636
      %v1985 = vmul.u32.u64.compose %v1984, 3817748708
      %v1986 = vextract.low.u32 %v1985
      %v1987 = vextract.high.u32 %v1985
      %v1988 = vshrl.u32 %v1987, 4
      %v1989 = vmul.u32 %v1988, 18
      %v1990 = vsub.s32 %v1984, %v1989
      %v1991 = vsub.s32 0, %v1990
      %v1992 = vsel %vm1982, %v1991, %v1990
      %vm1993 = vcmp.lt.s32.totalorder %v1637, 0
      %v1994 = vsub.s32 0, %v1637
      %v1995 = vsel %vm1993, %v1994, %v1637
      %v1996 = vmul.u32.u64.compose %v1995, 3817748708
      %v1997 = vextract.low.u32 %v1996
      %v1998 = vextract.high.u32 %v1996
      %v1999 = vshrl.u32 %v1998, 4
      %v2000 = vmul.u32 %v1999, 18
      %v2001 = vsub.s32 %v1995, %v2000
      %v2002 = vsub.s32 0, %v2001
      %v2003 = vsel %vm1993, %v2002, %v2001
      %vm2004 = vcmp.lt.s32.totalorder %v1638, 0
      %v2005 = vsub.s32 0, %v1638
      %v2006 = vsel %vm2004, %v2005, %v1638
      %v2007 = vmul.u32.u64.compose %v2006, 3817748708
      %v2008 = vextract.low.u32 %v2007
      %v2009 = vextract.high.u32 %v2007
      %v2010 = vshrl.u32 %v2009, 4
      %v2011 = vmul.u32 %v2010, 18
      %v2012 = vsub.s32 %v2006, %v2011
      %v2013 = vsub.s32 0, %v2012
      %v2014 = vsel %vm2004, %v2013, %v2012
      %vm2015 = vcmp.lt.s32.totalorder %v1639, 0
      %v2016 = vsub.s32 0, %v1639
      %v2017 = vsel %vm2015, %v2016, %v1639
      %v2018 = vmul.u32.u64.compose %v2017, 3817748708
      %v2019 = vextract.low.u32 %v2018
      %v2020 = vextract.high.u32 %v2018
      %v2021 = vshrl.u32 %v2020, 4
      %v2022 = vmul.u32 %v2021, 18
      %v2023 = vsub.s32 %v2017, %v2022
      %v2024 = vsub.s32 0, %v2023
      %v2025 = vsel %vm2015, %v2024, %v2023
      %vm2026 = vcmp.lt.s32.totalorder %v1640, 0
      %v2027 = vsub.s32 0, %v1640
      %v2028 = vsel %vm2026, %v2027, %v1640
      %v2029 = vmul.u32.u64.compose %v2028, 3817748708
      %v2030 = vextract.low.u32 %v2029
      %v2031 = vextract.high.u32 %v2029
      %v2032 = vshrl.u32 %v2031, 4
      %v2033 = vmul.u32 %v2032, 18
      %v2034 = vsub.s32 %v2028, %v2033
      %v2035 = vsub.s32 0, %v2034
      %v2036 = vsel %vm2026, %v2035, %v2034
      %vm2037 = vcmp.ne.s32.totalorder %v1651, 0
      %vm2038 = vcmp.ne.s32.totalorder %v1662, 0
      %vm2039 = vcmp.ne.s32.totalorder %v1673, 0
      %vm2040 = vcmp.ne.s32.totalorder %v1684, 0
      %vm2041 = vcmp.ne.s32.totalorder %v1695, 0
      %vm2042 = vcmp.ne.s32.totalorder %v1706, 0
      %vm2043 = vcmp.ne.s32.totalorder %v1717, 0
      %vm2044 = vcmp.ne.s32.totalorder %v1728, 0
      %vm2045 = vcmp.ne.s32.totalorder %v1739, 0
      %vm2046 = vcmp.ne.s32.totalorder %v1750, 0
      %vm2047 = vcmp.ne.s32.totalorder %v1761, 0
      %vm2048 = vcmp.ne.s32.totalorder %v1772, 0
      %vm2049 = vcmp.ne.s32.totalorder %v1783, 0
      %vm2050 = vcmp.ne.s32.totalorder %v1794, 0
      %vm2051 = vcmp.ne.s32.totalorder %v1805, 0
      %vm2052 = vcmp.ne.s32.totalorder %v1816, 0
      %vm2053 = vcmp.ne.s32.totalorder %v1827, 0
      %vm2054 = vcmp.ne.s32.totalorder %v1838, 0
      %vm2055 = vcmp.ne.s32.totalorder %v1849, 0
      %vm2056 = vcmp.ne.s32.totalorder %v1860, 0
      %vm2057 = vcmp.ne.s32.totalorder %v1871, 0
      %vm2058 = vcmp.ne.s32.totalorder %v1882, 0
      %vm2059 = vcmp.ne.s32.totalorder %v1893, 0
      %vm2060 = vcmp.ne.s32.totalorder %v1904, 0
      %vm2061 = vcmp.ne.s32.totalorder %v1915, 0
      %vm2062 = vcmp.ne.s32.totalorder %v1926, 0
      %vm2063 = vcmp.ne.s32.totalorder %v1937, 0
      %vm2064 = vcmp.ne.s32.totalorder %v1948, 0
      %vm2065 = vcmp.ne.s32.totalorder %v1959, 0
      %vm2066 = vcmp.ne.s32.totalorder %v1970, 0
      %vm2067 = vcmp.ne.s32.totalorder %v1981, 0
      %vm2068 = vcmp.ne.s32.totalorder %v1992, 0
      %vm2069 = vcmp.ne.s32.totalorder %v2003, 0
      %vm2070 = vcmp.ne.s32.totalorder %v2014, 0
      %vm2071 = vcmp.ne.s32.totalorder %v2025, 0
      %vm2072 = vcmp.ne.s32.totalorder %v2036, 0
      %vm2073 = vcmp.lt.s32.totalorder %v1651, 0
      %vm2074 = vcmp.lt.s32.totalorder %v1662, 0
      %vm2075 = vcmp.lt.s32.totalorder %v1673, 0
      %vm2076 = vcmp.lt.s32.totalorder %v1684, 0
      %vm2077 = vcmp.lt.s32.totalorder %v1695, 0
      %vm2078 = vcmp.lt.s32.totalorder %v1706, 0
      %vm2079 = vcmp.lt.s32.totalorder %v1717, 0
      %vm2080 = vcmp.lt.s32.totalorder %v1728, 0
      %vm2081 = vcmp.lt.s32.totalorder %v1739, 0
      %vm2082 = vcmp.lt.s32.totalorder %v1750, 0
      %vm2083 = vcmp.lt.s32.totalorder %v1761, 0
      %vm2084 = vcmp.lt.s32.totalorder %v1772, 0
      %vm2085 = vcmp.lt.s32.totalorder %v1783, 0
      %vm2086 = vcmp.lt.s32.totalorder %v1794, 0
      %vm2087 = vcmp.lt.s32.totalorder %v1805, 0
      %vm2088 = vcmp.lt.s32.totalorder %v1816, 0
      %vm2089 = vcmp.lt.s32.totalorder %v1827, 0
      %vm2090 = vcmp.lt.s32.totalorder %v1838, 0
      %vm2091 = vcmp.lt.s32.totalorder %v1849, 0
      %vm2092 = vcmp.lt.s32.totalorder %v1860, 0
      %vm2093 = vcmp.lt.s32.totalorder %v1871, 0
      %vm2094 = vcmp.lt.s32.totalorder %v1882, 0
      %vm2095 = vcmp.lt.s32.totalorder %v1893, 0
      %vm2096 = vcmp.lt.s32.totalorder %v1904, 0
      %vm2097 = vcmp.lt.s32.totalorder %v1915, 0
      %vm2098 = vcmp.lt.s32.totalorder %v1926, 0
      %vm2099 = vcmp.lt.s32.totalorder %v1937, 0
      %vm2100 = vcmp.lt.s32.totalorder %v1948, 0
      %vm2101 = vcmp.lt.s32.totalorder %v1959, 0
      %vm2102 = vcmp.lt.s32.totalorder %v1970, 0
      %vm2103 = vcmp.lt.s32.totalorder %v1981, 0
      %vm2104 = vcmp.lt.s32.totalorder %v1992, 0
      %vm2105 = vcmp.lt.s32.totalorder %v2003, 0
      %vm2106 = vcmp.lt.s32.totalorder %v2014, 0
      %vm2107 = vcmp.lt.s32.totalorder %v2025, 0
      %vm2108 = vcmp.lt.s32.totalorder %v2036, 0
      %vm2109 = vmand %vm2073, %vm2037
      %vm2110 = vmand %vm2074, %vm2038
      %vm2111 = vmand %vm2075, %vm2039
      %vm2112 = vmand %vm2076, %vm2040
      %vm2113 = vmand %vm2077, %vm2041
      %vm2114 = vmand %vm2078, %vm2042
      %vm2115 = vmand %vm2079, %vm2043
      %vm2116 = vmand %vm2080, %vm2044
      %vm2117 = vmand %vm2081, %vm2045
      %vm2118 = vmand %vm2082, %vm2046
      %vm2119 = vmand %vm2083, %vm2047
      %vm2120 = vmand %vm2084, %vm2048
      %vm2121 = vmand %vm2085, %vm2049
      %vm2122 = vmand %vm2086, %vm2050
      %vm2123 = vmand %vm2087, %vm2051
      %vm2124 = vmand %vm2088, %vm2052
      %vm2125 = vmand %vm2089, %vm2053
      %vm2126 = vmand %vm2090, %vm2054
      %vm2127 = vmand %vm2091, %vm2055
      %vm2128 = vmand %vm2092, %vm2056
      %vm2129 = vmand %vm2093, %vm2057
      %vm2130 = vmand %vm2094, %vm2058
      %vm2131 = vmand %vm2095, %vm2059
      %vm2132 = vmand %vm2096, %vm2060
      %vm2133 = vmand %vm2097, %vm2061
      %vm2134 = vmand %vm2098, %vm2062
      %vm2135 = vmand %vm2099, %vm2063
      %vm2136 = vmand %vm2100, %vm2064
      %vm2137 = vmand %vm2101, %vm2065
      %vm2138 = vmand %vm2102, %vm2066
      %vm2139 = vmand %vm2103, %vm2067
      %vm2140 = vmand %vm2104, %vm2068
      %vm2141 = vmand %vm2105, %vm2069
      %vm2142 = vmand %vm2106, %vm2070
      %vm2143 = vmand %vm2107, %vm2071
      %vm2144 = vmand %vm2108, %vm2072
      %v2145 = vadd.s32 %v1651, 18
      %v2146 = vadd.s32 %v1662, 18
      %v2147 = vadd.s32 %v1673, 18
      %v2148 = vadd.s32 %v1684, 18
      %v2149 = vadd.s32 %v1695, 18
      %v2150 = vadd.s32 %v1706, 18
      %v2151 = vadd.s32 %v1717, 18
      %v2152 = vadd.s32 %v1728, 18
      %v2153 = vadd.s32 %v1739, 18
      %v2154 = vadd.s32 %v1750, 18
      %v2155 = vadd.s32 %v1761, 18
      %v2156 = vadd.s32 %v1772, 18
      %v2157 = vadd.s32 %v1783, 18
      %v2158 = vadd.s32 %v1794, 18
      %v2159 = vadd.s32 %v1805, 18
      %v2160 = vadd.s32 %v1816, 18
      %v2161 = vadd.s32 %v1827, 18
      %v2162 = vadd.s32 %v1838, 18
      %v2163 = vadd.s32 %v1849, 18
      %v2164 = vadd.s32 %v1860, 18
      %v2165 = vadd.s32 %v1871, 18
      %v2166 = vadd.s32 %v1882, 18
      %v2167 = vadd.s32 %v1893, 18
      %v2168 = vadd.s32 %v1904, 18
      %v2169 = vadd.s32 %v1915, 18
      %v2170 = vadd.s32 %v1926, 18
      %v2171 = vadd.s32 %v1937, 18
      %v2172 = vadd.s32 %v1948, 18
      %v2173 = vadd.s32 %v1959, 18
      %v2174 = vadd.s32 %v1970, 18
      %v2175 = vadd.s32 %v1981, 18
      %v2176 = vadd.s32 %v1992, 18
      %v2177 = vadd.s32 %v2003, 18
      %v2178 = vadd.s32 %v2014, 18
      %v2179 = vadd.s32 %v2025, 18
      %v2180 = vadd.s32 %v2036, 18
      %v2181 = vsel %vm2109, %v2145, %v1651
      %v2182 = vsel %vm2110, %v2146, %v1662
      %v2183 = vsel %vm2111, %v2147, %v1673
      %v2184 = vsel %vm2112, %v2148, %v1684
      %v2185 = vsel %vm2113, %v2149, %v1695
      %v2186 = vsel %vm2114, %v2150, %v1706
      %v2187 = vsel %vm2115, %v2151, %v1717
      %v2188 = vsel %vm2116, %v2152, %v1728
      %v2189 = vsel %vm2117, %v2153, %v1739
      %v2190 = vsel %vm2118, %v2154, %v1750
      %v2191 = vsel %vm2119, %v2155, %v1761
      %v2192 = vsel %vm2120, %v2156, %v1772
      %v2193 = vsel %vm2121, %v2157, %v1783
      %v2194 = vsel %vm2122, %v2158, %v1794
      %v2195 = vsel %vm2123, %v2159, %v1805
      %v2196 = vsel %vm2124, %v2160, %v1816
      %v2197 = vsel %vm2125, %v2161, %v1827
      %v2198 = vsel %vm2126, %v2162, %v1838
      %v2199 = vsel %vm2127, %v2163, %v1849
      %v2200 = vsel %vm2128, %v2164, %v1860
      %v2201 = vsel %vm2129, %v2165, %v1871
      %v2202 = vsel %vm2130, %v2166, %v1882
      %v2203 = vsel %vm2131, %v2167, %v1893
      %v2204 = vsel %vm2132, %v2168, %v1904
      %v2205 = vsel %vm2133, %v2169, %v1915
      %v2206 = vsel %vm2134, %v2170, %v1926
      %v2207 = vsel %vm2135, %v2171, %v1937
      %v2208 = vsel %vm2136, %v2172, %v1948
      %v2209 = vsel %vm2137, %v2173, %v1959
      %v2210 = vsel %vm2138, %v2174, %v1970
      %v2211 = vsel %vm2139, %v2175, %v1981
      %v2212 = vsel %vm2140, %v2176, %v1992
      %v2213 = vsel %vm2141, %v2177, %v2003
      %v2214 = vsel %vm2142, %v2178, %v2014
      %v2215 = vsel %vm2143, %v2179, %v2025
      %v2216 = vsel %vm2144, %v2180, %v2036
      %vm2217 = vcmp.lt.s32.totalorder %v2181, 16
      %vm2218 = vcmp.lt.s32.totalorder %v2182, 16
      %vm2219 = vcmp.lt.s32.totalorder %v2183, 16
      %vm2220 = vcmp.lt.s32.totalorder %v2184, 16
      %vm2221 = vcmp.lt.s32.totalorder %v2185, 16
      %vm2222 = vcmp.lt.s32.totalorder %v2186, 16
      %vm2223 = vcmp.lt.s32.totalorder %v2187, 16
      %vm2224 = vcmp.lt.s32.totalorder %v2188, 16
      %vm2225 = vcmp.lt.s32.totalorder %v2189, 16
      %vm2226 = vcmp.lt.s32.totalorder %v2190, 16
      %vm2227 = vcmp.lt.s32.totalorder %v2191, 16
      %vm2228 = vcmp.lt.s32.totalorder %v2192, 16
      %vm2229 = vcmp.lt.s32.totalorder %v2193, 16
      %vm2230 = vcmp.lt.s32.totalorder %v2194, 16
      %vm2231 = vcmp.lt.s32.totalorder %v2195, 16
      %vm2232 = vcmp.lt.s32.totalorder %v2196, 16
      %vm2233 = vcmp.lt.s32.totalorder %v2197, 16
      %vm2234 = vcmp.lt.s32.totalorder %v2198, 16
      %vm2235 = vcmp.lt.s32.totalorder %v2199, 16
      %vm2236 = vcmp.lt.s32.totalorder %v2200, 16
      %vm2237 = vcmp.lt.s32.totalorder %v2201, 16
      %vm2238 = vcmp.lt.s32.totalorder %v2202, 16
      %vm2239 = vcmp.lt.s32.totalorder %v2203, 16
      %vm2240 = vcmp.lt.s32.totalorder %v2204, 16
      %vm2241 = vcmp.lt.s32.totalorder %v2205, 16
      %vm2242 = vcmp.lt.s32.totalorder %v2206, 16
      %vm2243 = vcmp.lt.s32.totalorder %v2207, 16
      %vm2244 = vcmp.lt.s32.totalorder %v2208, 16
      %vm2245 = vcmp.lt.s32.totalorder %v2209, 16
      %vm2246 = vcmp.lt.s32.totalorder %v2210, 16
      %vm2247 = vcmp.lt.s32.totalorder %v2211, 16
      %vm2248 = vcmp.lt.s32.totalorder %v2212, 16
      %vm2249 = vcmp.lt.s32.totalorder %v2213, 16
      %vm2250 = vcmp.lt.s32.totalorder %v2214, 16
      %vm2251 = vcmp.lt.s32.totalorder %v2215, 16
      %vm2252 = vcmp.lt.s32.totalorder %v2216, 16
      %v2253 = vsel %vm2217, 1, 0
      %v2254 = vsel %vm2218, 1, 0
      %v2255 = vsel %vm2219, 1, 0
      %v2256 = vsel %vm2220, 1, 0
      %v2257 = vsel %vm2221, 1, 0
      %v2258 = vsel %vm2222, 1, 0
      %v2259 = vsel %vm2223, 1, 0
      %v2260 = vsel %vm2224, 1, 0
      %v2261 = vsel %vm2225, 1, 0
      %v2262 = vsel %vm2226, 1, 0
      %v2263 = vsel %vm2227, 1, 0
      %v2264 = vsel %vm2228, 1, 0
      %v2265 = vsel %vm2229, 1, 0
      %v2266 = vsel %vm2230, 1, 0
      %v2267 = vsel %vm2231, 1, 0
      %v2268 = vsel %vm2232, 1, 0
      %v2269 = vsel %vm2233, 1, 0
      %v2270 = vsel %vm2234, 1, 0
      %v2271 = vsel %vm2235, 1, 0
      %v2272 = vsel %vm2236, 1, 0
      %v2273 = vsel %vm2237, 1, 0
      %v2274 = vsel %vm2238, 1, 0
      %v2275 = vsel %vm2239, 1, 0
      %v2276 = vsel %vm2240, 1, 0
      %v2277 = vsel %vm2241, 1, 0
      %v2278 = vsel %vm2242, 1, 0
      %v2279 = vsel %vm2243, 1, 0
      %v2280 = vsel %vm2244, 1, 0
      %v2281 = vsel %vm2245, 1, 0
      %v2282 = vsel %vm2246, 1, 0
      %v2283 = vsel %vm2247, 1, 0
      %v2284 = vsel %vm2248, 1, 0
      %v2285 = vsel %vm2249, 1, 0
      %v2286 = vsel %vm2250, 1, 0
      %v2287 = vsel %vm2251, 1, 0
      %v2288 = vsel %vm2252, 1, 0
      %vm2289 = vcmp.eq.s32.totalorder %v2253, 1
      %vm2290 = vcmp.eq.s32.totalorder %v2254, 1
      %vm2291 = vcmp.eq.s32.totalorder %v2255, 1
      %vm2292 = vcmp.eq.s32.totalorder %v2256, 1
      %vm2293 = vcmp.eq.s32.totalorder %v2257, 1
      %vm2294 = vcmp.eq.s32.totalorder %v2258, 1
      %vm2295 = vcmp.eq.s32.totalorder %v2259, 1
      %vm2296 = vcmp.eq.s32.totalorder %v2260, 1
      %vm2297 = vcmp.eq.s32.totalorder %v2261, 1
      %vm2298 = vcmp.eq.s32.totalorder %v2262, 1
      %vm2299 = vcmp.eq.s32.totalorder %v2263, 1
      %vm2300 = vcmp.eq.s32.totalorder %v2264, 1
      %vm2301 = vcmp.eq.s32.totalorder %v2265, 1
      %vm2302 = vcmp.eq.s32.totalorder %v2266, 1
      %vm2303 = vcmp.eq.s32.totalorder %v2267, 1
      %vm2304 = vcmp.eq.s32.totalorder %v2268, 1
      %vm2305 = vcmp.eq.s32.totalorder %v2269, 1
      %vm2306 = vcmp.eq.s32.totalorder %v2270, 1
      %vm2307 = vcmp.eq.s32.totalorder %v2271, 1
      %vm2308 = vcmp.eq.s32.totalorder %v2272, 1
      %vm2309 = vcmp.eq.s32.totalorder %v2273, 1
      %vm2310 = vcmp.eq.s32.totalorder %v2274, 1
      %vm2311 = vcmp.eq.s32.totalorder %v2275, 1
      %vm2312 = vcmp.eq.s32.totalorder %v2276, 1
      %vm2313 = vcmp.eq.s32.totalorder %v2277, 1
      %vm2314 = vcmp.eq.s32.totalorder %v2278, 1
      %vm2315 = vcmp.eq.s32.totalorder %v2279, 1
      %vm2316 = vcmp.eq.s32.totalorder %v2280, 1
      %vm2317 = vcmp.eq.s32.totalorder %v2281, 1
      %vm2318 = vcmp.eq.s32.totalorder %v2282, 1
      %vm2319 = vcmp.eq.s32.totalorder %v2283, 1
      %vm2320 = vcmp.eq.s32.totalorder %v2284, 1
      %vm2321 = vcmp.eq.s32.totalorder %v2285, 1
      %vm2322 = vcmp.eq.s32.totalorder %v2286, 1
      %vm2323 = vcmp.eq.s32.totalorder %v2287, 1
      %vm2324 = vcmp.eq.s32.totalorder %v2288, 1
      %v2325 = vsel %vm2289, %v1462, 0.0
      %v2326 = vsel %vm2290, %v1465, 0.0
      %v2327 = vsel %vm2291, %v1470, 0.0
      %v2328 = vsel %vm2292, %v1473, 0.0
      %v2329 = vsel %vm2293, %v1478, 0.0
      %v2330 = vsel %vm2294, %v1481, 0.0
      %v2331 = vsel %vm2295, %v1486, 0.0
      %v2332 = vsel %vm2296, %v1489, 0.0
      %v2333 = vsel %vm2297, %v1494, 0.0
      %v2334 = vsel %vm2298, %v1497, 0.0
      %v2335 = vsel %vm2299, %v1502, 0.0
      %v2336 = vsel %vm2300, %v1505, 0.0
      %v2337 = vsel %vm2301, %v1510, 0.0
      %v2338 = vsel %vm2302, %v1513, 0.0
      %v2339 = vsel %vm2303, %v1518, 0.0
      %v2340 = vsel %vm2304, %v1521, 0.0
      %v2341 = vsel %vm2305, %v1526, 0.0
      %v2342 = vsel %vm2306, %v1529, 0.0
      %v2343 = vsel %vm2307, %v1534, 0.0
      %v2344 = vsel %vm2308, %v1537, 0.0
      %v2345 = vsel %vm2309, %v1542, 0.0
      %v2346 = vsel %vm2310, %v1545, 0.0
      %v2347 = vsel %vm2311, %v1550, 0.0
      %v2348 = vsel %vm2312, %v1553, 0.0
      %v2349 = vsel %vm2313, %v1558, 0.0
      %v2350 = vsel %vm2314, %v1561, 0.0
      %v2351 = vsel %vm2315, %v1566, 0.0
      %v2352 = vsel %vm2316, %v1569, 0.0
      %v2353 = vsel %vm2317, %v1574, 0.0
      %v2354 = vsel %vm2318, %v1577, 0.0
      %v2355 = vsel %vm2319, %v1582, 0.0
      %v2356 = vsel %vm2320, %v1585, 0.0
      %v2357 = vsel %vm2321, %v1590, 0.0
      %v2358 = vsel %vm2322, %v1593, 0.0
      %v2359 = vsel %vm2323, %v1598, 0.0
      %v2360 = vsel %vm2324, %v1601, 0.0
      %v2361 = vsel %vm1061, %v2325, 0.0
      %v2362 = vsel %vm1061, %v2326, 0.0
      %v2363 = vadd.f32 %v2361, %v2362
      %v2364 = vsel %vm1061, %v2327, 0.0
      %v2365 = vadd.f32 %v2363, %v2364
      %v2366 = vsel %vm1061, %v2328, 0.0
      %v2367 = vadd.f32 %v2365, %v2366
      %v2368 = vsel %vm1061, %v2329, 0.0
      %v2369 = vadd.f32 %v2367, %v2368
      %v2370 = vsel %vm1061, %v2330, 0.0
      %v2371 = vadd.f32 %v2369, %v2370
      %v2372 = vsel %vm1061, %v2331, 0.0
      %v2373 = vadd.f32 %v2371, %v2372
      %v2374 = vsel %vm1061, %v2332, 0.0
      %v2375 = vadd.f32 %v2373, %v2374
      %v2376 = vsel %vm1061, %v2333, 0.0
      %v2377 = vadd.f32 %v2375, %v2376
      %v2378 = vsel %vm1061, %v2334, 0.0
      %v2379 = vadd.f32 %v2377, %v2378
      %v2380 = vsel %vm1061, %v2335, 0.0
      %v2381 = vadd.f32 %v2379, %v2380
      %v2382 = vsel %vm1061, %v2336, 0.0
      %v2383 = vadd.f32 %v2381, %v2382
      %v2384 = vsel %vm1061, %v2337, 0.0
      %v2385 = vadd.f32 %v2383, %v2384
      %v2386 = vsel %vm1061, %v2338, 0.0
      %v2387 = vadd.f32 %v2385, %v2386
      %v2388 = vsel %vm1061, %v2339, 0.0
      %v2389 = vadd.f32 %v2387, %v2388
      %v2390 = vsel %vm1061, %v2340, 0.0
      %v2391 = vadd.f32 %v2389, %v2390
      %v2392 = vsel %vm1061, %v2341, 0.0
      %v2393 = vadd.f32 %v2391, %v2392
      %v2394 = vsel %vm1061, %v2342, 0.0
      %v2395 = vadd.f32 %v2393, %v2394
      %v2396 = vsel %vm1061, %v2343, 0.0
      %v2397 = vadd.f32 %v2395, %v2396
      %v2398 = vsel %vm1061, %v2344, 0.0
      %v2399 = vadd.f32 %v2397, %v2398
      %v2400 = vsel %vm1061, %v2345, 0.0
      %v2401 = vadd.f32 %v2399, %v2400
      %v2402 = vsel %vm1061, %v2346, 0.0
      %v2403 = vadd.f32 %v2401, %v2402
      %v2404 = vsel %vm1061, %v2347, 0.0
      %v2405 = vadd.f32 %v2403, %v2404
      %v2406 = vsel %vm1061, %v2348, 0.0
      %v2407 = vadd.f32 %v2405, %v2406
      %v2408 = vsel %vm1061, %v2349, 0.0
      %v2409 = vadd.f32 %v2407, %v2408
      %v2410 = vsel %vm1061, %v2350, 0.0
      %v2411 = vadd.f32 %v2409, %v2410
      %v2412 = vsel %vm1061, %v2351, 0.0
      %v2413 = vadd.f32 %v2411, %v2412
      %v2414 = vsel %vm1061, %v2352, 0.0
      %v2415 = vadd.f32 %v2413, %v2414
      %v2416 = vsel %vm1061, %v2353, 0.0
      %v2417 = vadd.f32 %v2415, %v2416
      %v2418 = vsel %vm1061, %v2354, 0.0
      %v2419 = vadd.f32 %v2417, %v2418
      %v2420 = vsel %vm1061, %v2355, 0.0
      %v2421 = vadd.f32 %v2419, %v2420
      %v2422 = vsel %vm1061, %v2356, 0.0
      %v2423 = vadd.f32 %v2421, %v2422
      %v2424 = vsel %vm1061, %v2357, 0.0
      %v2425 = vadd.f32 %v2423, %v2424
      %v2426 = vsel %vm1061, %v2358, 0.0
      %v2427 = vadd.f32 %v2425, %v2426
      %v2428 = vsel %vm1061, %v2359, 0.0
      %v2429 = vadd.f32 %v2427, %v2428
      %v2430 = vsel %vm1061, %v2360, 0.0
      %v2431 = vadd.f32 %v2429, %v2430
      %v2432 = vrot.slane %v2431, 4
      %v2433 = vadd.f32 %v2431, %v2432
      %v2434 = vrot.slane %v2433, 2
      %v2435 = vadd.f32 %v2433, %v2434
      %v2436 = vrot.slane %v2435, 1
      %v2437 = vadd.f32 %v2435, %v2436
      %v2438 = vmul.f32 %v2325, %v2325
      %v2439 = vmul.f32 %v2326, %v2326
      %v2440 = vmul.f32 %v2327, %v2327
      %v2441 = vmul.f32 %v2328, %v2328
      %v2442 = vmul.f32 %v2329, %v2329
      %v2443 = vmul.f32 %v2330, %v2330
      %v2444 = vmul.f32 %v2331, %v2331
      %v2445 = vmul.f32 %v2332, %v2332
      %v2446 = vmul.f32 %v2333, %v2333
      %v2447 = vmul.f32 %v2334, %v2334
      %v2448 = vmul.f32 %v2335, %v2335
      %v2449 = vmul.f32 %v2336, %v2336
      %v2450 = vmul.f32 %v2337, %v2337
      %v2451 = vmul.f32 %v2338, %v2338
      %v2452 = vmul.f32 %v2339, %v2339
      %v2453 = vmul.f32 %v2340, %v2340
      %v2454 = vmul.f32 %v2341, %v2341
      %v2455 = vmul.f32 %v2342, %v2342
      %v2456 = vmul.f32 %v2343, %v2343
      %v2457 = vmul.f32 %v2344, %v2344
      %v2458 = vmul.f32 %v2345, %v2345
      %v2459 = vmul.f32 %v2346, %v2346
      %v2460 = vmul.f32 %v2347, %v2347
      %v2461 = vmul.f32 %v2348, %v2348
      %v2462 = vmul.f32 %v2349, %v2349
      %v2463 = vmul.f32 %v2350, %v2350
      %v2464 = vmul.f32 %v2351, %v2351
      %v2465 = vmul.f32 %v2352, %v2352
      %v2466 = vmul.f32 %v2353, %v2353
      %v2467 = vmul.f32 %v2354, %v2354
      %v2468 = vmul.f32 %v2355, %v2355
      %v2469 = vmul.f32 %v2356, %v2356
      %v2470 = vmul.f32 %v2357, %v2357
      %v2471 = vmul.f32 %v2358, %v2358
      %v2472 = vmul.f32 %v2359, %v2359
      %v2473 = vmul.f32 %v2360, %v2360
      %v2474 = vsel %vm1061, %v2438, 0.0
      %v2475 = vsel %vm1061, %v2439, 0.0
      %v2476 = vadd.f32 %v2474, %v2475
      %v2477 = vsel %vm1061, %v2440, 0.0
      %v2478 = vadd.f32 %v2476, %v2477
      %v2479 = vsel %vm1061, %v2441, 0.0
      %v2480 = vadd.f32 %v2478, %v2479
      %v2481 = vsel %vm1061, %v2442, 0.0
      %v2482 = vadd.f32 %v2480, %v2481
      %v2483 = vsel %vm1061, %v2443, 0.0
      %v2484 = vadd.f32 %v2482, %v2483
      %v2485 = vsel %vm1061, %v2444, 0.0
      %v2486 = vadd.f32 %v2484, %v2485
      %v2487 = vsel %vm1061, %v2445, 0.0
      %v2488 = vadd.f32 %v2486, %v2487
      %v2489 = vsel %vm1061, %v2446, 0.0
      %v2490 = vadd.f32 %v2488, %v2489
      %v2491 = vsel %vm1061, %v2447, 0.0
      %v2492 = vadd.f32 %v2490, %v2491
      %v2493 = vsel %vm1061, %v2448, 0.0
      %v2494 = vadd.f32 %v2492, %v2493
      %v2495 = vsel %vm1061, %v2449, 0.0
      %v2496 = vadd.f32 %v2494, %v2495
      %v2497 = vsel %vm1061, %v2450, 0.0
      %v2498 = vadd.f32 %v2496, %v2497
      %v2499 = vsel %vm1061, %v2451, 0.0
      %v2500 = vadd.f32 %v2498, %v2499
      %v2501 = vsel %vm1061, %v2452, 0.0
      %v2502 = vadd.f32 %v2500, %v2501
      %v2503 = vsel %vm1061, %v2453, 0.0
      %v2504 = vadd.f32 %v2502, %v2503
      %v2505 = vsel %vm1061, %v2454, 0.0
      %v2506 = vadd.f32 %v2504, %v2505
      %v2507 = vsel %vm1061, %v2455, 0.0
      %v2508 = vadd.f32 %v2506, %v2507
      %v2509 = vsel %vm1061, %v2456, 0.0
      %v2510 = vadd.f32 %v2508, %v2509
      %v2511 = vsel %vm1061, %v2457, 0.0
      %v2512 = vadd.f32 %v2510, %v2511
      %v2513 = vsel %vm1061, %v2458, 0.0
      %v2514 = vadd.f32 %v2512, %v2513
      %v2515 = vsel %vm1061, %v2459, 0.0
      %v2516 = vadd.f32 %v2514, %v2515
      %v2517 = vsel %vm1061, %v2460, 0.0
      %v2518 = vadd.f32 %v2516, %v2517
      %v2519 = vsel %vm1061, %v2461, 0.0
      %v2520 = vadd.f32 %v2518, %v2519
      %v2521 = vsel %vm1061, %v2462, 0.0
      %v2522 = vadd.f32 %v2520, %v2521
      %v2523 = vsel %vm1061, %v2463, 0.0
      %v2524 = vadd.f32 %v2522, %v2523
      %v2525 = vsel %vm1061, %v2464, 0.0
      %v2526 = vadd.f32 %v2524, %v2525
      %v2527 = vsel %vm1061, %v2465, 0.0
      %v2528 = vadd.f32 %v2526, %v2527
      %v2529 = vsel %vm1061, %v2466, 0.0
      %v2530 = vadd.f32 %v2528, %v2529
      %v2531 = vsel %vm1061, %v2467, 0.0
      %v2532 = vadd.f32 %v2530, %v2531
      %v2533 = vsel %vm1061, %v2468, 0.0
      %v2534 = vadd.f32 %v2532, %v2533
      %v2535 = vsel %vm1061, %v2469, 0.0
      %v2536 = vadd.f32 %v2534, %v2535
      %v2537 = vsel %vm1061, %v2470, 0.0
      %v2538 = vadd.f32 %v2536, %v2537
      %v2539 = vsel %vm1061, %v2471, 0.0
      %v2540 = vadd.f32 %v2538, %v2539
      %v2541 = vsel %vm1061, %v2472, 0.0
      %v2542 = vadd.f32 %v2540, %v2541
      %v2543 = vsel %vm1061, %v2473, 0.0
      %v2544 = vadd.f32 %v2542, %v2543
      %v2545 = vrot.slane %v2544, 4
      %v2546 = vadd.f32 %v2544, %v2545
      %v2547 = vrot.slane %v2546, 2
      %v2548 = vadd.f32 %v2546, %v2547
      %v2549 = vrot.slane %v2548, 1
      %v2550 = vadd.f32 %v2548, %v2549
      %vm2551 = vcmask 1040384
      %v2552 = vsel %vm2551, %v2437, %v2550
      %vm2553 = vcmask 254976
      %2554 = vst.msk [vmem:[%s181] sm:$0x3] %vm2553, %v2552
      %v2555 = vpack.c.bf16 %v1465, %v1462
      %v2556 = vpack.c.bf16 %v1473, %v1470
      %v2557 = vpack.c.bf16 %v1481, %v1478
      %v2558 = vpack.c.bf16 %v1489, %v1486
      %v2559 = vpack.c.bf16 %v1497, %v1494
      %v2560 = vpack.c.bf16 %v1505, %v1502
      %v2561 = vpack.c.bf16 %v1513, %v1510
      %v2562 = vpack.c.bf16 %v1521, %v1518
      %v2563 = vpack.c.bf16 %v1529, %v1526
      %v2564 = vpack.c.bf16 %v1537, %v1534
      %v2565 = vpack.c.bf16 %v1545, %v1542
      %v2566 = vpack.c.bf16 %v1553, %v1550
      %v2567 = vpack.c.bf16 %v1561, %v1558
      %v2568 = vpack.c.bf16 %v1569, %v1566
      %v2569 = vpack.c.bf16 %v1577, %v1574
      %v2570 = vpack.c.bf16 %v1585, %v1582
      %v2571 = vpack.c.bf16 %v1593, %v1590
      %v2572 = vpack.c.bf16 %v1601, %v1598
      %v2591 = vunpack.c.l.b16 %v2555
      %v2592 = vunpack.c.h.b16 %v2555
      %v2593 = vunpack.c.l.b16 %v2556
      %v2594 = vunpack.c.h.b16 %v2556
      %v2595 = vunpack.c.l.b16 %v2557
      %v2596 = vunpack.c.h.b16 %v2557
      %v2597 = vunpack.c.l.b16 %v2558
      %v2598 = vunpack.c.h.b16 %v2558
      %v2599 = vunpack.c.l.b16 %v2559
      %v2600 = vunpack.c.h.b16 %v2559
      %v2601 = vunpack.c.l.b16 %v2560
      %v2602 = vunpack.c.h.b16 %v2560
      %v2603 = vunpack.c.l.b16 %v2561
      %v2604 = vunpack.c.h.b16 %v2561
      %v2605 = vunpack.c.l.b16 %v2562
      %v2606 = vunpack.c.h.b16 %v2562
      %v2607 = vunpack.c.l.b16 %v2563
      %v2608 = vunpack.c.h.b16 %v2563
      %v2609 = vunpack.c.l.b16 %v2564
      %v2610 = vunpack.c.h.b16 %v2564
      %v2611 = vunpack.c.l.b16 %v2565
      %v2612 = vunpack.c.h.b16 %v2565
      %v2613 = vunpack.c.l.b16 %v2566
      %v2614 = vunpack.c.h.b16 %v2566
      %v2615 = vunpack.c.l.b16 %v2567
      %v2616 = vunpack.c.h.b16 %v2567
      %v2617 = vunpack.c.l.b16 %v2568
      %v2618 = vunpack.c.h.b16 %v2568
      %v2619 = vunpack.c.l.b16 %v2569
      %v2620 = vunpack.c.h.b16 %v2569
      %v2621 = vunpack.c.l.b16 %v2570
      %v2622 = vunpack.c.h.b16 %v2570
      %v2623 = vunpack.c.l.b16 %v2571
      %v2624 = vunpack.c.h.b16 %v2571
      %v2625 = vunpack.c.l.b16 %v2572
      %v2626 = vunpack.c.h.b16 %v2572
      %v2627 = vpack.c.b16 %v2591, %v2591
      %v2628 = vpack.c.b16 %v2592, %v2592
      %v2629 = vpack.c.b16 %v2593, %v2593
      %v2630 = vpack.c.b16 %v2594, %v2594
      %v2631 = vpack.c.b16 %v2595, %v2595
      %v2632 = vpack.c.b16 %v2596, %v2596
      %v2633 = vpack.c.b16 %v2597, %v2597
      %v2634 = vpack.c.b16 %v2598, %v2598
      %v2635 = vpack.c.b16 %v2599, %v2599
      %v2636 = vpack.c.b16 %v2600, %v2600
      %v2637 = vpack.c.b16 %v2601, %v2601
      %v2638 = vpack.c.b16 %v2602, %v2602
      %v2639 = vpack.c.b16 %v2603, %v2603
      %v2640 = vpack.c.b16 %v2604, %v2604
      %v2641 = vpack.c.b16 %v2605, %v2605
      %v2642 = vpack.c.b16 %v2606, %v2606
      %v2643 = vpack.c.b16 %v2607, %v2607
      %v2644 = vpack.c.b16 %v2608, %v2608
      %v2645 = vpack.c.b16 %v2609, %v2609
      %v2646 = vpack.c.b16 %v2610, %v2610
      %v2647 = vpack.c.b16 %v2611, %v2611
      %v2648 = vpack.c.b16 %v2612, %v2612
      %v2649 = vpack.c.b16 %v2613, %v2613
      %v2650 = vpack.c.b16 %v2614, %v2614
      %v2651 = vpack.c.b16 %v2615, %v2615
      %v2652 = vpack.c.b16 %v2616, %v2616
      %v2653 = vpack.c.b16 %v2617, %v2617
      %v2654 = vpack.c.b16 %v2618, %v2618
      %v2655 = vpack.c.b16 %v2619, %v2619
      %v2656 = vpack.c.b16 %v2620, %v2620
      %v2657 = vpack.c.b16 %v2621, %v2621
      %v2658 = vpack.c.b16 %v2622, %v2622
      %v2659 = vpack.c.b16 %v2623, %v2623
      %v2660 = vpack.c.b16 %v2624, %v2624
      %v2661 = vpack.c.b16 %v2625, %v2625
      %v2662 = vpack.c.b16 %v2626, %v2626
      %vm2699 = vcmask 257024
      %2700 = vst.msk [vmem:[%s177] sm:$0xf] %vm2699, %v2627
      %2701 = vst.msk [vmem:[%s177 + $0x4] sm:$0xf] %vm2699, %v2628
      %2702 = vst.msk [vmem:[%s177 + $0x8] sm:$0xf] %vm2699, %v2629
      %2703 = vst.msk [vmem:[%s177 + $0xc] sm:$0xf] %vm2699, %v2630
      %2704 = vst.msk [vmem:[%s177 + $0x10] sm:$0xf] %vm2699, %v2631
      %2705 = vst.msk [vmem:[%s177 + $0x14] sm:$0xf] %vm2699, %v2632
      %2706 = vst.msk [vmem:[%s177 + $0x18] sm:$0xf] %vm2699, %v2633
      %2707 = vst.msk [vmem:[%s177 + $0x1c] sm:$0xf] %vm2699, %v2634
      %2708 = vst.msk [vmem:[%s177 + $0x20] sm:$0xf] %vm2699, %v2635
      %2709 = vst.msk [vmem:[%s177 + $0x24] sm:$0xf] %vm2699, %v2636
      %2710 = vst.msk [vmem:[%s177 + $0x28] sm:$0xf] %vm2699, %v2637
      %2711 = vst.msk [vmem:[%s177 + $0x2c] sm:$0xf] %vm2699, %v2638
      %2712 = vst.msk [vmem:[%s177 + $0x30] sm:$0xf] %vm2699, %v2639
      %2713 = vst.msk [vmem:[%s177 + $0x34] sm:$0xf] %vm2699, %v2640
      %2714 = vst.msk [vmem:[%s177 + $0x38] sm:$0xf] %vm2699, %v2641
      %2715 = vst.msk [vmem:[%s177 + $0x3c] sm:$0xf] %vm2699, %v2642
      %2716 = vst.msk [vmem:[%s177 + $0x40] sm:$0xf] %vm2699, %v2643
      %2717 = vst.msk [vmem:[%s177 + $0x44] sm:$0xf] %vm2699, %v2644
      %2718 = vst.msk [vmem:[%s177 + $0x48] sm:$0xf] %vm2699, %v2645
      %2719 = vst.msk [vmem:[%s177 + $0x4c] sm:$0xf] %vm2699, %v2646
      %2720 = vst.msk [vmem:[%s177 + $0x50] sm:$0xf] %vm2699, %v2647
      %2721 = vst.msk [vmem:[%s177 + $0x54] sm:$0xf] %vm2699, %v2648
      %2722 = vst.msk [vmem:[%s177 + $0x58] sm:$0xf] %vm2699, %v2649
      %2723 = vst.msk [vmem:[%s177 + $0x5c] sm:$0xf] %vm2699, %v2650
      %2724 = vst.msk [vmem:[%s177 + $0x60] sm:$0xf] %vm2699, %v2651
      %2725 = vst.msk [vmem:[%s177 + $0x64] sm:$0xf] %vm2699, %v2652
      %2726 = vst.msk [vmem:[%s177 + $0x68] sm:$0xf] %vm2699, %v2653
      %2727 = vst.msk [vmem:[%s177 + $0x6c] sm:$0xf] %vm2699, %v2654
      %2728 = vst.msk [vmem:[%s177 + $0x70] sm:$0xf] %vm2699, %v2655
      %2729 = vst.msk [vmem:[%s177 + $0x74] sm:$0xf] %vm2699, %v2656
      %2730 = vst.msk [vmem:[%s177 + $0x78] sm:$0xf] %vm2699, %v2657
      %2731 = vst.msk [vmem:[%s177 + $0x7c] sm:$0xf] %vm2699, %v2658
      %2732 = vst.msk [vmem:[%s177 + $0x80] sm:$0xf] %vm2699, %v2659
      %2733 = vst.msk [vmem:[%s177 + $0x84] sm:$0xf] %vm2699, %v2660
      %2734 = vst.msk [vmem:[%s177 + $0x88] sm:$0xf] %vm2699, %v2661
      %2735 = vst.msk [vmem:[%s177 + $0x8c] sm:$0xf] %vm2699, %v2662
      %p2736 = scmp.lt.s32.totalorder %s15, 1
      %s2737 = scalar_select %p2736, %s15, 1
      %s2738 = smul.addr %s2737, 36
      %s2739 = smul.addr %s2738, 4
      %s2740 = scalar_lea.vmem %s2, %s2739
      %p2741 = scmp.lt.s32.totalorder %s15, 1
      %s2742 = scalar_select %p2741, %s15, 1
      %s2743 = smul.addr %s2742, 2
      %s2744 = scalar_lea.vmem %s3, %s2743
      // Predicated region
      $region29: #{generator_forward.8} parent=27 // pred_check
        %p2745 = pneg %p80
      $region30: #{generator_forward.8} parent=27 // pred_check_branch
        %2747 = sbr.rel (%p2745) target = $region32
      $region31: #{generator_forward.8} parent=27 // pred_region
        _
      $region32: #{generator_forward.8} parent=27 // pred_fallthru
        _
      // Predicated region
      $region33: #{generator_forward.8} parent=27 // pred_check
        %p2748 = pneg %p106
      $region34: #{generator_forward.8} parent=27 // pred_check_branch
        %2750 = sbr.rel (%p2748) target = $region36
      $region35: #{generator_forward.8} parent=27 // pred_region
        _
      $region36: #{generator_forward.8} parent=27 // pred_fallthru
        _
    $region28: #{generator_forward.8} parent=5 // pred_fallthru
      _
    %p2751 = scmp.le.s32.totalorder 2, %s10
    // Predicated region
    $region37: #{generator_forward.8} parent=5 // pred_check
      %p2752 = pneg %p2751
    $region38: #{generator_forward.8} parent=5 // pred_check_branch
      %2754 = sbr.rel (%p2752) target = $region40
    $region39: #{generator_forward.8} parent=5 // pred_region
      %s2755 = ssub.s32 %s10, 2
      // Predicated region
      $region41: #{generator_forward.8} parent=39 // pred_check
        %p2756 = pneg %p86
      $region42: #{generator_forward.8} parent=39 // pred_check_branch
        %2758 = sbr.rel (%p2756) target = $region44
      $region43: #{generator_forward.8} parent=39 // pred_region
        %p2759 = scmp.lt.s32.totalorder %s16, 1
        %s2760 = scalar_select %p2759, %s16, 1
        %s2761 = smul.addr %s2760, 36
        %s2762 = smul.addr %s2761, 4
        %s2763 = scalar_lea.vmem %s2, %s2762
      $region44: #{generator_forward.8} parent=39 // pred_fallthru
        _
      // Predicated region
      $region45: #{generator_forward.8} parent=39 // pred_check
        %p2764 = pneg %p112
      $region46: #{generator_forward.8} parent=39 // pred_check_branch
        %2766 = sbr.rel (%p2764) target = $region48
      $region47: #{generator_forward.8} parent=39 // pred_region
        %p2767 = scmp.lt.s32.totalorder %s16, 1
        %s2768 = scalar_select %p2767, %s16, 1
        %s2769 = smul.addr %s2768, 2
        %s2770 = scalar_lea.vmem %s3, %s2769
      $region48: #{generator_forward.8} parent=39 // pred_fallthru
        _
    $region40: #{generator_forward.8} parent=5 // pred_fallthru
      _
  $region6: #{generator_forward.8} parent=0 // loop_footer
    %s14 = sadd.s32 1, %s10
  $region7: #{generator_forward.8} parent=0 // loop_footer_branch
    %9 = sbr.rel target = $region3
  $region8: #{generator_forward.8} parent=0 // loop_exit
    _

// kernel: generator_forward.9
$region0: #{generator_forward.9}
  #allocation0 [shape = 'u32[]', space=smem, size = 0x4, offset = 0x4, fixed_abs, tag = 'smem constant byte address 0x4 - core index']
  #allocation1 [shape = 'u32[144,128]{1,0:T(1,128)}', space=vmem, size = 0x12000, scoped, tag = 'internal scratch']
  %s0 = inlined_call_operand.vmem [shape: bf16[2,1190,8], index: 0, kind: input, shape index: {}]
  %s1 = inlined_call_operand.vmem [shape: bf16[72,128], index: 1, kind: input, shape index: {}]
  %s2 = inlined_call_operand.vmem [shape: f32[2,1088,128], index: 2, kind: output, shape index: {}]
  %s3 = sld [smem:[#allocation0]]
  $region41: #{generator_forward.9} parent=0
    _
  %s5 = ssub.s32 1, %s3
  %s6 = scalar_select 0, %s5, %s3
  loop: start=0, step=1, limit=4
  $region2: #{generator_forward.9} parent=0 // loop_pre_header
    _
  $region3: #{generator_forward.9} parent=0 // loop_header
    %s8 = sphi 0, %s12
    %p9 = scmp.ge.s32.totalorder %s8, 4
    %s18 = sphi 0, %s20
    %s21 = sphi 0, %s18
    %s22 = sphi 0, %s21
    %s38 = sphi 0, %s22
    %s42 = sphi 0, %s42
    %s44 = sphi 0, %s42
    %s45 = sphi 0, %s44
    %s59 = sphi 0, %s45
    %s65 = sphi 0, %s67
    %s68 = sphi 0, %s65
    %s69 = sphi 0, %s68
    %s85 = sphi 0, %s69
  $region4: #{generator_forward.9} parent=0 // loop_header_branch
    %11 = sbr.rel (%p9) target = $region8
  $region5: #{generator_forward.9} parent=0 // loop_body
    %s13 = ssub.s32 %s8, 1
    %s14 = ssub.s32 %s8, 2
    %s15 = sadd.s32 %s8, 1
    %s16 = ssub.s32 %s8, %s15
    %p17 = scmp.eq.s32.totalorder %s16, 0
    %s19 = sadd.s32 %s18, 1
    %s20 = scalar_select %p17, %s18, %s19
    %p23 = pneg %p17
    %p24 = scmp.eq.s32.totalorder %s8, 1
    %p25 = por %p23, %p24
    %p26 = scmp.ne.s32.totalorder %s18, %s21
    %p27 = scmp.eq.s32.totalorder %s8, 0
    %p28 = por %p26, %p27
    %p29 = scmp.ne.s32.totalorder %s18, %s21
    %p30 = scmp.eq.s32.totalorder %s13, 1
    %p31 = por %p29, %p30
    %p32 = scmp.ne.s32.totalorder %s21, %s22
    %p33 = scmp.eq.s32.totalorder %s13, 0
    %p34 = por %p32, %p33
    %p35 = scmp.ne.s32.totalorder %s21, %s22
    %p36 = scmp.eq.s32.totalorder %s14, 1
    %p37 = por %p35, %p36
    %p39 = scmp.ne.s32.totalorder %s22, %s38
    %p40 = scmp.eq.s32.totalorder %s14, 0
    %p41 = por %p39, %p40
    %s43 = sadd.s32 %s42, 1
    %p46 = scmp.eq.s32.totalorder %s8, 1
    %p47 = scmp.ne.s32.totalorder %s42, %s44
    %p48 = scmp.eq.s32.totalorder %s8, 0
    %p49 = por %p47, %p48
    %p50 = scmp.ne.s32.totalorder %s42, %s44
    %p51 = scmp.eq.s32.totalorder %s13, 1
    %p52 = por %p50, %p51
    %p53 = scmp.ne.s32.totalorder %s44, %s45
    %p54 = scmp.eq.s32.totalorder %s13, 0
    %p55 = por %p53, %p54
    %p56 = scmp.ne.s32.totalorder %s44, %s45
    %p57 = scmp.eq.s32.totalorder %s14, 1
    %p58 = por %p56, %p57
    %p60 = scmp.ne.s32.totalorder %s45, %s59
    %p61 = scmp.eq.s32.totalorder %s14, 0
    %p62 = por %p60, %p61
    %s63 = ssub.s32 %s8, %s15
    %p64 = scmp.eq.s32.totalorder %s63, 0
    %s66 = sadd.s32 %s65, 1
    %s67 = scalar_select %p64, %s65, %s66
    %p70 = pneg %p64
    %p71 = scmp.eq.s32.totalorder %s8, 1
    %p72 = por %p70, %p71
    %p73 = scmp.ne.s32.totalorder %s65, %s68
    %p74 = scmp.eq.s32.totalorder %s8, 0
    %p75 = por %p73, %p74
    %p76 = scmp.ne.s32.totalorder %s65, %s68
    %p77 = scmp.eq.s32.totalorder %s13, 1
    %p78 = por %p76, %p77
    %p79 = scmp.ne.s32.totalorder %s68, %s69
    %p80 = scmp.eq.s32.totalorder %s13, 0
    %p81 = por %p79, %p80
    %p82 = scmp.ne.s32.totalorder %s68, %s69
    %p83 = scmp.eq.s32.totalorder %s14, 1
    %p84 = por %p82, %p83
    %p86 = scmp.ne.s32.totalorder %s69, %s85
    %p87 = scmp.eq.s32.totalorder %s14, 0
    %p88 = por %p86, %p87
    %p89 = scmp.le.s32.totalorder 1, %s8
    %p90 = scmp.lt.s32.totalorder %s8, 3
    %p91 = pnand %p89, %p90
    %p92 = pneg %p91
    // Predicated region
    $region9: #{generator_forward.9} parent=5 // pred_check
      _
    $region10: #{generator_forward.9} parent=5 // pred_check_branch
      %94 = sbr.rel (%p91) target = $region12
    $region11: #{generator_forward.9} parent=5 // pred_region
      %s95 = ssub.s32 %s8, 1
      // Predicated region
      $region13: #{generator_forward.9} parent=11 // pred_check
        %p96 = pneg %p55
      $region14: #{generator_forward.9} parent=11 // pred_check_branch
        %98 = sbr.rel (%p96) target = $region16
      $region15: #{generator_forward.9} parent=11 // pred_region
        _
      $region16: #{generator_forward.9} parent=11 // pred_fallthru
        _
    $region12: #{generator_forward.9} parent=5 // pred_fallthru
      _
    %p99 = scmp.lt.s32.totalorder %s8, 2
    // Predicated region
    $region17: #{generator_forward.9} parent=5 // pred_check
      %p100 = pneg %p99
    $region18: #{generator_forward.9} parent=5 // pred_check_branch
      %102 = sbr.rel (%p100) target = $region20
    $region19: #{generator_forward.9} parent=5 // pred_region
      // Predicated region
      $region21: #{generator_forward.9} parent=19 // pred_check
        %p103 = pneg %p28
      $region22: #{generator_forward.9} parent=19 // pred_check_branch
        %105 = sbr.rel (%p103) target = $region24
      $region23: #{generator_forward.9} parent=19 // pred_region
        %p106 = scmp.lt.s32.totalorder %s8, 1
        %s107 = scalar_select %p106, %s8, 1
        %s108 = smul.addr %s107, 149
        %s109 = smul.addr %s108, 4
        %s110 = scalar_lea.vmem %s0, %s109
      $region24: #{generator_forward.9} parent=19 // pred_fallthru
        _
    $region20: #{generator_forward.9} parent=5 // pred_fallthru
      _
    %p111 = scmp.le.s32.totalorder 1, %s8
    %p112 = scmp.lt.s32.totalorder %s8, 3
    %p113 = pnand %p111, %p112
    %p114 = pneg %p113
    // Predicated region
    $region25: #{generator_forward.9} parent=5 // pred_check
      _
    $region26: #{generator_forward.9} parent=5 // pred_check_branch
      %116 = sbr.rel (%p113) target = $region28
    $region27: #{generator_forward.9} parent=5 // pred_region
      %s117 = ssub.s32 %s8, 1
      %p118 = scmp.lt.s32.totalorder %s13, 1
      %s119 = scalar_select %p118, %s13, 1
      %s120 = smul.addr %s119, 149
      %s121 = smul.addr %s120, 4
      %s122 = scalar_lea.vmem %s0, %s121
      %p123 = pneg %p34
      %p124 = pneg %p31
      %p125 = pneg %p55
      %p126 = pneg %p52
      %p127 = pneg %p81
      %p128 = pneg %p78
      %p129 = scmp.lt.s32.totalorder %s13, 1
      %s130 = scalar_select %p129, %s13, 1
      %s131 = smul.addr %s130, 136
      %s132 = smul.addr %s131, 8
      %s133 = scalar_lea.vmem %s2, %s132
      %p134 = scmp.lt.s32.totalorder %s13, 1
      %s135 = scalar_select %p134, %s13, 1
      %s136 = smul.addr %s135, 149
      %s137 = smul.addr %s136, 4
      %s138 = scalar_lea.vmem %s0, %s137
      %p139 = scmp.lt.s32.totalorder %s13, 1
      %s140 = scalar_select %p139, %s13, 1
      %s141 = smul.addr %s140, 136
      %s142 = smul.addr %s141, 8
      %s143 = scalar_lea.vmem %s2, %s142
      %v145 = vld [vmem:[%s138] sm:$0xf]
      %v146 = vld [vmem:[%s138 + $0x4] sm:$0xf]
      %v147 = vld [vmem:[%s138 + $0x8] sm:$0xf]
      %v148 = vld [vmem:[%s138 + $0xc] sm:$0xf]
      %v149 = vld [vmem:[%s138 + $0x10] sm:$0xf]
      %v150 = vld [vmem:[%s138 + $0x14] sm:$0xf]
      %v151 = vld [vmem:[%s138 + $0x18] sm:$0xf]
      %v152 = vld [vmem:[%s138 + $0x1c] sm:$0xf]
      %v153 = vld [vmem:[%s138 + $0x20] sm:$0xf]
      %v154 = vld [vmem:[%s138 + $0x24] sm:$0xf]
      %v155 = vld [vmem:[%s138 + $0x28] sm:$0xf]
      %v156 = vld [vmem:[%s138 + $0x2c] sm:$0xf]
      %v157 = vld [vmem:[%s138 + $0x30] sm:$0xf]
      %v158 = vld [vmem:[%s138 + $0x34] sm:$0xf]
      %v159 = vld [vmem:[%s138 + $0x38] sm:$0xf]
      %v160 = vld [vmem:[%s138 + $0x3c] sm:$0xf]
      %v161 = vld [vmem:[%s138 + $0x40] sm:$0xf]
      %v162 = vld [vmem:[%s138 + $0x44] sm:$0xf]
      %v163 = vld [vmem:[%s138 + $0x48] sm:$0xf]
      %v164 = vld [vmem:[%s138 + $0x4c] sm:$0xf]
      %v165 = vld [vmem:[%s138 + $0x50] sm:$0xf]
      %v166 = vld [vmem:[%s138 + $0x54] sm:$0xf]
      %v167 = vld [vmem:[%s138 + $0x58] sm:$0xf]
      %v168 = vld [vmem:[%s138 + $0x5c] sm:$0xf]
      %v169 = vld [vmem:[%s138 + $0x60] sm:$0xf]
      %v170 = vld [vmem:[%s138 + $0x64] sm:$0xf]
      %v171 = vld [vmem:[%s138 + $0x68] sm:$0xf]
      %v172 = vld [vmem:[%s138 + $0x6c] sm:$0xf]
      %v173 = vld [vmem:[%s138 + $0x70] sm:$0xf]
      %v174 = vld [vmem:[%s138 + $0x74] sm:$0xf]
      %v175 = vld [vmem:[%s138 + $0x78] sm:$0xf]
      %v176 = vld [vmem:[%s138 + $0x7c] sm:$0xf]
      %v177 = vld [vmem:[%s138 + $0x80] sm:$0xf]
      %v178 = vld [vmem:[%s138 + $0x84] sm:$0xf]
      %v179 = vld [vmem:[%s138 + $0x88] sm:$0xf]
      %v180 = vld [vmem:[%s138 + $0x8c] sm:$0xf]
      %v181 = vld [vmem:[%s138 + $0x90] sm:$0xf]
      %v182 = vld [vmem:[%s138 + $0x94] sm:$0xf]
      %v183 = vld [vmem:[%s138 + $0x98] sm:$0xf]
      %v184 = vld [vmem:[%s138 + $0x9c] sm:$0xf]
      %v185 = vld [vmem:[%s138 + $0xa0] sm:$0xf]
      %v186 = vld [vmem:[%s138 + $0xa4] sm:$0xf]
      %v187 = vld [vmem:[%s138 + $0xa8] sm:$0xf]
      %v188 = vld [vmem:[%s138 + $0xac] sm:$0xf]
      %v189 = vld [vmem:[%s138 + $0xb0] sm:$0xf]
      %v190 = vld [vmem:[%s138 + $0xb4] sm:$0xf]
      %v191 = vld [vmem:[%s138 + $0xb8] sm:$0xf]
      %v192 = vld [vmem:[%s138 + $0xbc] sm:$0xf]
      %v193 = vld [vmem:[%s138 + $0xc0] sm:$0xf]
      %v194 = vld [vmem:[%s138 + $0xc4] sm:$0xf]
      %v195 = vld [vmem:[%s138 + $0xc8] sm:$0xf]
      %v196 = vld [vmem:[%s138 + $0xcc] sm:$0xf]
      %v197 = vld [vmem:[%s138 + $0xd0] sm:$0xf]
      %v198 = vld [vmem:[%s138 + $0xd4] sm:$0xf]
      %v199 = vld [vmem:[%s138 + $0xd8] sm:$0xf]
      %v200 = vld [vmem:[%s138 + $0xdc] sm:$0xf]
      %v201 = vld [vmem:[%s138 + $0xe0] sm:$0xf]
      %v202 = vld [vmem:[%s138 + $0xe4] sm:$0xf]
      %v203 = vld [vmem:[%s138 + $0xe8] sm:$0xf]
      %v204 = vld [vmem:[%s138 + $0xec] sm:$0xf]
      %v205 = vld [vmem:[%s138 + $0xf0] sm:$0xf]
      %v206 = vld [vmem:[%s138 + $0xf4] sm:$0xf]
      %v207 = vld [vmem:[%s138 + $0xf8] sm:$0xf]
      %v208 = vld [vmem:[%s138 + $0xfc] sm:$0xf]
      %v209 = vld [vmem:[%s138 + $0x100] sm:$0xf]
      %v210 = vld [vmem:[%s138 + $0x104] sm:$0xf]
      %v211 = vld [vmem:[%s138 + $0x108] sm:$0xf]
      %v212 = vld [vmem:[%s138 + $0x10c] sm:$0xf]
      %v213 = vld [vmem:[%s138 + $0x110] sm:$0xf]
      %v214 = vld [vmem:[%s138 + $0x114] sm:$0xf]
      %v215 = vld [vmem:[%s138 + $0x118] sm:$0xf]
      %v216 = vld [vmem:[%s138 + $0x11c] sm:$0xf]
      %v217 = vld [vmem:[%s138 + $0x120] sm:$0xf]
      %v218 = vld [vmem:[%s138 + $0x124] sm:$0xf]
      %v219 = vld [vmem:[%s138 + $0x128] sm:$0xf]
      %v220 = vld [vmem:[%s138 + $0x12c] sm:$0xf]
      %v221 = vld [vmem:[%s138 + $0x130] sm:$0xf]
      %v222 = vld [vmem:[%s138 + $0x134] sm:$0xf]
      %v223 = vld [vmem:[%s138 + $0x138] sm:$0xf]
      %v224 = vld [vmem:[%s138 + $0x13c] sm:$0xf]
      %v225 = vld [vmem:[%s138 + $0x140] sm:$0xf]
      %v226 = vld [vmem:[%s138 + $0x144] sm:$0xf]
      %v227 = vld [vmem:[%s138 + $0x148] sm:$0xf]
      %v228 = vld [vmem:[%s138 + $0x14c] sm:$0xf]
      %v229 = vld [vmem:[%s138 + $0x150] sm:$0xf]
      %v230 = vld [vmem:[%s138 + $0x154] sm:$0xf]
      %v231 = vld [vmem:[%s138 + $0x158] sm:$0xf]
      %v232 = vld [vmem:[%s138 + $0x15c] sm:$0xf]
      %v233 = vld [vmem:[%s138 + $0x160] sm:$0xf]
      %v234 = vld [vmem:[%s138 + $0x164] sm:$0xf]
      %v235 = vld [vmem:[%s138 + $0x168] sm:$0xf]
      %v236 = vld [vmem:[%s138 + $0x16c] sm:$0xf]
      %v237 = vld [vmem:[%s138 + $0x170] sm:$0xf]
      %v238 = vld [vmem:[%s138 + $0x174] sm:$0xf]
      %v239 = vld [vmem:[%s138 + $0x178] sm:$0xf]
      %v240 = vld [vmem:[%s138 + $0x17c] sm:$0xf]
      %v241 = vld [vmem:[%s138 + $0x180] sm:$0xf]
      %v242 = vld [vmem:[%s138 + $0x184] sm:$0xf]
      %v243 = vld [vmem:[%s138 + $0x188] sm:$0xf]
      %v244 = vld [vmem:[%s138 + $0x18c] sm:$0xf]
      %v245 = vld [vmem:[%s138 + $0x190] sm:$0xf]
      %v246 = vld [vmem:[%s138 + $0x194] sm:$0xf]
      %v247 = vld [vmem:[%s138 + $0x198] sm:$0xf]
      %v248 = vld [vmem:[%s138 + $0x19c] sm:$0xf]
      %v249 = vld [vmem:[%s138 + $0x1a0] sm:$0xf]
      %v250 = vld [vmem:[%s138 + $0x1a4] sm:$0xf]
      %v251 = vld [vmem:[%s138 + $0x1a8] sm:$0xf]
      %v252 = vld [vmem:[%s138 + $0x1ac] sm:$0xf]
      %v253 = vld [vmem:[%s138 + $0x1b0] sm:$0xf]
      %v254 = vld [vmem:[%s138 + $0x1b4] sm:$0xf]
      %v255 = vld [vmem:[%s138 + $0x1b8] sm:$0xf]
      %v256 = vld [vmem:[%s138 + $0x1bc] sm:$0xf]
      %v257 = vld [vmem:[%s138 + $0x1c0] sm:$0xf]
      %v258 = vld [vmem:[%s138 + $0x1c4] sm:$0xf]
      %v259 = vld [vmem:[%s138 + $0x1c8] sm:$0xf]
      %v260 = vld [vmem:[%s138 + $0x1cc] sm:$0xf]
      %v261 = vld [vmem:[%s138 + $0x1d0] sm:$0xf]
      %v262 = vld [vmem:[%s138 + $0x1d4] sm:$0xf]
      %v263 = vld [vmem:[%s138 + $0x1d8] sm:$0xf]
      %v264 = vld [vmem:[%s138 + $0x1dc] sm:$0xf]
      %v265 = vld [vmem:[%s138 + $0x1e0] sm:$0xf]
      %v266 = vld [vmem:[%s138 + $0x1e4] sm:$0xf]
      %v267 = vld [vmem:[%s138 + $0x1e8] sm:$0xf]
      %v268 = vld [vmem:[%s138 + $0x1ec] sm:$0xf]
      %v269 = vld [vmem:[%s138 + $0x1f0] sm:$0xf]
      %v270 = vld [vmem:[%s138 + $0x1f4] sm:$0xf]
      %v271 = vld [vmem:[%s138 + $0x1f8] sm:$0xf]
      %v272 = vld [vmem:[%s138 + $0x1fc] sm:$0xf]
      %v273 = vld [vmem:[%s138 + $0x200] sm:$0xf]
      %v274 = vld [vmem:[%s138 + $0x204] sm:$0xf]
      %v275 = vld [vmem:[%s138 + $0x208] sm:$0xf]
      %v276 = vld [vmem:[%s138 + $0x20c] sm:$0xf]
      %v277 = vld [vmem:[%s138 + $0x210] sm:$0xf]
      %v278 = vld [vmem:[%s138 + $0x214] sm:$0xf]
      %v279 = vld [vmem:[%s138 + $0x218] sm:$0xf]
      %v280 = vld [vmem:[%s138 + $0x21c] sm:$0xf]
      %v281 = vld [vmem:[%s138 + $0x220] sm:$0xf]
      %v282 = vld [vmem:[%s138 + $0x224] sm:$0xf]
      %v283 = vld [vmem:[%s138 + $0x228] sm:$0xf]
      %v284 = vld [vmem:[%s138 + $0x22c] sm:$0xf]
      %v285 = vld [vmem:[%s138 + $0x230] sm:$0xf]
      %v286 = vld [vmem:[%s138 + $0x234] sm:$0xf]
      %v287 = vld [vmem:[%s138 + $0x238] sm:$0xf]
      %v288 = vld [vmem:[%s138 + $0x23c] sm:$0xf]
      %v289 = vld [vmem:[%s138 + $0x240] sm:$0xf]
      %v426 = vunpack.c.l.b16 %v145
      %v427 = vunpack.c.l.b16 %v146
      %v428 = vunpack.c.l.b16 %v147
      %v429 = vunpack.c.l.b16 %v148
      %v430 = vunpack.c.l.b16 %v149
      %v431 = vunpack.c.l.b16 %v150
      %v432 = vunpack.c.l.b16 %v151
      %v433 = vunpack.c.l.b16 %v152
      %v434 = vunpack.c.l.b16 %v153
      %v435 = vunpack.c.l.b16 %v154
      %v436 = vunpack.c.l.b16 %v155
      %v437 = vunpack.c.l.b16 %v156
      %v438 = vunpack.c.l.b16 %v157
      %v439 = vunpack.c.l.b16 %v158
      %v440 = vunpack.c.l.b16 %v159
      %v441 = vunpack.c.l.b16 %v160
      %v442 = vunpack.c.l.b16 %v161
      %v443 = vunpack.c.l.b16 %v162
      %v444 = vunpack.c.l.b16 %v163
      %v445 = vunpack.c.l.b16 %v164
      %v446 = vunpack.c.l.b16 %v165
      %v447 = vunpack.c.l.b16 %v166
      %v448 = vunpack.c.l.b16 %v167
      %v449 = vunpack.c.l.b16 %v168
      %v450 = vunpack.c.l.b16 %v169
      %v451 = vunpack.c.l.b16 %v170
      %v452 = vunpack.c.l.b16 %v171
      %v453 = vunpack.c.l.b16 %v172
      %v454 = vunpack.c.l.b16 %v173
      %v455 = vunpack.c.l.b16 %v174
      %v456 = vunpack.c.l.b16 %v175
      %v457 = vunpack.c.l.b16 %v176
      %v458 = vunpack.c.l.b16 %v177
      %v459 = vunpack.c.l.b16 %v178
      %v460 = vunpack.c.l.b16 %v179
      %v461 = vunpack.c.l.b16 %v180
      %v462 = vunpack.c.l.b16 %v181
      %v463 = vunpack.c.l.b16 %v182
      %v464 = vunpack.c.l.b16 %v183
      %v465 = vunpack.c.l.b16 %v184
      %v466 = vunpack.c.l.b16 %v185
      %v467 = vunpack.c.l.b16 %v186
      %v468 = vunpack.c.l.b16 %v187
      %v469 = vunpack.c.l.b16 %v188
      %v470 = vunpack.c.l.b16 %v189
      %v471 = vunpack.c.l.b16 %v190
      %v472 = vunpack.c.l.b16 %v191
      %v473 = vunpack.c.l.b16 %v192
      %v474 = vunpack.c.l.b16 %v193
      %v475 = vunpack.c.l.b16 %v194
      %v476 = vunpack.c.l.b16 %v195
      %v477 = vunpack.c.l.b16 %v196
      %v478 = vunpack.c.l.b16 %v197
      %v479 = vunpack.c.l.b16 %v198
      %v480 = vunpack.c.l.b16 %v199
      %v481 = vunpack.c.l.b16 %v200
      %v482 = vunpack.c.l.b16 %v201
      %v483 = vunpack.c.l.b16 %v202
      %v484 = vunpack.c.l.b16 %v203
      %v485 = vunpack.c.l.b16 %v204
      %v486 = vunpack.c.l.b16 %v205
      %v487 = vunpack.c.l.b16 %v206
      %v488 = vunpack.c.l.b16 %v207
      %v489 = vunpack.c.l.b16 %v208
      %v490 = vunpack.c.l.b16 %v209
      %v491 = vunpack.c.l.b16 %v210
      %v492 = vunpack.c.l.b16 %v211
      %v493 = vunpack.c.l.b16 %v212
      %v494 = vunpack.c.l.b16 %v213
      %v495 = vunpack.c.l.b16 %v214
      %v496 = vunpack.c.l.b16 %v215
      %v497 = vunpack.c.l.b16 %v216
      %v498 = vunpack.c.l.b16 %v217
      %v499 = vunpack.c.l.b16 %v218
      %v500 = vunpack.c.l.b16 %v219
      %v501 = vunpack.c.l.b16 %v220
      %v502 = vunpack.c.l.b16 %v221
      %v503 = vunpack.c.l.b16 %v222
      %v504 = vunpack.c.l.b16 %v223
      %v505 = vunpack.c.l.b16 %v224
      %v506 = vunpack.c.l.b16 %v225
      %v507 = vunpack.c.l.b16 %v226
      %v508 = vunpack.c.l.b16 %v227
      %v509 = vunpack.c.l.b16 %v228
      %v510 = vunpack.c.l.b16 %v229
      %v511 = vunpack.c.l.b16 %v230
      %v512 = vunpack.c.l.b16 %v231
      %v513 = vunpack.c.l.b16 %v232
      %v514 = vunpack.c.l.b16 %v233
      %v515 = vunpack.c.l.b16 %v234
      %v516 = vunpack.c.l.b16 %v235
      %v517 = vunpack.c.l.b16 %v236
      %v518 = vunpack.c.l.b16 %v237
      %v519 = vunpack.c.l.b16 %v238
      %v520 = vunpack.c.l.b16 %v239
      %v521 = vunpack.c.l.b16 %v240
      %v522 = vunpack.c.l.b16 %v241
      %v523 = vunpack.c.l.b16 %v242
      %v524 = vunpack.c.l.b16 %v243
      %v525 = vunpack.c.l.b16 %v244
      %v526 = vunpack.c.l.b16 %v245
      %v527 = vunpack.c.l.b16 %v246
      %v528 = vunpack.c.l.b16 %v247
      %v529 = vunpack.c.l.b16 %v248
      %v530 = vunpack.c.l.b16 %v249
      %v531 = vunpack.c.l.b16 %v250
      %v532 = vunpack.c.l.b16 %v251
      %v533 = vunpack.c.l.b16 %v252
      %v534 = vunpack.c.l.b16 %v253
      %v535 = vunpack.c.l.b16 %v254
      %v536 = vunpack.c.l.b16 %v255
      %v537 = vunpack.c.l.b16 %v256
      %v538 = vunpack.c.l.b16 %v257
      %v539 = vunpack.c.l.b16 %v258
      %v540 = vunpack.c.l.b16 %v259
      %v541 = vunpack.c.l.b16 %v260
      %v542 = vunpack.c.l.b16 %v261
      %v543 = vunpack.c.l.b16 %v262
      %v544 = vunpack.c.l.b16 %v263
      %v545 = vunpack.c.l.b16 %v264
      %v546 = vunpack.c.l.b16 %v265
      %v547 = vunpack.c.l.b16 %v266
      %v548 = vunpack.c.l.b16 %v267
      %v549 = vunpack.c.l.b16 %v268
      %v550 = vunpack.c.l.b16 %v269
      %v551 = vunpack.c.l.b16 %v270
      %v552 = vunpack.c.l.b16 %v271
      %v553 = vunpack.c.l.b16 %v272
      %v554 = vunpack.c.l.b16 %v273
      %v555 = vunpack.c.l.b16 %v274
      %v556 = vunpack.c.l.b16 %v275
      %v557 = vunpack.c.l.b16 %v276
      %v558 = vunpack.c.l.b16 %v277
      %v559 = vunpack.c.l.b16 %v278
      %v560 = vunpack.c.l.b16 %v279
      %v561 = vunpack.c.l.b16 %v280
      %v562 = vpack.c.b16 %v427, %v426
      %v563 = vpack.c.b16 %v429, %v428
      %v564 = vpack.c.b16 %v431, %v430
      %v565 = vpack.c.b16 %v433, %v432
      %v566 = vpack.c.b16 %v435, %v434
      %v567 = vpack.c.b16 %v437, %v436
      %v568 = vpack.c.b16 %v439, %v438
      %v569 = vpack.c.b16 %v441, %v440
      %v570 = vpack.c.b16 %v443, %v442
      %v571 = vpack.c.b16 %v445, %v444
      %v572 = vpack.c.b16 %v447, %v446
      %v573 = vpack.c.b16 %v449, %v448
      %v574 = vpack.c.b16 %v451, %v450
      %v575 = vpack.c.b16 %v453, %v452
      %v576 = vpack.c.b16 %v455, %v454
      %v577 = vpack.c.b16 %v457, %v456
      %v578 = vpack.c.b16 %v459, %v458
      %v579 = vpack.c.b16 %v461, %v460
      %v580 = vpack.c.b16 %v463, %v462
      %v581 = vpack.c.b16 %v465, %v464
      %v582 = vpack.c.b16 %v467, %v466
      %v583 = vpack.c.b16 %v469, %v468
      %v584 = vpack.c.b16 %v471, %v470
      %v585 = vpack.c.b16 %v473, %v472
      %v586 = vpack.c.b16 %v475, %v474
      %v587 = vpack.c.b16 %v477, %v476
      %v588 = vpack.c.b16 %v479, %v478
      %v589 = vpack.c.b16 %v481, %v480
      %v590 = vpack.c.b16 %v483, %v482
      %v591 = vpack.c.b16 %v485, %v484
      %v592 = vpack.c.b16 %v487, %v486
      %v593 = vpack.c.b16 %v489, %v488
      %v594 = vpack.c.b16 %v491, %v490
      %v595 = vpack.c.b16 %v493, %v492
      %v596 = vpack.c.b16 %v495, %v494
      %v597 = vpack.c.b16 %v497, %v496
      %v598 = vpack.c.b16 %v499, %v498
      %v599 = vpack.c.b16 %v501, %v500
      %v600 = vpack.c.b16 %v503, %v502
      %v601 = vpack.c.b16 %v505, %v504
      %v602 = vpack.c.b16 %v507, %v506
      %v603 = vpack.c.b16 %v509, %v508
      %v604 = vpack.c.b16 %v511, %v510
      %v605 = vpack.c.b16 %v513, %v512
      %v606 = vpack.c.b16 %v515, %v514
      %v607 = vpack.c.b16 %v517, %v516
      %v608 = vpack.c.b16 %v519, %v518
      %v609 = vpack.c.b16 %v521, %v520
      %v610 = vpack.c.b16 %v523, %v522
      %v611 = vpack.c.b16 %v525, %v524
      %v612 = vpack.c.b16 %v527, %v526
      %v613 = vpack.c.b16 %v529, %v528
      %v614 = vpack.c.b16 %v531, %v530
      %v615 = vpack.c.b16 %v533, %v532
      %v616 = vpack.c.b16 %v535, %v534
      %v617 = vpack.c.b16 %v537, %v536
      %v618 = vpack.c.b16 %v539, %v538
      %v619 = vpack.c.b16 %v541, %v540
      %v620 = vpack.c.b16 %v543, %v542
      %v621 = vpack.c.b16 %v545, %v544
      %v622 = vpack.c.b16 %v547, %v546
      %v623 = vpack.c.b16 %v549, %v548
      %v624 = vpack.c.b16 %v551, %v550
      %v625 = vpack.c.b16 %v553, %v552
      %v626 = vpack.c.b16 %v555, %v554
      %v627 = vpack.c.b16 %v557, %v556
      %v628 = vpack.c.b16 %v559, %v558
      %v629 = vpack.c.b16 %v561, %v560
      %v631 = vunpack.c.l.b16 %v281
      %v632 = vpack.c.b16 %v631, %v631
      %vm633 = vsmask.f32 7424
      %v635 = vshrl.u32 %v562, 16
      %v637 = vshll.u32 %v562, 16
      %v639 = vrot.slane %v637, 1
      %v640 = vor.u32 %v635, %v639
      %v642 = vshll.u32 %v563, 16
      %v644 = vrot.slane %v642, 1
      %v645 = vsel %vm633, %v640, %v644
      %v646 = vshrl.u32 %v563, 16
      %v648 = vor.u32 %v646, %v644
      %v650 = vshll.u32 %v564, 16
      %v652 = vrot.slane %v650, 1
      %v653 = vsel %vm633, %v648, %v652
      %v654 = vshrl.u32 %v564, 16
      %v656 = vor.u32 %v654, %v652
      %v658 = vshll.u32 %v565, 16
      %v660 = vrot.slane %v658, 1
      %v661 = vsel %vm633, %v656, %v660
      %v662 = vshrl.u32 %v565, 16
      %v664 = vor.u32 %v662, %v660
      %v666 = vshll.u32 %v566, 16
      %v668 = vrot.slane %v666, 1
      %v669 = vsel %vm633, %v664, %v668
      %v670 = vshrl.u32 %v566, 16
      %v672 = vor.u32 %v670, %v668
      %v674 = vshll.u32 %v567, 16
      %v676 = vrot.slane %v674, 1
      %v677 = vsel %vm633, %v672, %v676
      %v678 = vshrl.u32 %v567, 16
      %v680 = vor.u32 %v678, %v676
      %v682 = vshll.u32 %v568, 16
      %v684 = vrot.slane %v682, 1
      %v685 = vsel %vm633, %v680, %v684
      %v686 = vshrl.u32 %v568, 16
      %v688 = vor.u32 %v686, %v684
      %v690 = vshll.u32 %v569, 16
      %v692 = vrot.slane %v690, 1
      %v693 = vsel %vm633, %v688, %v692
      %v694 = vshrl.u32 %v569, 16
      %v696 = vor.u32 %v694, %v692
      %v698 = vshll.u32 %v570, 16
      %v700 = vrot.slane %v698, 1
      %v701 = vsel %vm633, %v696, %v700
      %v702 = vshrl.u32 %v570, 16
      %v704 = vor.u32 %v702, %v700
      %v706 = vshll.u32 %v571, 16
      %v708 = vrot.slane %v706, 1
      %v709 = vsel %vm633, %v704, %v708
      %v710 = vshrl.u32 %v571, 16
      %v712 = vor.u32 %v710, %v708
      %v714 = vshll.u32 %v572, 16
      %v716 = vrot.slane %v714, 1
      %v717 = vsel %vm633, %v712, %v716
      %v718 = vshrl.u32 %v572, 16
      %v720 = vor.u32 %v718, %v716
      %v722 = vshll.u32 %v573, 16
      %v724 = vrot.slane %v722, 1
      %v725 = vsel %vm633, %v720, %v724
      %v726 = vshrl.u32 %v573, 16
      %v728 = vor.u32 %v726, %v724
      %v730 = vshll.u32 %v574, 16
      %v732 = vrot.slane %v730, 1
      %v733 = vsel %vm633, %v728, %v732
      %v734 = vshrl.u32 %v574, 16
      %v736 = vor.u32 %v734, %v732
      %v738 = vshll.u32 %v575, 16
      %v740 = vrot.slane %v738, 1
      %v741 = vsel %vm633, %v736, %v740
      %v742 = vshrl.u32 %v575, 16
      %v744 = vor.u32 %v742, %v740
      %v746 = vshll.u32 %v576, 16
      %v748 = vrot.slane %v746, 1
      %v749 = vsel %vm633, %v744, %v748
      %v750 = vshrl.u32 %v576, 16
      %v752 = vor.u32 %v750, %v748
      %v754 = vshll.u32 %v577, 16
      %v756 = vrot.slane %v754, 1
      %v757 = vsel %vm633, %v752, %v756
      %v758 = vshrl.u32 %v577, 16
      %v760 = vor.u32 %v758, %v756
      %v762 = vshll.u32 %v578, 16
      %v764 = vrot.slane %v762, 1
      %v765 = vsel %vm633, %v760, %v764
      %v766 = vshrl.u32 %v578, 16
      %v768 = vor.u32 %v766, %v764
      %v770 = vshll.u32 %v579, 16
      %v772 = vrot.slane %v770, 1
      %v773 = vsel %vm633, %v768, %v772
      %v774 = vshrl.u32 %v579, 16
      %v776 = vor.u32 %v774, %v772
      %v778 = vshll.u32 %v580, 16
      %v780 = vrot.slane %v778, 1
      %v781 = vsel %vm633, %v776, %v780
      %v782 = vshrl.u32 %v580, 16
      %v784 = vor.u32 %v782, %v780
      %v786 = vshll.u32 %v581, 16
      %v788 = vrot.slane %v786, 1
      %v789 = vsel %vm633, %v784, %v788
      %v790 = vshrl.u32 %v581, 16
      %v792 = vor.u32 %v790, %v788
      %v794 = vshll.u32 %v582, 16
      %v796 = vrot.slane %v794, 1
      %v797 = vsel %vm633, %v792, %v796
      %v798 = vshrl.u32 %v582, 16
      %v800 = vor.u32 %v798, %v796
      %v802 = vshll.u32 %v583, 16
      %v804 = vrot.slane %v802, 1
      %v805 = vsel %vm633, %v800, %v804
      %v806 = vshrl.u32 %v583, 16
      %v808 = vor.u32 %v806, %v804
      %v810 = vshll.u32 %v584, 16
      %v812 = vrot.slane %v810, 1
      %v813 = vsel %vm633, %v808, %v812
      %v814 = vshrl.u32 %v584, 16
      %v816 = vor.u32 %v814, %v812
      %v818 = vshll.u32 %v585, 16
      %v820 = vrot.slane %v818, 1
      %v821 = vsel %vm633, %v816, %v820
      %v822 = vshrl.u32 %v585, 16
      %v824 = vor.u32 %v822, %v820
      %v826 = vshll.u32 %v586, 16
      %v828 = vrot.slane %v826, 1
      %v829 = vsel %vm633, %v824, %v828
      %v830 = vshrl.u32 %v586, 16
      %v832 = vor.u32 %v830, %v828
      %v834 = vshll.u32 %v587, 16
      %v836 = vrot.slane %v834, 1
      %v837 = vsel %vm633, %v832, %v836
      %v838 = vshrl.u32 %v587, 16
      %v840 = vor.u32 %v838, %v836
      %v842 = vshll.u32 %v588, 16
      %v844 = vrot.slane %v842, 1
      %v845 = vsel %vm633, %v840, %v844
      %v846 = vshrl.u32 %v588, 16
      %v848 = vor.u32 %v846, %v844
      %v850 = vshll.u32 %v589, 16
      %v852 = vrot.slane %v850, 1
      %v853 = vsel %vm633, %v848, %v852
      %v854 = vshrl.u32 %v589, 16
      %v856 = vor.u32 %v854, %v852
      %v858 = vshll.u32 %v590, 16
      %v860 = vrot.slane %v858, 1
      %v861 = vsel %vm633, %v856, %v860
      %v862 = vshrl.u32 %v590, 16
      %v864 = vor.u32 %v862, %v860
      %v866 = vshll.u32 %v591, 16
      %v868 = vrot.slane %v866, 1
      %v869 = vsel %vm633, %v864, %v868
      %v870 = vshrl.u32 %v591, 16
      %v872 = vor.u32 %v870, %v868
      %v874 = vshll.u32 %v592, 16
      %v876 = vrot.slane %v874, 1
      %v877 = vsel %vm633, %v872, %v876
      %v878 = vshrl.u32 %v592, 16
      %v880 = vor.u32 %v878, %v876
      %v882 = vshll.u32 %v593, 16
      %v884 = vrot.slane %v882, 1
      %v885 = vsel %vm633, %v880, %v884
      %v886 = vshrl.u32 %v593, 16
      %v888 = vor.u32 %v886, %v884
      %v890 = vshll.u32 %v594, 16
      %v892 = vrot.slane %v890, 1
      %v893 = vsel %vm633, %v888, %v892
      %v894 = vshrl.u32 %v594, 16
      %v896 = vor.u32 %v894, %v892
      %v898 = vshll.u32 %v595, 16
      %v900 = vrot.slane %v898, 1
      %v901 = vsel %vm633, %v896, %v900
      %v902 = vshrl.u32 %v595, 16
      %v904 = vor.u32 %v902, %v900
      %v906 = vshll.u32 %v596, 16
      %v908 = vrot.slane %v906, 1
      %v909 = vsel %vm633, %v904, %v908
      %v910 = vshrl.u32 %v596, 16
      %v912 = vor.u32 %v910, %v908
      %v914 = vshll.u32 %v597, 16
      %v916 = vrot.slane %v914, 1
      %v917 = vsel %vm633, %v912, %v916
      %v918 = vshrl.u32 %v597, 16
      %v920 = vor.u32 %v918, %v916
      %v922 = vshll.u32 %v598, 16
      %v924 = vrot.slane %v922, 1
      %v925 = vsel %vm633, %v920, %v924
      %v926 = vshrl.u32 %v598, 16
      %v928 = vor.u32 %v926, %v924
      %v930 = vshll.u32 %v599, 16
      %v932 = vrot.slane %v930, 1
      %v933 = vsel %vm633, %v928, %v932
      %v934 = vshrl.u32 %v599, 16
      %v936 = vor.u32 %v934, %v932
      %v938 = vshll.u32 %v600, 16
      %v940 = vrot.slane %v938, 1
      %v941 = vsel %vm633, %v936, %v940
      %v942 = vshrl.u32 %v600, 16
      %v944 = vor.u32 %v942, %v940
      %v946 = vshll.u32 %v601, 16
      %v948 = vrot.slane %v946, 1
      %v949 = vsel %vm633, %v944, %v948
      %v950 = vshrl.u32 %v601, 16
      %v952 = vor.u32 %v950, %v948
      %v954 = vshll.u32 %v602, 16
      %v956 = vrot.slane %v954, 1
      %v957 = vsel %vm633, %v952, %v956
      %v958 = vshrl.u32 %v602, 16
      %v960 = vor.u32 %v958, %v956
      %v962 = vshll.u32 %v603, 16
      %v964 = vrot.slane %v962, 1
      %v965 = vsel %vm633, %v960, %v964
      %v966 = vshrl.u32 %v603, 16
      %v968 = vor.u32 %v966, %v964
      %v970 = vshll.u32 %v604, 16
      %v972 = vrot.slane %v970, 1
      %v973 = vsel %vm633, %v968, %v972
      %v974 = vshrl.u32 %v604, 16
      %v976 = vor.u32 %v974, %v972
      %v978 = vshll.u32 %v605, 16
      %v980 = vrot.slane %v978, 1
      %v981 = vsel %vm633, %v976, %v980
      %v982 = vshrl.u32 %v605, 16
      %v984 = vor.u32 %v982, %v980
      %v986 = vshll.u32 %v606, 16
      %v988 = vrot.slane %v986, 1
      %v989 = vsel %vm633, %v984, %v988
      %v990 = vshrl.u32 %v606, 16
      %v992 = vor.u32 %v990, %v988
      %v994 = vshll.u32 %v607, 16
      %v996 = vrot.slane %v994, 1
      %v997 = vsel %vm633, %v992, %v996
      %v998 = vshrl.u32 %v607, 16
      %v1000 = vor.u32 %v998, %v996
      %v1002 = vshll.u32 %v608, 16
      %v1004 = vrot.slane %v1002, 1
      %v1005 = vsel %vm633, %v1000, %v1004
      %v1006 = vshrl.u32 %v608, 16
      %v1008 = vor.u32 %v1006, %v1004
      %v1010 = vshll.u32 %v609, 16
      %v1012 = vrot.slane %v1010, 1
      %v1013 = vsel %vm633, %v1008, %v1012
      %v1014 = vshrl.u32 %v609, 16
      %v1016 = vor.u32 %v1014, %v1012
      %v1018 = vshll.u32 %v610, 16
      %v1020 = vrot.slane %v1018, 1
      %v1021 = vsel %vm633, %v1016, %v1020
      %v1022 = vshrl.u32 %v610, 16
      %v1024 = vor.u32 %v1022, %v1020
      %v1026 = vshll.u32 %v611, 16
      %v1028 = vrot.slane %v1026, 1
      %v1029 = vsel %vm633, %v1024, %v1028
      %v1030 = vshrl.u32 %v611, 16
      %v1032 = vor.u32 %v1030, %v1028
      %v1034 = vshll.u32 %v612, 16
      %v1036 = vrot.slane %v1034, 1
      %v1037 = vsel %vm633, %v1032, %v1036
      %v1038 = vshrl.u32 %v612, 16
      %v1040 = vor.u32 %v1038, %v1036
      %v1042 = vshll.u32 %v613, 16
      %v1044 = vrot.slane %v1042, 1
      %v1045 = vsel %vm633, %v1040, %v1044
      %v1046 = vshrl.u32 %v613, 16
      %v1048 = vor.u32 %v1046, %v1044
      %v1050 = vshll.u32 %v614, 16
      %v1052 = vrot.slane %v1050, 1
      %v1053 = vsel %vm633, %v1048, %v1052
      %v1054 = vshrl.u32 %v614, 16
      %v1056 = vor.u32 %v1054, %v1052
      %v1058 = vshll.u32 %v615, 16
      %v1060 = vrot.slane %v1058, 1
      %v1061 = vsel %vm633, %v1056, %v1060
      %v1062 = vshrl.u32 %v615, 16
      %v1064 = vor.u32 %v1062, %v1060
      %v1066 = vshll.u32 %v616, 16
      %v1068 = vrot.slane %v1066, 1
      %v1069 = vsel %vm633, %v1064, %v1068
      %v1070 = vshrl.u32 %v616, 16
      %v1072 = vor.u32 %v1070, %v1068
      %v1074 = vshll.u32 %v617, 16
      %v1076 = vrot.slane %v1074, 1
      %v1077 = vsel %vm633, %v1072, %v1076
      %v1078 = vshrl.u32 %v617, 16
      %v1080 = vor.u32 %v1078, %v1076
      %v1082 = vshll.u32 %v618, 16
      %v1084 = vrot.slane %v1082, 1
      %v1085 = vsel %vm633, %v1080, %v1084
      %v1086 = vshrl.u32 %v618, 16
      %v1088 = vor.u32 %v1086, %v1084
      %v1090 = vshll.u32 %v619, 16
      %v1092 = vrot.slane %v1090, 1
      %v1093 = vsel %vm633, %v1088, %v1092
      %v1094 = vshrl.u32 %v619, 16
      %v1096 = vor.u32 %v1094, %v1092
      %v1098 = vshll.u32 %v620, 16
      %v1100 = vrot.slane %v1098, 1
      %v1101 = vsel %vm633, %v1096, %v1100
      %v1102 = vshrl.u32 %v620, 16
      %v1104 = vor.u32 %v1102, %v1100
      %v1106 = vshll.u32 %v621, 16
      %v1108 = vrot.slane %v1106, 1
      %v1109 = vsel %vm633, %v1104, %v1108
      %v1110 = vshrl.u32 %v621, 16
      %v1112 = vor.u32 %v1110, %v1108
      %v1114 = vshll.u32 %v622, 16
      %v1116 = vrot.slane %v1114, 1
      %v1117 = vsel %vm633, %v1112, %v1116
      %v1118 = vshrl.u32 %v622, 16
      %v1120 = vor.u32 %v1118, %v1116
      %v1122 = vshll.u32 %v623, 16
      %v1124 = vrot.slane %v1122, 1
      %v1125 = vsel %vm633, %v1120, %v1124
      %v1126 = vshrl.u32 %v623, 16
      %v1128 = vor.u32 %v1126, %v1124
      %v1130 = vshll.u32 %v624, 16
      %v1132 = vrot.slane %v1130, 1
      %v1133 = vsel %vm633, %v1128, %v1132
      %v1134 = vshrl.u32 %v624, 16
      %v1136 = vor.u32 %v1134, %v1132
      %v1138 = vshll.u32 %v625, 16
      %v1140 = vrot.slane %v1138, 1
      %v1141 = vsel %vm633, %v1136, %v1140
      %v1142 = vshrl.u32 %v625, 16
      %v1144 = vor.u32 %v1142, %v1140
      %v1146 = vshll.u32 %v626, 16
      %v1148 = vrot.slane %v1146, 1
      %v1149 = vsel %vm633, %v1144, %v1148
      %v1150 = vshrl.u32 %v626, 16
      %v1152 = vor.u32 %v1150, %v1148
      %v1154 = vshll.u32 %v627, 16
      %v1156 = vrot.slane %v1154, 1
      %v1157 = vsel %vm633, %v1152, %v1156
      %v1158 = vshrl.u32 %v627, 16
      %v1160 = vor.u32 %v1158, %v1156
      %v1162 = vshll.u32 %v628, 16
      %v1164 = vrot.slane %v1162, 1
      %v1165 = vsel %vm633, %v1160, %v1164
      %v1166 = vshrl.u32 %v628, 16
      %v1168 = vor.u32 %v1166, %v1164
      %v1170 = vshll.u32 %v629, 16
      %v1172 = vrot.slane %v1170, 1
      %v1173 = vsel %vm633, %v1168, %v1172
      %v1174 = vshrl.u32 %v629, 16
      %v1176 = vor.u32 %v1174, %v1172
      %v1178 = vshll.u32 %v632, 16
      %v1180 = vrot.slane %v1178, 1
      %v1181 = vsel %vm633, %v1176, %v1180
      %1182 = vrot.lane.b32.xlu0 %v645, 8
      %v1183 = vpop.permute.xlu0 %1182
      %1184 = vrot.lane.b32.xlu0 %v653, 8
      %v1185 = vpop.permute.xlu0 %1184
      %1186 = vrot.lane.b32.xlu0 %v661, 8
      %v1187 = vpop.permute.xlu0 %1186
      %1188 = vrot.lane.b32.xlu0 %v669, 8
      %v1189 = vpop.permute.xlu0 %1188
      %1190 = vrot.lane.b32.xlu0 %v677, 8
      %v1191 = vpop.permute.xlu0 %1190
      %1192 = vrot.lane.b32.xlu0 %v685, 8
      %v1193 = vpop.permute.xlu0 %1192
      %1194 = vrot.lane.b32.xlu0 %v693, 8
      %v1195 = vpop.permute.xlu0 %1194
      %1196 = vrot.lane.b32.xlu0 %v701, 8
      %v1197 = vpop.permute.xlu0 %1196
      %1198 = vrot.lane.b32.xlu0 %v709, 8
      %v1199 = vpop.permute.xlu0 %1198
      %1200 = vrot.lane.b32.xlu0 %v717, 8
      %v1201 = vpop.permute.xlu0 %1200
      %1202 = vrot.lane.b32.xlu0 %v725, 8
      %v1203 = vpop.permute.xlu0 %1202
      %1204 = vrot.lane.b32.xlu0 %v733, 8
      %v1205 = vpop.permute.xlu0 %1204
      %1206 = vrot.lane.b32.xlu0 %v741, 8
      %v1207 = vpop.permute.xlu0 %1206
      %1208 = vrot.lane.b32.xlu0 %v749, 8
      %v1209 = vpop.permute.xlu0 %1208
      %1210 = vrot.lane.b32.xlu0 %v757, 8
      %v1211 = vpop.permute.xlu0 %1210
      %1212 = vrot.lane.b32.xlu0 %v765, 8
      %v1213 = vpop.permute.xlu0 %1212
      %1214 = vrot.lane.b32.xlu0 %v773, 8
      %v1215 = vpop.permute.xlu0 %1214
      %1216 = vrot.lane.b32.xlu0 %v781, 8
      %v1217 = vpop.permute.xlu0 %1216
      %1218 = vrot.lane.b32.xlu0 %v789, 8
      %v1219 = vpop.permute.xlu0 %1218
      %1220 = vrot.lane.b32.xlu0 %v797, 8
      %v1221 = vpop.permute.xlu0 %1220
      %1222 = vrot.lane.b32.xlu0 %v805, 8
      %v1223 = vpop.permute.xlu0 %1222
      %1224 = vrot.lane.b32.xlu0 %v813, 8
      %v1225 = vpop.permute.xlu0 %1224
      %1226 = vrot.lane.b32.xlu0 %v821, 8
      %v1227 = vpop.permute.xlu0 %1226
      %1228 = vrot.lane.b32.xlu0 %v829, 8
      %v1229 = vpop.permute.xlu0 %1228
      %1230 = vrot.lane.b32.xlu0 %v837, 8
      %v1231 = vpop.permute.xlu0 %1230
      %1232 = vrot.lane.b32.xlu0 %v845, 8
      %v1233 = vpop.permute.xlu0 %1232
      %1234 = vrot.lane.b32.xlu0 %v853, 8
      %v1235 = vpop.permute.xlu0 %1234
      %1236 = vrot.lane.b32.xlu0 %v861, 8
      %v1237 = vpop.permute.xlu0 %1236
      %1238 = vrot.lane.b32.xlu0 %v869, 8
      %v1239 = vpop.permute.xlu0 %1238
      %1240 = vrot.lane.b32.xlu0 %v877, 8
      %v1241 = vpop.permute.xlu0 %1240
      %1242 = vrot.lane.b32.xlu0 %v885, 8
      %v1243 = vpop.permute.xlu0 %1242
      %1244 = vrot.lane.b32.xlu0 %v893, 8
      %v1245 = vpop.permute.xlu0 %1244
      %1246 = vrot.lane.b32.xlu0 %v901, 8
      %v1247 = vpop.permute.xlu0 %1246
      %1248 = vrot.lane.b32.xlu0 %v909, 8
      %v1249 = vpop.permute.xlu0 %1248
      %1250 = vrot.lane.b32.xlu0 %v917, 8
      %v1251 = vpop.permute.xlu0 %1250
      %1252 = vrot.lane.b32.xlu0 %v925, 8
      %v1253 = vpop.permute.xlu0 %1252
      %1254 = vrot.lane.b32.xlu0 %v933, 8
      %v1255 = vpop.permute.xlu0 %1254
      %1256 = vrot.lane.b32.xlu0 %v941, 8
      %v1257 = vpop.permute.xlu0 %1256
      %1258 = vrot.lane.b32.xlu0 %v949, 8
      %v1259 = vpop.permute.xlu0 %1258
      %1260 = vrot.lane.b32.xlu0 %v957, 8
      %v1261 = vpop.permute.xlu0 %1260
      %1262 = vrot.lane.b32.xlu0 %v965, 8
      %v1263 = vpop.permute.xlu0 %1262
      %1264 = vrot.lane.b32.xlu0 %v973, 8
      %v1265 = vpop.permute.xlu0 %1264
      %1266 = vrot.lane.b32.xlu0 %v981, 8
      %v1267 = vpop.permute.xlu0 %1266
      %1268 = vrot.lane.b32.xlu0 %v989, 8
      %v1269 = vpop.permute.xlu0 %1268
      %1270 = vrot.lane.b32.xlu0 %v997, 8
      %v1271 = vpop.permute.xlu0 %1270
      %1272 = vrot.lane.b32.xlu0 %v1005, 8
      %v1273 = vpop.permute.xlu0 %1272
      %1274 = vrot.lane.b32.xlu0 %v1013, 8
      %v1275 = vpop.permute.xlu0 %1274
      %1276 = vrot.lane.b32.xlu0 %v1021, 8
      %v1277 = vpop.permute.xlu0 %1276
      %1278 = vrot.lane.b32.xlu0 %v1029, 8
      %v1279 = vpop.permute.xlu0 %1278
      %1280 = vrot.lane.b32.xlu0 %v1037, 8
      %v1281 = vpop.permute.xlu0 %1280
      %1282 = vrot.lane.b32.xlu0 %v1045, 8
      %v1283 = vpop.permute.xlu0 %1282
      %1284 = vrot.lane.b32.xlu0 %v1053, 8
      %v1285 = vpop.permute.xlu0 %1284
      %1286 = vrot.lane.b32.xlu0 %v1061, 8
      %v1287 = vpop.permute.xlu0 %1286
      %1288 = vrot.lane.b32.xlu0 %v1069, 8
      %v1289 = vpop.permute.xlu0 %1288
      %1290 = vrot.lane.b32.xlu0 %v1077, 8
      %v1291 = vpop.permute.xlu0 %1290
      %1292 = vrot.lane.b32.xlu0 %v1085, 8
      %v1293 = vpop.permute.xlu0 %1292
      %1294 = vrot.lane.b32.xlu0 %v1093, 8
      %v1295 = vpop.permute.xlu0 %1294
      %1296 = vrot.lane.b32.xlu0 %v1101, 8
      %v1297 = vpop.permute.xlu0 %1296
      %1298 = vrot.lane.b32.xlu0 %v1109, 8
      %v1299 = vpop.permute.xlu0 %1298
      %1300 = vrot.lane.b32.xlu0 %v1117, 8
      %v1301 = vpop.permute.xlu0 %1300
      %1302 = vrot.lane.b32.xlu0 %v1125, 8
      %v1303 = vpop.permute.xlu0 %1302
      %1304 = vrot.lane.b32.xlu0 %v1133, 8
      %v1305 = vpop.permute.xlu0 %1304
      %1306 = vrot.lane.b32.xlu0 %v1141, 8
      %v1307 = vpop.permute.xlu0 %1306
      %1308 = vrot.lane.b32.xlu0 %v1149, 8
      %v1309 = vpop.permute.xlu0 %1308
      %1310 = vrot.lane.b32.xlu0 %v1157, 8
      %v1311 = vpop.permute.xlu0 %1310
      %1312 = vrot.lane.b32.xlu0 %v1165, 8
      %v1313 = vpop.permute.xlu0 %1312
      %1314 = vrot.lane.b32.xlu0 %v1173, 8
      %v1315 = vpop.permute.xlu0 %1314
      %1316 = vrot.lane.b32.xlu0 %v1181, 8
      %v1317 = vpop.permute.xlu0 %1316
      %vm1318 = vcmask 1046528
      %v1319 = vrot.slane %v562, 1
      %v1320 = vrot.slane %v563, 1
      %v1321 = vsel %vm1318, %v1319, %v1320
      %v1322 = vrot.slane %v564, 1
      %v1323 = vsel %vm1318, %v1320, %v1322
      %v1324 = vrot.slane %v565, 1
      %v1325 = vsel %vm1318, %v1322, %v1324
      %v1326 = vrot.slane %v566, 1
      %v1327 = vsel %vm1318, %v1324, %v1326
      %v1328 = vrot.slane %v567, 1
      %v1329 = vsel %vm1318, %v1326, %v1328
      %v1330 = vrot.slane %v568, 1
      %v1331 = vsel %vm1318, %v1328, %v1330
      %v1332 = vrot.slane %v569, 1
      %v1333 = vsel %vm1318, %v1330, %v1332
      %v1334 = vrot.slane %v570, 1
      %v1335 = vsel %vm1318, %v1332, %v1334
      %v1336 = vrot.slane %v571, 1
      %v1337 = vsel %vm1318, %v1334, %v1336
      %v1338 = vrot.slane %v572, 1
      %v1339 = vsel %vm1318, %v1336, %v1338
      %v1340 = vrot.slane %v573, 1
      %v1341 = vsel %vm1318, %v1338, %v1340
      %v1342 = vrot.slane %v574, 1
      %v1343 = vsel %vm1318, %v1340, %v1342
      %v1344 = vrot.slane %v575, 1
      %v1345 = vsel %vm1318, %v1342, %v1344
      %v1346 = vrot.slane %v576, 1
      %v1347 = vsel %vm1318, %v1344, %v1346
      %v1348 = vrot.slane %v577, 1
      %v1349 = vsel %vm1318, %v1346, %v1348
      %v1350 = vrot.slane %v578, 1
      %v1351 = vsel %vm1318, %v1348, %v1350
      %v1352 = vrot.slane %v579, 1
      %v1353 = vsel %vm1318, %v1350, %v1352
      %v1354 = vrot.slane %v580, 1
      %v1355 = vsel %vm1318, %v1352, %v1354
      %v1356 = vrot.slane %v581, 1
      %v1357 = vsel %vm1318, %v1354, %v1356
      %v1358 = vrot.slane %v582, 1
      %v1359 = vsel %vm1318, %v1356, %v1358
      %v1360 = vrot.slane %v583, 1
      %v1361 = vsel %vm1318, %v1358, %v1360
      %v1362 = vrot.slane %v584, 1
      %v1363 = vsel %vm1318, %v1360, %v1362
      %v1364 = vrot.slane %v585, 1
      %v1365 = vsel %vm1318, %v1362, %v1364
      %v1366 = vrot.slane %v586, 1
      %v1367 = vsel %vm1318, %v1364, %v1366
      %v1368 = vrot.slane %v587, 1
      %v1369 = vsel %vm1318, %v1366, %v1368
      %v1370 = vrot.slane %v588, 1
      %v1371 = vsel %vm1318, %v1368, %v1370
      %v1372 = vrot.slane %v589, 1
      %v1373 = vsel %vm1318, %v1370, %v1372
      %v1374 = vrot.slane %v590, 1
      %v1375 = vsel %vm1318, %v1372, %v1374
      %v1376 = vrot.slane %v591, 1
      %v1377 = vsel %vm1318, %v1374, %v1376
      %v1378 = vrot.slane %v592, 1
      %v1379 = vsel %vm1318, %v1376, %v1378
      %v1380 = vrot.slane %v593, 1
      %v1381 = vsel %vm1318, %v1378, %v1380
      %v1382 = vrot.slane %v594, 1
      %v1383 = vsel %vm1318, %v1380, %v1382
      %v1384 = vrot.slane %v595, 1
      %v1385 = vsel %vm1318, %v1382, %v1384
      %v1386 = vrot.slane %v596, 1
      %v1387 = vsel %vm1318, %v1384, %v1386
      %v1388 = vrot.slane %v597, 1
      %v1389 = vsel %vm1318, %v1386, %v1388
      %v1390 = vrot.slane %v598, 1
      %v1391 = vsel %vm1318, %v1388, %v1390
      %v1392 = vrot.slane %v599, 1
      %v1393 = vsel %vm1318, %v1390, %v1392
      %v1394 = vrot.slane %v600, 1
      %v1395 = vsel %vm1318, %v1392, %v1394
      %v1396 = vrot.slane %v601, 1
      %v1397 = vsel %vm1318, %v1394, %v1396
      %v1398 = vrot.slane %v602, 1
      %v1399 = vsel %vm1318, %v1396, %v1398
      %v1400 = vrot.slane %v603, 1
      %v1401 = vsel %vm1318, %v1398, %v1400
      %v1402 = vrot.slane %v604, 1
      %v1403 = vsel %vm1318, %v1400, %v1402
      %v1404 = vrot.slane %v605, 1
      %v1405 = vsel %vm1318, %v1402, %v1404
      %v1406 = vrot.slane %v606, 1
      %v1407 = vsel %vm1318, %v1404, %v1406
      %v1408 = vrot.slane %v607, 1
      %v1409 = vsel %vm1318, %v1406, %v1408
      %v1410 = vrot.slane %v608, 1
      %v1411 = vsel %vm1318, %v1408, %v1410
      %v1412 = vrot.slane %v609, 1
      %v1413 = vsel %vm1318, %v1410, %v1412
      %v1414 = vrot.slane %v610, 1
      %v1415 = vsel %vm1318, %v1412, %v1414
      %v1416 = vrot.slane %v611, 1
      %v1417 = vsel %vm1318, %v1414, %v1416
      %v1418 = vrot.slane %v612, 1
      %v1419 = vsel %vm1318, %v1416, %v1418
      %v1420 = vrot.slane %v613, 1
      %v1421 = vsel %vm1318, %v1418, %v1420
      %v1422 = vrot.slane %v614, 1
      %v1423 = vsel %vm1318, %v1420, %v1422
      %v1424 = vrot.slane %v615, 1
      %v1425 = vsel %vm1318, %v1422, %v1424
      %v1426 = vrot.slane %v616, 1
      %v1427 = vsel %vm1318, %v1424, %v1426
      %v1428 = vrot.slane %v617, 1
      %v1429 = vsel %vm1318, %v1426, %v1428
      %v1430 = vrot.slane %v618, 1
      %v1431 = vsel %vm1318, %v1428, %v1430
      %v1432 = vrot.slane %v619, 1
      %v1433 = vsel %vm1318, %v1430, %v1432
      %v1434 = vrot.slane %v620, 1
      %v1435 = vsel %vm1318, %v1432, %v1434
      %v1436 = vrot.slane %v621, 1
      %v1437 = vsel %vm1318, %v1434, %v1436
      %v1438 = vrot.slane %v622, 1
      %v1439 = vsel %vm1318, %v1436, %v1438
      %v1440 = vrot.slane %v623, 1
      %v1441 = vsel %vm1318, %v1438, %v1440
      %v1442 = vrot.slane %v624, 1
      %v1443 = vsel %vm1318, %v1440, %v1442
      %v1444 = vrot.slane %v625, 1
      %v1445 = vsel %vm1318, %v1442, %v1444
      %v1446 = vrot.slane %v626, 1
      %v1447 = vsel %vm1318, %v1444, %v1446
      %v1448 = vrot.slane %v627, 1
      %v1449 = vsel %vm1318, %v1446, %v1448
      %v1450 = vrot.slane %v628, 1
      %v1451 = vsel %vm1318, %v1448, %v1450
      %v1452 = vrot.slane %v629, 1
      %v1453 = vsel %vm1318, %v1450, %v1452
      %v1454 = vrot.slane %v632, 1
      %v1455 = vsel %vm1318, %v1452, %v1454
      %1456 = vrot.lane.b32.xlu0 %v1321, 16
      %v1457 = vpop.permute.xlu0 %1456
      %1458 = vrot.lane.b32.xlu0 %v1323, 16
      %v1459 = vpop.permute.xlu0 %1458
      %1460 = vrot.lane.b32.xlu0 %v1325, 16
      %v1461 = vpop.permute.xlu0 %1460
      %1462 = vrot.lane.b32.xlu0 %v1327, 16
      %v1463 = vpop.permute.xlu0 %1462
      %1464 = vrot.lane.b32.xlu0 %v1329, 16
      %v1465 = vpop.permute.xlu0 %1464
      %1466 = vrot.lane.b32.xlu0 %v1331, 16
      %v1467 = vpop.permute.xlu0 %1466
      %1468 = vrot.lane.b32.xlu0 %v1333, 16
      %v1469 = vpop.permute.xlu0 %1468
      %1470 = vrot.lane.b32.xlu0 %v1335, 16
      %v1471 = vpop.permute.xlu0 %1470
      %1472 = vrot.lane.b32.xlu0 %v1337, 16
      %v1473 = vpop.permute.xlu0 %1472
      %1474 = vrot.lane.b32.xlu0 %v1339, 16
      %v1475 = vpop.permute.xlu0 %1474
      %1476 = vrot.lane.b32.xlu0 %v1341, 16
      %v1477 = vpop.permute.xlu0 %1476
      %1478 = vrot.lane.b32.xlu0 %v1343, 16
      %v1479 = vpop.permute.xlu0 %1478
      %1480 = vrot.lane.b32.xlu0 %v1345, 16
      %v1481 = vpop.permute.xlu0 %1480
      %1482 = vrot.lane.b32.xlu0 %v1347, 16
      %v1483 = vpop.permute.xlu0 %1482
      %1484 = vrot.lane.b32.xlu0 %v1349, 16
      %v1485 = vpop.permute.xlu0 %1484
      %1486 = vrot.lane.b32.xlu0 %v1351, 16
      %v1487 = vpop.permute.xlu0 %1486
      %1488 = vrot.lane.b32.xlu0 %v1353, 16
      %v1489 = vpop.permute.xlu0 %1488
      %1490 = vrot.lane.b32.xlu0 %v1355, 16
      %v1491 = vpop.permute.xlu0 %1490
      %1492 = vrot.lane.b32.xlu0 %v1357, 16
      %v1493 = vpop.permute.xlu0 %1492
      %1494 = vrot.lane.b32.xlu0 %v1359, 16
      %v1495 = vpop.permute.xlu0 %1494
      %1496 = vrot.lane.b32.xlu0 %v1361, 16
      %v1497 = vpop.permute.xlu0 %1496
      %1498 = vrot.lane.b32.xlu0 %v1363, 16
      %v1499 = vpop.permute.xlu0 %1498
      %1500 = vrot.lane.b32.xlu0 %v1365, 16
      %v1501 = vpop.permute.xlu0 %1500
      %1502 = vrot.lane.b32.xlu0 %v1367, 16
      %v1503 = vpop.permute.xlu0 %1502
      %1504 = vrot.lane.b32.xlu0 %v1369, 16
      %v1505 = vpop.permute.xlu0 %1504
      %1506 = vrot.lane.b32.xlu0 %v1371, 16
      %v1507 = vpop.permute.xlu0 %1506
      %1508 = vrot.lane.b32.xlu0 %v1373, 16
      %v1509 = vpop.permute.xlu0 %1508
      %1510 = vrot.lane.b32.xlu0 %v1375, 16
      %v1511 = vpop.permute.xlu0 %1510
      %1512 = vrot.lane.b32.xlu0 %v1377, 16
      %v1513 = vpop.permute.xlu0 %1512
      %1514 = vrot.lane.b32.xlu0 %v1379, 16
      %v1515 = vpop.permute.xlu0 %1514
      %1516 = vrot.lane.b32.xlu0 %v1381, 16
      %v1517 = vpop.permute.xlu0 %1516
      %1518 = vrot.lane.b32.xlu0 %v1383, 16
      %v1519 = vpop.permute.xlu0 %1518
      %1520 = vrot.lane.b32.xlu0 %v1385, 16
      %v1521 = vpop.permute.xlu0 %1520
      %1522 = vrot.lane.b32.xlu0 %v1387, 16
      %v1523 = vpop.permute.xlu0 %1522
      %1524 = vrot.lane.b32.xlu0 %v1389, 16
      %v1525 = vpop.permute.xlu0 %1524
      %1526 = vrot.lane.b32.xlu0 %v1391, 16
      %v1527 = vpop.permute.xlu0 %1526
      %1528 = vrot.lane.b32.xlu0 %v1393, 16
      %v1529 = vpop.permute.xlu0 %1528
      %1530 = vrot.lane.b32.xlu0 %v1395, 16
      %v1531 = vpop.permute.xlu0 %1530
      %1532 = vrot.lane.b32.xlu0 %v1397, 16
      %v1533 = vpop.permute.xlu0 %1532
      %1534 = vrot.lane.b32.xlu0 %v1399, 16
      %v1535 = vpop.permute.xlu0 %1534
      %1536 = vrot.lane.b32.xlu0 %v1401, 16
      %v1537 = vpop.permute.xlu0 %1536
      %1538 = vrot.lane.b32.xlu0 %v1403, 16
      %v1539 = vpop.permute.xlu0 %1538
      %1540 = vrot.lane.b32.xlu0 %v1405, 16
      %v1541 = vpop.permute.xlu0 %1540
      %1542 = vrot.lane.b32.xlu0 %v1407, 16
      %v1543 = vpop.permute.xlu0 %1542
      %1544 = vrot.lane.b32.xlu0 %v1409, 16
      %v1545 = vpop.permute.xlu0 %1544
      %1546 = vrot.lane.b32.xlu0 %v1411, 16
      %v1547 = vpop.permute.xlu0 %1546
      %1548 = vrot.lane.b32.xlu0 %v1413, 16
      %v1549 = vpop.permute.xlu0 %1548
      %1550 = vrot.lane.b32.xlu0 %v1415, 16
      %v1551 = vpop.permute.xlu0 %1550
      %1552 = vrot.lane.b32.xlu0 %v1417, 16
      %v1553 = vpop.permute.xlu0 %1552
      %1554 = vrot.lane.b32.xlu0 %v1419, 16
      %v1555 = vpop.permute.xlu0 %1554
      %1556 = vrot.lane.b32.xlu0 %v1421, 16
      %v1557 = vpop.permute.xlu0 %1556
      %1558 = vrot.lane.b32.xlu0 %v1423, 16
      %v1559 = vpop.permute.xlu0 %1558
      %1560 = vrot.lane.b32.xlu0 %v1425, 16
      %v1561 = vpop.permute.xlu0 %1560
      %1562 = vrot.lane.b32.xlu0 %v1427, 16
      %v1563 = vpop.permute.xlu0 %1562
      %1564 = vrot.lane.b32.xlu0 %v1429, 16
      %v1565 = vpop.permute.xlu0 %1564
      %1566 = vrot.lane.b32.xlu0 %v1431, 16
      %v1567 = vpop.permute.xlu0 %1566
      %1568 = vrot.lane.b32.xlu0 %v1433, 16
      %v1569 = vpop.permute.xlu0 %1568
      %1570 = vrot.lane.b32.xlu0 %v1435, 16
      %v1571 = vpop.permute.xlu0 %1570
      %1572 = vrot.lane.b32.xlu0 %v1437, 16
      %v1573 = vpop.permute.xlu0 %1572
      %1574 = vrot.lane.b32.xlu0 %v1439, 16
      %v1575 = vpop.permute.xlu0 %1574
      %1576 = vrot.lane.b32.xlu0 %v1441, 16
      %v1577 = vpop.permute.xlu0 %1576
      %1578 = vrot.lane.b32.xlu0 %v1443, 16
      %v1579 = vpop.permute.xlu0 %1578
      %1580 = vrot.lane.b32.xlu0 %v1445, 16
      %v1581 = vpop.permute.xlu0 %1580
      %1582 = vrot.lane.b32.xlu0 %v1447, 16
      %v1583 = vpop.permute.xlu0 %1582
      %1584 = vrot.lane.b32.xlu0 %v1449, 16
      %v1585 = vpop.permute.xlu0 %1584
      %1586 = vrot.lane.b32.xlu0 %v1451, 16
      %v1587 = vpop.permute.xlu0 %1586
      %1588 = vrot.lane.b32.xlu0 %v1453, 16
      %v1589 = vpop.permute.xlu0 %1588
      %1590 = vrot.lane.b32.xlu0 %v1455, 16
      %v1591 = vpop.permute.xlu0 %1590
      %v1596 = vunpack.c.l.b16 %v282
      %v1597 = vunpack.c.l.b16 %v283
      %v1598 = vunpack.c.l.b16 %v284
      %v1599 = vunpack.c.l.b16 %v285
      %v1600 = vpack.c.b16 %v1596, %v631
      %v1601 = vpack.c.b16 %v1598, %v1597
      %v1602 = vpack.c.b16 %v1599, %v1599
      %v1603 = vrot.slane %v1600, 1
      %v1604 = vsel %vm1318, %v1452, %v1603
      %v1605 = vrot.slane %v1601, 1
      %v1606 = vsel %vm1318, %v1603, %v1605
      %v1607 = vrot.slane %v1602, 1
      %v1608 = vsel %vm1318, %v1605, %v1607
      %1609 = vrot.lane.b32.xlu0 %v1325, 24
      %v1610 = vpop.permute.xlu0 %1609
      %1611 = vrot.lane.b32.xlu0 %v1327, 24
      %v1612 = vpop.permute.xlu0 %1611
      %1613 = vrot.lane.b32.xlu0 %v1329, 24
      %v1614 = vpop.permute.xlu0 %1613
      %1615 = vrot.lane.b32.xlu0 %v1331, 24
      %v1616 = vpop.permute.xlu0 %1615
      %1617 = vrot.lane.b32.xlu0 %v1333, 24
      %v1618 = vpop.permute.xlu0 %1617
      %1619 = vrot.lane.b32.xlu0 %v1335, 24
      %v1620 = vpop.permute.xlu0 %1619
      %1621 = vrot.lane.b32.xlu0 %v1337, 24
      %v1622 = vpop.permute.xlu0 %1621
      %1623 = vrot.lane.b32.xlu0 %v1339, 24
      %v1624 = vpop.permute.xlu0 %1623
      %1625 = vrot.lane.b32.xlu0 %v1341, 24
      %v1626 = vpop.permute.xlu0 %1625
      %1627 = vrot.lane.b32.xlu0 %v1343, 24
      %v1628 = vpop.permute.xlu0 %1627
      %1629 = vrot.lane.b32.xlu0 %v1345, 24
      %v1630 = vpop.permute.xlu0 %1629
      %1631 = vrot.lane.b32.xlu0 %v1347, 24
      %v1632 = vpop.permute.xlu0 %1631
      %1633 = vrot.lane.b32.xlu0 %v1349, 24
      %v1634 = vpop.permute.xlu0 %1633
      %1635 = vrot.lane.b32.xlu0 %v1351, 24
      %v1636 = vpop.permute.xlu0 %1635
      %1637 = vrot.lane.b32.xlu0 %v1353, 24
      %v1638 = vpop.permute.xlu0 %1637
      %1639 = vrot.lane.b32.xlu0 %v1355, 24
      %v1640 = vpop.permute.xlu0 %1639
      %1641 = vrot.lane.b32.xlu0 %v1357, 24
      %v1642 = vpop.permute.xlu0 %1641
      %1643 = vrot.lane.b32.xlu0 %v1359, 24
      %v1644 = vpop.permute.xlu0 %1643
      %1645 = vrot.lane.b32.xlu0 %v1361, 24
      %v1646 = vpop.permute.xlu0 %1645
      %1647 = vrot.lane.b32.xlu0 %v1363, 24
      %v1648 = vpop.permute.xlu0 %1647
      %1649 = vrot.lane.b32.xlu0 %v1365, 24
      %v1650 = vpop.permute.xlu0 %1649
      %1651 = vrot.lane.b32.xlu0 %v1367, 24
      %v1652 = vpop.permute.xlu0 %1651
      %1653 = vrot.lane.b32.xlu0 %v1369, 24
      %v1654 = vpop.permute.xlu0 %1653
      %1655 = vrot.lane.b32.xlu0 %v1371, 24
      %v1656 = vpop.permute.xlu0 %1655
      %1657 = vrot.lane.b32.xlu0 %v1373, 24
      %v1658 = vpop.permute.xlu0 %1657
      %1659 = vrot.lane.b32.xlu0 %v1375, 24
      %v1660 = vpop.permute.xlu0 %1659
      %1661 = vrot.lane.b32.xlu0 %v1377, 24
      %v1662 = vpop.permute.xlu0 %1661
      %1663 = vrot.lane.b32.xlu0 %v1379, 24
      %v1664 = vpop.permute.xlu0 %1663
      %1665 = vrot.lane.b32.xlu0 %v1381, 24
      %v1666 = vpop.permute.xlu0 %1665
      %1667 = vrot.lane.b32.xlu0 %v1383, 24
      %v1668 = vpop.permute.xlu0 %1667
      %1669 = vrot.lane.b32.xlu0 %v1385, 24
      %v1670 = vpop.permute.xlu0 %1669
      %1671 = vrot.lane.b32.xlu0 %v1387, 24
      %v1672 = vpop.permute.xlu0 %1671
      %1673 = vrot.lane.b32.xlu0 %v1389, 24
      %v1674 = vpop.permute.xlu0 %1673
      %1675 = vrot.lane.b32.xlu0 %v1391, 24
      %v1676 = vpop.permute.xlu0 %1675
      %1677 = vrot.lane.b32.xlu0 %v1393, 24
      %v1678 = vpop.permute.xlu0 %1677
      %1679 = vrot.lane.b32.xlu0 %v1395, 24
      %v1680 = vpop.permute.xlu0 %1679
      %1681 = vrot.lane.b32.xlu0 %v1397, 24
      %v1682 = vpop.permute.xlu0 %1681
      %1683 = vrot.lane.b32.xlu0 %v1399, 24
      %v1684 = vpop.permute.xlu0 %1683
      %1685 = vrot.lane.b32.xlu0 %v1401, 24
      %v1686 = vpop.permute.xlu0 %1685
      %1687 = vrot.lane.b32.xlu0 %v1403, 24
      %v1688 = vpop.permute.xlu0 %1687
      %1689 = vrot.lane.b32.xlu0 %v1405, 24
      %v1690 = vpop.permute.xlu0 %1689
      %1691 = vrot.lane.b32.xlu0 %v1407, 24
      %v1692 = vpop.permute.xlu0 %1691
      %1693 = vrot.lane.b32.xlu0 %v1409, 24
      %v1694 = vpop.permute.xlu0 %1693
      %1695 = vrot.lane.b32.xlu0 %v1411, 24
      %v1696 = vpop.permute.xlu0 %1695
      %1697 = vrot.lane.b32.xlu0 %v1413, 24
      %v1698 = vpop.permute.xlu0 %1697
      %1699 = vrot.lane.b32.xlu0 %v1415, 24
      %v1700 = vpop.permute.xlu0 %1699
      %1701 = vrot.lane.b32.xlu0 %v1417, 24
      %v1702 = vpop.permute.xlu0 %1701
      %1703 = vrot.lane.b32.xlu0 %v1419, 24
      %v1704 = vpop.permute.xlu0 %1703
      %1705 = vrot.lane.b32.xlu0 %v1421, 24
      %v1706 = vpop.permute.xlu0 %1705
      %1707 = vrot.lane.b32.xlu0 %v1423, 24
      %v1708 = vpop.permute.xlu0 %1707
      %1709 = vrot.lane.b32.xlu0 %v1425, 24
      %v1710 = vpop.permute.xlu0 %1709
      %1711 = vrot.lane.b32.xlu0 %v1427, 24
      %v1712 = vpop.permute.xlu0 %1711
      %1713 = vrot.lane.b32.xlu0 %v1429, 24
      %v1714 = vpop.permute.xlu0 %1713
      %1715 = vrot.lane.b32.xlu0 %v1431, 24
      %v1716 = vpop.permute.xlu0 %1715
      %1717 = vrot.lane.b32.xlu0 %v1433, 24
      %v1718 = vpop.permute.xlu0 %1717
      %1719 = vrot.lane.b32.xlu0 %v1435, 24
      %v1720 = vpop.permute.xlu0 %1719
      %1721 = vrot.lane.b32.xlu0 %v1437, 24
      %v1722 = vpop.permute.xlu0 %1721
      %1723 = vrot.lane.b32.xlu0 %v1439, 24
      %v1724 = vpop.permute.xlu0 %1723
      %1725 = vrot.lane.b32.xlu0 %v1441, 24
      %v1726 = vpop.permute.xlu0 %1725
      %1727 = vrot.lane.b32.xlu0 %v1443, 24
      %v1728 = vpop.permute.xlu0 %1727
      %1729 = vrot.lane.b32.xlu0 %v1445, 24
      %v1730 = vpop.permute.xlu0 %1729
      %1731 = vrot.lane.b32.xlu0 %v1447, 24
      %v1732 = vpop.permute.xlu0 %1731
      %1733 = vrot.lane.b32.xlu0 %v1449, 24
      %v1734 = vpop.permute.xlu0 %1733
      %1735 = vrot.lane.b32.xlu0 %v1451, 24
      %v1736 = vpop.permute.xlu0 %1735
      %1737 = vrot.lane.b32.xlu0 %v1453, 24
      %v1738 = vpop.permute.xlu0 %1737
      %1739 = vrot.lane.b32.xlu0 %v1604, 24
      %v1740 = vpop.permute.xlu0 %1739
      %1741 = vrot.lane.b32.xlu0 %v1606, 24
      %v1742 = vpop.permute.xlu0 %1741
      %1743 = vrot.lane.b32.xlu0 %v1608, 24
      %v1744 = vpop.permute.xlu0 %1743
      %vm1745 = vsmask.f32 6400
      %v1746 = vrot.slane %v654, 1
      %v1747 = vrot.slane %v650, 2
      %v1748 = vor.u32 %v1746, %v1747
      %v1749 = vrot.slane %v662, 1
      %v1750 = vrot.slane %v658, 2
      %v1751 = vor.u32 %v1749, %v1750
      %v1752 = vsel %vm1745, %v1748, %v1751
      %v1753 = vrot.slane %v670, 1
      %v1754 = vrot.slane %v666, 2
      %v1755 = vor.u32 %v1753, %v1754
      %v1756 = vsel %vm1745, %v1751, %v1755
      %v1757 = vrot.slane %v678, 1
      %v1758 = vrot.slane %v674, 2
      %v1759 = vor.u32 %v1757, %v1758
      %v1760 = vsel %vm1745, %v1755, %v1759
      %v1761 = vrot.slane %v686, 1
      %v1762 = vrot.slane %v682, 2
      %v1763 = vor.u32 %v1761, %v1762
      %v1764 = vsel %vm1745, %v1759, %v1763
      %v1765 = vrot.slane %v694, 1
      %v1766 = vrot.slane %v690, 2
      %v1767 = vor.u32 %v1765, %v1766
      %v1768 = vsel %vm1745, %v1763, %v1767
      %v1769 = vrot.slane %v702, 1
      %v1770 = vrot.slane %v698, 2
      %v1771 = vor.u32 %v1769, %v1770
      %v1772 = vsel %vm1745, %v1767, %v1771
      %v1773 = vrot.slane %v710, 1
      %v1774 = vrot.slane %v706, 2
      %v1775 = vor.u32 %v1773, %v1774
      %v1776 = vsel %vm1745, %v1771, %v1775
      %v1777 = vrot.slane %v718, 1
      %v1778 = vrot.slane %v714, 2
      %v1779 = vor.u32 %v1777, %v1778
      %v1780 = vsel %vm1745, %v1775, %v1779
      %v1781 = vrot.slane %v726, 1
      %v1782 = vrot.slane %v722, 2
      %v1783 = vor.u32 %v1781, %v1782
      %v1784 = vsel %vm1745, %v1779, %v1783
      %v1785 = vrot.slane %v734, 1
      %v1786 = vrot.slane %v730, 2
      %v1787 = vor.u32 %v1785, %v1786
      %v1788 = vsel %vm1745, %v1783, %v1787
      %v1789 = vrot.slane %v742, 1
      %v1790 = vrot.slane %v738, 2
      %v1791 = vor.u32 %v1789, %v1790
      %v1792 = vsel %vm1745, %v1787, %v1791
      %v1793 = vrot.slane %v750, 1
      %v1794 = vrot.slane %v746, 2
      %v1795 = vor.u32 %v1793, %v1794
      %v1796 = vsel %vm1745, %v1791, %v1795
      %v1797 = vrot.slane %v758, 1
      %v1798 = vrot.slane %v754, 2
      %v1799 = vor.u32 %v1797, %v1798
      %v1800 = vsel %vm1745, %v1795, %v1799
      %v1801 = vrot.slane %v766, 1
      %v1802 = vrot.slane %v762, 2
      %v1803 = vor.u32 %v1801, %v1802
      %v1804 = vsel %vm1745, %v1799, %v1803
      %v1805 = vrot.slane %v774, 1
      %v1806 = vrot.slane %v770, 2
      %v1807 = vor.u32 %v1805, %v1806
      %v1808 = vsel %vm1745, %v1803, %v1807
      %v1809 = vrot.slane %v782, 1
      %v1810 = vrot.slane %v778, 2
      %v1811 = vor.u32 %v1809, %v1810
      %v1812 = vsel %vm1745, %v1807, %v1811
      %v1813 = vrot.slane %v790, 1
      %v1814 = vrot.slane %v786, 2
      %v1815 = vor.u32 %v1813, %v1814
      %v1816 = vsel %vm1745, %v1811, %v1815
      %v1817 = vrot.slane %v798, 1
      %v1818 = vrot.slane %v794, 2
      %v1819 = vor.u32 %v1817, %v1818
      %v1820 = vsel %vm1745, %v1815, %v1819
      %v1821 = vrot.slane %v806, 1
      %v1822 = vrot.slane %v802, 2
      %v1823 = vor.u32 %v1821, %v1822
      %v1824 = vsel %vm1745, %v1819, %v1823
      %v1825 = vrot.slane %v814, 1
      %v1826 = vrot.slane %v810, 2
      %v1827 = vor.u32 %v1825, %v1826
      %v1828 = vsel %vm1745, %v1823, %v1827
      %v1829 = vrot.slane %v822, 1
      %v1830 = vrot.slane %v818, 2
      %v1831 = vor.u32 %v1829, %v1830
      %v1832 = vsel %vm1745, %v1827, %v1831
      %v1833 = vrot.slane %v830, 1
      %v1834 = vrot.slane %v826, 2
      %v1835 = vor.u32 %v1833, %v1834
      %v1836 = vsel %vm1745, %v1831, %v1835
      %v1837 = vrot.slane %v838, 1
      %v1838 = vrot.slane %v834, 2
      %v1839 = vor.u32 %v1837, %v1838
      %v1840 = vsel %vm1745, %v1835, %v1839
      %v1841 = vrot.slane %v846, 1
      %v1842 = vrot.slane %v842, 2
      %v1843 = vor.u32 %v1841, %v1842
      %v1844 = vsel %vm1745, %v1839, %v1843
      %v1845 = vrot.slane %v854, 1
      %v1846 = vrot.slane %v850, 2
      %v1847 = vor.u32 %v1845, %v1846
      %v1848 = vsel %vm1745, %v1843, %v1847
      %v1849 = vrot.slane %v862, 1
      %v1850 = vrot.slane %v858, 2
      %v1851 = vor.u32 %v1849, %v1850
      %v1852 = vsel %vm1745, %v1847, %v1851
      %v1853 = vrot.slane %v870, 1
      %v1854 = vrot.slane %v866, 2
      %v1855 = vor.u32 %v1853, %v1854
      %v1856 = vsel %vm1745, %v1851, %v1855
      %v1857 = vrot.slane %v878, 1
      %v1858 = vrot.slane %v874, 2
      %v1859 = vor.u32 %v1857, %v1858
      %v1860 = vsel %vm1745, %v1855, %v1859
      %v1861 = vrot.slane %v886, 1
      %v1862 = vrot.slane %v882, 2
      %v1863 = vor.u32 %v1861, %v1862
      %v1864 = vsel %vm1745, %v1859, %v1863
      %v1865 = vrot.slane %v894, 1
      %v1866 = vrot.slane %v890, 2
      %v1867 = vor.u32 %v1865, %v1866
      %v1868 = vsel %vm1745, %v1863, %v1867
      %v1869 = vrot.slane %v902, 1
      %v1870 = vrot.slane %v898, 2
      %v1871 = vor.u32 %v1869, %v1870
      %v1872 = vsel %vm1745, %v1867, %v1871
      %v1873 = vrot.slane %v910, 1
      %v1874 = vrot.slane %v906, 2
      %v1875 = vor.u32 %v1873, %v1874
      %v1876 = vsel %vm1745, %v1871, %v1875
      %v1877 = vrot.slane %v918, 1
      %v1878 = vrot.slane %v914, 2
      %v1879 = vor.u32 %v1877, %v1878
      %v1880 = vsel %vm1745, %v1875, %v1879
      %v1881 = vrot.slane %v926, 1
      %v1882 = vrot.slane %v922, 2
      %v1883 = vor.u32 %v1881, %v1882
      %v1884 = vsel %vm1745, %v1879, %v1883
      %v1885 = vrot.slane %v934, 1
      %v1886 = vrot.slane %v930, 2
      %v1887 = vor.u32 %v1885, %v1886
      %v1888 = vsel %vm1745, %v1883, %v1887
      %v1889 = vrot.slane %v942, 1
      %v1890 = vrot.slane %v938, 2
      %v1891 = vor.u32 %v1889, %v1890
      %v1892 = vsel %vm1745, %v1887, %v1891
      %v1893 = vrot.slane %v950, 1
      %v1894 = vrot.slane %v946, 2
      %v1895 = vor.u32 %v1893, %v1894
      %v1896 = vsel %vm1745, %v1891, %v1895
      %v1897 = vrot.slane %v958, 1
      %v1898 = vrot.slane %v954, 2
      %v1899 = vor.u32 %v1897, %v1898
      %v1900 = vsel %vm1745, %v1895, %v1899
      %v1901 = vrot.slane %v966, 1
      %v1902 = vrot.slane %v962, 2
      %v1903 = vor.u32 %v1901, %v1902
      %v1904 = vsel %vm1745, %v1899, %v1903
      %v1905 = vrot.slane %v974, 1
      %v1906 = vrot.slane %v970, 2
      %v1907 = vor.u32 %v1905, %v1906
      %v1908 = vsel %vm1745, %v1903, %v1907
      %v1909 = vrot.slane %v982, 1
      %v1910 = vrot.slane %v978, 2
      %v1911 = vor.u32 %v1909, %v1910
      %v1912 = vsel %vm1745, %v1907, %v1911
      %v1913 = vrot.slane %v990, 1
      %v1914 = vrot.slane %v986, 2
      %v1915 = vor.u32 %v1913, %v1914
      %v1916 = vsel %vm1745, %v1911, %v1915
      %v1917 = vrot.slane %v998, 1
      %v1918 = vrot.slane %v994, 2
      %v1919 = vor.u32 %v1917, %v1918
      %v1920 = vsel %vm1745, %v1915, %v1919
      %v1921 = vrot.slane %v1006, 1
      %v1922 = vrot.slane %v1002, 2
      %v1923 = vor.u32 %v1921, %v1922
      %v1924 = vsel %vm1745, %v1919, %v1923
      %v1925 = vrot.slane %v1014, 1
      %v1926 = vrot.slane %v1010, 2
      %v1927 = vor.u32 %v1925, %v1926
      %v1928 = vsel %vm1745, %v1923, %v1927
      %v1929 = vrot.slane %v1022, 1
      %v1930 = vrot.slane %v1018, 2
      %v1931 = vor.u32 %v1929, %v1930
      %v1932 = vsel %vm1745, %v1927, %v1931
      %v1933 = vrot.slane %v1030, 1
      %v1934 = vrot.slane %v1026, 2
      %v1935 = vor.u32 %v1933, %v1934
      %v1936 = vsel %vm1745, %v1931, %v1935
      %v1937 = vrot.slane %v1038, 1
      %v1938 = vrot.slane %v1034, 2
      %v1939 = vor.u32 %v1937, %v1938
      %v1940 = vsel %vm1745, %v1935, %v1939
      %v1941 = vrot.slane %v1046, 1
      %v1942 = vrot.slane %v1042, 2
      %v1943 = vor.u32 %v1941, %v1942
      %v1944 = vsel %vm1745, %v1939, %v1943
      %v1945 = vrot.slane %v1054, 1
      %v1946 = vrot.slane %v1050, 2
      %v1947 = vor.u32 %v1945, %v1946
      %v1948 = vsel %vm1745, %v1943, %v1947
      %v1949 = vrot.slane %v1062, 1
      %v1950 = vrot.slane %v1058, 2
      %v1951 = vor.u32 %v1949, %v1950
      %v1952 = vsel %vm1745, %v1947, %v1951
      %v1953 = vrot.slane %v1070, 1
      %v1954 = vrot.slane %v1066, 2
      %v1955 = vor.u32 %v1953, %v1954
      %v1956 = vsel %vm1745, %v1951, %v1955
      %v1957 = vrot.slane %v1078, 1
      %v1958 = vrot.slane %v1074, 2
      %v1959 = vor.u32 %v1957, %v1958
      %v1960 = vsel %vm1745, %v1955, %v1959
      %v1961 = vrot.slane %v1086, 1
      %v1962 = vrot.slane %v1082, 2
      %v1963 = vor.u32 %v1961, %v1962
      %v1964 = vsel %vm1745, %v1959, %v1963
      %v1965 = vrot.slane %v1094, 1
      %v1966 = vrot.slane %v1090, 2
      %v1967 = vor.u32 %v1965, %v1966
      %v1968 = vsel %vm1745, %v1963, %v1967
      %v1969 = vrot.slane %v1102, 1
      %v1970 = vrot.slane %v1098, 2
      %v1971 = vor.u32 %v1969, %v1970
      %v1972 = vsel %vm1745, %v1967, %v1971
      %v1973 = vrot.slane %v1110, 1
      %v1974 = vrot.slane %v1106, 2
      %v1975 = vor.u32 %v1973, %v1974
      %v1976 = vsel %vm1745, %v1971, %v1975
      %v1977 = vrot.slane %v1118, 1
      %v1978 = vrot.slane %v1114, 2
      %v1979 = vor.u32 %v1977, %v1978
      %v1980 = vsel %vm1745, %v1975, %v1979
      %v1981 = vrot.slane %v1126, 1
      %v1982 = vrot.slane %v1122, 2
      %v1983 = vor.u32 %v1981, %v1982
      %v1984 = vsel %vm1745, %v1979, %v1983
      %v1985 = vrot.slane %v1134, 1
      %v1986 = vrot.slane %v1130, 2
      %v1987 = vor.u32 %v1985, %v1986
      %v1988 = vsel %vm1745, %v1983, %v1987
      %v1989 = vrot.slane %v1142, 1
      %v1990 = vrot.slane %v1138, 2
      %v1991 = vor.u32 %v1989, %v1990
      %v1992 = vsel %vm1745, %v1987, %v1991
      %v1993 = vrot.slane %v1150, 1
      %v1994 = vrot.slane %v1146, 2
      %v1995 = vor.u32 %v1993, %v1994
      %v1996 = vsel %vm1745, %v1991, %v1995
      %v1997 = vrot.slane %v1158, 1
      %v1998 = vrot.slane %v1154, 2
      %v1999 = vor.u32 %v1997, %v1998
      %v2000 = vsel %vm1745, %v1995, %v1999
      %v2001 = vrot.slane %v1166, 1
      %v2002 = vrot.slane %v1162, 2
      %v2003 = vor.u32 %v2001, %v2002
      %v2004 = vsel %vm1745, %v1999, %v2003
      %v2005 = vrot.slane %v1174, 1
      %v2006 = vrot.slane %v1170, 2
      %v2007 = vor.u32 %v2005, %v2006
      %v2008 = vsel %vm1745, %v2003, %v2007
      %v2010 = vshrl.u32 %v1600, 16
      %v2012 = vrot.slane %v2010, 1
      %v2013 = vshll.u32 %v1600, 16
      %v2015 = vrot.slane %v2013, 2
      %v2016 = vor.u32 %v2012, %v2015
      %v2017 = vsel %vm1745, %v2007, %v2016
      %v2019 = vshrl.u32 %v1601, 16
      %v2021 = vrot.slane %v2019, 1
      %v2022 = vshll.u32 %v1601, 16
      %v2024 = vrot.slane %v2022, 2
      %v2025 = vor.u32 %v2021, %v2024
      %v2026 = vsel %vm1745, %v2016, %v2025
      %v2028 = vshrl.u32 %v1602, 16
      %v2030 = vrot.slane %v2028, 1
      %v2031 = vshll.u32 %v1602, 16
      %v2033 = vrot.slane %v2031, 2
      %v2034 = vor.u32 %v2030, %v2033
      %v2035 = vsel %vm1745, %v2025, %v2034
      %2036 = vrot.lane.b32.xlu0 %v1752, 32
      %v2037 = vpop.permute.xlu0 %2036
      %2038 = vrot.lane.b32.xlu0 %v1756, 32
      %v2039 = vpop.permute.xlu0 %2038
      %2040 = vrot.lane.b32.xlu0 %v1760, 32
      %v2041 = vpop.permute.xlu0 %2040
      %2042 = vrot.lane.b32.xlu0 %v1764, 32
      %v2043 = vpop.permute.xlu0 %2042
      %2044 = vrot.lane.b32.xlu0 %v1768, 32
      %v2045 = vpop.permute.xlu0 %2044
      %2046 = vrot.lane.b32.xlu0 %v1772, 32
      %v2047 = vpop.permute.xlu0 %2046
      %2048 = vrot.lane.b32.xlu0 %v1776, 32
      %v2049 = vpop.permute.xlu0 %2048
      %2050 = vrot.lane.b32.xlu0 %v1780, 32
      %v2051 = vpop.permute.xlu0 %2050
      %2052 = vrot.lane.b32.xlu0 %v1784, 32
      %v2053 = vpop.permute.xlu0 %2052
      %2054 = vrot.lane.b32.xlu0 %v1788, 32
      %v2055 = vpop.permute.xlu0 %2054
      %2056 = vrot.lane.b32.xlu0 %v1792, 32
      %v2057 = vpop.permute.xlu0 %2056
      %2058 = vrot.lane.b32.xlu0 %v1796, 32
      %v2059 = vpop.permute.xlu0 %2058
      %2060 = vrot.lane.b32.xlu0 %v1800, 32
      %v2061 = vpop.permute.xlu0 %2060
      %2062 = vrot.lane.b32.xlu0 %v1804, 32
      %v2063 = vpop.permute.xlu0 %2062
      %2064 = vrot.lane.b32.xlu0 %v1808, 32
      %v2065 = vpop.permute.xlu0 %2064
      %2066 = vrot.lane.b32.xlu0 %v1812, 32
      %v2067 = vpop.permute.xlu0 %2066
      %2068 = vrot.lane.b32.xlu0 %v1816, 32
      %v2069 = vpop.permute.xlu0 %2068
      %2070 = vrot.lane.b32.xlu0 %v1820, 32
      %v2071 = vpop.permute.xlu0 %2070
      %2072 = vrot.lane.b32.xlu0 %v1824, 32
      %v2073 = vpop.permute.xlu0 %2072
      %2074 = vrot.lane.b32.xlu0 %v1828, 32
      %v2075 = vpop.permute.xlu0 %2074
      %2076 = vrot.lane.b32.xlu0 %v1832, 32
      %v2077 = vpop.permute.xlu0 %2076
      %2078 = vrot.lane.b32.xlu0 %v1836, 32
      %v2079 = vpop.permute.xlu0 %2078
      %2080 = vrot.lane.b32.xlu0 %v1840, 32
      %v2081 = vpop.permute.xlu0 %2080
      %2082 = vrot.lane.b32.xlu0 %v1844, 32
      %v2083 = vpop.permute.xlu0 %2082
      %2084 = vrot.lane.b32.xlu0 %v1848, 32
      %v2085 = vpop.permute.xlu0 %2084
      %2086 = vrot.lane.b32.xlu0 %v1852, 32
      %v2087 = vpop.permute.xlu0 %2086
      %2088 = vrot.lane.b32.xlu0 %v1856, 32
      %v2089 = vpop.permute.xlu0 %2088
      %2090 = vrot.lane.b32.xlu0 %v1860, 32
      %v2091 = vpop.permute.xlu0 %2090
      %2092 = vrot.lane.b32.xlu0 %v1864, 32
      %v2093 = vpop.permute.xlu0 %2092
      %2094 = vrot.lane.b32.xlu0 %v1868, 32
      %v2095 = vpop.permute.xlu0 %2094
      %2096 = vrot.lane.b32.xlu0 %v1872, 32
      %v2097 = vpop.permute.xlu0 %2096
      %2098 = vrot.lane.b32.xlu0 %v1876, 32
      %v2099 = vpop.permute.xlu0 %2098
      %2100 = vrot.lane.b32.xlu0 %v1880, 32
      %v2101 = vpop.permute.xlu0 %2100
      %2102 = vrot.lane.b32.xlu0 %v1884, 32
      %v2103 = vpop.permute.xlu0 %2102
      %2104 = vrot.lane.b32.xlu0 %v1888, 32
      %v2105 = vpop.permute.xlu0 %2104
      %2106 = vrot.lane.b32.xlu0 %v1892, 32
      %v2107 = vpop.permute.xlu0 %2106
      %2108 = vrot.lane.b32.xlu0 %v1896, 32
      %v2109 = vpop.permute.xlu0 %2108
      %2110 = vrot.lane.b32.xlu0 %v1900, 32
      %v2111 = vpop.permute.xlu0 %2110
      %2112 = vrot.lane.b32.xlu0 %v1904, 32
      %v2113 = vpop.permute.xlu0 %2112
      %2114 = vrot.lane.b32.xlu0 %v1908, 32
      %v2115 = vpop.permute.xlu0 %2114
      %2116 = vrot.lane.b32.xlu0 %v1912, 32
      %v2117 = vpop.permute.xlu0 %2116
      %2118 = vrot.lane.b32.xlu0 %v1916, 32
      %v2119 = vpop.permute.xlu0 %2118
      %2120 = vrot.lane.b32.xlu0 %v1920, 32
      %v2121 = vpop.permute.xlu0 %2120
      %2122 = vrot.lane.b32.xlu0 %v1924, 32
      %v2123 = vpop.permute.xlu0 %2122
      %2124 = vrot.lane.b32.xlu0 %v1928, 32
      %v2125 = vpop.permute.xlu0 %2124
      %2126 = vrot.lane.b32.xlu0 %v1932, 32
      %v2127 = vpop.permute.xlu0 %2126
      %2128 = vrot.lane.b32.xlu0 %v1936, 32
      %v2129 = vpop.permute.xlu0 %2128
      %2130 = vrot.lane.b32.xlu0 %v1940, 32
      %v2131 = vpop.permute.xlu0 %2130
      %2132 = vrot.lane.b32.xlu0 %v1944, 32
      %v2133 = vpop.permute.xlu0 %2132
      %2134 = vrot.lane.b32.xlu0 %v1948, 32
      %v2135 = vpop.permute.xlu0 %2134
      %2136 = vrot.lane.b32.xlu0 %v1952, 32
      %v2137 = vpop.permute.xlu0 %2136
      %2138 = vrot.lane.b32.xlu0 %v1956, 32
      %v2139 = vpop.permute.xlu0 %2138
      %2140 = vrot.lane.b32.xlu0 %v1960, 32
      %v2141 = vpop.permute.xlu0 %2140
      %2142 = vrot.lane.b32.xlu0 %v1964, 32
      %v2143 = vpop.permute.xlu0 %2142
      %2144 = vrot.lane.b32.xlu0 %v1968, 32
      %v2145 = vpop.permute.xlu0 %2144
      %2146 = vrot.lane.b32.xlu0 %v1972, 32
      %v2147 = vpop.permute.xlu0 %2146
      %2148 = vrot.lane.b32.xlu0 %v1976, 32
      %v2149 = vpop.permute.xlu0 %2148
      %2150 = vrot.lane.b32.xlu0 %v1980, 32
      %v2151 = vpop.permute.xlu0 %2150
      %2152 = vrot.lane.b32.xlu0 %v1984, 32
      %v2153 = vpop.permute.xlu0 %2152
      %2154 = vrot.lane.b32.xlu0 %v1988, 32
      %v2155 = vpop.permute.xlu0 %2154
      %2156 = vrot.lane.b32.xlu0 %v1992, 32
      %v2157 = vpop.permute.xlu0 %2156
      %2158 = vrot.lane.b32.xlu0 %v1996, 32
      %v2159 = vpop.permute.xlu0 %2158
      %2160 = vrot.lane.b32.xlu0 %v2000, 32
      %v2161 = vpop.permute.xlu0 %2160
      %2162 = vrot.lane.b32.xlu0 %v2004, 32
      %v2163 = vpop.permute.xlu0 %2162
      %2164 = vrot.lane.b32.xlu0 %v2008, 32
      %v2165 = vpop.permute.xlu0 %2164
      %2166 = vrot.lane.b32.xlu0 %v2017, 32
      %v2167 = vpop.permute.xlu0 %2166
      %2168 = vrot.lane.b32.xlu0 %v2026, 32
      %v2169 = vpop.permute.xlu0 %2168
      %2170 = vrot.lane.b32.xlu0 %v2035, 32
      %v2171 = vpop.permute.xlu0 %2170
      %vm2172 = vcmask 1045504
      %v2173 = vrot.slane %v564, 2
      %v2174 = vrot.slane %v565, 2
      %v2175 = vsel %vm2172, %v2173, %v2174
      %v2176 = vrot.slane %v566, 2
      %v2177 = vsel %vm2172, %v2174, %v2176
      %v2178 = vrot.slane %v567, 2
      %v2179 = vsel %vm2172, %v2176, %v2178
      %v2180 = vrot.slane %v568, 2
      %v2181 = vsel %vm2172, %v2178, %v2180
      %v2182 = vrot.slane %v569, 2
      %v2183 = vsel %vm2172, %v2180, %v2182
      %v2184 = vrot.slane %v570, 2
      %v2185 = vsel %vm2172, %v2182, %v2184
      %v2186 = vrot.slane %v571, 2
      %v2187 = vsel %vm2172, %v2184, %v2186
      %v2188 = vrot.slane %v572, 2
      %v2189 = vsel %vm2172, %v2186, %v2188
      %v2190 = vrot.slane %v573, 2
      %v2191 = vsel %vm2172, %v2188, %v2190
      %v2192 = vrot.slane %v574, 2
      %v2193 = vsel %vm2172, %v2190, %v2192
      %v2194 = vrot.slane %v575, 2
      %v2195 = vsel %vm2172, %v2192, %v2194
      %v2196 = vrot.slane %v576, 2
      %v2197 = vsel %vm2172, %v2194, %v2196
      %v2198 = vrot.slane %v577, 2
      %v2199 = vsel %vm2172, %v2196, %v2198
      %v2200 = vrot.slane %v578, 2
      %v2201 = vsel %vm2172, %v2198, %v2200
      %v2202 = vrot.slane %v579, 2
      %v2203 = vsel %vm2172, %v2200, %v2202
      %v2204 = vrot.slane %v580, 2
      %v2205 = vsel %vm2172, %v2202, %v2204
      %v2206 = vrot.slane %v581, 2
      %v2207 = vsel %vm2172, %v2204, %v2206
      %v2208 = vrot.slane %v582, 2
      %v2209 = vsel %vm2172, %v2206, %v2208
      %v2210 = vrot.slane %v583, 2
      %v2211 = vsel %vm2172, %v2208, %v2210
      %v2212 = vrot.slane %v584, 2
      %v2213 = vsel %vm2172, %v2210, %v2212
      %v2214 = vrot.slane %v585, 2
      %v2215 = vsel %vm2172, %v2212, %v2214
      %v2216 = vrot.slane %v586, 2
      %v2217 = vsel %vm2172, %v2214, %v2216
      %v2218 = vrot.slane %v587, 2
      %v2219 = vsel %vm2172, %v2216, %v2218
      %v2220 = vrot.slane %v588, 2
      %v2221 = vsel %vm2172, %v2218, %v2220
      %v2222 = vrot.slane %v589, 2
      %v2223 = vsel %vm2172, %v2220, %v2222
      %v2224 = vrot.slane %v590, 2
      %v2225 = vsel %vm2172, %v2222, %v2224
      %v2226 = vrot.slane %v591, 2
      %v2227 = vsel %vm2172, %v2224, %v2226
      %v2228 = vrot.slane %v592, 2
      %v2229 = vsel %vm2172, %v2226, %v2228
      %v2230 = vrot.slane %v593, 2
      %v2231 = vsel %vm2172, %v2228, %v2230
      %v2232 = vrot.slane %v594, 2
      %v2233 = vsel %vm2172, %v2230, %v2232
      %v2234 = vrot.slane %v595, 2
      %v2235 = vsel %vm2172, %v2232, %v2234
      %v2236 = vrot.slane %v596, 2
      %v2237 = vsel %vm2172, %v2234, %v2236
      %v2238 = vrot.slane %v597, 2
      %v2239 = vsel %vm2172, %v2236, %v2238
      %v2240 = vrot.slane %v598, 2
      %v2241 = vsel %vm2172, %v2238, %v2240
      %v2242 = vrot.slane %v599, 2
      %v2243 = vsel %vm2172, %v2240, %v2242
      %v2244 = vrot.slane %v600, 2
      %v2245 = vsel %vm2172, %v2242, %v2244
      %v2246 = vrot.slane %v601, 2
      %v2247 = vsel %vm2172, %v2244, %v2246
      %v2248 = vrot.slane %v602, 2
      %v2249 = vsel %vm2172, %v2246, %v2248
      %v2250 = vrot.slane %v603, 2
      %v2251 = vsel %vm2172, %v2248, %v2250
      %v2252 = vrot.slane %v604, 2
      %v2253 = vsel %vm2172, %v2250, %v2252
      %v2254 = vrot.slane %v605, 2
      %v2255 = vsel %vm2172, %v2252, %v2254
      %v2256 = vrot.slane %v606, 2
      %v2257 = vsel %vm2172, %v2254, %v2256
      %v2258 = vrot.slane %v607, 2
      %v2259 = vsel %vm2172, %v2256, %v2258
      %v2260 = vrot.slane %v608, 2
      %v2261 = vsel %vm2172, %v2258, %v2260
      %v2262 = vrot.slane %v609, 2
      %v2263 = vsel %vm2172, %v2260, %v2262
      %v2264 = vrot.slane %v610, 2
      %v2265 = vsel %vm2172, %v2262, %v2264
      %v2266 = vrot.slane %v611, 2
      %v2267 = vsel %vm2172, %v2264, %v2266
      %v2268 = vrot.slane %v612, 2
      %v2269 = vsel %vm2172, %v2266, %v2268
      %v2270 = vrot.slane %v613, 2
      %v2271 = vsel %vm2172, %v2268, %v2270
      %v2272 = vrot.slane %v614, 2
      %v2273 = vsel %vm2172, %v2270, %v2272
      %v2274 = vrot.slane %v615, 2
      %v2275 = vsel %vm2172, %v2272, %v2274
      %v2276 = vrot.slane %v616, 2
      %v2277 = vsel %vm2172, %v2274, %v2276
      %v2278 = vrot.slane %v617, 2
      %v2279 = vsel %vm2172, %v2276, %v2278
      %v2280 = vrot.slane %v618, 2
      %v2281 = vsel %vm2172, %v2278, %v2280
      %v2282 = vrot.slane %v619, 2
      %v2283 = vsel %vm2172, %v2280, %v2282
      %v2284 = vrot.slane %v620, 2
      %v2285 = vsel %vm2172, %v2282, %v2284
      %v2286 = vrot.slane %v621, 2
      %v2287 = vsel %vm2172, %v2284, %v2286
      %v2288 = vrot.slane %v622, 2
      %v2289 = vsel %vm2172, %v2286, %v2288
      %v2290 = vrot.slane %v623, 2
      %v2291 = vsel %vm2172, %v2288, %v2290
      %v2292 = vrot.slane %v624, 2
      %v2293 = vsel %vm2172, %v2290, %v2292
      %v2294 = vrot.slane %v625, 2
      %v2295 = vsel %vm2172, %v2292, %v2294
      %v2296 = vrot.slane %v626, 2
      %v2297 = vsel %vm2172, %v2294, %v2296
      %v2298 = vrot.slane %v627, 2
      %v2299 = vsel %vm2172, %v2296, %v2298
      %v2300 = vrot.slane %v628, 2
      %v2301 = vsel %vm2172, %v2298, %v2300
      %v2302 = vrot.slane %v629, 2
      %v2303 = vsel %vm2172, %v2300, %v2302
      %v2304 = vrot.slane %v1600, 2
      %v2305 = vsel %vm2172, %v2302, %v2304
      %v2306 = vrot.slane %v1601, 2
      %v2307 = vsel %vm2172, %v2304, %v2306
      %v2308 = vrot.slane %v1602, 2
      %v2309 = vsel %vm2172, %v2306, %v2308
      %2310 = vrot.lane.b32.xlu0 %v2175, 40
      %v2311 = vpop.permute.xlu0 %2310
      %2312 = vrot.lane.b32.xlu0 %v2177, 40
      %v2313 = vpop.permute.xlu0 %2312
      %2314 = vrot.lane.b32.xlu0 %v2179, 40
      %v2315 = vpop.permute.xlu0 %2314
      %2316 = vrot.lane.b32.xlu0 %v2181, 40
      %v2317 = vpop.permute.xlu0 %2316
      %2318 = vrot.lane.b32.xlu0 %v2183, 40
      %v2319 = vpop.permute.xlu0 %2318
      %2320 = vrot.lane.b32.xlu0 %v2185, 40
      %v2321 = vpop.permute.xlu0 %2320
      %2322 = vrot.lane.b32.xlu0 %v2187, 40
      %v2323 = vpop.permute.xlu0 %2322
      %2324 = vrot.lane.b32.xlu0 %v2189, 40
      %v2325 = vpop.permute.xlu0 %2324
      %2326 = vrot.lane.b32.xlu0 %v2191, 40
      %v2327 = vpop.permute.xlu0 %2326
      %2328 = vrot.lane.b32.xlu0 %v2193, 40
      %v2329 = vpop.permute.xlu0 %2328
      %2330 = vrot.lane.b32.xlu0 %v2195, 40
      %v2331 = vpop.permute.xlu0 %2330
      %2332 = vrot.lane.b32.xlu0 %v2197, 40
      %v2333 = vpop.permute.xlu0 %2332
      %2334 = vrot.lane.b32.xlu0 %v2199, 40
      %v2335 = vpop.permute.xlu0 %2334
      %2336 = vrot.lane.b32.xlu0 %v2201, 40
      %v2337 = vpop.permute.xlu0 %2336
      %2338 = vrot.lane.b32.xlu0 %v2203, 40
      %v2339 = vpop.permute.xlu0 %2338
      %2340 = vrot.lane.b32.xlu0 %v2205, 40
      %v2341 = vpop.permute.xlu0 %2340
      %2342 = vrot.lane.b32.xlu0 %v2207, 40
      %v2343 = vpop.permute.xlu0 %2342
      %2344 = vrot.lane.b32.xlu0 %v2209, 40
      %v2345 = vpop.permute.xlu0 %2344
      %2346 = vrot.lane.b32.xlu0 %v2211, 40
      %v2347 = vpop.permute.xlu0 %2346
      %2348 = vrot.lane.b32.xlu0 %v2213, 40
      %v2349 = vpop.permute.xlu0 %2348
      %2350 = vrot.lane.b32.xlu0 %v2215, 40
      %v2351 = vpop.permute.xlu0 %2350
      %2352 = vrot.lane.b32.xlu0 %v2217, 40
      %v2353 = vpop.permute.xlu0 %2352
      %2354 = vrot.lane.b32.xlu0 %v2219, 40
      %v2355 = vpop.permute.xlu0 %2354
      %2356 = vrot.lane.b32.xlu0 %v2221, 40
      %v2357 = vpop.permute.xlu0 %2356
      %2358 = vrot.lane.b32.xlu0 %v2223, 40
      %v2359 = vpop.permute.xlu0 %2358
      %2360 = vrot.lane.b32.xlu0 %v2225, 40
      %v2361 = vpop.permute.xlu0 %2360
      %2362 = vrot.lane.b32.xlu0 %v2227, 40
      %v2363 = vpop.permute.xlu0 %2362
      %2364 = vrot.lane.b32.xlu0 %v2229, 40
      %v2365 = vpop.permute.xlu0 %2364
      %2366 = vrot.lane.b32.xlu0 %v2231, 40
      %v2367 = vpop.permute.xlu0 %2366
      %2368 = vrot.lane.b32.xlu0 %v2233, 40
      %v2369 = vpop.permute.xlu0 %2368
      %2370 = vrot.lane.b32.xlu0 %v2235, 40
      %v2371 = vpop.permute.xlu0 %2370
      %2372 = vrot.lane.b32.xlu0 %v2237, 40
      %v2373 = vpop.permute.xlu0 %2372
      %2374 = vrot.lane.b32.xlu0 %v2239, 40
      %v2375 = vpop.permute.xlu0 %2374
      %2376 = vrot.lane.b32.xlu0 %v2241, 40
      %v2377 = vpop.permute.xlu0 %2376
      %2378 = vrot.lane.b32.xlu0 %v2243, 40
      %v2379 = vpop.permute.xlu0 %2378
      %2380 = vrot.lane.b32.xlu0 %v2245, 40
      %v2381 = vpop.permute.xlu0 %2380
      %2382 = vrot.lane.b32.xlu0 %v2247, 40
      %v2383 = vpop.permute.xlu0 %2382
      %2384 = vrot.lane.b32.xlu0 %v2249, 40
      %v2385 = vpop.permute.xlu0 %2384
      %2386 = vrot.lane.b32.xlu0 %v2251, 40
      %v2387 = vpop.permute.xlu0 %2386
      %2388 = vrot.lane.b32.xlu0 %v2253, 40
      %v2389 = vpop.permute.xlu0 %2388
      %2390 = vrot.lane.b32.xlu0 %v2255, 40
      %v2391 = vpop.permute.xlu0 %2390
      %2392 = vrot.lane.b32.xlu0 %v2257, 40
      %v2393 = vpop.permute.xlu0 %2392
      %2394 = vrot.lane.b32.xlu0 %v2259, 40
      %v2395 = vpop.permute.xlu0 %2394
      %2396 = vrot.lane.b32.xlu0 %v2261, 40
      %v2397 = vpop.permute.xlu0 %2396
      %2398 = vrot.lane.b32.xlu0 %v2263, 40
      %v2399 = vpop.permute.xlu0 %2398
      %2400 = vrot.lane.b32.xlu0 %v2265, 40
      %v2401 = vpop.permute.xlu0 %2400
      %2402 = vrot.lane.b32.xlu0 %v2267, 40
      %v2403 = vpop.permute.xlu0 %2402
      %2404 = vrot.lane.b32.xlu0 %v2269, 40
      %v2405 = vpop.permute.xlu0 %2404
      %2406 = vrot.lane.b32.xlu0 %v2271, 40
      %v2407 = vpop.permute.xlu0 %2406
      %2408 = vrot.lane.b32.xlu0 %v2273, 40
      %v2409 = vpop.permute.xlu0 %2408
      %2410 = vrot.lane.b32.xlu0 %v2275, 40
      %v2411 = vpop.permute.xlu0 %2410
      %2412 = vrot.lane.b32.xlu0 %v2277, 40
      %v2413 = vpop.permute.xlu0 %2412
      %2414 = vrot.lane.b32.xlu0 %v2279, 40
      %v2415 = vpop.permute.xlu0 %2414
      %2416 = vrot.lane.b32.xlu0 %v2281, 40
      %v2417 = vpop.permute.xlu0 %2416
      %2418 = vrot.lane.b32.xlu0 %v2283, 40
      %v2419 = vpop.permute.xlu0 %2418
      %2420 = vrot.lane.b32.xlu0 %v2285, 40
      %v2421 = vpop.permute.xlu0 %2420
      %2422 = vrot.lane.b32.xlu0 %v2287, 40
      %v2423 = vpop.permute.xlu0 %2422
      %2424 = vrot.lane.b32.xlu0 %v2289, 40
      %v2425 = vpop.permute.xlu0 %2424
      %2426 = vrot.lane.b32.xlu0 %v2291, 40
      %v2427 = vpop.permute.xlu0 %2426
      %2428 = vrot.lane.b32.xlu0 %v2293, 40
      %v2429 = vpop.permute.xlu0 %2428
      %2430 = vrot.lane.b32.xlu0 %v2295, 40
      %v2431 = vpop.permute.xlu0 %2430
      %2432 = vrot.lane.b32.xlu0 %v2297, 40
      %v2433 = vpop.permute.xlu0 %2432
      %2434 = vrot.lane.b32.xlu0 %v2299, 40
      %v2435 = vpop.permute.xlu0 %2434
      %2436 = vrot.lane.b32.xlu0 %v2301, 40
      %v2437 = vpop.permute.xlu0 %2436
      %2438 = vrot.lane.b32.xlu0 %v2303, 40
      %v2439 = vpop.permute.xlu0 %2438
      %2440 = vrot.lane.b32.xlu0 %v2305, 40
      %v2441 = vpop.permute.xlu0 %2440
      %2442 = vrot.lane.b32.xlu0 %v2307, 40
      %v2443 = vpop.permute.xlu0 %2442
      %2444 = vrot.lane.b32.xlu0 %v2309, 40
      %v2445 = vpop.permute.xlu0 %2444
      %v2450 = vunpack.c.l.b16 %v286
      %v2451 = vunpack.c.l.b16 %v287
      %v2452 = vunpack.c.l.b16 %v288
      %v2453 = vunpack.c.l.b16 %v289
      %v2454 = vpack.c.b16 %v2450, %v1599
      %v2455 = vpack.c.b16 %v2452, %v2451
      %v2456 = vpack.c.b16 %v2453, %v2453
      %v2457 = vrot.slane %v2454, 2
      %v2458 = vsel %vm2172, %v2306, %v2457
      %v2459 = vrot.slane %v2455, 2
      %v2460 = vsel %vm2172, %v2457, %v2459
      %v2461 = vrot.slane %v2456, 2
      %v2462 = vsel %vm2172, %v2459, %v2461
      %2463 = vrot.lane.b32.xlu0 %v2179, 48
      %v2464 = vpop.permute.xlu0 %2463
      %2465 = vrot.lane.b32.xlu0 %v2181, 48
      %v2466 = vpop.permute.xlu0 %2465
      %2467 = vrot.lane.b32.xlu0 %v2183, 48
      %v2468 = vpop.permute.xlu0 %2467
      %2469 = vrot.lane.b32.xlu0 %v2185, 48
      %v2470 = vpop.permute.xlu0 %2469
      %2471 = vrot.lane.b32.xlu0 %v2187, 48
      %v2472 = vpop.permute.xlu0 %2471
      %2473 = vrot.lane.b32.xlu0 %v2189, 48
      %v2474 = vpop.permute.xlu0 %2473
      %2475 = vrot.lane.b32.xlu0 %v2191, 48
      %v2476 = vpop.permute.xlu0 %2475
      %2477 = vrot.lane.b32.xlu0 %v2193, 48
      %v2478 = vpop.permute.xlu0 %2477
      %2479 = vrot.lane.b32.xlu0 %v2195, 48
      %v2480 = vpop.permute.xlu0 %2479
      %2481 = vrot.lane.b32.xlu0 %v2197, 48
      %v2482 = vpop.permute.xlu0 %2481
      %2483 = vrot.lane.b32.xlu0 %v2199, 48
      %v2484 = vpop.permute.xlu0 %2483
      %2485 = vrot.lane.b32.xlu0 %v2201, 48
      %v2486 = vpop.permute.xlu0 %2485
      %2487 = vrot.lane.b32.xlu0 %v2203, 48
      %v2488 = vpop.permute.xlu0 %2487
      %2489 = vrot.lane.b32.xlu0 %v2205, 48
      %v2490 = vpop.permute.xlu0 %2489
      %2491 = vrot.lane.b32.xlu0 %v2207, 48
      %v2492 = vpop.permute.xlu0 %2491
      %2493 = vrot.lane.b32.xlu0 %v2209, 48
      %v2494 = vpop.permute.xlu0 %2493
      %2495 = vrot.lane.b32.xlu0 %v2211, 48
      %v2496 = vpop.permute.xlu0 %2495
      %2497 = vrot.lane.b32.xlu0 %v2213, 48
      %v2498 = vpop.permute.xlu0 %2497
      %2499 = vrot.lane.b32.xlu0 %v2215, 48
      %v2500 = vpop.permute.xlu0 %2499
      %2501 = vrot.lane.b32.xlu0 %v2217, 48
      %v2502 = vpop.permute.xlu0 %2501
      %2503 = vrot.lane.b32.xlu0 %v2219, 48
      %v2504 = vpop.permute.xlu0 %2503
      %2505 = vrot.lane.b32.xlu0 %v2221, 48
      %v2506 = vpop.permute.xlu0 %2505
      %2507 = vrot.lane.b32.xlu0 %v2223, 48
      %v2508 = vpop.permute.xlu0 %2507
      %2509 = vrot.lane.b32.xlu0 %v2225, 48
      %v2510 = vpop.permute.xlu0 %2509
      %2511 = vrot.lane.b32.xlu0 %v2227, 48
      %v2512 = vpop.permute.xlu0 %2511
      %2513 = vrot.lane.b32.xlu0 %v2229, 48
      %v2514 = vpop.permute.xlu0 %2513
      %2515 = vrot.lane.b32.xlu0 %v2231, 48
      %v2516 = vpop.permute.xlu0 %2515
      %2517 = vrot.lane.b32.xlu0 %v2233, 48
      %v2518 = vpop.permute.xlu0 %2517
      %2519 = vrot.lane.b32.xlu0 %v2235, 48
      %v2520 = vpop.permute.xlu0 %2519
      %2521 = vrot.lane.b32.xlu0 %v2237, 48
      %v2522 = vpop.permute.xlu0 %2521
      %2523 = vrot.lane.b32.xlu0 %v2239, 48
      %v2524 = vpop.permute.xlu0 %2523
      %2525 = vrot.lane.b32.xlu0 %v2241, 48
      %v2526 = vpop.permute.xlu0 %2525
      %2527 = vrot.lane.b32.xlu0 %v2243, 48
      %v2528 = vpop.permute.xlu0 %2527
      %2529 = vrot.lane.b32.xlu0 %v2245, 48
      %v2530 = vpop.permute.xlu0 %2529
      %2531 = vrot.lane.b32.xlu0 %v2247, 48
      %v2532 = vpop.permute.xlu0 %2531
      %2533 = vrot.lane.b32.xlu0 %v2249, 48
      %v2534 = vpop.permute.xlu0 %2533
      %2535 = vrot.lane.b32.xlu0 %v2251, 48
      %v2536 = vpop.permute.xlu0 %2535
      %2537 = vrot.lane.b32.xlu0 %v2253, 48
      %v2538 = vpop.permute.xlu0 %2537
      %2539 = vrot.lane.b32.xlu0 %v2255, 48
      %v2540 = vpop.permute.xlu0 %2539
      %2541 = vrot.lane.b32.xlu0 %v2257, 48
      %v2542 = vpop.permute.xlu0 %2541
      %2543 = vrot.lane.b32.xlu0 %v2259, 48
      %v2544 = vpop.permute.xlu0 %2543
      %2545 = vrot.lane.b32.xlu0 %v2261, 48
      %v2546 = vpop.permute.xlu0 %2545
      %2547 = vrot.lane.b32.xlu0 %v2263, 48
      %v2548 = vpop.permute.xlu0 %2547
      %2549 = vrot.lane.b32.xlu0 %v2265, 48
      %v2550 = vpop.permute.xlu0 %2549
      %2551 = vrot.lane.b32.xlu0 %v2267, 48
      %v2552 = vpop.permute.xlu0 %2551
      %2553 = vrot.lane.b32.xlu0 %v2269, 48
      %v2554 = vpop.permute.xlu0 %2553
      %2555 = vrot.lane.b32.xlu0 %v2271, 48
      %v2556 = vpop.permute.xlu0 %2555
      %2557 = vrot.lane.b32.xlu0 %v2273, 48
      %v2558 = vpop.permute.xlu0 %2557
      %2559 = vrot.lane.b32.xlu0 %v2275, 48
      %v2560 = vpop.permute.xlu0 %2559
      %2561 = vrot.lane.b32.xlu0 %v2277, 48
      %v2562 = vpop.permute.xlu0 %2561
      %2563 = vrot.lane.b32.xlu0 %v2279, 48
      %v2564 = vpop.permute.xlu0 %2563
      %2565 = vrot.lane.b32.xlu0 %v2281, 48
      %v2566 = vpop.permute.xlu0 %2565
      %2567 = vrot.lane.b32.xlu0 %v2283, 48
      %v2568 = vpop.permute.xlu0 %2567
      %2569 = vrot.lane.b32.xlu0 %v2285, 48
      %v2570 = vpop.permute.xlu0 %2569
      %2571 = vrot.lane.b32.xlu0 %v2287, 48
      %v2572 = vpop.permute.xlu0 %2571
      %2573 = vrot.lane.b32.xlu0 %v2289, 48
      %v2574 = vpop.permute.xlu0 %2573
      %2575 = vrot.lane.b32.xlu0 %v2291, 48
      %v2576 = vpop.permute.xlu0 %2575
      %2577 = vrot.lane.b32.xlu0 %v2293, 48
      %v2578 = vpop.permute.xlu0 %2577
      %2579 = vrot.lane.b32.xlu0 %v2295, 48
      %v2580 = vpop.permute.xlu0 %2579
      %2581 = vrot.lane.b32.xlu0 %v2297, 48
      %v2582 = vpop.permute.xlu0 %2581
      %2583 = vrot.lane.b32.xlu0 %v2299, 48
      %v2584 = vpop.permute.xlu0 %2583
      %2585 = vrot.lane.b32.xlu0 %v2301, 48
      %v2586 = vpop.permute.xlu0 %2585
      %2587 = vrot.lane.b32.xlu0 %v2303, 48
      %v2588 = vpop.permute.xlu0 %2587
      %2589 = vrot.lane.b32.xlu0 %v2305, 48
      %v2590 = vpop.permute.xlu0 %2589
      %2591 = vrot.lane.b32.xlu0 %v2307, 48
      %v2592 = vpop.permute.xlu0 %2591
      %2593 = vrot.lane.b32.xlu0 %v2458, 48
      %v2594 = vpop.permute.xlu0 %2593
      %2595 = vrot.lane.b32.xlu0 %v2460, 48
      %v2596 = vpop.permute.xlu0 %2595
      %2597 = vrot.lane.b32.xlu0 %v2462, 48
      %v2598 = vpop.permute.xlu0 %2597
      %vm2599 = vsmask.f32 5376
      %v2600 = vrot.slane %v670, 2
      %v2601 = vrot.slane %v666, 3
      %v2602 = vor.u32 %v2600, %v2601
      %v2603 = vrot.slane %v678, 2
      %v2604 = vrot.slane %v674, 3
      %v2605 = vor.u32 %v2603, %v2604
      %v2606 = vsel %vm2599, %v2602, %v2605
      %v2607 = vrot.slane %v686, 2
      %v2608 = vrot.slane %v682, 3
      %v2609 = vor.u32 %v2607, %v2608
      %v2610 = vsel %vm2599, %v2605, %v2609
      %v2611 = vrot.slane %v694, 2
      %v2612 = vrot.slane %v690, 3
      %v2613 = vor.u32 %v2611, %v2612
      %v2614 = vsel %vm2599, %v2609, %v2613
      %v2615 = vrot.slane %v702, 2
      %v2616 = vrot.slane %v698, 3
      %v2617 = vor.u32 %v2615, %v2616
      %v2618 = vsel %vm2599, %v2613, %v2617
      %v2619 = vrot.slane %v710, 2
      %v2620 = vrot.slane %v706, 3
      %v2621 = vor.u32 %v2619, %v2620
      %v2622 = vsel %vm2599, %v2617, %v2621
      %v2623 = vrot.slane %v718, 2
      %v2624 = vrot.slane %v714, 3
      %v2625 = vor.u32 %v2623, %v2624
      %v2626 = vsel %vm2599, %v2621, %v2625
      %v2627 = vrot.slane %v726, 2
      %v2628 = vrot.slane %v722, 3
      %v2629 = vor.u32 %v2627, %v2628
      %v2630 = vsel %vm2599, %v2625, %v2629
      %v2631 = vrot.slane %v734, 2
      %v2632 = vrot.slane %v730, 3
      %v2633 = vor.u32 %v2631, %v2632
      %v2634 = vsel %vm2599, %v2629, %v2633
      %v2635 = vrot.slane %v742, 2
      %v2636 = vrot.slane %v738, 3
      %v2637 = vor.u32 %v2635, %v2636
      %v2638 = vsel %vm2599, %v2633, %v2637
      %v2639 = vrot.slane %v750, 2
      %v2640 = vrot.slane %v746, 3
      %v2641 = vor.u32 %v2639, %v2640
      %v2642 = vsel %vm2599, %v2637, %v2641
      %v2643 = vrot.slane %v758, 2
      %v2644 = vrot.slane %v754, 3
      %v2645 = vor.u32 %v2643, %v2644
      %v2646 = vsel %vm2599, %v2641, %v2645
      %v2647 = vrot.slane %v766, 2
      %v2648 = vrot.slane %v762, 3
      %v2649 = vor.u32 %v2647, %v2648
      %v2650 = vsel %vm2599, %v2645, %v2649
      %v2651 = vrot.slane %v774, 2
      %v2652 = vrot.slane %v770, 3
      %v2653 = vor.u32 %v2651, %v2652
      %v2654 = vsel %vm2599, %v2649, %v2653
      %v2655 = vrot.slane %v782, 2
      %v2656 = vrot.slane %v778, 3
      %v2657 = vor.u32 %v2655, %v2656
      %v2658 = vsel %vm2599, %v2653, %v2657
      %v2659 = vrot.slane %v790, 2
      %v2660 = vrot.slane %v786, 3
      %v2661 = vor.u32 %v2659, %v2660
      %v2662 = vsel %vm2599, %v2657, %v2661
      %v2663 = vrot.slane %v798, 2
      %v2664 = vrot.slane %v794, 3
      %v2665 = vor.u32 %v2663, %v2664
      %v2666 = vsel %vm2599, %v2661, %v2665
      %v2667 = vrot.slane %v806, 2
      %v2668 = vrot.slane %v802, 3
      %v2669 = vor.u32 %v2667, %v2668
      %v2670 = vsel %vm2599, %v2665, %v2669
      %v2671 = vrot.slane %v814, 2
      %v2672 = vrot.slane %v810, 3
      %v2673 = vor.u32 %v2671, %v2672
      %v2674 = vsel %vm2599, %v2669, %v2673
      %v2675 = vrot.slane %v822, 2
      %v2676 = vrot.slane %v818, 3
      %v2677 = vor.u32 %v2675, %v2676
      %v2678 = vsel %vm2599, %v2673, %v2677
      %v2679 = vrot.slane %v830, 2
      %v2680 = vrot.slane %v826, 3
      %v2681 = vor.u32 %v2679, %v2680
      %v2682 = vsel %vm2599, %v2677, %v2681
      %v2683 = vrot.slane %v838, 2
      %v2684 = vrot.slane %v834, 3
      %v2685 = vor.u32 %v2683, %v2684
      %v2686 = vsel %vm2599, %v2681, %v2685
      %v2687 = vrot.slane %v846, 2
      %v2688 = vrot.slane %v842, 3
      %v2689 = vor.u32 %v2687, %v2688
      %v2690 = vsel %vm2599, %v2685, %v2689
      %v2691 = vrot.slane %v854, 2
      %v2692 = vrot.slane %v850, 3
      %v2693 = vor.u32 %v2691, %v2692
      %v2694 = vsel %vm2599, %v2689, %v2693
      %v2695 = vrot.slane %v862, 2
      %v2696 = vrot.slane %v858, 3
      %v2697 = vor.u32 %v2695, %v2696
      %v2698 = vsel %vm2599, %v2693, %v2697
      %v2699 = vrot.slane %v870, 2
      %v2700 = vrot.slane %v866, 3
      %v2701 = vor.u32 %v2699, %v2700
      %v2702 = vsel %vm2599, %v2697, %v2701
      %v2703 = vrot.slane %v878, 2
      %v2704 = vrot.slane %v874, 3
      %v2705 = vor.u32 %v2703, %v2704
      %v2706 = vsel %vm2599, %v2701, %v2705
      %v2707 = vrot.slane %v886, 2
      %v2708 = vrot.slane %v882, 3
      %v2709 = vor.u32 %v2707, %v2708
      %v2710 = vsel %vm2599, %v2705, %v2709
      %v2711 = vrot.slane %v894, 2
      %v2712 = vrot.slane %v890, 3
      %v2713 = vor.u32 %v2711, %v2712
      %v2714 = vsel %vm2599, %v2709, %v2713
      %v2715 = vrot.slane %v902, 2
      %v2716 = vrot.slane %v898, 3
      %v2717 = vor.u32 %v2715, %v2716
      %v2718 = vsel %vm2599, %v2713, %v2717
      %v2719 = vrot.slane %v910, 2
      %v2720 = vrot.slane %v906, 3
      %v2721 = vor.u32 %v2719, %v2720
      %v2722 = vsel %vm2599, %v2717, %v2721
      %v2723 = vrot.slane %v918, 2
      %v2724 = vrot.slane %v914, 3
      %v2725 = vor.u32 %v2723, %v2724
      %v2726 = vsel %vm2599, %v2721, %v2725
      %v2727 = vrot.slane %v926, 2
      %v2728 = vrot.slane %v922, 3
      %v2729 = vor.u32 %v2727, %v2728
      %v2730 = vsel %vm2599, %v2725, %v2729
      %v2731 = vrot.slane %v934, 2
      %v2732 = vrot.slane %v930, 3
      %v2733 = vor.u32 %v2731, %v2732
      %v2734 = vsel %vm2599, %v2729, %v2733
      %v2735 = vrot.slane %v942, 2
      %v2736 = vrot.slane %v938, 3
      %v2737 = vor.u32 %v2735, %v2736
      %v2738 = vsel %vm2599, %v2733, %v2737
      %v2739 = vrot.slane %v950, 2
      %v2740 = vrot.slane %v946, 3
      %v2741 = vor.u32 %v2739, %v2740
      %v2742 = vsel %vm2599, %v2737, %v2741
      %v2743 = vrot.slane %v958, 2
      %v2744 = vrot.slane %v954, 3
      %v2745 = vor.u32 %v2743, %v2744
      %v2746 = vsel %vm2599, %v2741, %v2745
      %v2747 = vrot.slane %v966, 2
      %v2748 = vrot.slane %v962, 3
      %v2749 = vor.u32 %v2747, %v2748
      %v2750 = vsel %vm2599, %v2745, %v2749
      %v2751 = vrot.slane %v974, 2
      %v2752 = vrot.slane %v970, 3
      %v2753 = vor.u32 %v2751, %v2752
      %v2754 = vsel %vm2599, %v2749, %v2753
      %v2755 = vrot.slane %v982, 2
      %v2756 = vrot.slane %v978, 3
      %v2757 = vor.u32 %v2755, %v2756
      %v2758 = vsel %vm2599, %v2753, %v2757
      %v2759 = vrot.slane %v990, 2
      %v2760 = vrot.slane %v986, 3
      %v2761 = vor.u32 %v2759, %v2760
      %v2762 = vsel %vm2599, %v2757, %v2761
      %v2763 = vrot.slane %v998, 2
      %v2764 = vrot.slane %v994, 3
      %v2765 = vor.u32 %v2763, %v2764
      %v2766 = vsel %vm2599, %v2761, %v2765
      %v2767 = vrot.slane %v1006, 2
      %v2768 = vrot.slane %v1002, 3
      %v2769 = vor.u32 %v2767, %v2768
      %v2770 = vsel %vm2599, %v2765, %v2769
      %v2771 = vrot.slane %v1014, 2
      %v2772 = vrot.slane %v1010, 3
      %v2773 = vor.u32 %v2771, %v2772
      %v2774 = vsel %vm2599, %v2769, %v2773
      %v2775 = vrot.slane %v1022, 2
      %v2776 = vrot.slane %v1018, 3
      %v2777 = vor.u32 %v2775, %v2776
      %v2778 = vsel %vm2599, %v2773, %v2777
      %v2779 = vrot.slane %v1030, 2
      %v2780 = vrot.slane %v1026, 3
      %v2781 = vor.u32 %v2779, %v2780
      %v2782 = vsel %vm2599, %v2777, %v2781
      %v2783 = vrot.slane %v1038, 2
      %v2784 = vrot.slane %v1034, 3
      %v2785 = vor.u32 %v2783, %v2784
      %v2786 = vsel %vm2599, %v2781, %v2785
      %v2787 = vrot.slane %v1046, 2
      %v2788 = vrot.slane %v1042, 3
      %v2789 = vor.u32 %v2787, %v2788
      %v2790 = vsel %vm2599, %v2785, %v2789
      %v2791 = vrot.slane %v1054, 2
      %v2792 = vrot.slane %v1050, 3
      %v2793 = vor.u32 %v2791, %v2792
      %v2794 = vsel %vm2599, %v2789, %v2793
      %v2795 = vrot.slane %v1062, 2
      %v2796 = vrot.slane %v1058, 3
      %v2797 = vor.u32 %v2795, %v2796
      %v2798 = vsel %vm2599, %v2793, %v2797
      %v2799 = vrot.slane %v1070, 2
      %v2800 = vrot.slane %v1066, 3
      %v2801 = vor.u32 %v2799, %v2800
      %v2802 = vsel %vm2599, %v2797, %v2801
      %v2803 = vrot.slane %v1078, 2
      %v2804 = vrot.slane %v1074, 3
      %v2805 = vor.u32 %v2803, %v2804
      %v2806 = vsel %vm2599, %v2801, %v2805
      %v2807 = vrot.slane %v1086, 2
      %v2808 = vrot.slane %v1082, 3
      %v2809 = vor.u32 %v2807, %v2808
      %v2810 = vsel %vm2599, %v2805, %v2809
      %v2811 = vrot.slane %v1094, 2
      %v2812 = vrot.slane %v1090, 3
      %v2813 = vor.u32 %v2811, %v2812
      %v2814 = vsel %vm2599, %v2809, %v2813
      %v2815 = vrot.slane %v1102, 2
      %v2816 = vrot.slane %v1098, 3
      %v2817 = vor.u32 %v2815, %v2816
      %v2818 = vsel %vm2599, %v2813, %v2817
      %v2819 = vrot.slane %v1110, 2
      %v2820 = vrot.slane %v1106, 3
      %v2821 = vor.u32 %v2819, %v2820
      %v2822 = vsel %vm2599, %v2817, %v2821
      %v2823 = vrot.slane %v1118, 2
      %v2824 = vrot.slane %v1114, 3
      %v2825 = vor.u32 %v2823, %v2824
      %v2826 = vsel %vm2599, %v2821, %v2825
      %v2827 = vrot.slane %v1126, 2
      %v2828 = vrot.slane %v1122, 3
      %v2829 = vor.u32 %v2827, %v2828
      %v2830 = vsel %vm2599, %v2825, %v2829
      %v2831 = vrot.slane %v1134, 2
      %v2832 = vrot.slane %v1130, 3
      %v2833 = vor.u32 %v2831, %v2832
      %v2834 = vsel %vm2599, %v2829, %v2833
      %v2835 = vrot.slane %v1142, 2
      %v2836 = vrot.slane %v1138, 3
      %v2837 = vor.u32 %v2835, %v2836
      %v2838 = vsel %vm2599, %v2833, %v2837
      %v2839 = vrot.slane %v1150, 2
      %v2840 = vrot.slane %v1146, 3
      %v2841 = vor.u32 %v2839, %v2840
      %v2842 = vsel %vm2599, %v2837, %v2841
      %v2843 = vrot.slane %v1158, 2
      %v2844 = vrot.slane %v1154, 3
      %v2845 = vor.u32 %v2843, %v2844
      %v2846 = vsel %vm2599, %v2841, %v2845
      %v2847 = vrot.slane %v1166, 2
      %v2848 = vrot.slane %v1162, 3
      %v2849 = vor.u32 %v2847, %v2848
      %v2850 = vsel %vm2599, %v2845, %v2849
      %v2851 = vrot.slane %v1174, 2
      %v2852 = vrot.slane %v1170, 3
      %v2853 = vor.u32 %v2851, %v2852
      %v2854 = vsel %vm2599, %v2849, %v2853
      %v2855 = vrot.slane %v2010, 2
      %v2856 = vrot.slane %v2013, 3
      %v2857 = vor.u32 %v2855, %v2856
      %v2858 = vsel %vm2599, %v2853, %v2857
      %v2859 = vrot.slane %v2019, 2
      %v2860 = vrot.slane %v2022, 3
      %v2861 = vor.u32 %v2859, %v2860
      %v2862 = vsel %vm2599, %v2857, %v2861
      %v2864 = vshrl.u32 %v2454, 16
      %v2866 = vrot.slane %v2864, 2
      %v2867 = vshll.u32 %v2454, 16
      %v2869 = vrot.slane %v2867, 3
      %v2870 = vor.u32 %v2866, %v2869
      %v2871 = vsel %vm2599, %v2861, %v2870
      %v2873 = vshrl.u32 %v2455, 16
      %v2875 = vrot.slane %v2873, 2
      %v2876 = vshll.u32 %v2455, 16
      %v2878 = vrot.slane %v2876, 3
      %v2879 = vor.u32 %v2875, %v2878
      %v2880 = vsel %vm2599, %v2870, %v2879
      %v2882 = vshrl.u32 %v2456, 16
      %v2884 = vrot.slane %v2882, 2
      %v2885 = vshll.u32 %v2456, 16
      %v2887 = vrot.slane %v2885, 3
      %v2888 = vor.u32 %v2884, %v2887
      %v2889 = vsel %vm2599, %v2879, %v2888
      %2890 = vrot.lane.b32.xlu0 %v2606, 56
      %v2891 = vpop.permute.xlu0 %2890
      %2892 = vrot.lane.b32.xlu0 %v2610, 56
      %v2893 = vpop.permute.xlu0 %2892
      %2894 = vrot.lane.b32.xlu0 %v2614, 56
      %v2895 = vpop.permute.xlu0 %2894
      %2896 = vrot.lane.b32.xlu0 %v2618, 56
      %v2897 = vpop.permute.xlu0 %2896
      %2898 = vrot.lane.b32.xlu0 %v2622, 56
      %v2899 = vpop.permute.xlu0 %2898
      %2900 = vrot.lane.b32.xlu0 %v2626, 56
      %v2901 = vpop.permute.xlu0 %2900
      %2902 = vrot.lane.b32.xlu0 %v2630, 56
      %v2903 = vpop.permute.xlu0 %2902
      %2904 = vrot.lane.b32.xlu0 %v2634, 56
      %v2905 = vpop.permute.xlu0 %2904
      %2906 = vrot.lane.b32.xlu0 %v2638, 56
      %v2907 = vpop.permute.xlu0 %2906
      %2908 = vrot.lane.b32.xlu0 %v2642, 56
      %v2909 = vpop.permute.xlu0 %2908
      %2910 = vrot.lane.b32.xlu0 %v2646, 56
      %v2911 = vpop.permute.xlu0 %2910
      %2912 = vrot.lane.b32.xlu0 %v2650, 56
      %v2913 = vpop.permute.xlu0 %2912
      %2914 = vrot.lane.b32.xlu0 %v2654, 56
      %v2915 = vpop.permute.xlu0 %2914
      %2916 = vrot.lane.b32.xlu0 %v2658, 56
      %v2917 = vpop.permute.xlu0 %2916
      %2918 = vrot.lane.b32.xlu0 %v2662, 56
      %v2919 = vpop.permute.xlu0 %2918
      %2920 = vrot.lane.b32.xlu0 %v2666, 56
      %v2921 = vpop.permute.xlu0 %2920
      %2922 = vrot.lane.b32.xlu0 %v2670, 56
      %v2923 = vpop.permute.xlu0 %2922
      %2924 = vrot.lane.b32.xlu0 %v2674, 56
      %v2925 = vpop.permute.xlu0 %2924
      %2926 = vrot.lane.b32.xlu0 %v2678, 56
      %v2927 = vpop.permute.xlu0 %2926
      %2928 = vrot.lane.b32.xlu0 %v2682, 56
      %v2929 = vpop.permute.xlu0 %2928
      %2930 = vrot.lane.b32.xlu0 %v2686, 56
      %v2931 = vpop.permute.xlu0 %2930
      %2932 = vrot.lane.b32.xlu0 %v2690, 56
      %v2933 = vpop.permute.xlu0 %2932
      %2934 = vrot.lane.b32.xlu0 %v2694, 56
      %v2935 = vpop.permute.xlu0 %2934
      %2936 = vrot.lane.b32.xlu0 %v2698, 56
      %v2937 = vpop.permute.xlu0 %2936
      %2938 = vrot.lane.b32.xlu0 %v2702, 56
      %v2939 = vpop.permute.xlu0 %2938
      %2940 = vrot.lane.b32.xlu0 %v2706, 56
      %v2941 = vpop.permute.xlu0 %2940
      %2942 = vrot.lane.b32.xlu0 %v2710, 56
      %v2943 = vpop.permute.xlu0 %2942
      %2944 = vrot.lane.b32.xlu0 %v2714, 56
      %v2945 = vpop.permute.xlu0 %2944
      %2946 = vrot.lane.b32.xlu0 %v2718, 56
      %v2947 = vpop.permute.xlu0 %2946
      %2948 = vrot.lane.b32.xlu0 %v2722, 56
      %v2949 = vpop.permute.xlu0 %2948
      %2950 = vrot.lane.b32.xlu0 %v2726, 56
      %v2951 = vpop.permute.xlu0 %2950
      %2952 = vrot.lane.b32.xlu0 %v2730, 56
      %v2953 = vpop.permute.xlu0 %2952
      %2954 = vrot.lane.b32.xlu0 %v2734, 56
      %v2955 = vpop.permute.xlu0 %2954
      %2956 = vrot.lane.b32.xlu0 %v2738, 56
      %v2957 = vpop.permute.xlu0 %2956
      %2958 = vrot.lane.b32.xlu0 %v2742, 56
      %v2959 = vpop.permute.xlu0 %2958
      %2960 = vrot.lane.b32.xlu0 %v2746, 56
      %v2961 = vpop.permute.xlu0 %2960
      %2962 = vrot.lane.b32.xlu0 %v2750, 56
      %v2963 = vpop.permute.xlu0 %2962
      %2964 = vrot.lane.b32.xlu0 %v2754, 56
      %v2965 = vpop.permute.xlu0 %2964
      %2966 = vrot.lane.b32.xlu0 %v2758, 56
      %v2967 = vpop.permute.xlu0 %2966
      %2968 = vrot.lane.b32.xlu0 %v2762, 56
      %v2969 = vpop.permute.xlu0 %2968
      %2970 = vrot.lane.b32.xlu0 %v2766, 56
      %v2971 = vpop.permute.xlu0 %2970
      %2972 = vrot.lane.b32.xlu0 %v2770, 56
      %v2973 = vpop.permute.xlu0 %2972
      %2974 = vrot.lane.b32.xlu0 %v2774, 56
      %v2975 = vpop.permute.xlu0 %2974
      %2976 = vrot.lane.b32.xlu0 %v2778, 56
      %v2977 = vpop.permute.xlu0 %2976
      %2978 = vrot.lane.b32.xlu0 %v2782, 56
      %v2979 = vpop.permute.xlu0 %2978
      %2980 = vrot.lane.b32.xlu0 %v2786, 56
      %v2981 = vpop.permute.xlu0 %2980
      %2982 = vrot.lane.b32.xlu0 %v2790, 56
      %v2983 = vpop.permute.xlu0 %2982
      %2984 = vrot.lane.b32.xlu0 %v2794, 56
      %v2985 = vpop.permute.xlu0 %2984
      %2986 = vrot.lane.b32.xlu0 %v2798, 56
      %v2987 = vpop.permute.xlu0 %2986
      %2988 = vrot.lane.b32.xlu0 %v2802, 56
      %v2989 = vpop.permute.xlu0 %2988
      %2990 = vrot.lane.b32.xlu0 %v2806, 56
      %v2991 = vpop.permute.xlu0 %2990
      %2992 = vrot.lane.b32.xlu0 %v2810, 56
      %v2993 = vpop.permute.xlu0 %2992
      %2994 = vrot.lane.b32.xlu0 %v2814, 56
      %v2995 = vpop.permute.xlu0 %2994
      %2996 = vrot.lane.b32.xlu0 %v2818, 56
      %v2997 = vpop.permute.xlu0 %2996
      %2998 = vrot.lane.b32.xlu0 %v2822, 56
      %v2999 = vpop.permute.xlu0 %2998
      %3000 = vrot.lane.b32.xlu0 %v2826, 56
      %v3001 = vpop.permute.xlu0 %3000
      %3002 = vrot.lane.b32.xlu0 %v2830, 56
      %v3003 = vpop.permute.xlu0 %3002
      %3004 = vrot.lane.b32.xlu0 %v2834, 56
      %v3005 = vpop.permute.xlu0 %3004
      %3006 = vrot.lane.b32.xlu0 %v2838, 56
      %v3007 = vpop.permute.xlu0 %3006
      %3008 = vrot.lane.b32.xlu0 %v2842, 56
      %v3009 = vpop.permute.xlu0 %3008
      %3010 = vrot.lane.b32.xlu0 %v2846, 56
      %v3011 = vpop.permute.xlu0 %3010
      %3012 = vrot.lane.b32.xlu0 %v2850, 56
      %v3013 = vpop.permute.xlu0 %3012
      %3014 = vrot.lane.b32.xlu0 %v2854, 56
      %v3015 = vpop.permute.xlu0 %3014
      %3016 = vrot.lane.b32.xlu0 %v2858, 56
      %v3017 = vpop.permute.xlu0 %3016
      %3018 = vrot.lane.b32.xlu0 %v2862, 56
      %v3019 = vpop.permute.xlu0 %3018
      %3020 = vrot.lane.b32.xlu0 %v2871, 56
      %v3021 = vpop.permute.xlu0 %3020
      %3022 = vrot.lane.b32.xlu0 %v2880, 56
      %v3023 = vpop.permute.xlu0 %3022
      %3024 = vrot.lane.b32.xlu0 %v2889, 56
      %v3025 = vpop.permute.xlu0 %3024
      %vm3026 = vcmask 1044480
      %v3027 = vrot.slane %v566, 3
      %v3028 = vrot.slane %v567, 3
      %v3029 = vsel %vm3026, %v3027, %v3028
      %v3030 = vrot.slane %v568, 3
      %v3031 = vsel %vm3026, %v3028, %v3030
      %v3032 = vrot.slane %v569, 3
      %v3033 = vsel %vm3026, %v3030, %v3032
      %v3034 = vrot.slane %v570, 3
      %v3035 = vsel %vm3026, %v3032, %v3034
      %v3036 = vrot.slane %v571, 3
      %v3037 = vsel %vm3026, %v3034, %v3036
      %v3038 = vrot.slane %v572, 3
      %v3039 = vsel %vm3026, %v3036, %v3038
      %v3040 = vrot.slane %v573, 3
      %v3041 = vsel %vm3026, %v3038, %v3040
      %v3042 = vrot.slane %v574, 3
      %v3043 = vsel %vm3026, %v3040, %v3042
      %v3044 = vrot.slane %v575, 3
      %v3045 = vsel %vm3026, %v3042, %v3044
      %v3046 = vrot.slane %v576, 3
      %v3047 = vsel %vm3026, %v3044, %v3046
      %v3048 = vrot.slane %v577, 3
      %v3049 = vsel %vm3026, %v3046, %v3048
      %v3050 = vrot.slane %v578, 3
      %v3051 = vsel %vm3026, %v3048, %v3050
      %v3052 = vrot.slane %v579, 3
      %v3053 = vsel %vm3026, %v3050, %v3052
      %v3054 = vrot.slane %v580, 3
      %v3055 = vsel %vm3026, %v3052, %v3054
      %v3056 = vrot.slane %v581, 3
      %v3057 = vsel %vm3026, %v3054, %v3056
      %v3058 = vrot.slane %v582, 3
      %v3059 = vsel %vm3026, %v3056, %v3058
      %v3060 = vrot.slane %v583, 3
      %v3061 = vsel %vm3026, %v3058, %v3060
      %v3062 = vrot.slane %v584, 3
      %v3063 = vsel %vm3026, %v3060, %v3062
      %v3064 = vrot.slane %v585, 3
      %v3065 = vsel %vm3026, %v3062, %v3064
      %v3066 = vrot.slane %v586, 3
      %v3067 = vsel %vm3026, %v3064, %v3066
      %v3068 = vrot.slane %v587, 3
      %v3069 = vsel %vm3026, %v3066, %v3068
      %v3070 = vrot.slane %v588, 3
      %v3071 = vsel %vm3026, %v3068, %v3070
      %v3072 = vrot.slane %v589, 3
      %v3073 = vsel %vm3026, %v3070, %v3072
      %v3074 = vrot.slane %v590, 3
      %v3075 = vsel %vm3026, %v3072, %v3074
      %v3076 = vrot.slane %v591, 3
      %v3077 = vsel %vm3026, %v3074, %v3076
      %v3078 = vrot.slane %v592, 3
      %v3079 = vsel %vm3026, %v3076, %v3078
      %v3080 = vrot.slane %v593, 3
      %v3081 = vsel %vm3026, %v3078, %v3080
      %v3082 = vrot.slane %v594, 3
      %v3083 = vsel %vm3026, %v3080, %v3082
      %v3084 = vrot.slane %v595, 3
      %v3085 = vsel %vm3026, %v3082, %v3084
      %v3086 = vrot.slane %v596, 3
      %v3087 = vsel %vm3026, %v3084, %v3086
      %v3088 = vrot.slane %v597, 3
      %v3089 = vsel %vm3026, %v3086, %v3088
      %v3090 = vrot.slane %v598, 3
      %v3091 = vsel %vm3026, %v3088, %v3090
      %v3092 = vrot.slane %v599, 3
      %v3093 = vsel %vm3026, %v3090, %v3092
      %v3094 = vrot.slane %v600, 3
      %v3095 = vsel %vm3026, %v3092, %v3094
      %v3096 = vrot.slane %v601, 3
      %v3097 = vsel %vm3026, %v3094, %v3096
      %v3098 = vrot.slane %v602, 3
      %v3099 = vsel %vm3026, %v3096, %v3098
      %v3100 = vrot.slane %v603, 3
      %v3101 = vsel %vm3026, %v3098, %v3100
      %v3102 = vrot.slane %v604, 3
      %v3103 = vsel %vm3026, %v3100, %v3102
      %v3104 = vrot.slane %v605, 3
      %v3105 = vsel %vm3026, %v3102, %v3104
      %v3106 = vrot.slane %v606, 3
      %v3107 = vsel %vm3026, %v3104, %v3106
      %v3108 = vrot.slane %v607, 3
      %v3109 = vsel %vm3026, %v3106, %v3108
      %v3110 = vrot.slane %v608, 3
      %v3111 = vsel %vm3026, %v3108, %v3110
      %v3112 = vrot.slane %v609, 3
      %v3113 = vsel %vm3026, %v3110, %v3112
      %v3114 = vrot.slane %v610, 3
      %v3115 = vsel %vm3026, %v3112, %v3114
      %v3116 = vrot.slane %v611, 3
      %v3117 = vsel %vm3026, %v3114, %v3116
      %v3118 = vrot.slane %v612, 3
      %v3119 = vsel %vm3026, %v3116, %v3118
      %v3120 = vrot.slane %v613, 3
      %v3121 = vsel %vm3026, %v3118, %v3120
      %v3122 = vrot.slane %v614, 3
      %v3123 = vsel %vm3026, %v3120, %v3122
      %v3124 = vrot.slane %v615, 3
      %v3125 = vsel %vm3026, %v3122, %v3124
      %v3126 = vrot.slane %v616, 3
      %v3127 = vsel %vm3026, %v3124, %v3126
      %v3128 = vrot.slane %v617, 3
      %v3129 = vsel %vm3026, %v3126, %v3128
      %v3130 = vrot.slane %v618, 3
      %v3131 = vsel %vm3026, %v3128, %v3130
      %v3132 = vrot.slane %v619, 3
      %v3133 = vsel %vm3026, %v3130, %v3132
      %v3134 = vrot.slane %v620, 3
      %v3135 = vsel %vm3026, %v3132, %v3134
      %v3136 = vrot.slane %v621, 3
      %v3137 = vsel %vm3026, %v3134, %v3136
      %v3138 = vrot.slane %v622, 3
      %v3139 = vsel %vm3026, %v3136, %v3138
      %v3140 = vrot.slane %v623, 3
      %v3141 = vsel %vm3026, %v3138, %v3140
      %v3142 = vrot.slane %v624, 3
      %v3143 = vsel %vm3026, %v3140, %v3142
      %v3144 = vrot.slane %v625, 3
      %v3145 = vsel %vm3026, %v3142, %v3144
      %v3146 = vrot.slane %v626, 3
      %v3147 = vsel %vm3026, %v3144, %v3146
      %v3148 = vrot.slane %v627, 3
      %v3149 = vsel %vm3026, %v3146, %v3148
      %v3150 = vrot.slane %v628, 3
      %v3151 = vsel %vm3026, %v3148, %v3150
      %v3152 = vrot.slane %v629, 3
      %v3153 = vsel %vm3026, %v3150, %v3152
      %v3154 = vrot.slane %v1600, 3
      %v3155 = vsel %vm3026, %v3152, %v3154
      %v3156 = vrot.slane %v1601, 3
      %v3157 = vsel %vm3026, %v3154, %v3156
      %v3158 = vrot.slane %v2454, 3
      %v3159 = vsel %vm3026, %v3156, %v3158
      %v3160 = vrot.slane %v2455, 3
      %v3161 = vsel %vm3026, %v3158, %v3160
      %v3162 = vrot.slane %v2456, 3
      %v3163 = vsel %vm3026, %v3160, %v3162
      %3164 = vrot.lane.b32.xlu0 %v3029, 64
      %v3165 = vpop.permute.xlu0 %3164
      %3166 = vrot.lane.b32.xlu0 %v3031, 64
      %v3167 = vpop.permute.xlu0 %3166
      %3168 = vrot.lane.b32.xlu0 %v3033, 64
      %v3169 = vpop.permute.xlu0 %3168
      %3170 = vrot.lane.b32.xlu0 %v3035, 64
      %v3171 = vpop.permute.xlu0 %3170
      %3172 = vrot.lane.b32.xlu0 %v3037, 64
      %v3173 = vpop.permute.xlu0 %3172
      %3174 = vrot.lane.b32.xlu0 %v3039, 64
      %v3175 = vpop.permute.xlu0 %3174
      %3176 = vrot.lane.b32.xlu0 %v3041, 64
      %v3177 = vpop.permute.xlu0 %3176
      %3178 = vrot.lane.b32.xlu0 %v3043, 64
      %v3179 = vpop.permute.xlu0 %3178
      %3180 = vrot.lane.b32.xlu0 %v3045, 64
      %v3181 = vpop.permute.xlu0 %3180
      %3182 = vrot.lane.b32.xlu0 %v3047, 64
      %v3183 = vpop.permute.xlu0 %3182
      %3184 = vrot.lane.b32.xlu0 %v3049, 64
      %v3185 = vpop.permute.xlu0 %3184
      %3186 = vrot.lane.b32.xlu0 %v3051, 64
      %v3187 = vpop.permute.xlu0 %3186
      %3188 = vrot.lane.b32.xlu0 %v3053, 64
      %v3189 = vpop.permute.xlu0 %3188
      %3190 = vrot.lane.b32.xlu0 %v3055, 64
      %v3191 = vpop.permute.xlu0 %3190
      %3192 = vrot.lane.b32.xlu0 %v3057, 64
      %v3193 = vpop.permute.xlu0 %3192
      %3194 = vrot.lane.b32.xlu0 %v3059, 64
      %v3195 = vpop.permute.xlu0 %3194
      %3196 = vrot.lane.b32.xlu0 %v3061, 64
      %v3197 = vpop.permute.xlu0 %3196
      %3198 = vrot.lane.b32.xlu0 %v3063, 64
      %v3199 = vpop.permute.xlu0 %3198
      %3200 = vrot.lane.b32.xlu0 %v3065, 64
      %v3201 = vpop.permute.xlu0 %3200
      %3202 = vrot.lane.b32.xlu0 %v3067, 64
      %v3203 = vpop.permute.xlu0 %3202
      %3204 = vrot.lane.b32.xlu0 %v3069, 64
      %v3205 = vpop.permute.xlu0 %3204
      %3206 = vrot.lane.b32.xlu0 %v3071, 64
      %v3207 = vpop.permute.xlu0 %3206
      %3208 = vrot.lane.b32.xlu0 %v3073, 64
      %v3209 = vpop.permute.xlu0 %3208
      %3210 = vrot.lane.b32.xlu0 %v3075, 64
      %v3211 = vpop.permute.xlu0 %3210
      %3212 = vrot.lane.b32.xlu0 %v3077, 64
      %v3213 = vpop.permute.xlu0 %3212
      %3214 = vrot.lane.b32.xlu0 %v3079, 64
      %v3215 = vpop.permute.xlu0 %3214
      %3216 = vrot.lane.b32.xlu0 %v3081, 64
      %v3217 = vpop.permute.xlu0 %3216
      %3218 = vrot.lane.b32.xlu0 %v3083, 64
      %v3219 = vpop.permute.xlu0 %3218
      %3220 = vrot.lane.b32.xlu0 %v3085, 64
      %v3221 = vpop.permute.xlu0 %3220
      %3222 = vrot.lane.b32.xlu0 %v3087, 64
      %v3223 = vpop.permute.xlu0 %3222
      %3224 = vrot.lane.b32.xlu0 %v3089, 64
      %v3225 = vpop.permute.xlu0 %3224
      %3226 = vrot.lane.b32.xlu0 %v3091, 64
      %v3227 = vpop.permute.xlu0 %3226
      %3228 = vrot.lane.b32.xlu0 %v3093, 64
      %v3229 = vpop.permute.xlu0 %3228
      %3230 = vrot.lane.b32.xlu0 %v3095, 64
      %v3231 = vpop.permute.xlu0 %3230
      %3232 = vrot.lane.b32.xlu0 %v3097, 64
      %v3233 = vpop.permute.xlu0 %3232
      %3234 = vrot.lane.b32.xlu0 %v3099, 64
      %v3235 = vpop.permute.xlu0 %3234
      %3236 = vrot.lane.b32.xlu0 %v3101, 64
      %v3237 = vpop.permute.xlu0 %3236
      %3238 = vrot.lane.b32.xlu0 %v3103, 64
      %v3239 = vpop.permute.xlu0 %3238
      %3240 = vrot.lane.b32.xlu0 %v3105, 64
      %v3241 = vpop.permute.xlu0 %3240
      %3242 = vrot.lane.b32.xlu0 %v3107, 64
      %v3243 = vpop.permute.xlu0 %3242
      %3244 = vrot.lane.b32.xlu0 %v3109, 64
      %v3245 = vpop.permute.xlu0 %3244
      %3246 = vrot.lane.b32.xlu0 %v3111, 64
      %v3247 = vpop.permute.xlu0 %3246
      %3248 = vrot.lane.b32.xlu0 %v3113, 64
      %v3249 = vpop.permute.xlu0 %3248
      %3250 = vrot.lane.b32.xlu0 %v3115, 64
      %v3251 = vpop.permute.xlu0 %3250
      %3252 = vrot.lane.b32.xlu0 %v3117, 64
      %v3253 = vpop.permute.xlu0 %3252
      %3254 = vrot.lane.b32.xlu0 %v3119, 64
      %v3255 = vpop.permute.xlu0 %3254
      %3256 = vrot.lane.b32.xlu0 %v3121, 64
      %v3257 = vpop.permute.xlu0 %3256
      %3258 = vrot.lane.b32.xlu0 %v3123, 64
      %v3259 = vpop.permute.xlu0 %3258
      %3260 = vrot.lane.b32.xlu0 %v3125, 64
      %v3261 = vpop.permute.xlu0 %3260
      %3262 = vrot.lane.b32.xlu0 %v3127, 64
      %v3263 = vpop.permute.xlu0 %3262
      %3264 = vrot.lane.b32.xlu0 %v3129, 64
      %v3265 = vpop.permute.xlu0 %3264
      %3266 = vrot.lane.b32.xlu0 %v3131, 64
      %v3267 = vpop.permute.xlu0 %3266
      %3268 = vrot.lane.b32.xlu0 %v3133, 64
      %v3269 = vpop.permute.xlu0 %3268
      %3270 = vrot.lane.b32.xlu0 %v3135, 64
      %v3271 = vpop.permute.xlu0 %3270
      %3272 = vrot.lane.b32.xlu0 %v3137, 64
      %v3273 = vpop.permute.xlu0 %3272
      %3274 = vrot.lane.b32.xlu0 %v3139, 64
      %v3275 = vpop.permute.xlu0 %3274
      %3276 = vrot.lane.b32.xlu0 %v3141, 64
      %v3277 = vpop.permute.xlu0 %3276
      %3278 = vrot.lane.b32.xlu0 %v3143, 64
      %v3279 = vpop.permute.xlu0 %3278
      %3280 = vrot.lane.b32.xlu0 %v3145, 64
      %v3281 = vpop.permute.xlu0 %3280
      %3282 = vrot.lane.b32.xlu0 %v3147, 64
      %v3283 = vpop.permute.xlu0 %3282
      %3284 = vrot.lane.b32.xlu0 %v3149, 64
      %v3285 = vpop.permute.xlu0 %3284
      %3286 = vrot.lane.b32.xlu0 %v3151, 64
      %v3287 = vpop.permute.xlu0 %3286
      %3288 = vrot.lane.b32.xlu0 %v3153, 64
      %v3289 = vpop.permute.xlu0 %3288
      %3290 = vrot.lane.b32.xlu0 %v3155, 64
      %v3291 = vpop.permute.xlu0 %3290
      %3292 = vrot.lane.b32.xlu0 %v3157, 64
      %v3293 = vpop.permute.xlu0 %3292
      %3294 = vrot.lane.b32.xlu0 %v3159, 64
      %v3295 = vpop.permute.xlu0 %3294
      %3296 = vrot.lane.b32.xlu0 %v3161, 64
      %v3297 = vpop.permute.xlu0 %3296
      %3298 = vrot.lane.b32.xlu0 %v3163, 64
      %v3299 = vpop.permute.xlu0 %3298
      %vm3300 = vcmask 64512
      %v3302 = vsel %vm3300, %v562, %v1183
      %v3304 = vsel %vm3300, %v563, %v1185
      %v3306 = vsel %vm3300, %v564, %v1187
      %v3308 = vsel %vm3300, %v565, %v1189
      %v3310 = vsel %vm3300, %v566, %v1191
      %v3312 = vsel %vm3300, %v567, %v1193
      %v3314 = vsel %vm3300, %v568, %v1195
      %v3316 = vsel %vm3300, %v569, %v1197
      %v3318 = vsel %vm3300, %v570, %v1199
      %v3320 = vsel %vm3300, %v571, %v1201
      %v3322 = vsel %vm3300, %v572, %v1203
      %v3324 = vsel %vm3300, %v573, %v1205
      %v3326 = vsel %vm3300, %v574, %v1207
      %v3328 = vsel %vm3300, %v575, %v1209
      %v3330 = vsel %vm3300, %v576, %v1211
      %v3332 = vsel %vm3300, %v577, %v1213
      %v3334 = vsel %vm3300, %v578, %v1215
      %v3336 = vsel %vm3300, %v579, %v1217
      %v3338 = vsel %vm3300, %v580, %v1219
      %v3340 = vsel %vm3300, %v581, %v1221
      %v3342 = vsel %vm3300, %v582, %v1223
      %v3344 = vsel %vm3300, %v583, %v1225
      %v3346 = vsel %vm3300, %v584, %v1227
      %v3348 = vsel %vm3300, %v585, %v1229
      %v3350 = vsel %vm3300, %v586, %v1231
      %v3352 = vsel %vm3300, %v587, %v1233
      %v3354 = vsel %vm3300, %v588, %v1235
      %v3356 = vsel %vm3300, %v589, %v1237
      %v3358 = vsel %vm3300, %v590, %v1239
      %v3360 = vsel %vm3300, %v591, %v1241
      %v3362 = vsel %vm3300, %v592, %v1243
      %v3364 = vsel %vm3300, %v593, %v1245
      %v3366 = vsel %vm3300, %v594, %v1247
      %v3368 = vsel %vm3300, %v595, %v1249
      %v3370 = vsel %vm3300, %v596, %v1251
      %v3372 = vsel %vm3300, %v597, %v1253
      %v3374 = vsel %vm3300, %v598, %v1255
      %v3376 = vsel %vm3300, %v599, %v1257
      %v3378 = vsel %vm3300, %v600, %v1259
      %v3380 = vsel %vm3300, %v601, %v1261
      %v3382 = vsel %vm3300, %v602, %v1263
      %v3384 = vsel %vm3300, %v603, %v1265
      %v3386 = vsel %vm3300, %v604, %v1267
      %v3388 = vsel %vm3300, %v605, %v1269
      %v3390 = vsel %vm3300, %v606, %v1271
      %v3392 = vsel %vm3300, %v607, %v1273
      %v3394 = vsel %vm3300, %v608, %v1275
      %v3396 = vsel %vm3300, %v609, %v1277
      %v3398 = vsel %vm3300, %v610, %v1279
      %v3400 = vsel %vm3300, %v611, %v1281
      %v3402 = vsel %vm3300, %v612, %v1283
      %v3404 = vsel %vm3300, %v613, %v1285
      %v3406 = vsel %vm3300, %v614, %v1287
      %v3408 = vsel %vm3300, %v615, %v1289
      %v3410 = vsel %vm3300, %v616, %v1291
      %v3412 = vsel %vm3300, %v617, %v1293
      %v3414 = vsel %vm3300, %v618, %v1295
      %v3416 = vsel %vm3300, %v619, %v1297
      %v3418 = vsel %vm3300, %v620, %v1299
      %v3420 = vsel %vm3300, %v621, %v1301
      %v3422 = vsel %vm3300, %v622, %v1303
      %v3424 = vsel %vm3300, %v623, %v1305
      %v3426 = vsel %vm3300, %v624, %v1307
      %v3428 = vsel %vm3300, %v625, %v1309
      %v3430 = vsel %vm3300, %v626, %v1311
      %v3432 = vsel %vm3300, %v627, %v1313
      %v3434 = vsel %vm3300, %v628, %v1315
      %v3436 = vsel %vm3300, %v629, %v1317
      %vm3437 = vcmask 130048
      %v3439 = vsel %vm3437, %v3302, %v1457
      %v3441 = vsel %vm3437, %v3304, %v1459
      %v3443 = vsel %vm3437, %v3306, %v1461
      %v3445 = vsel %vm3437, %v3308, %v1463
      %v3447 = vsel %vm3437, %v3310, %v1465
      %v3449 = vsel %vm3437, %v3312, %v1467
      %v3451 = vsel %vm3437, %v3314, %v1469
      %v3453 = vsel %vm3437, %v3316, %v1471
      %v3455 = vsel %vm3437, %v3318, %v1473
      %v3457 = vsel %vm3437, %v3320, %v1475
      %v3459 = vsel %vm3437, %v3322, %v1477
      %v3461 = vsel %vm3437, %v3324, %v1479
      %v3463 = vsel %vm3437, %v3326, %v1481
      %v3465 = vsel %vm3437, %v3328, %v1483
      %v3467 = vsel %vm3437, %v3330, %v1485
      %v3469 = vsel %vm3437, %v3332, %v1487
      %v3471 = vsel %vm3437, %v3334, %v1489
      %v3473 = vsel %vm3437, %v3336, %v1491
      %v3475 = vsel %vm3437, %v3338, %v1493
      %v3477 = vsel %vm3437, %v3340, %v1495
      %v3479 = vsel %vm3437, %v3342, %v1497
      %v3481 = vsel %vm3437, %v3344, %v1499
      %v3483 = vsel %vm3437, %v3346, %v1501
      %v3485 = vsel %vm3437, %v3348, %v1503
      %v3487 = vsel %vm3437, %v3350, %v1505
      %v3489 = vsel %vm3437, %v3352, %v1507
      %v3491 = vsel %vm3437, %v3354, %v1509
      %v3493 = vsel %vm3437, %v3356, %v1511
      %v3495 = vsel %vm3437, %v3358, %v1513
      %v3497 = vsel %vm3437, %v3360, %v1515
      %v3499 = vsel %vm3437, %v3362, %v1517
      %v3501 = vsel %vm3437, %v3364, %v1519
      %v3503 = vsel %vm3437, %v3366, %v1521
      %v3505 = vsel %vm3437, %v3368, %v1523
      %v3507 = vsel %vm3437, %v3370, %v1525
      %v3509 = vsel %vm3437, %v3372, %v1527
      %v3511 = vsel %vm3437, %v3374, %v1529
      %v3513 = vsel %vm3437, %v3376, %v1531
      %v3515 = vsel %vm3437, %v3378, %v1533
      %v3517 = vsel %vm3437, %v3380, %v1535
      %v3519 = vsel %vm3437, %v3382, %v1537
      %v3521 = vsel %vm3437, %v3384, %v1539
      %v3523 = vsel %vm3437, %v3386, %v1541
      %v3525 = vsel %vm3437, %v3388, %v1543
      %v3527 = vsel %vm3437, %v3390, %v1545
      %v3529 = vsel %vm3437, %v3392, %v1547
      %v3531 = vsel %vm3437, %v3394, %v1549
      %v3533 = vsel %vm3437, %v3396, %v1551
      %v3535 = vsel %vm3437, %v3398, %v1553
      %v3537 = vsel %vm3437, %v3400, %v1555
      %v3539 = vsel %vm3437, %v3402, %v1557
      %v3541 = vsel %vm3437, %v3404, %v1559
      %v3543 = vsel %vm3437, %v3406, %v1561
      %v3545 = vsel %vm3437, %v3408, %v1563
      %v3547 = vsel %vm3437, %v3410, %v1565
      %v3549 = vsel %vm3437, %v3412, %v1567
      %v3551 = vsel %vm3437, %v3414, %v1569
      %v3553 = vsel %vm3437, %v3416, %v1571
      %v3555 = vsel %vm3437, %v3418, %v1573
      %v3557 = vsel %vm3437, %v3420, %v1575
      %v3559 = vsel %vm3437, %v3422, %v1577
      %v3561 = vsel %vm3437, %v3424, %v1579
      %v3563 = vsel %vm3437, %v3426, %v1581
      %v3565 = vsel %vm3437, %v3428, %v1583
      %v3567 = vsel %vm3437, %v3430, %v1585
      %v3569 = vsel %vm3437, %v3432, %v1587
      %v3571 = vsel %vm3437, %v3434, %v1589
      %v3573 = vsel %vm3437, %v3436, %v1591
      %vm3574 = vcmask 195584
      %v3576 = vsel %vm3574, %v3439, %v1610
      %v3578 = vsel %vm3574, %v3441, %v1612
      %v3580 = vsel %vm3574, %v3443, %v1614
      %v3582 = vsel %vm3574, %v3445, %v1616
      %v3584 = vsel %vm3574, %v3447, %v1618
      %v3586 = vsel %vm3574, %v3449, %v1620
      %v3588 = vsel %vm3574, %v3451, %v1622
      %v3590 = vsel %vm3574, %v3453, %v1624
      %v3592 = vsel %vm3574, %v3455, %v1626
      %v3594 = vsel %vm3574, %v3457, %v1628
      %v3596 = vsel %vm3574, %v3459, %v1630
      %v3598 = vsel %vm3574, %v3461, %v1632
      %v3600 = vsel %vm3574, %v3463, %v1634
      %v3602 = vsel %vm3574, %v3465, %v1636
      %v3604 = vsel %vm3574, %v3467, %v1638
      %v3606 = vsel %vm3574, %v3469, %v1640
      %v3608 = vsel %vm3574, %v3471, %v1642
      %v3610 = vsel %vm3574, %v3473, %v1644
      %v3612 = vsel %vm3574, %v3475, %v1646
      %v3614 = vsel %vm3574, %v3477, %v1648
      %v3616 = vsel %vm3574, %v3479, %v1650
      %v3618 = vsel %vm3574, %v3481, %v1652
      %v3620 = vsel %vm3574, %v3483, %v1654
      %v3622 = vsel %vm3574, %v3485, %v1656
      %v3624 = vsel %vm3574, %v3487, %v1658
      %v3626 = vsel %vm3574, %v3489, %v1660
      %v3628 = vsel %vm3574, %v3491, %v1662
      %v3630 = vsel %vm3574, %v3493, %v1664
      %v3632 = vsel %vm3574, %v3495, %v1666
      %v3634 = vsel %vm3574, %v3497, %v1668
      %v3636 = vsel %vm3574, %v3499, %v1670
      %v3638 = vsel %vm3574, %v3501, %v1672
      %v3640 = vsel %vm3574, %v3503, %v1674
      %v3642 = vsel %vm3574, %v3505, %v1676
      %v3644 = vsel %vm3574, %v3507, %v1678
      %v3646 = vsel %vm3574, %v3509, %v1680
      %v3648 = vsel %vm3574, %v3511, %v1682
      %v3650 = vsel %vm3574, %v3513, %v1684
      %v3652 = vsel %vm3574, %v3515, %v1686
      %v3654 = vsel %vm3574, %v3517, %v1688
      %v3656 = vsel %vm3574, %v3519, %v1690
      %v3658 = vsel %vm3574, %v3521, %v1692
      %v3660 = vsel %vm3574, %v3523, %v1694
      %v3662 = vsel %vm3574, %v3525, %v1696
      %v3664 = vsel %vm3574, %v3527, %v1698
      %v3666 = vsel %vm3574, %v3529, %v1700
      %v3668 = vsel %vm3574, %v3531, %v1702
      %v3670 = vsel %vm3574, %v3533, %v1704
      %v3672 = vsel %vm3574, %v3535, %v1706
      %v3674 = vsel %vm3574, %v3537, %v1708
      %v3676 = vsel %vm3574, %v3539, %v1710
      %v3678 = vsel %vm3574, %v3541, %v1712
      %v3680 = vsel %vm3574, %v3543, %v1714
      %v3682 = vsel %vm3574, %v3545, %v1716
      %v3684 = vsel %vm3574, %v3547, %v1718
      %v3686 = vsel %vm3574, %v3549, %v1720
      %v3688 = vsel %vm3574, %v3551, %v1722
      %v3690 = vsel %vm3574, %v3553, %v1724
      %v3692 = vsel %vm3574, %v3555, %v1726
      %v3694 = vsel %vm3574, %v3557, %v1728
      %v3696 = vsel %vm3574, %v3559, %v1730
      %v3698 = vsel %vm3574, %v3561, %v1732
      %v3700 = vsel %vm3574, %v3563, %v1734
      %v3702 = vsel %vm3574, %v3565, %v1736
      %v3704 = vsel %vm3574, %v3567, %v1738
      %v3706 = vsel %vm3574, %v3569, %v1740
      %v3708 = vsel %vm3574, %v3571, %v1742
      %v3710 = vsel %vm3574, %v3573, %v1744
      %vm3711 = vcmask 261120
      %v3713 = vsel %vm3711, %v3576, %v2037
      %v3715 = vsel %vm3711, %v3578, %v2039
      %v3717 = vsel %vm3711, %v3580, %v2041
      %v3719 = vsel %vm3711, %v3582, %v2043
      %v3721 = vsel %vm3711, %v3584, %v2045
      %v3723 = vsel %vm3711, %v3586, %v2047
      %v3725 = vsel %vm3711, %v3588, %v2049
      %v3727 = vsel %vm3711, %v3590, %v2051
      %v3729 = vsel %vm3711, %v3592, %v2053
      %v3731 = vsel %vm3711, %v3594, %v2055
      %v3733 = vsel %vm3711, %v3596, %v2057
      %v3735 = vsel %vm3711, %v3598, %v2059
      %v3737 = vsel %vm3711, %v3600, %v2061
      %v3739 = vsel %vm3711, %v3602, %v2063
      %v3741 = vsel %vm3711, %v3604, %v2065
      %v3743 = vsel %vm3711, %v3606, %v2067
      %v3745 = vsel %vm3711, %v3608, %v2069
      %v3747 = vsel %vm3711, %v3610, %v2071
      %v3749 = vsel %vm3711, %v3612, %v2073
      %v3751 = vsel %vm3711, %v3614, %v2075
      %v3753 = vsel %vm3711, %v3616, %v2077
      %v3755 = vsel %vm3711, %v3618, %v2079
      %v3757 = vsel %vm3711, %v3620, %v2081
      %v3759 = vsel %vm3711, %v3622, %v2083
      %v3761 = vsel %vm3711, %v3624, %v2085
      %v3763 = vsel %vm3711, %v3626, %v2087
      %v3765 = vsel %vm3711, %v3628, %v2089
      %v3767 = vsel %vm3711, %v3630, %v2091
      %v3769 = vsel %vm3711, %v3632, %v2093
      %v3771 = vsel %vm3711, %v3634, %v2095
      %v3773 = vsel %vm3711, %v3636, %v2097
      %v3775 = vsel %vm3711, %v3638, %v2099
      %v3777 = vsel %vm3711, %v3640, %v2101
      %v3779 = vsel %vm3711, %v3642, %v2103
      %v3781 = vsel %vm3711, %v3644, %v2105
      %v3783 = vsel %vm3711, %v3646, %v2107
      %v3785 = vsel %vm3711, %v3648, %v2109
      %v3787 = vsel %vm3711, %v3650, %v2111
      %v3789 = vsel %vm3711, %v3652, %v2113
      %v3791 = vsel %vm3711, %v3654, %v2115
      %v3793 = vsel %vm3711, %v3656, %v2117
      %v3795 = vsel %vm3711, %v3658, %v2119
      %v3797 = vsel %vm3711, %v3660, %v2121
      %v3799 = vsel %vm3711, %v3662, %v2123
      %v3801 = vsel %vm3711, %v3664, %v2125
      %v3803 = vsel %vm3711, %v3666, %v2127
      %v3805 = vsel %vm3711, %v3668, %v2129
      %v3807 = vsel %vm3711, %v3670, %v2131
      %v3809 = vsel %vm3711, %v3672, %v2133
      %v3811 = vsel %vm3711, %v3674, %v2135
      %v3813 = vsel %vm3711, %v3676, %v2137
      %v3815 = vsel %vm3711, %v3678, %v2139
      %v3817 = vsel %vm3711, %v3680, %v2141
      %v3819 = vsel %vm3711, %v3682, %v2143
      %v3821 = vsel %vm3711, %v3684, %v2145
      %v3823 = vsel %vm3711, %v3686, %v2147
      %v3825 = vsel %vm3711, %v3688, %v2149
      %v3827 = vsel %vm3711, %v3690, %v2151
      %v3829 = vsel %vm3711, %v3692, %v2153
      %v3831 = vsel %vm3711, %v3694, %v2155
      %v3833 = vsel %vm3711, %v3696, %v2157
      %v3835 = vsel %vm3711, %v3698, %v2159
      %v3837 = vsel %vm3711, %v3700, %v2161
      %v3839 = vsel %vm3711, %v3702, %v2163
      %v3841 = vsel %vm3711, %v3704, %v2165
      %v3843 = vsel %vm3711, %v3706, %v2167
      %v3845 = vsel %vm3711, %v3708, %v2169
      %v3847 = vsel %vm3711, %v3710, %v2171
      %vm3848 = vcmask 326656
      %v3850 = vsel %vm3848, %v3713, %v2311
      %v3852 = vsel %vm3848, %v3715, %v2313
      %v3854 = vsel %vm3848, %v3717, %v2315
      %v3856 = vsel %vm3848, %v3719, %v2317
      %v3858 = vsel %vm3848, %v3721, %v2319
      %v3860 = vsel %vm3848, %v3723, %v2321
      %v3862 = vsel %vm3848, %v3725, %v2323
      %v3864 = vsel %vm3848, %v3727, %v2325
      %v3866 = vsel %vm3848, %v3729, %v2327
      %v3868 = vsel %vm3848, %v3731, %v2329
      %v3870 = vsel %vm3848, %v3733, %v2331
      %v3872 = vsel %vm3848, %v3735, %v2333
      %v3874 = vsel %vm3848, %v3737, %v2335
      %v3876 = vsel %vm3848, %v3739, %v2337
      %v3878 = vsel %vm3848, %v3741, %v2339
      %v3880 = vsel %vm3848, %v3743, %v2341
      %v3882 = vsel %vm3848, %v3745, %v2343
      %v3884 = vsel %vm3848, %v3747, %v2345
      %v3886 = vsel %vm3848, %v3749, %v2347
      %v3888 = vsel %vm3848, %v3751, %v2349
      %v3890 = vsel %vm3848, %v3753, %v2351
      %v3892 = vsel %vm3848, %v3755, %v2353
      %v3894 = vsel %vm3848, %v3757, %v2355
      %v3896 = vsel %vm3848, %v3759, %v2357
      %v3898 = vsel %vm3848, %v3761, %v2359
      %v3900 = vsel %vm3848, %v3763, %v2361
      %v3902 = vsel %vm3848, %v3765, %v2363
      %v3904 = vsel %vm3848, %v3767, %v2365
      %v3906 = vsel %vm3848, %v3769, %v2367
      %v3908 = vsel %vm3848, %v3771, %v2369
      %v3910 = vsel %vm3848, %v3773, %v2371
      %v3912 = vsel %vm3848, %v3775, %v2373
      %v3914 = vsel %vm3848, %v3777, %v2375
      %v3916 = vsel %vm3848, %v3779, %v2377
      %v3918 = vsel %vm3848, %v3781, %v2379
      %v3920 = vsel %vm3848, %v3783, %v2381
      %v3922 = vsel %vm3848, %v3785, %v2383
      %v3924 = vsel %vm3848, %v3787, %v2385
      %v3926 = vsel %vm3848, %v3789, %v2387
      %v3928 = vsel %vm3848, %v3791, %v2389
      %v3930 = vsel %vm3848, %v3793, %v2391
      %v3932 = vsel %vm3848, %v3795, %v2393
      %v3934 = vsel %vm3848, %v3797, %v2395
      %v3936 = vsel %vm3848, %v3799, %v2397
      %v3938 = vsel %vm3848, %v3801, %v2399
      %v3940 = vsel %vm3848, %v3803, %v2401
      %v3942 = vsel %vm3848, %v3805, %v2403
      %v3944 = vsel %vm3848, %v3807, %v2405
      %v3946 = vsel %vm3848, %v3809, %v2407
      %v3948 = vsel %vm3848, %v3811, %v2409
      %v3950 = vsel %vm3848, %v3813, %v2411
      %v3952 = vsel %vm3848, %v3815, %v2413
      %v3954 = vsel %vm3848, %v3817, %v2415
      %v3956 = vsel %vm3848, %v3819, %v2417
      %v3958 = vsel %vm3848, %v3821, %v2419
      %v3960 = vsel %vm3848, %v3823, %v2421
      %v3962 = vsel %vm3848, %v3825, %v2423
      %v3964 = vsel %vm3848, %v3827, %v2425
      %v3966 = vsel %vm3848, %v3829, %v2427
      %v3968 = vsel %vm3848, %v3831, %v2429
      %v3970 = vsel %vm3848, %v3833, %v2431
      %v3972 = vsel %vm3848, %v3835, %v2433
      %v3974 = vsel %vm3848, %v3837, %v2435
      %v3976 = vsel %vm3848, %v3839, %v2437
      %v3978 = vsel %vm3848, %v3841, %v2439
      %v3980 = vsel %vm3848, %v3843, %v2441
      %v3982 = vsel %vm3848, %v3845, %v2443
      %v3984 = vsel %vm3848, %v3847, %v2445
      %vm3985 = vcmask 392192
      %v3987 = vsel %vm3985, %v3850, %v2464
      %v3989 = vsel %vm3985, %v3852, %v2466
      %v3991 = vsel %vm3985, %v3854, %v2468
      %v3993 = vsel %vm3985, %v3856, %v2470
      %v3995 = vsel %vm3985, %v3858, %v2472
      %v3997 = vsel %vm3985, %v3860, %v2474
      %v3999 = vsel %vm3985, %v3862, %v2476
      %v4001 = vsel %vm3985, %v3864, %v2478
      %v4003 = vsel %vm3985, %v3866, %v2480
      %v4005 = vsel %vm3985, %v3868, %v2482
      %v4007 = vsel %vm3985, %v3870, %v2484
      %v4009 = vsel %vm3985, %v3872, %v2486
      %v4011 = vsel %vm3985, %v3874, %v2488
      %v4013 = vsel %vm3985, %v3876, %v2490
      %v4015 = vsel %vm3985, %v3878, %v2492
      %v4017 = vsel %vm3985, %v3880, %v2494
      %v4019 = vsel %vm3985, %v3882, %v2496
      %v4021 = vsel %vm3985, %v3884, %v2498
      %v4023 = vsel %vm3985, %v3886, %v2500
      %v4025 = vsel %vm3985, %v3888, %v2502
      %v4027 = vsel %vm3985, %v3890, %v2504
      %v4029 = vsel %vm3985, %v3892, %v2506
      %v4031 = vsel %vm3985, %v3894, %v2508
      %v4033 = vsel %vm3985, %v3896, %v2510
      %v4035 = vsel %vm3985, %v3898, %v2512
      %v4037 = vsel %vm3985, %v3900, %v2514
      %v4039 = vsel %vm3985, %v3902, %v2516
      %v4041 = vsel %vm3985, %v3904, %v2518
      %v4043 = vsel %vm3985, %v3906, %v2520
      %v4045 = vsel %vm3985, %v3908, %v2522
      %v4047 = vsel %vm3985, %v3910, %v2524
      %v4049 = vsel %vm3985, %v3912, %v2526
      %v4051 = vsel %vm3985, %v3914, %v2528
      %v4053 = vsel %vm3985, %v3916, %v2530
      %v4055 = vsel %vm3985, %v3918, %v2532
      %v4057 = vsel %vm3985, %v3920, %v2534
      %v4059 = vsel %vm3985, %v3922, %v2536
      %v4061 = vsel %vm3985, %v3924, %v2538
      %v4063 = vsel %vm3985, %v3926, %v2540
      %v4065 = vsel %vm3985, %v3928, %v2542
      %v4067 = vsel %vm3985, %v3930, %v2544
      %v4069 = vsel %vm3985, %v3932, %v2546
      %v4071 = vsel %vm3985, %v3934, %v2548
      %v4073 = vsel %vm3985, %v3936, %v2550
      %v4075 = vsel %vm3985, %v3938, %v2552
      %v4077 = vsel %vm3985, %v3940, %v2554
      %v4079 = vsel %vm3985, %v3942, %v2556
      %v4081 = vsel %vm3985, %v3944, %v2558
      %v4083 = vsel %vm3985, %v3946, %v2560
      %v4085 = vsel %vm3985, %v3948, %v2562
      %v4087 = vsel %vm3985, %v3950, %v2564
      %v4089 = vsel %vm3985, %v3952, %v2566
      %v4091 = vsel %vm3985, %v3954, %v2568
      %v4093 = vsel %vm3985, %v3956, %v2570
      %v4095 = vsel %vm3985, %v3958, %v2572
      %v4097 = vsel %vm3985, %v3960, %v2574
      %v4099 = vsel %vm3985, %v3962, %v2576
      %v4101 = vsel %vm3985, %v3964, %v2578
      %v4103 = vsel %vm3985, %v3966, %v2580
      %v4105 = vsel %vm3985, %v3968, %v2582
      %v4107 = vsel %vm3985, %v3970, %v2584
      %v4109 = vsel %vm3985, %v3972, %v2586
      %v4111 = vsel %vm3985, %v3974, %v2588
      %v4113 = vsel %vm3985, %v3976, %v2590
      %v4115 = vsel %vm3985, %v3978, %v2592
      %v4117 = vsel %vm3985, %v3980, %v2594
      %v4119 = vsel %vm3985, %v3982, %v2596
      %v4121 = vsel %vm3985, %v3984, %v2598
      %vm4122 = vcmask 457728
      %v4124 = vsel %vm4122, %v3987, %v2891
      %v4126 = vsel %vm4122, %v3989, %v2893
      %v4128 = vsel %vm4122, %v3991, %v2895
      %v4130 = vsel %vm4122, %v3993, %v2897
      %v4132 = vsel %vm4122, %v3995, %v2899
      %v4134 = vsel %vm4122, %v3997, %v2901
      %v4136 = vsel %vm4122, %v3999, %v2903
      %v4138 = vsel %vm4122, %v4001, %v2905
      %v4140 = vsel %vm4122, %v4003, %v2907
      %v4142 = vsel %vm4122, %v4005, %v2909
      %v4144 = vsel %vm4122, %v4007, %v2911
      %v4146 = vsel %vm4122, %v4009, %v2913
      %v4148 = vsel %vm4122, %v4011, %v2915
      %v4150 = vsel %vm4122, %v4013, %v2917
      %v4152 = vsel %vm4122, %v4015, %v2919
      %v4154 = vsel %vm4122, %v4017, %v2921
      %v4156 = vsel %vm4122, %v4019, %v2923
      %v4158 = vsel %vm4122, %v4021, %v2925
      %v4160 = vsel %vm4122, %v4023, %v2927
      %v4162 = vsel %vm4122, %v4025, %v2929
      %v4164 = vsel %vm4122, %v4027, %v2931
      %v4166 = vsel %vm4122, %v4029, %v2933
      %v4168 = vsel %vm4122, %v4031, %v2935
      %v4170 = vsel %vm4122, %v4033, %v2937
      %v4172 = vsel %vm4122, %v4035, %v2939
      %v4174 = vsel %vm4122, %v4037, %v2941
      %v4176 = vsel %vm4122, %v4039, %v2943
      %v4178 = vsel %vm4122, %v4041, %v2945
      %v4180 = vsel %vm4122, %v4043, %v2947
      %v4182 = vsel %vm4122, %v4045, %v2949
      %v4184 = vsel %vm4122, %v4047, %v2951
      %v4186 = vsel %vm4122, %v4049, %v2953
      %v4188 = vsel %vm4122, %v4051, %v2955
      %v4190 = vsel %vm4122, %v4053, %v2957
      %v4192 = vsel %vm4122, %v4055, %v2959
      %v4194 = vsel %vm4122, %v4057, %v2961
      %v4196 = vsel %vm4122, %v4059, %v2963
      %v4198 = vsel %vm4122, %v4061, %v2965
      %v4200 = vsel %vm4122, %v4063, %v2967
      %v4202 = vsel %vm4122, %v4065, %v2969
      %v4204 = vsel %vm4122, %v4067, %v2971
      %v4206 = vsel %vm4122, %v4069, %v2973
      %v4208 = vsel %vm4122, %v4071, %v2975
      %v4210 = vsel %vm4122, %v4073, %v2977
      %v4212 = vsel %vm4122, %v4075, %v2979
      %v4214 = vsel %vm4122, %v4077, %v2981
      %v4216 = vsel %vm4122, %v4079, %v2983
      %v4218 = vsel %vm4122, %v4081, %v2985
      %v4220 = vsel %vm4122, %v4083, %v2987
      %v4222 = vsel %vm4122, %v4085, %v2989
      %v4224 = vsel %vm4122, %v4087, %v2991
      %v4226 = vsel %vm4122, %v4089, %v2993
      %v4228 = vsel %vm4122, %v4091, %v2995
      %v4230 = vsel %vm4122, %v4093, %v2997
      %v4232 = vsel %vm4122, %v4095, %v2999
      %v4234 = vsel %vm4122, %v4097, %v3001
      %v4236 = vsel %vm4122, %v4099, %v3003
      %v4238 = vsel %vm4122, %v4101, %v3005
      %v4240 = vsel %vm4122, %v4103, %v3007
      %v4242 = vsel %vm4122, %v4105, %v3009
      %v4244 = vsel %vm4122, %v4107, %v3011
      %v4246 = vsel %vm4122, %v4109, %v3013
      %v4248 = vsel %vm4122, %v4111, %v3015
      %v4250 = vsel %vm4122, %v4113, %v3017
      %v4252 = vsel %vm4122, %v4115, %v3019
      %v4254 = vsel %vm4122, %v4117, %v3021
      %v4256 = vsel %vm4122, %v4119, %v3023
      %v4258 = vsel %vm4122, %v4121, %v3025
      %vm4259 = vcmask 523264
      %v4261 = vsel %vm4259, %v4124, %v3165
      %v4263 = vsel %vm4259, %v4126, %v3167
      %v4265 = vsel %vm4259, %v4128, %v3169
      %v4267 = vsel %vm4259, %v4130, %v3171
      %v4269 = vsel %vm4259, %v4132, %v3173
      %v4271 = vsel %vm4259, %v4134, %v3175
      %v4273 = vsel %vm4259, %v4136, %v3177
      %v4275 = vsel %vm4259, %v4138, %v3179
      %v4277 = vsel %vm4259, %v4140, %v3181
      %v4279 = vsel %vm4259, %v4142, %v3183
      %v4281 = vsel %vm4259, %v4144, %v3185
      %v4283 = vsel %vm4259, %v4146, %v3187
      %v4285 = vsel %vm4259, %v4148, %v3189
      %v4287 = vsel %vm4259, %v4150, %v3191
      %v4289 = vsel %vm4259, %v4152, %v3193
      %v4291 = vsel %vm4259, %v4154, %v3195
      %v4293 = vsel %vm4259, %v4156, %v3197
      %v4295 = vsel %vm4259, %v4158, %v3199
      %v4297 = vsel %vm4259, %v4160, %v3201
      %v4299 = vsel %vm4259, %v4162, %v3203
      %v4301 = vsel %vm4259, %v4164, %v3205
      %v4303 = vsel %vm4259, %v4166, %v3207
      %v4305 = vsel %vm4259, %v4168, %v3209
      %v4307 = vsel %vm4259, %v4170, %v3211
      %v4309 = vsel %vm4259, %v4172, %v3213
      %v4311 = vsel %vm4259, %v4174, %v3215
      %v4313 = vsel %vm4259, %v4176, %v3217
      %v4315 = vsel %vm4259, %v4178, %v3219
      %v4317 = vsel %vm4259, %v4180, %v3221
      %v4319 = vsel %vm4259, %v4182, %v3223
      %v4321 = vsel %vm4259, %v4184, %v3225
      %v4323 = vsel %vm4259, %v4186, %v3227
      %v4325 = vsel %vm4259, %v4188, %v3229
      %v4327 = vsel %vm4259, %v4190, %v3231
      %v4329 = vsel %vm4259, %v4192, %v3233
      %v4331 = vsel %vm4259, %v4194, %v3235
      %v4333 = vsel %vm4259, %v4196, %v3237
      %v4335 = vsel %vm4259, %v4198, %v3239
      %v4337 = vsel %vm4259, %v4200, %v3241
      %v4339 = vsel %vm4259, %v4202, %v3243
      %v4341 = vsel %vm4259, %v4204, %v3245
      %v4343 = vsel %vm4259, %v4206, %v3247
      %v4345 = vsel %vm4259, %v4208, %v3249
      %v4347 = vsel %vm4259, %v4210, %v3251
      %v4349 = vsel %vm4259, %v4212, %v3253
      %v4351 = vsel %vm4259, %v4214, %v3255
      %v4353 = vsel %vm4259, %v4216, %v3257
      %v4355 = vsel %vm4259, %v4218, %v3259
      %v4357 = vsel %vm4259, %v4220, %v3261
      %v4359 = vsel %vm4259, %v4222, %v3263
      %v4361 = vsel %vm4259, %v4224, %v3265
      %v4363 = vsel %vm4259, %v4226, %v3267
      %v4365 = vsel %vm4259, %v4228, %v3269
      %v4367 = vsel %vm4259, %v4230, %v3271
      %v4369 = vsel %vm4259, %v4232, %v3273
      %v4371 = vsel %vm4259, %v4234, %v3275
      %v4373 = vsel %vm4259, %v4236, %v3277
      %v4375 = vsel %vm4259, %v4238, %v3279
      %v4377 = vsel %vm4259, %v4240, %v3281
      %v4379 = vsel %vm4259, %v4242, %v3283
      %v4381 = vsel %vm4259, %v4244, %v3285
      %v4383 = vsel %vm4259, %v4246, %v3287
      %v4385 = vsel %vm4259, %v4248, %v3289
      %v4387 = vsel %vm4259, %v4250, %v3291
      %v4389 = vsel %vm4259, %v4252, %v3293
      %v4391 = vsel %vm4259, %v4254, %v3295
      %v4393 = vsel %vm4259, %v4256, %v3297
      %v4395 = vsel %vm4259, %v4258, %v3299
      %v4396 = vld [vmem:[%s1] sm:$0xf]
      %v4397 = vld [vmem:[%s1 + $0x4] sm:$0xf]
      %v4398 = vld [vmem:[%s1 + $0x8] sm:$0xf]
      %v4399 = vld [vmem:[%s1 + $0xc] sm:$0xf]
      %v4400 = vld [vmem:[%s1 + $0x10] sm:$0xf]
      %v4401 = vld [vmem:[%s1 + $0x14] sm:$0xf]
      %v4402 = vld [vmem:[%s1 + $0x18] sm:$0xf]
      %v4403 = vld [vmem:[%s1 + $0x1c] sm:$0xf]
      %v4404 = vld [vmem:[%s1 + $0x20] sm:$0xf]
      %v4414 = vunpack.c.l.b16 %v4396
      %v4415 = vunpack.c.l.b16 %v4397
      %v4416 = vunpack.c.l.b16 %v4398
      %v4417 = vunpack.c.l.b16 %v4399
      %v4418 = vunpack.c.l.b16 %v4400
      %v4419 = vunpack.c.l.b16 %v4401
      %v4420 = vunpack.c.l.b16 %v4402
      %v4421 = vunpack.c.l.b16 %v4403
      %v4422 = vunpack.c.l.b16 %v4404
      %v4423 = vpack.c.b16 %v4415, %v4414
      %v4424 = vpack.c.b16 %v4417, %v4416
      %v4425 = vpack.c.b16 %v4419, %v4418
      %v4426 = vpack.c.b16 %v4421, %v4420
      %v4427 = vpack.c.b16 %v4422, %v4422
      %vm4432 = vcmask 588800
      %v4433 = vsel %vm4432, %v4261, 0
      %v4435 = vsel %vm4432, %v4263, 0
      %v4437 = vsel %vm4432, %v4265, 0
      %v4439 = vsel %vm4432, %v4267, 0
      %v4441 = vsel %vm4432, %v4269, 0
      %v4443 = vsel %vm4432, %v4271, 0
      %v4445 = vsel %vm4432, %v4273, 0
      %v4447 = vsel %vm4432, %v4275, 0
      %v4449 = vsel %vm4432, %v4277, 0
      %v4451 = vsel %vm4432, %v4279, 0
      %v4453 = vsel %vm4432, %v4281, 0
      %v4455 = vsel %vm4432, %v4283, 0
      %v4457 = vsel %vm4432, %v4285, 0
      %v4459 = vsel %vm4432, %v4287, 0
      %v4461 = vsel %vm4432, %v4289, 0
      %v4463 = vsel %vm4432, %v4291, 0
      %v4465 = vsel %vm4432, %v4293, 0
      %v4467 = vsel %vm4432, %v4295, 0
      %v4469 = vsel %vm4432, %v4297, 0
      %v4471 = vsel %vm4432, %v4299, 0
      %v4473 = vsel %vm4432, %v4301, 0
      %v4475 = vsel %vm4432, %v4303, 0
      %v4477 = vsel %vm4432, %v4305, 0
      %v4479 = vsel %vm4432, %v4307, 0
      %v4481 = vsel %vm4432, %v4309, 0
      %v4483 = vsel %vm4432, %v4311, 0
      %v4485 = vsel %vm4432, %v4313, 0
      %v4487 = vsel %vm4432, %v4315, 0
      %v4489 = vsel %vm4432, %v4317, 0
      %v4491 = vsel %vm4432, %v4319, 0
      %v4493 = vsel %vm4432, %v4321, 0
      %v4495 = vsel %vm4432, %v4323, 0
      %v4497 = vsel %vm4432, %v4325, 0
      %v4499 = vsel %vm4432, %v4327, 0
      %v4501 = vsel %vm4432, %v4329, 0
      %v4503 = vsel %vm4432, %v4331, 0
      %v4505 = vsel %vm4432, %v4333, 0
      %v4507 = vsel %vm4432, %v4335, 0
      %v4509 = vsel %vm4432, %v4337, 0
      %v4511 = vsel %vm4432, %v4339, 0
      %v4513 = vsel %vm4432, %v4341, 0
      %v4515 = vsel %vm4432, %v4343, 0
      %v4517 = vsel %vm4432, %v4345, 0
      %v4519 = vsel %vm4432, %v4347, 0
      %v4521 = vsel %vm4432, %v4349, 0
      %v4523 = vsel %vm4432, %v4351, 0
      %v4525 = vsel %vm4432, %v4353, 0
      %v4527 = vsel %vm4432, %v4355, 0
      %v4529 = vsel %vm4432, %v4357, 0
      %v4531 = vsel %vm4432, %v4359, 0
      %v4533 = vsel %vm4432, %v4361, 0
      %v4535 = vsel %vm4432, %v4363, 0
      %v4537 = vsel %vm4432, %v4365, 0
      %v4539 = vsel %vm4432, %v4367, 0
      %v4541 = vsel %vm4432, %v4369, 0
      %v4543 = vsel %vm4432, %v4371, 0
      %v4545 = vsel %vm4432, %v4373, 0
      %v4547 = vsel %vm4432, %v4375, 0
      %v4549 = vsel %vm4432, %v4377, 0
      %v4551 = vsel %vm4432, %v4379, 0
      %v4553 = vsel %vm4432, %v4381, 0
      %v4555 = vsel %vm4432, %v4383, 0
      %v4557 = vsel %vm4432, %v4385, 0
      %v4559 = vsel %vm4432, %v4387, 0
      %v4561 = vsel %vm4432, %v4389, 0
      %v4563 = vsel %vm4432, %v4391, 0
      %v4565 = vsel %vm4432, %v4393, 0
      %v4567 = vsel %vm4432, %v4395, 0
      %vm4569 = vcmask 1043456
      %v4571 = vsel %vm4569, %v4427, 0
      %4573 = vmatprep.subr.bf16.mxu0 0
      %4574 = vmatpush1.bf16.msra.mxu0 %v4423
      %4575 = vmatprep.subr.bf16.mxu0 0
      %4576 = vmatpush1.bf16.msra.mxu0 %v4424
      %4577 = vmatprep.subr.bf16.mxu0 0
      %4578 = vmatpush1.bf16.msra.mxu0 %v4425
      %4579 = vmatprep.subr.bf16.mxu0 0
      %4580 = vmatpush1.bf16.msra.mxu0 %v4426
      %4581 = vmatprep.subr.bf16.mxu0 0
      %4582 = vmatpush1.bf16.msra.mxu0 %v4571
      %4583 = vmatprep.subr.bf16.mxu0 0
      %4584 = vmatpush1.bf16.msra.mxu0 0
      %4585 = vmatprep.subr.bf16.mxu0 0
      %4586 = vmatpush1.bf16.msra.mxu0 0
      %4587 = vmatprep.subr.bf16.mxu0 0
      %4588 = vmatpush1.bf16.msra.mxu0 0
      %4589 = vmatprep.subr.bf16.mxu0 0
      %4590 = vmatpush1.bf16.msra.mxu0 0
      %4591 = vmatprep.subr.bf16.mxu0 0
      %4592 = vmatpush1.bf16.msra.mxu0 0
      %4593 = vmatprep.subr.bf16.mxu0 0
      %4594 = vmatpush1.bf16.msra.mxu0 0
      %4595 = vmatprep.subr.bf16.mxu0 0
      %4596 = vmatpush1.bf16.msra.mxu0 0
      %4597 = vmatprep.subr.bf16.mxu0 0
      %4598 = vmatpush1.bf16.msra.mxu0 0
      %4599 = vmatprep.subr.bf16.mxu0 0
      %4600 = vmatpush1.bf16.msra.mxu0 0
      %4601 = vmatprep.subr.bf16.mxu0 0
      %4602 = vmatpush1.bf16.msra.mxu0 0
      %4603 = vmatprep.subr.bf16.mxu0 0
      %4604 = vmatpush1.bf16.msra.mxu0 0
      %4605 = vmatprep.mubr.bf16.mxu0 0
      %4606 = vmatmul.mubr.bf16.gmra.mrb[0].mxu0 %v4433
      %v4607 = vpop.f32.mrb[0].mxu0
      %v4608 = vadd.f32 0.0, %v4607
      %v4609 = vpop.f32.mrb[0].mxu0
      %v4610 = vpop.f32.mrb[0].mxu0
      %v4611 = vadd.f32 0.0, %v4610
      %v4612 = vpop.f32.mrb[0].mxu0
      %4613 = vmatprep.mubr.bf16.mxu0 0
      %4614 = vmatmul.mubr.bf16.gmra.mrb[0].mxu0 %v4435
      %v4615 = vpop.f32.mrb[0].mxu0
      %v4616 = vadd.f32 0.0, %v4615
      %v4617 = vpop.f32.mrb[0].mxu0
      %v4618 = vpop.f32.mrb[0].mxu0
      %v4619 = vadd.f32 0.0, %v4618
      %v4620 = vpop.f32.mrb[0].mxu0
      %4621 = vmatprep.mubr.bf16.mxu0 0
      %4622 = vmatmul.mubr.bf16.gmra.mrb[0].mxu0 %v4437
      %v4623 = vpop.f32.mrb[0].mxu0
      %v4624 = vadd.f32 0.0, %v4623
      %v4625 = vpop.f32.mrb[0].mxu0
      %v4626 = vpop.f32.mrb[0].mxu0
      %v4627 = vadd.f32 0.0, %v4626
      %v4628 = vpop.f32.mrb[0].mxu0
      %4629 = vmatprep.mubr.bf16.mxu0 0
      %4630 = vmatmul.mubr.bf16.gmra.mrb[0].mxu0 %v4439
      %v4631 = vpop.f32.mrb[0].mxu0
      %v4632 = vadd.f32 0.0, %v4631
      %v4633 = vpop.f32.mrb[0].mxu0
      %v4634 = vpop.f32.mrb[0].mxu0
      %v4635 = vadd.f32 0.0, %v4634
      %v4636 = vpop.f32.mrb[0].mxu0
      %4637 = vmatprep.mubr.bf16.mxu0 0
      %4638 = vmatmul.mubr.bf16.gmra.mrb[0].mxu0 %v4441
      %v4639 = vpop.f32.mrb[0].mxu0
      %v4640 = vadd.f32 0.0, %v4639
      %v4641 = vpop.f32.mrb[0].mxu0
      %v4642 = vpop.f32.mrb[0].mxu0
      %v4643 = vadd.f32 0.0, %v4642
      %v4644 = vpop.f32.mrb[0].mxu0
      %4645 = vmatprep.mubr.bf16.mxu0 0
      %4646 = vmatmul.mubr.bf16.gmra.mrb[0].mxu0 %v4443
      %v4647 = vpop.f32.mrb[0].mxu0
      %v4648 = vadd.f32 0.0, %v4647
      %v4649 = vpop.f32.mrb[0].mxu0
      %v4650 = vpop.f32.mrb[0].mxu0
      %v4651 = vadd.f32 0.0, %v4650
      %v4652 = vpop.f32.mrb[0].mxu0
      %4653 = vmatprep.mubr.bf16.mxu0 0
      %4654 = vmatmul.mubr.bf16.gmra.mrb[0].mxu0 %v4445
      %v4655 = vpop.f32.mrb[0].mxu0
      %v4656 = vadd.f32 0.0, %v4655
      %v4657 = vpop.f32.mrb[0].mxu0
      %v4658 = vpop.f32.mrb[0].mxu0
      %v4659 = vadd.f32 0.0, %v4658
      %v4660 = vpop.f32.mrb[0].mxu0
      %4661 = vmatprep.mubr.bf16.mxu0 0
      %4662 = vmatmul.mubr.bf16.gmra.mrb[0].mxu0 %v4447
      %v4663 = vpop.f32.mrb[0].mxu0
      %v4664 = vadd.f32 0.0, %v4663
      %v4665 = vpop.f32.mrb[0].mxu0
      %v4666 = vpop.f32.mrb[0].mxu0
      %v4667 = vadd.f32 0.0, %v4666
      %v4668 = vpop.f32.mrb[0].mxu0
      %4669 = vmatprep.mubr.bf16.mxu0 0
      %4670 = vmatmul.mubr.bf16.gmra.mrb[0].mxu0 %v4449
      %v4671 = vpop.f32.mrb[0].mxu0
      %v4672 = vadd.f32 0.0, %v4671
      %v4673 = vpop.f32.mrb[0].mxu0
      %v4674 = vpop.f32.mrb[0].mxu0
      %v4675 = vadd.f32 0.0, %v4674
      %v4676 = vpop.f32.mrb[0].mxu0
      %4677 = vmatprep.mubr.bf16.mxu0 0
      %4678 = vmatmul.mubr.bf16.gmra.mrb[0].mxu0 %v4451
      %v4679 = vpop.f32.mrb[0].mxu0
      %v4680 = vadd.f32 0.0, %v4679
      %v4681 = vpop.f32.mrb[0].mxu0
      %v4682 = vpop.f32.mrb[0].mxu0
      %v4683 = vadd.f32 0.0, %v4682
      %v4684 = vpop.f32.mrb[0].mxu0
      %4685 = vmatprep.mubr.bf16.mxu0 0
      %4686 = vmatmul.mubr.bf16.gmra.mrb[0].mxu0 %v4453
      %v4687 = vpop.f32.mrb[0].mxu0
      %v4688 = vadd.f32 0.0, %v4687
      %v4689 = vpop.f32.mrb[0].mxu0
      %v4690 = vpop.f32.mrb[0].mxu0
      %v4691 = vadd.f32 0.0, %v4690
      %v4692 = vpop.f32.mrb[0].mxu0
      %4693 = vmatprep.mubr.bf16.mxu0 0
      %4694 = vmatmul.mubr.bf16.gmra.mrb[0].mxu0 %v4455
      %v4695 = vpop.f32.mrb[0].mxu0
      %v4696 = vadd.f32 0.0, %v4695
      %v4697 = vpop.f32.mrb[0].mxu0
      %v4698 = vpop.f32.mrb[0].mxu0
      %v4699 = vadd.f32 0.0, %v4698
      %v4700 = vpop.f32.mrb[0].mxu0
      %4701 = vmatprep.mubr.bf16.mxu0 0
      %4702 = vmatmul.mubr.bf16.gmra.mrb[0].mxu0 %v4457
      %v4703 = vpop.f32.mrb[0].mxu0
      %v4704 = vadd.f32 0.0, %v4703
      %v4705 = vpop.f32.mrb[0].mxu0
      %v4706 = vpop.f32.mrb[0].mxu0
      %v4707 = vadd.f32 0.0, %v4706
      %v4708 = vpop.f32.mrb[0].mxu0
      %4709 = vmatprep.mubr.bf16.mxu0 0
      %4710 = vmatmul.mubr.bf16.gmra.mrb[0].mxu0 %v4459
      %v4711 = vpop.f32.mrb[0].mxu0
      %v4712 = vadd.f32 0.0, %v4711
      %v4713 = vpop.f32.mrb[0].mxu0
      %v4714 = vpop.f32.mrb[0].mxu0
      %v4715 = vadd.f32 0.0, %v4714
      %v4716 = vpop.f32.mrb[0].mxu0
      %4717 = vmatprep.mubr.bf16.mxu0 0
      %4718 = vmatmul.mubr.bf16.gmra.mrb[0].mxu0 %v4461
      %v4719 = vpop.f32.mrb[0].mxu0
      %v4720 = vadd.f32 0.0, %v4719
      %v4721 = vpop.f32.mrb[0].mxu0
      %v4722 = vpop.f32.mrb[0].mxu0
      %v4723 = vadd.f32 0.0, %v4722
      %v4724 = vpop.f32.mrb[0].mxu0
      %4725 = vmatprep.mubr.bf16.mxu0 0
      %4726 = vmatmul.mubr.bf16.gmra.mrb[0].mxu0 %v4463
      %v4727 = vpop.f32.mrb[0].mxu0
      %v4728 = vadd.f32 0.0, %v4727
      %v4729 = vpop.f32.mrb[0].mxu0
      %v4730 = vpop.f32.mrb[0].mxu0
      %v4731 = vadd.f32 0.0, %v4730
      %v4732 = vpop.f32.mrb[0].mxu0
      %4733 = vmatprep.mubr.bf16.mxu0 0
      %4734 = vmatmul.mubr.bf16.gmra.mrb[0].mxu0 %v4465
      %v4735 = vpop.f32.mrb[0].mxu0
      %v4736 = vadd.f32 0.0, %v4735
      %v4737 = vpop.f32.mrb[0].mxu0
      %v4738 = vpop.f32.mrb[0].mxu0
      %v4739 = vadd.f32 0.0, %v4738
      %v4740 = vpop.f32.mrb[0].mxu0
      %4741 = vmatprep.mubr.bf16.mxu0 0
      %4742 = vmatmul.mubr.bf16.gmra.mrb[0].mxu0 %v4467
      %v4743 = vpop.f32.mrb[0].mxu0
      %v4744 = vadd.f32 0.0, %v4743
      %v4745 = vpop.f32.mrb[0].mxu0
      %v4746 = vpop.f32.mrb[0].mxu0
      %v4747 = vadd.f32 0.0, %v4746
      %v4748 = vpop.f32.mrb[0].mxu0
      %4749 = vmatprep.mubr.bf16.mxu0 0
      %4750 = vmatmul.mubr.bf16.gmra.mrb[0].mxu0 %v4469
      %v4751 = vpop.f32.mrb[0].mxu0
      %v4752 = vadd.f32 0.0, %v4751
      %v4753 = vpop.f32.mrb[0].mxu0
      %v4754 = vpop.f32.mrb[0].mxu0
      %v4755 = vadd.f32 0.0, %v4754
      %v4756 = vpop.f32.mrb[0].mxu0
      %4757 = vmatprep.mubr.bf16.mxu0 0
      %4758 = vmatmul.mubr.bf16.gmra.mrb[0].mxu0 %v4471
      %v4759 = vpop.f32.mrb[0].mxu0
      %v4760 = vadd.f32 0.0, %v4759
      %v4761 = vpop.f32.mrb[0].mxu0
      %v4762 = vpop.f32.mrb[0].mxu0
      %v4763 = vadd.f32 0.0, %v4762
      %v4764 = vpop.f32.mrb[0].mxu0
      %4765 = vmatprep.mubr.bf16.mxu0 0
      %4766 = vmatmul.mubr.bf16.gmra.mrb[0].mxu0 %v4473
      %v4767 = vpop.f32.mrb[0].mxu0
      %v4768 = vadd.f32 0.0, %v4767
      %v4769 = vpop.f32.mrb[0].mxu0
      %v4770 = vpop.f32.mrb[0].mxu0
      %v4771 = vadd.f32 0.0, %v4770
      %v4772 = vpop.f32.mrb[0].mxu0
      %4773 = vmatprep.mubr.bf16.mxu0 0
      %4774 = vmatmul.mubr.bf16.gmra.mrb[0].mxu0 %v4475
      %v4775 = vpop.f32.mrb[0].mxu0
      %v4776 = vadd.f32 0.0, %v4775
      %v4777 = vpop.f32.mrb[0].mxu0
      %v4778 = vpop.f32.mrb[0].mxu0
      %v4779 = vadd.f32 0.0, %v4778
      %v4780 = vpop.f32.mrb[0].mxu0
      %4781 = vmatprep.mubr.bf16.mxu0 0
      %4782 = vmatmul.mubr.bf16.gmra.mrb[0].mxu0 %v4477
      %v4783 = vpop.f32.mrb[0].mxu0
      %v4784 = vadd.f32 0.0, %v4783
      %v4785 = vpop.f32.mrb[0].mxu0
      %v4786 = vpop.f32.mrb[0].mxu0
      %v4787 = vadd.f32 0.0, %v4786
      %v4788 = vpop.f32.mrb[0].mxu0
      %4789 = vmatprep.mubr.bf16.mxu0 0
      %4790 = vmatmul.mubr.bf16.gmra.mrb[0].mxu0 %v4479
      %v4791 = vpop.f32.mrb[0].mxu0
      %v4792 = vadd.f32 0.0, %v4791
      %v4793 = vpop.f32.mrb[0].mxu0
      %v4794 = vpop.f32.mrb[0].mxu0
      %v4795 = vadd.f32 0.0, %v4794
      %v4796 = vpop.f32.mrb[0].mxu0
      %4797 = vmatprep.mubr.bf16.mxu0 0
      %4798 = vmatmul.mubr.bf16.gmra.mrb[0].mxu0 %v4481
      %v4799 = vpop.f32.mrb[0].mxu0
      %v4800 = vadd.f32 0.0, %v4799
      %v4801 = vpop.f32.mrb[0].mxu0
      %v4802 = vpop.f32.mrb[0].mxu0
      %v4803 = vadd.f32 0.0, %v4802
      %v4804 = vpop.f32.mrb[0].mxu0
      %4805 = vmatprep.mubr.bf16.mxu0 0
      %4806 = vmatmul.mubr.bf16.gmra.mrb[0].mxu0 %v4483
      %v4807 = vpop.f32.mrb[0].mxu0
      %v4808 = vadd.f32 0.0, %v4807
      %v4809 = vpop.f32.mrb[0].mxu0
      %v4810 = vpop.f32.mrb[0].mxu0
      %v4811 = vadd.f32 0.0, %v4810
      %v4812 = vpop.f32.mrb[0].mxu0
      %4813 = vmatprep.mubr.bf16.mxu0 0
      %4814 = vmatmul.mubr.bf16.gmra.mrb[0].mxu0 %v4485
      %v4815 = vpop.f32.mrb[0].mxu0
      %v4816 = vadd.f32 0.0, %v4815
      %v4817 = vpop.f32.mrb[0].mxu0
      %v4818 = vpop.f32.mrb[0].mxu0
      %v4819 = vadd.f32 0.0, %v4818
      %v4820 = vpop.f32.mrb[0].mxu0
      %4821 = vmatprep.mubr.bf16.mxu0 0
      %4822 = vmatmul.mubr.bf16.gmra.mrb[0].mxu0 %v4487
      %v4823 = vpop.f32.mrb[0].mxu0
      %v4824 = vadd.f32 0.0, %v4823
      %v4825 = vpop.f32.mrb[0].mxu0
      %v4826 = vpop.f32.mrb[0].mxu0
      %v4827 = vadd.f32 0.0, %v4826
      %v4828 = vpop.f32.mrb[0].mxu0
      %4829 = vmatprep.mubr.bf16.mxu0 0
      %4830 = vmatmul.mubr.bf16.gmra.mrb[0].mxu0 %v4489
      %v4831 = vpop.f32.mrb[0].mxu0
      %v4832 = vadd.f32 0.0, %v4831
      %v4833 = vpop.f32.mrb[0].mxu0
      %v4834 = vpop.f32.mrb[0].mxu0
      %v4835 = vadd.f32 0.0, %v4834
      %v4836 = vpop.f32.mrb[0].mxu0
      %4837 = vmatprep.mubr.bf16.mxu0 0
      %4838 = vmatmul.mubr.bf16.gmra.mrb[0].mxu0 %v4491
      %v4839 = vpop.f32.mrb[0].mxu0
      %v4840 = vadd.f32 0.0, %v4839
      %v4841 = vpop.f32.mrb[0].mxu0
      %v4842 = vpop.f32.mrb[0].mxu0
      %v4843 = vadd.f32 0.0, %v4842
      %v4844 = vpop.f32.mrb[0].mxu0
      %4845 = vmatprep.mubr.bf16.mxu0 0
      %4846 = vmatmul.mubr.bf16.gmra.mrb[0].mxu0 %v4493
      %v4847 = vpop.f32.mrb[0].mxu0
      %v4848 = vadd.f32 0.0, %v4847
      %v4849 = vpop.f32.mrb[0].mxu0
      %v4850 = vpop.f32.mrb[0].mxu0
      %v4851 = vadd.f32 0.0, %v4850
      %v4852 = vpop.f32.mrb[0].mxu0
      %4853 = vmatprep.mubr.bf16.mxu0 0
      %4854 = vmatmul.mubr.bf16.gmra.mrb[0].mxu0 %v4495
      %v4855 = vpop.f32.mrb[0].mxu0
      %v4856 = vadd.f32 0.0, %v4855
      %v4857 = vpop.f32.mrb[0].mxu0
      %v4858 = vpop.f32.mrb[0].mxu0
      %v4859 = vadd.f32 0.0, %v4858
      %v4860 = vpop.f32.mrb[0].mxu0
      %4861 = vmatprep.mubr.bf16.mxu0 0
      %4862 = vmatmul.mubr.bf16.gmra.mrb[0].mxu0 %v4497
      %v4863 = vpop.f32.mrb[0].mxu0
      %v4864 = vadd.f32 0.0, %v4863
      %v4865 = vpop.f32.mrb[0].mxu0
      %v4866 = vpop.f32.mrb[0].mxu0
      %v4867 = vadd.f32 0.0, %v4866
      %v4868 = vpop.f32.mrb[0].mxu0
      %4869 = vmatprep.mubr.bf16.mxu0 0
      %4870 = vmatmul.mubr.bf16.gmra.mrb[0].mxu0 %v4499
      %v4871 = vpop.f32.mrb[0].mxu0
      %v4872 = vadd.f32 0.0, %v4871
      %v4873 = vpop.f32.mrb[0].mxu0
      %v4874 = vpop.f32.mrb[0].mxu0
      %v4875 = vadd.f32 0.0, %v4874
      %v4876 = vpop.f32.mrb[0].mxu0
      %4877 = vmatprep.mubr.bf16.mxu0 0
      %4878 = vmatmul.mubr.bf16.gmra.mrb[0].mxu0 %v4501
      %v4879 = vpop.f32.mrb[0].mxu0
      %v4880 = vadd.f32 0.0, %v4879
      %v4881 = vpop.f32.mrb[0].mxu0
      %v4882 = vpop.f32.mrb[0].mxu0
      %v4883 = vadd.f32 0.0, %v4882
      %v4884 = vpop.f32.mrb[0].mxu0
      %4885 = vmatprep.mubr.bf16.mxu0 0
      %4886 = vmatmul.mubr.bf16.gmra.mrb[0].mxu0 %v4503
      %v4887 = vpop.f32.mrb[0].mxu0
      %v4888 = vadd.f32 0.0, %v4887
      %v4889 = vpop.f32.mrb[0].mxu0
      %v4890 = vpop.f32.mrb[0].mxu0
      %v4891 = vadd.f32 0.0, %v4890
      %v4892 = vpop.f32.mrb[0].mxu0
      %4893 = vmatprep.mubr.bf16.mxu0 0
      %4894 = vmatmul.mubr.bf16.gmra.mrb[0].mxu0 %v4505
      %v4895 = vpop.f32.mrb[0].mxu0
      %v4896 = vadd.f32 0.0, %v4895
      %v4897 = vpop.f32.mrb[0].mxu0
      %v4898 = vpop.f32.mrb[0].mxu0
      %v4899 = vadd.f32 0.0, %v4898
      %v4900 = vpop.f32.mrb[0].mxu0
      %4901 = vmatprep.mubr.bf16.mxu0 0
      %4902 = vmatmul.mubr.bf16.gmra.mrb[0].mxu0 %v4507
      %v4903 = vpop.f32.mrb[0].mxu0
      %v4904 = vadd.f32 0.0, %v4903
      %v4905 = vpop.f32.mrb[0].mxu0
      %v4906 = vpop.f32.mrb[0].mxu0
      %v4907 = vadd.f32 0.0, %v4906
      %v4908 = vpop.f32.mrb[0].mxu0
      %4909 = vmatprep.mubr.bf16.mxu0 0
      %4910 = vmatmul.mubr.bf16.gmra.mrb[0].mxu0 %v4509
      %v4911 = vpop.f32.mrb[0].mxu0
      %v4912 = vadd.f32 0.0, %v4911
      %v4913 = vpop.f32.mrb[0].mxu0
      %v4914 = vpop.f32.mrb[0].mxu0
      %v4915 = vadd.f32 0.0, %v4914
      %v4916 = vpop.f32.mrb[0].mxu0
      %4917 = vmatprep.mubr.bf16.mxu0 0
      %4918 = vmatmul.mubr.bf16.gmra.mrb[0].mxu0 %v4511
      %v4919 = vpop.f32.mrb[0].mxu0
      %v4920 = vadd.f32 0.0, %v4919
      %v4921 = vpop.f32.mrb[0].mxu0
      %v4922 = vpop.f32.mrb[0].mxu0
      %v4923 = vadd.f32 0.0, %v4922
      %v4924 = vpop.f32.mrb[0].mxu0
      %4925 = vmatprep.mubr.bf16.mxu0 0
      %4926 = vmatmul.mubr.bf16.gmra.mrb[0].mxu0 %v4513
      %v4927 = vpop.f32.mrb[0].mxu0
      %v4928 = vadd.f32 0.0, %v4927
      %v4929 = vpop.f32.mrb[0].mxu0
      %v4930 = vpop.f32.mrb[0].mxu0
      %v4931 = vadd.f32 0.0, %v4930
      %v4932 = vpop.f32.mrb[0].mxu0
      %4933 = vmatprep.mubr.bf16.mxu0 0
      %4934 = vmatmul.mubr.bf16.gmra.mrb[0].mxu0 %v4515
      %v4935 = vpop.f32.mrb[0].mxu0
      %v4936 = vadd.f32 0.0, %v4935
      %v4937 = vpop.f32.mrb[0].mxu0
      %v4938 = vpop.f32.mrb[0].mxu0
      %v4939 = vadd.f32 0.0, %v4938
      %v4940 = vpop.f32.mrb[0].mxu0
      %4941 = vmatprep.mubr.bf16.mxu0 0
      %4942 = vmatmul.mubr.bf16.gmra.mrb[0].mxu0 %v4517
      %v4943 = vpop.f32.mrb[0].mxu0
      %v4944 = vadd.f32 0.0, %v4943
      %v4945 = vpop.f32.mrb[0].mxu0
      %v4946 = vpop.f32.mrb[0].mxu0
      %v4947 = vadd.f32 0.0, %v4946
      %v4948 = vpop.f32.mrb[0].mxu0
      %4949 = vmatprep.mubr.bf16.mxu0 0
      %4950 = vmatmul.mubr.bf16.gmra.mrb[0].mxu0 %v4519
      %v4951 = vpop.f32.mrb[0].mxu0
      %v4952 = vadd.f32 0.0, %v4951
      %v4953 = vpop.f32.mrb[0].mxu0
      %v4954 = vpop.f32.mrb[0].mxu0
      %v4955 = vadd.f32 0.0, %v4954
      %v4956 = vpop.f32.mrb[0].mxu0
      %4957 = vmatprep.mubr.bf16.mxu0 0
      %4958 = vmatmul.mubr.bf16.gmra.mrb[0].mxu0 %v4521
      %v4959 = vpop.f32.mrb[0].mxu0
      %v4960 = vadd.f32 0.0, %v4959
      %v4961 = vpop.f32.mrb[0].mxu0
      %v4962 = vpop.f32.mrb[0].mxu0
      %v4963 = vadd.f32 0.0, %v4962
      %v4964 = vpop.f32.mrb[0].mxu0
      %4965 = vmatprep.mubr.bf16.mxu0 0
      %4966 = vmatmul.mubr.bf16.gmra.mrb[0].mxu0 %v4523
      %v4967 = vpop.f32.mrb[0].mxu0
      %v4968 = vadd.f32 0.0, %v4967
      %v4969 = vpop.f32.mrb[0].mxu0
      %v4970 = vpop.f32.mrb[0].mxu0
      %v4971 = vadd.f32 0.0, %v4970
      %v4972 = vpop.f32.mrb[0].mxu0
      %4973 = vmatprep.mubr.bf16.mxu0 0
      %4974 = vmatmul.mubr.bf16.gmra.mrb[0].mxu0 %v4525
      %v4975 = vpop.f32.mrb[0].mxu0
      %v4976 = vadd.f32 0.0, %v4975
      %v4977 = vpop.f32.mrb[0].mxu0
      %v4978 = vpop.f32.mrb[0].mxu0
      %v4979 = vadd.f32 0.0, %v4978
      %v4980 = vpop.f32.mrb[0].mxu0
      %4981 = vmatprep.mubr.bf16.mxu0 0
      %4982 = vmatmul.mubr.bf16.gmra.mrb[0].mxu0 %v4527
      %v4983 = vpop.f32.mrb[0].mxu0
      %v4984 = vadd.f32 0.0, %v4983
      %v4985 = vpop.f32.mrb[0].mxu0
      %v4986 = vpop.f32.mrb[0].mxu0
      %v4987 = vadd.f32 0.0, %v4986
      %v4988 = vpop.f32.mrb[0].mxu0
      %4989 = vmatprep.mubr.bf16.mxu0 0
      %4990 = vmatmul.mubr.bf16.gmra.mrb[0].mxu0 %v4529
      %v4991 = vpop.f32.mrb[0].mxu0
      %v4992 = vadd.f32 0.0, %v4991
      %v4993 = vpop.f32.mrb[0].mxu0
      %v4994 = vpop.f32.mrb[0].mxu0
      %v4995 = vadd.f32 0.0, %v4994
      %v4996 = vpop.f32.mrb[0].mxu0
      %4997 = vmatprep.mubr.bf16.mxu0 0
      %4998 = vmatmul.mubr.bf16.gmra.mrb[0].mxu0 %v4531
      %v4999 = vpop.f32.mrb[0].mxu0
      %v5000 = vadd.f32 0.0, %v4999
      %v5001 = vpop.f32.mrb[0].mxu0
      %v5002 = vpop.f32.mrb[0].mxu0
      %v5003 = vadd.f32 0.0, %v5002
      %v5004 = vpop.f32.mrb[0].mxu0
      %5005 = vmatprep.mubr.bf16.mxu0 0
      %5006 = vmatmul.mubr.bf16.gmra.mrb[0].mxu0 %v4533
      %v5007 = vpop.f32.mrb[0].mxu0
      %v5008 = vadd.f32 0.0, %v5007
      %v5009 = vpop.f32.mrb[0].mxu0
      %v5010 = vpop.f32.mrb[0].mxu0
      %v5011 = vadd.f32 0.0, %v5010
      %v5012 = vpop.f32.mrb[0].mxu0
      %5013 = vmatprep.mubr.bf16.mxu0 0
      %5014 = vmatmul.mubr.bf16.gmra.mrb[0].mxu0 %v4535
      %v5015 = vpop.f32.mrb[0].mxu0
      %v5016 = vadd.f32 0.0, %v5015
      %v5017 = vpop.f32.mrb[0].mxu0
      %v5018 = vpop.f32.mrb[0].mxu0
      %v5019 = vadd.f32 0.0, %v5018
      %v5020 = vpop.f32.mrb[0].mxu0
      %5021 = vmatprep.mubr.bf16.mxu0 0
      %5022 = vmatmul.mubr.bf16.gmra.mrb[0].mxu0 %v4537
      %v5023 = vpop.f32.mrb[0].mxu0
      %v5024 = vadd.f32 0.0, %v5023
      %v5025 = vpop.f32.mrb[0].mxu0
      %v5026 = vpop.f32.mrb[0].mxu0
      %v5027 = vadd.f32 0.0, %v5026
      %v5028 = vpop.f32.mrb[0].mxu0
      %5029 = vmatprep.mubr.bf16.mxu0 0
      %5030 = vmatmul.mubr.bf16.gmra.mrb[0].mxu0 %v4539
      %v5031 = vpop.f32.mrb[0].mxu0
      %v5032 = vadd.f32 0.0, %v5031
      %v5033 = vpop.f32.mrb[0].mxu0
      %v5034 = vpop.f32.mrb[0].mxu0
      %v5035 = vadd.f32 0.0, %v5034
      %v5036 = vpop.f32.mrb[0].mxu0
      %5037 = vmatprep.mubr.bf16.mxu0 0
      %5038 = vmatmul.mubr.bf16.gmra.mrb[0].mxu0 %v4541
      %v5039 = vpop.f32.mrb[0].mxu0
      %v5040 = vadd.f32 0.0, %v5039
      %v5041 = vpop.f32.mrb[0].mxu0
      %v5042 = vpop.f32.mrb[0].mxu0
      %v5043 = vadd.f32 0.0, %v5042
      %v5044 = vpop.f32.mrb[0].mxu0
      %5045 = vmatprep.mubr.bf16.mxu0 0
      %5046 = vmatmul.mubr.bf16.gmra.mrb[0].mxu0 %v4543
      %v5047 = vpop.f32.mrb[0].mxu0
      %v5048 = vadd.f32 0.0, %v5047
      %v5049 = vpop.f32.mrb[0].mxu0
      %v5050 = vpop.f32.mrb[0].mxu0
      %v5051 = vadd.f32 0.0, %v5050
      %v5052 = vpop.f32.mrb[0].mxu0
      %5053 = vmatprep.mubr.bf16.mxu0 0
      %5054 = vmatmul.mubr.bf16.gmra.mrb[0].mxu0 %v4545
      %v5055 = vpop.f32.mrb[0].mxu0
      %v5056 = vadd.f32 0.0, %v5055
      %v5057 = vpop.f32.mrb[0].mxu0
      %v5058 = vpop.f32.mrb[0].mxu0
      %v5059 = vadd.f32 0.0, %v5058
      %v5060 = vpop.f32.mrb[0].mxu0
      %5061 = vmatprep.mubr.bf16.mxu0 0
      %5062 = vmatmul.mubr.bf16.gmra.mrb[0].mxu0 %v4547
      %v5063 = vpop.f32.mrb[0].mxu0
      %v5064 = vadd.f32 0.0, %v5063
      %v5065 = vpop.f32.mrb[0].mxu0
      %v5066 = vpop.f32.mrb[0].mxu0
      %v5067 = vadd.f32 0.0, %v5066
      %v5068 = vpop.f32.mrb[0].mxu0
      %5069 = vmatprep.mubr.bf16.mxu0 0
      %5070 = vmatmul.mubr.bf16.gmra.mrb[0].mxu0 %v4549
      %v5071 = vpop.f32.mrb[0].mxu0
      %v5072 = vadd.f32 0.0, %v5071
      %v5073 = vpop.f32.mrb[0].mxu0
      %v5074 = vpop.f32.mrb[0].mxu0
      %v5075 = vadd.f32 0.0, %v5074
      %v5076 = vpop.f32.mrb[0].mxu0
      %5077 = vmatprep.mubr.bf16.mxu0 0
      %5078 = vmatmul.mubr.bf16.gmra.mrb[0].mxu0 %v4551
      %v5079 = vpop.f32.mrb[0].mxu0
      %v5080 = vadd.f32 0.0, %v5079
      %v5081 = vpop.f32.mrb[0].mxu0
      %v5082 = vpop.f32.mrb[0].mxu0
      %v5083 = vadd.f32 0.0, %v5082
      %v5084 = vpop.f32.mrb[0].mxu0
      %5085 = vmatprep.mubr.bf16.mxu0 0
      %5086 = vmatmul.mubr.bf16.gmra.mrb[0].mxu0 %v4553
      %v5087 = vpop.f32.mrb[0].mxu0
      %v5088 = vadd.f32 0.0, %v5087
      %v5089 = vpop.f32.mrb[0].mxu0
      %v5090 = vpop.f32.mrb[0].mxu0
      %v5091 = vadd.f32 0.0, %v5090
      %v5092 = vpop.f32.mrb[0].mxu0
      %5093 = vmatprep.mubr.bf16.mxu0 0
      %5094 = vmatmul.mubr.bf16.gmra.mrb[0].mxu0 %v4555
      %v5095 = vpop.f32.mrb[0].mxu0
      %v5096 = vadd.f32 0.0, %v5095
      %v5097 = vpop.f32.mrb[0].mxu0
      %v5098 = vpop.f32.mrb[0].mxu0
      %v5099 = vadd.f32 0.0, %v5098
      %v5100 = vpop.f32.mrb[0].mxu0
      %5101 = vmatprep.mubr.bf16.mxu0 0
      %5102 = vmatmul.mubr.bf16.gmra.mrb[0].mxu0 %v4557
      %v5103 = vpop.f32.mrb[0].mxu0
      %v5104 = vadd.f32 0.0, %v5103
      %v5105 = vpop.f32.mrb[0].mxu0
      %v5106 = vpop.f32.mrb[0].mxu0
      %v5107 = vadd.f32 0.0, %v5106
      %v5108 = vpop.f32.mrb[0].mxu0
      %5109 = vmatprep.mubr.bf16.mxu0 0
      %5110 = vmatmul.mubr.bf16.gmra.mrb[0].mxu0 %v4559
      %v5111 = vpop.f32.mrb[0].mxu0
      %v5112 = vadd.f32 0.0, %v5111
      %v5113 = vpop.f32.mrb[0].mxu0
      %v5114 = vpop.f32.mrb[0].mxu0
      %v5115 = vadd.f32 0.0, %v5114
      %v5116 = vpop.f32.mrb[0].mxu0
      %5117 = vmatprep.mubr.bf16.mxu0 0
      %5118 = vmatmul.mubr.bf16.gmra.mrb[0].mxu0 %v4561
      %v5119 = vpop.f32.mrb[0].mxu0
      %v5120 = vadd.f32 0.0, %v5119
      %v5121 = vpop.f32.mrb[0].mxu0
      %v5122 = vpop.f32.mrb[0].mxu0
      %v5123 = vadd.f32 0.0, %v5122
      %v5124 = vpop.f32.mrb[0].mxu0
      %5125 = vmatprep.mubr.bf16.mxu0 0
      %5126 = vmatmul.mubr.bf16.gmra.mrb[0].mxu0 %v4563
      %v5127 = vpop.f32.mrb[0].mxu0
      %v5128 = vadd.f32 0.0, %v5127
      %v5129 = vpop.f32.mrb[0].mxu0
      %v5130 = vpop.f32.mrb[0].mxu0
      %v5131 = vadd.f32 0.0, %v5130
      %v5132 = vpop.f32.mrb[0].mxu0
      %5133 = vmatprep.mubr.bf16.mxu0 0
      %5134 = vmatmul.mubr.bf16.gmra.mrb[0].mxu0 %v4565
      %v5135 = vpop.f32.mrb[0].mxu0
      %v5136 = vadd.f32 0.0, %v5135
      %v5137 = vpop.f32.mrb[0].mxu0
      %v5138 = vpop.f32.mrb[0].mxu0
      %v5139 = vadd.f32 0.0, %v5138
      %v5140 = vpop.f32.mrb[0].mxu0
      %5141 = vmatprep.mubr.bf16.mxu0 0
      %5142 = vmatmul.mubr.bf16.gmra.mrb[0].mxu0 %v4567
      %v5143 = vpop.f32.mrb[0].mxu0
      %v5144 = vadd.f32 0.0, %v5143
      %v5145 = vpop.f32.mrb[0].mxu0
      %v5146 = vpop.f32.mrb[0].mxu0
      %v5147 = vadd.f32 0.0, %v5146
      %v5148 = vpop.f32.mrb[0].mxu0
      %5149 = vdwg.mxu0
      %v5150 = vtanh.pop %v4608
      %v5151 = vtanh.pop %v4611
      %v5152 = vtanh.pop %v4616
      %v5153 = vtanh.pop %v4619
      %v5154 = vtanh.pop %v4624
      %v5155 = vtanh.pop %v4627
      %v5156 = vtanh.pop %v4632
      %v5157 = vtanh.pop %v4635
      %v5158 = vtanh.pop %v4640
      %v5159 = vtanh.pop %v4643
      %v5160 = vtanh.pop %v4648
      %v5161 = vtanh.pop %v4651
      %v5162 = vtanh.pop %v4656
      %v5163 = vtanh.pop %v4659
      %v5164 = vtanh.pop %v4664
      %v5165 = vtanh.pop %v4667
      %v5166 = vtanh.pop %v4672
      %v5167 = vtanh.pop %v4675
      %v5168 = vtanh.pop %v4680
      %v5169 = vtanh.pop %v4683
      %v5170 = vtanh.pop %v4688
      %v5171 = vtanh.pop %v4691
      %v5172 = vtanh.pop %v4696
      %v5173 = vtanh.pop %v4699
      %v5174 = vtanh.pop %v4704
      %v5175 = vtanh.pop %v4707
      %v5176 = vtanh.pop %v4712
      %v5177 = vtanh.pop %v4715
      %v5178 = vtanh.pop %v4720
      %v5179 = vtanh.pop %v4723
      %v5180 = vtanh.pop %v4728
      %v5181 = vtanh.pop %v4731
      %v5182 = vtanh.pop %v4736
      %v5183 = vtanh.pop %v4739
      %v5184 = vtanh.pop %v4744
      %v5185 = vtanh.pop %v4747
      %v5186 = vtanh.pop %v4752
      %v5187 = vtanh.pop %v4755
      %v5188 = vtanh.pop %v4760
      %v5189 = vtanh.pop %v4763
      %v5190 = vtanh.pop %v4768
      %v5191 = vtanh.pop %v4771
      %v5192 = vtanh.pop %v4776
      %v5193 = vtanh.pop %v4779
      %v5194 = vtanh.pop %v4784
      %v5195 = vtanh.pop %v4787
      %v5196 = vtanh.pop %v4792
      %v5197 = vtanh.pop %v4795
      %v5198 = vtanh.pop %v4800
      %v5199 = vtanh.pop %v4803
      %v5200 = vtanh.pop %v4808
      %v5201 = vtanh.pop %v4811
      %v5202 = vtanh.pop %v4816
      %v5203 = vtanh.pop %v4819
      %v5204 = vtanh.pop %v4824
      %v5205 = vtanh.pop %v4827
      %v5206 = vtanh.pop %v4832
      %v5207 = vtanh.pop %v4835
      %v5208 = vtanh.pop %v4840
      %v5209 = vtanh.pop %v4843
      %v5210 = vtanh.pop %v4848
      %v5211 = vtanh.pop %v4851
      %v5212 = vtanh.pop %v4856
      %v5213 = vtanh.pop %v4859
      %v5214 = vtanh.pop %v4864
      %v5215 = vtanh.pop %v4867
      %v5216 = vtanh.pop %v4872
      %v5217 = vtanh.pop %v4875
      %v5218 = vtanh.pop %v4880
      %v5219 = vtanh.pop %v4883
      %v5220 = vtanh.pop %v4888
      %v5221 = vtanh.pop %v4891
      %v5222 = vtanh.pop %v4896
      %v5223 = vtanh.pop %v4899
      %v5224 = vtanh.pop %v4904
      %v5225 = vtanh.pop %v4907
      %v5226 = vtanh.pop %v4912
      %v5227 = vtanh.pop %v4915
      %v5228 = vtanh.pop %v4920
      %v5229 = vtanh.pop %v4923
      %v5230 = vtanh.pop %v4928
      %v5231 = vtanh.pop %v4931
      %v5232 = vtanh.pop %v4936
      %v5233 = vtanh.pop %v4939
      %v5234 = vtanh.pop %v4944
      %v5235 = vtanh.pop %v4947
      %v5236 = vtanh.pop %v4952
      %v5237 = vtanh.pop %v4955
      %v5238 = vtanh.pop %v4960
      %v5239 = vtanh.pop %v4963
      %v5240 = vtanh.pop %v4968
      %v5241 = vtanh.pop %v4971
      %v5242 = vtanh.pop %v4976
      %v5243 = vtanh.pop %v4979
      %v5244 = vtanh.pop %v4984
      %v5245 = vtanh.pop %v4987
      %v5246 = vtanh.pop %v4992
      %v5247 = vtanh.pop %v4995
      %v5248 = vtanh.pop %v5000
      %v5249 = vtanh.pop %v5003
      %v5250 = vtanh.pop %v5008
      %v5251 = vtanh.pop %v5011
      %v5252 = vtanh.pop %v5016
      %v5253 = vtanh.pop %v5019
      %v5254 = vtanh.pop %v5024
      %v5255 = vtanh.pop %v5027
      %v5256 = vtanh.pop %v5032
      %v5257 = vtanh.pop %v5035
      %v5258 = vtanh.pop %v5040
      %v5259 = vtanh.pop %v5043
      %v5260 = vtanh.pop %v5048
      %v5261 = vtanh.pop %v5051
      %v5262 = vtanh.pop %v5056
      %v5263 = vtanh.pop %v5059
      %v5264 = vtanh.pop %v5064
      %v5265 = vtanh.pop %v5067
      %v5266 = vtanh.pop %v5072
      %v5267 = vtanh.pop %v5075
      %v5268 = vtanh.pop %v5080
      %v5269 = vtanh.pop %v5083
      %v5270 = vtanh.pop %v5088
      %v5271 = vtanh.pop %v5091
      %v5272 = vtanh.pop %v5096
      %v5273 = vtanh.pop %v5099
      %v5274 = vtanh.pop %v5104
      %v5275 = vtanh.pop %v5107
      %v5276 = vtanh.pop %v5112
      %v5277 = vtanh.pop %v5115
      %v5278 = vtanh.pop %v5120
      %v5279 = vtanh.pop %v5123
      %v5280 = vtanh.pop %v5128
      %v5281 = vtanh.pop %v5131
      %v5282 = vtanh.pop %v5136
      %v5283 = vtanh.pop %v5139
      %v5284 = vtanh.pop %v5144
      %v5285 = vtanh.pop %v5147
      %5286 = vst [vmem:[%s143] sm:$0xff] %v5150
      %5287 = vst [vmem:[%s143 + $0x8] sm:$0xff] %v5151
      %5288 = vst [vmem:[%s143 + $0x10] sm:$0xff] %v5152
      %5289 = vst [vmem:[%s143 + $0x18] sm:$0xff] %v5153
      %5290 = vst [vmem:[%s143 + $0x20] sm:$0xff] %v5154
      %5291 = vst [vmem:[%s143 + $0x28] sm:$0xff] %v5155
      %5292 = vst [vmem:[%s143 + $0x30] sm:$0xff] %v5156
      %5293 = vst [vmem:[%s143 + $0x38] sm:$0xff] %v5157
      %5294 = vst [vmem:[%s143 + $0x40] sm:$0xff] %v5158
      %5295 = vst [vmem:[%s143 + $0x48] sm:$0xff] %v5159
      %5296 = vst [vmem:[%s143 + $0x50] sm:$0xff] %v5160
      %5297 = vst [vmem:[%s143 + $0x58] sm:$0xff] %v5161
      %5298 = vst [vmem:[%s143 + $0x60] sm:$0xff] %v5162
      %5299 = vst [vmem:[%s143 + $0x68] sm:$0xff] %v5163
      %5300 = vst [vmem:[%s143 + $0x70] sm:$0xff] %v5164
      %5301 = vst [vmem:[%s143 + $0x78] sm:$0xff] %v5165
      %5302 = vst [vmem:[%s143 + $0x80] sm:$0xff] %v5166
      %5303 = vst [vmem:[%s143 + $0x88] sm:$0xff] %v5167
      %5304 = vst [vmem:[%s143 + $0x90] sm:$0xff] %v5168
      %5305 = vst [vmem:[%s143 + $0x98] sm:$0xff] %v5169
      %5306 = vst [vmem:[%s143 + $0xa0] sm:$0xff] %v5170
      %5307 = vst [vmem:[%s143 + $0xa8] sm:$0xff] %v5171
      %5308 = vst [vmem:[%s143 + $0xb0] sm:$0xff] %v5172
      %5309 = vst [vmem:[%s143 + $0xb8] sm:$0xff] %v5173
      %5310 = vst [vmem:[%s143 + $0xc0] sm:$0xff] %v5174
      %5311 = vst [vmem:[%s143 + $0xc8] sm:$0xff] %v5175
      %5312 = vst [vmem:[%s143 + $0xd0] sm:$0xff] %v5176
      %5313 = vst [vmem:[%s143 + $0xd8] sm:$0xff] %v5177
      %5314 = vst [vmem:[%s143 + $0xe0] sm:$0xff] %v5178
      %5315 = vst [vmem:[%s143 + $0xe8] sm:$0xff] %v5179
      %5316 = vst [vmem:[%s143 + $0xf0] sm:$0xff] %v5180
      %5317 = vst [vmem:[%s143 + $0xf8] sm:$0xff] %v5181
      %5318 = vst [vmem:[%s143 + $0x100] sm:$0xff] %v5182
      %5319 = vst [vmem:[%s143 + $0x108] sm:$0xff] %v5183
      %5320 = vst [vmem:[%s143 + $0x110] sm:$0xff] %v5184
      %5321 = vst [vmem:[%s143 + $0x118] sm:$0xff] %v5185
      %5322 = vst [vmem:[%s143 + $0x120] sm:$0xff] %v5186
      %5323 = vst [vmem:[%s143 + $0x128] sm:$0xff] %v5187
      %5324 = vst [vmem:[%s143 + $0x130] sm:$0xff] %v5188
      %5325 = vst [vmem:[%s143 + $0x138] sm:$0xff] %v5189
      %5326 = vst [vmem:[%s143 + $0x140] sm:$0xff] %v5190
      %5327 = vst [vmem:[%s143 + $0x148] sm:$0xff] %v5191
      %5328 = vst [vmem:[%s143 + $0x150] sm:$0xff] %v5192
      %5329 = vst [vmem:[%s143 + $0x158] sm:$0xff] %v5193
      %5330 = vst [vmem:[%s143 + $0x160] sm:$0xff] %v5194
      %5331 = vst [vmem:[%s143 + $0x168] sm:$0xff] %v5195
      %5332 = vst [vmem:[%s143 + $0x170] sm:$0xff] %v5196
      %5333 = vst [vmem:[%s143 + $0x178] sm:$0xff] %v5197
      %5334 = vst [vmem:[%s143 + $0x180] sm:$0xff] %v5198
      %5335 = vst [vmem:[%s143 + $0x188] sm:$0xff] %v5199
      %5336 = vst [vmem:[%s143 + $0x190] sm:$0xff] %v5200
      %5337 = vst [vmem:[%s143 + $0x198] sm:$0xff] %v5201
      %5338 = vst [vmem:[%s143 + $0x1a0] sm:$0xff] %v5202
      %5339 = vst [vmem:[%s143 + $0x1a8] sm:$0xff] %v5203
      %5340 = vst [vmem:[%s143 + $0x1b0] sm:$0xff] %v5204
      %5341 = vst [vmem:[%s143 + $0x1b8] sm:$0xff] %v5205
      %5342 = vst [vmem:[%s143 + $0x1c0] sm:$0xff] %v5206
      %5343 = vst [vmem:[%s143 + $0x1c8] sm:$0xff] %v5207
      %5344 = vst [vmem:[%s143 + $0x1d0] sm:$0xff] %v5208
      %5345 = vst [vmem:[%s143 + $0x1d8] sm:$0xff] %v5209
      %5346 = vst [vmem:[%s143 + $0x1e0] sm:$0xff] %v5210
      %5347 = vst [vmem:[%s143 + $0x1e8] sm:$0xff] %v5211
      %5348 = vst [vmem:[%s143 + $0x1f0] sm:$0xff] %v5212
      %5349 = vst [vmem:[%s143 + $0x1f8] sm:$0xff] %v5213
      %5350 = vst [vmem:[%s143 + $0x200] sm:$0xff] %v5214
      %5351 = vst [vmem:[%s143 + $0x208] sm:$0xff] %v5215
      %5352 = vst [vmem:[%s143 + $0x210] sm:$0xff] %v5216
      %5353 = vst [vmem:[%s143 + $0x218] sm:$0xff] %v5217
      %5354 = vst [vmem:[%s143 + $0x220] sm:$0xff] %v5218
      %5355 = vst [vmem:[%s143 + $0x228] sm:$0xff] %v5219
      %5356 = vst [vmem:[%s143 + $0x230] sm:$0xff] %v5220
      %5357 = vst [vmem:[%s143 + $0x238] sm:$0xff] %v5221
      %5358 = vst [vmem:[%s143 + $0x240] sm:$0xff] %v5222
      %5359 = vst [vmem:[%s143 + $0x248] sm:$0xff] %v5223
      %5360 = vst [vmem:[%s143 + $0x250] sm:$0xff] %v5224
      %5361 = vst [vmem:[%s143 + $0x258] sm:$0xff] %v5225
      %5362 = vst [vmem:[%s143 + $0x260] sm:$0xff] %v5226
      %5363 = vst [vmem:[%s143 + $0x268] sm:$0xff] %v5227
      %5364 = vst [vmem:[%s143 + $0x270] sm:$0xff] %v5228
      %5365 = vst [vmem:[%s143 + $0x278] sm:$0xff] %v5229
      %5366 = vst [vmem:[%s143 + $0x280] sm:$0xff] %v5230
      %5367 = vst [vmem:[%s143 + $0x288] sm:$0xff] %v5231
      %5368 = vst [vmem:[%s143 + $0x290] sm:$0xff] %v5232
      %5369 = vst [vmem:[%s143 + $0x298] sm:$0xff] %v5233
      %5370 = vst [vmem:[%s143 + $0x2a0] sm:$0xff] %v5234
      %5371 = vst [vmem:[%s143 + $0x2a8] sm:$0xff] %v5235
      %5372 = vst [vmem:[%s143 + $0x2b0] sm:$0xff] %v5236
      %5373 = vst [vmem:[%s143 + $0x2b8] sm:$0xff] %v5237
      %5374 = vst [vmem:[%s143 + $0x2c0] sm:$0xff] %v5238
      %5375 = vst [vmem:[%s143 + $0x2c8] sm:$0xff] %v5239
      %5376 = vst [vmem:[%s143 + $0x2d0] sm:$0xff] %v5240
      %5377 = vst [vmem:[%s143 + $0x2d8] sm:$0xff] %v5241
      %5378 = vst [vmem:[%s143 + $0x2e0] sm:$0xff] %v5242
      %5379 = vst [vmem:[%s143 + $0x2e8] sm:$0xff] %v5243
      %5380 = vst [vmem:[%s143 + $0x2f0] sm:$0xff] %v5244
      %5381 = vst [vmem:[%s143 + $0x2f8] sm:$0xff] %v5245
      %5382 = vst [vmem:[%s143 + $0x300] sm:$0xff] %v5246
      %5383 = vst [vmem:[%s143 + $0x308] sm:$0xff] %v5247
      %5384 = vst [vmem:[%s143 + $0x310] sm:$0xff] %v5248
      %5385 = vst [vmem:[%s143 + $0x318] sm:$0xff] %v5249
      %5386 = vst [vmem:[%s143 + $0x320] sm:$0xff] %v5250
      %5387 = vst [vmem:[%s143 + $0x328] sm:$0xff] %v5251
      %5388 = vst [vmem:[%s143 + $0x330] sm:$0xff] %v5252
      %5389 = vst [vmem:[%s143 + $0x338] sm:$0xff] %v5253
      %5390 = vst [vmem:[%s143 + $0x340] sm:$0xff] %v5254
      %5391 = vst [vmem:[%s143 + $0x348] sm:$0xff] %v5255
      %5392 = vst [vmem:[%s143 + $0x350] sm:$0xff] %v5256
      %5393 = vst [vmem:[%s143 + $0x358] sm:$0xff] %v5257
      %5394 = vst [vmem:[%s143 + $0x360] sm:$0xff] %v5258
      %5395 = vst [vmem:[%s143 + $0x368] sm:$0xff] %v5259
      %5396 = vst [vmem:[%s143 + $0x370] sm:$0xff] %v5260
      %5397 = vst [vmem:[%s143 + $0x378] sm:$0xff] %v5261
      %5398 = vst [vmem:[%s143 + $0x380] sm:$0xff] %v5262
      %5399 = vst [vmem:[%s143 + $0x388] sm:$0xff] %v5263
      %5400 = vst [vmem:[%s143 + $0x390] sm:$0xff] %v5264
      %5401 = vst [vmem:[%s143 + $0x398] sm:$0xff] %v5265
      %5402 = vst [vmem:[%s143 + $0x3a0] sm:$0xff] %v5266
      %5403 = vst [vmem:[%s143 + $0x3a8] sm:$0xff] %v5267
      %5404 = vst [vmem:[%s143 + $0x3b0] sm:$0xff] %v5268
      %5405 = vst [vmem:[%s143 + $0x3b8] sm:$0xff] %v5269
      %5406 = vst [vmem:[%s143 + $0x3c0] sm:$0xff] %v5270
      %5407 = vst [vmem:[%s143 + $0x3c8] sm:$0xff] %v5271
      %5408 = vst [vmem:[%s143 + $0x3d0] sm:$0xff] %v5272
      %5409 = vst [vmem:[%s143 + $0x3d8] sm:$0xff] %v5273
      %5410 = vst [vmem:[%s143 + $0x3e0] sm:$0xff] %v5274
      %5411 = vst [vmem:[%s143 + $0x3e8] sm:$0xff] %v5275
      %5412 = vst [vmem:[%s143 + $0x3f0] sm:$0xff] %v5276
      %5413 = vst [vmem:[%s143 + $0x3f8] sm:$0xff] %v5277
      %5414 = vst [vmem:[%s143 + $0x400] sm:$0xff] %v5278
      %5415 = vst [vmem:[%s143 + $0x408] sm:$0xff] %v5279
      %5416 = vst [vmem:[%s143 + $0x410] sm:$0xff] %v5280
      %5417 = vst [vmem:[%s143 + $0x418] sm:$0xff] %v5281
      %5418 = vst [vmem:[%s143 + $0x420] sm:$0xff] %v5282
      %5419 = vst [vmem:[%s143 + $0x428] sm:$0xff] %v5283
      %5420 = vst [vmem:[%s143 + $0x430] sm:$0xff] %v5284
      %5421 = vst [vmem:[%s143 + $0x438] sm:$0xff] %v5285
      %p5422 = scmp.lt.s32.totalorder %s13, 1
      %s5423 = scalar_select %p5422, %s13, 1
      %s5424 = smul.addr %s5423, 136
      %s5425 = smul.addr %s5424, 8
      %s5426 = scalar_lea.vmem %s2, %s5425
      // Predicated region
      $region29: #{generator_forward.9} parent=27 // pred_check
        %p5427 = pneg %p78
      $region30: #{generator_forward.9} parent=27 // pred_check_branch
        %5429 = sbr.rel (%p5427) target = $region32
      $region31: #{generator_forward.9} parent=27 // pred_region
        _
      $region32: #{generator_forward.9} parent=27 // pred_fallthru
        _
    $region28: #{generator_forward.9} parent=5 // pred_fallthru
      _
    %p5430 = scmp.le.s32.totalorder 2, %s8
    // Predicated region
    $region33: #{generator_forward.9} parent=5 // pred_check
      %p5431 = pneg %p5430
    $region34: #{generator_forward.9} parent=5 // pred_check_branch
      %5433 = sbr.rel (%p5431) target = $region36
    $region35: #{generator_forward.9} parent=5 // pred_region
      %s5434 = ssub.s32 %s8, 2
      // Predicated region
      $region37: #{generator_forward.9} parent=35 // pred_check
        %p5435 = pneg %p84
      $region38: #{generator_forward.9} parent=35 // pred_check_branch
        %5437 = sbr.rel (%p5435) target = $region40
      $region39: #{generator_forward.9} parent=35 // pred_region
        %p5438 = scmp.lt.s32.totalorder %s14, 1
        %s5439 = scalar_select %p5438, %s14, 1
        %s5440 = smul.addr %s5439, 136
        %s5441 = smul.addr %s5440, 8
        %s5442 = scalar_lea.vmem %s2, %s5441
      $region40: #{generator_forward.9} parent=35 // pred_fallthru
        _
    $region36: #{generator_forward.9} parent=5 // pred_fallthru
      _
  $region6: #{generator_forward.9} parent=0 // loop_footer
    %s12 = sadd.s32 1, %s8
  $region7: #{generator_forward.9} parent=0 // loop_footer_branch
    %7 = sbr.rel target = $region3
  $region8: #{generator_forward.9} parent=0 // loop_exit
    _

</llo_original>
